<compile_context>
chip_gen: v7x
topology: tpu7x:2x2x1
jax: 0.10.0
libtpu: 0.0.40
codegen_flags: <defaults>
</compile_context>

<pallas_src>
import jax
import jax.numpy as jnp
from jax.experimental import pallas as pl
from jax.experimental.pallas import tpu as pltpu


def _row_l2_normalize(x):
    # matches torch l2_norm: x / ||x||_2 along last axis (no eps)
    return x * jax.lax.rsqrt(jnp.sum(x * x, axis=-1, keepdims=True))


def dal_embed_kernel(x_ref, w1_ref, b1_ref, w2_ref, b2_ref, id_ref, age_ref):
    # l2_norm(embs) in f32: XLU lane-reduce + EUP rsqrt (free slots next to MXU).
    xn = _row_l2_normalize(x_ref[...].astype(jnp.float32))

    # RFM layer 1: Linear + ReLU. bf16 MXU operands, f32 accumulation.
    h = jnp.dot(xn.astype(w1_ref.dtype), w1_ref[...],
                preferred_element_type=jnp.float32)
    h = jnp.maximum(h + b1_ref[...], 0.0)          # bias + ReLU stay in f32

    # RFM layer 2: downcast h only immediately before the dot.
    a = jnp.dot(h.astype(w2_ref.dtype), w2_ref[...],
                preferred_element_type=jnp.float32)
    embs_age = jnp.maximum(a + b2_ref[...], 0.0)

    # embs_id = embs - embs_age.  Re-read x from the still-resident VMEM tile
    # instead of keeping an f32 copy live across both matmuls (vreg pressure).
    embs_id = x_ref[...].astype(jnp.float32) - embs_age

    id_ref[...] = _row_l2_normalize(embs_id).astype(id_ref.dtype)
    age_ref[...] = embs_age.astype(age_ref.dtype)


def _round_down8(x):
    return max(8, (x // 8) * 8)


def _choose_tile(batch, block_b):
    """Batch-tile size: sublane-aligned, capped at block_b, and split so there
    are >= 2 grid steps (keeps the second v7x TensorCore busy and gives the
    per-core input/output double-buffering something to overlap with)."""
    if batch <= 8:
        return batch                       # one short full-extent tile
    tb = min(block_b, batch)
    if tb >= batch:                        # would compile to a single grid step
        tb = (batch + 1) // 2
    return _round_down8(tb)


def dal_embedding_head(embs, w1, b1, w2, b2, *, block_b=256,
                       weight_dtype=jnp.bfloat16, io_dtype=jnp.bfloat16):
    """Fused l2_norm -> RFM -> residual split -> l2_norm.

    embs: (B, D) backbone embeddings.
    w1, w2: (D, D) PyTorch-layout (out, in) nn.Linear weights.
    b1, b2: (D,) biases.
    Returns (l2_norm(embs_id), embs_age), both (B, D) in io_dtype.
    """
    B, D = embs.shape
    assert D % 128 == 0, "feature dim must be lane-dense (multiple of 128)"

    # Pre-transpose so the kernel computes x @ Wt == x @ W.T (PyTorch Linear).
    w1_t = w1.T.astype(weight_dtype)
    w2_t = w2.T.astype(weight_dtype)
    b1_2d = b1.reshape(1, D).astype(jnp.float32)
    b2_2d = b2.reshape(1, D).astype(jnp.float32)

    tb = _choose_tile(B, block_b)
    n_tiles = pl.cdiv(B, tb)       # ragged tail handled by masked edge blocks
    x = embs.astype(io_dtype)      # halve streamed HBM traffic (no pad copy)

    io_item = jnp.dtype(io_dtype).itemsize
    w_item = jnp.dtype(weight_dtype).itemsize
    weight_bytes = 2 * D * D * w_item + 2 * D * 4

    # VMEM budget: streamed (x + 2 outputs) double-buffered + resident weights
    # + f32 temporaries; clamp inside v7x's 64 MiB physical (<= 48 MiB).
    stream_bytes = 3 * 2 * tb * D * io_item
    scratch_bytes = 8 * tb * D * 4
    vmem_limit = min(48 << 20,
                     max(16 << 20,
                         int(1.5 * (stream_bytes + weight_bytes + scratch_bytes))))

    cost = pl.CostEstimate(
        flops=2 * 2 * B * D * D,                 # two (B,D)@(D,D) MXU matmuls
        transcendentals=2 * B,                   # two rsqrt per row
        bytes_accessed=3 * B * D * io_item + weight_bytes,
    )

    def act_spec():
        return pl.BlockSpec((tb, D), lambda i: (i, 0))

    def run(single_buffer_weights):
        if single_buffer_weights:
            # Constant index_map -> the second pipeline buffer is dead weight;
            # single-buffer the resident operands to save ~1.5 MiB of VMEM.
            def resident(shape):
                return pl.BlockSpec(shape, lambda i: (0, 0),
                                    pipeline_mode=pl.Buffered(1))
        else:
            def resident(shape):
                return pl.BlockSpec(shape, lambda i: (0, 0))

        return pl.pallas_call(
            dal_embed_kernel,
            out_shape=(jax.ShapeDtypeStruct((B, D), io_dtype),
                       jax.ShapeDtypeStruct((B, D), io_dtype)),
            grid=(n_tiles,),
            in_specs=[
                act_spec(),            # embs tile, streamed / double-buffered
                resident((D, D)),      # W1^T (bf16), pinned in VMEM
                resident((1, D)),      # b1   (f32)
                resident((D, D)),      # W2^T (bf16), pinned in VMEM
                resident((1, D)),      # b2   (f32)
            ],
            out_specs=(act_spec(), act_spec()),
            compiler_params=pltpu.CompilerParams(
                dimension_semantics=("parallel",),   # shard batch on v7x 2 TCs
                vmem_limit_bytes=vmem_limit,
            ),
            cost_estimate=cost,
        )(x, w1_t, b1_2d, w2_t, b2_2d)

    try:
        out_id, out_age = run(single_buffer_weights=True)
    except Exception:
        # pl.Buffered(1) not accepted by this jax/backend combo -> default
        # double-buffered resident weights (only costs a little VMEM).
        out_id, out_age = run(single_buffer_weights=False)

    return out_id, out_age


def _linear_init(key, n_in):
    # Mimics nn.Linear defaults: W, b ~ U(-1/sqrt(n_in), 1/sqrt(n_in)).
    kw, kb = jax.random.split(key)
    bound = 1.0 / jnp.sqrt(float(n_in))
    w = jax.random.uniform(kw, (n_in, n_in), jnp.float32, -bound, bound)
    b = jax.random.uniform(kb, (n_in,), jnp.float32, -bound, bound)
    return w, b


if __name__ == "__main__":
    # embedding_size = 512 in DAL_model (4 * 128 lanes).  B=512 with
    # block_b=256 -> 2 batch tiles (one per v7x TensorCore).
    B, D = 512, 512

    key = jax.random.PRNGKey(0)
    kx, k1, k2 = jax.random.split(key, 3)

    # Stand-in for backbone(x) output.
    embs = jax.random.normal(kx, (B, D), jnp.float32)
    w1, b1 = _linear_init(k1, D)     # PyTorch layout (out, in)
    w2, b2 = _linear_init(k2, D)

    out_id, out_age = dal_embedding_head(embs, w1, b1, w2, b2)
    out_id, out_age = jax.block_until_ready((out_id, out_age))

    # Pure-JAX f32 reference of the PyTorch inference path (emb=True).
    xn = embs / jnp.linalg.norm(embs, axis=1, keepdims=True)
    h_ref = jnp.maximum(xn @ w1.T + b1, 0.0)
    age_ref = jnp.maximum(h_ref @ w2.T + b2, 0.0)
    id_ref = embs - age_ref
    id_ref = id_ref / jnp.linalg.norm(id_ref, axis=1, keepdims=True)

    assert out_id.shape == (B, D) and out_age.shape == (B, D)
    out_id_f32 = out_id.astype(jnp.float32)
    out_age_f32 = out_age.astype(jnp.float32)
    assert bool(jnp.all(jnp.isfinite(out_id_f32)))
    assert bool(jnp.all(jnp.isfinite(out_age_f32)))
    # bf16-streamed activations + bf16 MXU operands (f32 accumulation) ->
    # loosened tolerances vs. the pure-f32 PyTorch path.
    assert jnp.allclose(out_age_f32, age_ref, atol=5e-3, rtol=5e-2)
    assert jnp.allclose(out_id_f32, id_ref, atol=5e-3, rtol=5e-2)
    print("KERNEL_OK")
</pallas_src>

<mosaic_0001>
module attributes {stable_mosaic.version = 11 : i64} {
  func.func @dal_embed_kernel(%arg0: i32, %arg1: memref<256x512xbf16, #tpu.memory_space<vmem>>, %arg2: memref<512x512xbf16, #tpu.memory_space<vmem>>, %arg3: memref<1x512xf32, #tpu.memory_space<vmem>>, %arg4: memref<512x512xbf16, #tpu.memory_space<vmem>>, %arg5: memref<1x512xf32, #tpu.memory_space<vmem>>, %arg6: memref<256x512xbf16, #tpu.memory_space<vmem>>, %arg7: memref<256x512xbf16, #tpu.memory_space<vmem>>) attributes {dimension_semantics = [#tpu.dimension_semantics<parallel>], iteration_bounds = array<i64: 2>, scalar_prefetch = 0 : i64, scratch_operands = 0 : i64, tpu.core_type = #tpu.core_type<tc>, window_params = [{transform_indices = @transform_0, window_bounds = array<i64: 256, 512>}, {pipeline_mode = #tpu.pipeline_mode<synchronous>, transform_indices = @transform_1, window_bounds = array<i64: 512, 512>}, {pipeline_mode = #tpu.pipeline_mode<synchronous>, transform_indices = @transform_2, window_bounds = array<i64: 1, 512>}, {pipeline_mode = #tpu.pipeline_mode<synchronous>, transform_indices = @transform_3, window_bounds = array<i64: 512, 512>}, {pipeline_mode = #tpu.pipeline_mode<synchronous>, transform_indices = @transform_4, window_bounds = array<i64: 1, 512>}, {transform_indices = @transform_5, window_bounds = array<i64: 256, 512>}, {transform_indices = @transform_6, window_bounds = array<i64: 256, 512>}]} {
    %c0 = arith.constant 0 : index
    %c0_0 = arith.constant 0 : index
    %0 = vector.load %arg1[%c0, %c0_0] : memref<256x512xbf16, #tpu.memory_space<vmem>>, vector<256x512xbf16>
    %1 = arith.extf %0 : vector<256x512xbf16> to vector<256x512xf32>
    %2 = arith.mulf %1, %1 : vector<256x512xf32>
    %cst = arith.constant dense<0.000000e+00> : vector<256xf32>
    %3 = vector.multi_reduction <add>, %2, %cst [1] : vector<256x512xf32> to vector<256xf32>
    %4 = vector.shape_cast %3 : vector<256xf32> to vector<256x1xf32>
    %5 = math.rsqrt %4 : vector<256x1xf32>
    %6 = vector.broadcast %5 : vector<256x1xf32> to vector<256x512xf32>
    %7 = arith.mulf %1, %6 : vector<256x512xf32>
    %8 = arith.truncf %7 : vector<256x512xf32> to vector<256x512xbf16>
    %c0_1 = arith.constant 0 : index
    %c0_2 = arith.constant 0 : index
    %9 = vector.load %arg2[%c0_1, %c0_2] : memref<512x512xbf16, #tpu.memory_space<vmem>>, vector<512x512xbf16>
    %cst_3 = arith.constant dense<0.000000e+00> : vector<256x512xf32>
    %10 = tpu.matmul %8, %9, %cst_3 {dimension_numbers = #tpu.dot_dimension_numbers<[1], [0], [0], [1], [0, 0, 1, 1], [], []>} : vector<256x512xbf16>, vector<512x512xbf16>, vector<256x512xf32> -> vector<256x512xf32>
    %c0_4 = arith.constant 0 : index
    %c0_5 = arith.constant 0 : index
    %11 = vector.load %arg3[%c0_4, %c0_5] : memref<1x512xf32, #tpu.memory_space<vmem>>, vector<1x512xf32>
    %12 = vector.broadcast %11 : vector<1x512xf32> to vector<256x512xf32>
    %13 = arith.addf %10, %12 : vector<256x512xf32>
    %cst_6 = arith.constant 0.000000e+00 : f32
    %14 = vector.broadcast %cst_6 : f32 to vector<256x512xf32>
    %15 = arith.maximumf %13, %14 : vector<256x512xf32>
    %16 = arith.truncf %15 : vector<256x512xf32> to vector<256x512xbf16>
    %c0_7 = arith.constant 0 : index
    %c0_8 = arith.constant 0 : index
    %17 = vector.load %arg4[%c0_7, %c0_8] : memref<512x512xbf16, #tpu.memory_space<vmem>>, vector<512x512xbf16>
    %cst_9 = arith.constant dense<0.000000e+00> : vector<256x512xf32>
    %18 = tpu.matmul %16, %17, %cst_9 {dimension_numbers = #tpu.dot_dimension_numbers<[1], [0], [0], [1], [0, 0, 1, 1], [], []>} : vector<256x512xbf16>, vector<512x512xbf16>, vector<256x512xf32> -> vector<256x512xf32>
    %c0_10 = arith.constant 0 : index
    %c0_11 = arith.constant 0 : index
    %19 = vector.load %arg5[%c0_10, %c0_11] : memref<1x512xf32, #tpu.memory_space<vmem>>, vector<1x512xf32>
    %20 = vector.broadcast %19 : vector<1x512xf32> to vector<256x512xf32>
    %21 = arith.addf %18, %20 : vector<256x512xf32>
    %cst_12 = arith.constant 0.000000e+00 : f32
    %22 = vector.broadcast %cst_12 : f32 to vector<256x512xf32>
    %23 = arith.maximumf %21, %22 : vector<256x512xf32>
    %c0_13 = arith.constant 0 : index
    %c0_14 = arith.constant 0 : index
    %24 = vector.load %arg1[%c0_13, %c0_14] : memref<256x512xbf16, #tpu.memory_space<vmem>>, vector<256x512xbf16>
    %25 = arith.extf %24 : vector<256x512xbf16> to vector<256x512xf32>
    %26 = arith.subf %25, %23 : vector<256x512xf32>
    %27 = arith.mulf %26, %26 : vector<256x512xf32>
    %cst_15 = arith.constant dense<0.000000e+00> : vector<256xf32>
    %28 = vector.multi_reduction <add>, %27, %cst_15 [1] : vector<256x512xf32> to vector<256xf32>
    %29 = vector.shape_cast %28 : vector<256xf32> to vector<256x1xf32>
    %30 = math.rsqrt %29 : vector<256x1xf32>
    %31 = vector.broadcast %30 : vector<256x1xf32> to vector<256x512xf32>
    %32 = arith.mulf %26, %31 : vector<256x512xf32>
    %33 = arith.truncf %32 : vector<256x512xf32> to vector<256x512xbf16>
    %c0_16 = arith.constant 0 : index
    %c0_17 = arith.constant 0 : index
    %34 = vector.load %arg6[%c0_16, %c0_17] : memref<256x512xbf16, #tpu.memory_space<vmem>>, vector<256x512xbf16>
    tpu.vector_store %arg6[%c0_16, %c0_17], %33 {strides = array<i32>} : memref<256x512xbf16, #tpu.memory_space<vmem>>, vector<256x512xbf16>,
    %35 = arith.truncf %23 : vector<256x512xf32> to vector<256x512xbf16>
    %c0_18 = arith.constant 0 : index
    %c0_19 = arith.constant 0 : index
    %36 = vector.load %arg7[%c0_18, %c0_19] : memref<256x512xbf16, #tpu.memory_space<vmem>>, vector<256x512xbf16>
    tpu.vector_store %arg7[%c0_18, %c0_19], %35 {strides = array<i32>} : memref<256x512xbf16, #tpu.memory_space<vmem>>, vector<256x512xbf16>,
    return
  }
  func.func @transform_0(%arg0: i32) -> (i32, i32) {
    %c0_i32 = arith.constant 0 : i32
    %c0_i32_0 = arith.constant 0 : i32
    return %arg0, %c0_i32 : i32, i32
  }
  func.func @transform_1(%arg0: i32) -> (i32, i32) {
    %c0_i32 = arith.constant 0 : i32
    %c0_i32_0 = arith.constant 0 : i32
    %c0_i32_1 = arith.constant 0 : i32
    return %c0_i32, %c0_i32_0 : i32, i32
  }
  func.func @transform_2(%arg0: i32) -> (i32, i32) {
    %c0_i32 = arith.constant 0 : i32
    %c0_i32_0 = arith.constant 0 : i32
    %c0_i32_1 = arith.constant 0 : i32
    return %c0_i32, %c0_i32_0 : i32, i32
  }
  func.func @transform_3(%arg0: i32) -> (i32, i32) {
    %c0_i32 = arith.constant 0 : i32
    %c0_i32_0 = arith.constant 0 : i32
    %c0_i32_1 = arith.constant 0 : i32
    return %c0_i32, %c0_i32_0 : i32, i32
  }
  func.func @transform_4(%arg0: i32) -> (i32, i32) {
    %c0_i32 = arith.constant 0 : i32
    %c0_i32_0 = arith.constant 0 : i32
    %c0_i32_1 = arith.constant 0 : i32
    return %c0_i32, %c0_i32_0 : i32, i32
  }
  func.func @transform_5(%arg0: i32) -> (i32, i32) {
    %c0_i32 = arith.constant 0 : i32
    %c0_i32_0 = arith.constant 0 : i32
    return %arg0, %c0_i32 : i32, i32
  }
  func.func @transform_6(%arg0: i32) -> (i32, i32) {
    %c0_i32 = arith.constant 0 : i32
    %c0_i32_0 = arith.constant 0 : i32
    return %arg0, %c0_i32 : i32, i32
  }
}

module attributes {stable_mosaic.version = 11 : i64} {
  func.func @dal_embed_kernel(%arg0: i32, %arg1: memref<256x512xbf16, #tpu.memory_space<vmem>>, %arg2: memref<512x512xbf16, #tpu.memory_space<vmem>>, %arg3: memref<1x512xf32, #tpu.memory_space<vmem>>, %arg4: memref<512x512xbf16, #tpu.memory_space<vmem>>, %arg5: memref<1x512xf32, #tpu.memory_space<vmem>>, %arg6: memref<256x512xbf16, #tpu.memory_space<vmem>>, %arg7: memref<256x512xbf16, #tpu.memory_space<vmem>>) attributes {dimension_semantics = [#tpu.dimension_semantics<parallel>], iteration_bounds = array<i64: 2>, scalar_prefetch = 0 : i64, scratch_operands = 0 : i64, tpu.core_type = #tpu.core_type<tc>, window_params = [{transform_indices = @transform_0, window_bounds = array<i64: 256, 512>}, {pipeline_mode = #tpu.pipeline_mode<synchronous>, transform_indices = @transform_1, window_bounds = array<i64: 512, 512>}, {pipeline_mode = #tpu.pipeline_mode<synchronous>, transform_indices = @transform_2, window_bounds = array<i64: 1, 512>}, {pipeline_mode = #tpu.pipeline_mode<synchronous>, transform_indices = @transform_3, window_bounds = array<i64: 512, 512>}, {pipeline_mode = #tpu.pipeline_mode<synchronous>, transform_indices = @transform_4, window_bounds = array<i64: 1, 512>}, {transform_indices = @transform_5, window_bounds = array<i64: 256, 512>}, {transform_indices = @transform_6, window_bounds = array<i64: 256, 512>}]} {
    %c0 = arith.constant 0 : index
    %c0_0 = arith.constant 0 : index
    %0 = vector.load %arg1[%c0, %c0_0] : memref<256x512xbf16, #tpu.memory_space<vmem>>, vector<256x512xbf16>
    %1 = arith.extf %0 : vector<256x512xbf16> to vector<256x512xf32>
    %2 = arith.mulf %1, %1 : vector<256x512xf32>
    %cst = arith.constant dense<0.000000e+00> : vector<256xf32>
    %3 = vector.multi_reduction <add>, %2, %cst [1] : vector<256x512xf32> to vector<256xf32>
    %4 = vector.shape_cast %3 : vector<256xf32> to vector<256x1xf32>
    %5 = math.rsqrt %4 : vector<256x1xf32>
    %6 = vector.broadcast %5 : vector<256x1xf32> to vector<256x512xf32>
    %7 = arith.mulf %1, %6 : vector<256x512xf32>
    %8 = arith.truncf %7 : vector<256x512xf32> to vector<256x512xbf16>
    %c0_1 = arith.constant 0 : index
    %c0_2 = arith.constant 0 : index
    %9 = vector.load %arg2[%c0_1, %c0_2] : memref<512x512xbf16, #tpu.memory_space<vmem>>, vector<512x512xbf16>
    %cst_3 = arith.constant dense<0.000000e+00> : vector<256x512xf32>
    %10 = tpu.matmul %8, %9, %cst_3 {dimension_numbers = #tpu.dot_dimension_numbers<[1], [0], [0], [1], [0, 0, 1, 1], [], []>} : vector<256x512xbf16>, vector<512x512xbf16>, vector<256x512xf32> -> vector<256x512xf32>
    %c0_4 = arith.constant 0 : index
    %c0_5 = arith.constant 0 : index
    %11 = vector.load %arg3[%c0_4, %c0_5] : memref<1x512xf32, #tpu.memory_space<vmem>>, vector<1x512xf32>
    %12 = vector.broadcast %11 : vector<1x512xf32> to vector<256x512xf32>
    %13 = arith.addf %10, %12 : vector<256x512xf32>
    %cst_6 = arith.constant 0.000000e+00 : f32
    %14 = vector.broadcast %cst_6 : f32 to vector<256x512xf32>
    %15 = arith.maximumf %13, %14 : vector<256x512xf32>
    %16 = arith.truncf %15 : vector<256x512xf32> to vector<256x512xbf16>
    %c0_7 = arith.constant 0 : index
    %c0_8 = arith.constant 0 : index
    %17 = vector.load %arg4[%c0_7, %c0_8] : memref<512x512xbf16, #tpu.memory_space<vmem>>, vector<512x512xbf16>
    %cst_9 = arith.constant dense<0.000000e+00> : vector<256x512xf32>
    %18 = tpu.matmul %16, %17, %cst_9 {dimension_numbers = #tpu.dot_dimension_numbers<[1], [0], [0], [1], [0, 0, 1, 1], [], []>} : vector<256x512xbf16>, vector<512x512xbf16>, vector<256x512xf32> -> vector<256x512xf32>
    %c0_10 = arith.constant 0 : index
    %c0_11 = arith.constant 0 : index
    %19 = vector.load %arg5[%c0_10, %c0_11] : memref<1x512xf32, #tpu.memory_space<vmem>>, vector<1x512xf32>
    %20 = vector.broadcast %19 : vector<1x512xf32> to vector<256x512xf32>
    %21 = arith.addf %18, %20 : vector<256x512xf32>
    %cst_12 = arith.constant 0.000000e+00 : f32
    %22 = vector.broadcast %cst_12 : f32 to vector<256x512xf32>
    %23 = arith.maximumf %21, %22 : vector<256x512xf32>
    %c0_13 = arith.constant 0 : index
    %c0_14 = arith.constant 0 : index
    %24 = vector.load %arg1[%c0_13, %c0_14] : memref<256x512xbf16, #tpu.memory_space<vmem>>, vector<256x512xbf16>
    %25 = arith.extf %24 : vector<256x512xbf16> to vector<256x512xf32>
    %26 = arith.subf %25, %23 : vector<256x512xf32>
    %27 = arith.mulf %26, %26 : vector<256x512xf32>
    %cst_15 = arith.constant dense<0.000000e+00> : vector<256xf32>
    %28 = vector.multi_reduction <add>, %27, %cst_15 [1] : vector<256x512xf32> to vector<256xf32>
    %29 = vector.shape_cast %28 : vector<256xf32> to vector<256x1xf32>
    %30 = math.rsqrt %29 : vector<256x1xf32>
    %31 = vector.broadcast %30 : vector<256x1xf32> to vector<256x512xf32>
    %32 = arith.mulf %26, %31 : vector<256x512xf32>
    %33 = arith.truncf %32 : vector<256x512xf32> to vector<256x512xbf16>
    %c0_16 = arith.constant 0 : index
    %c0_17 = arith.constant 0 : index
    %34 = vector.load %arg6[%c0_16, %c0_17] : memref<256x512xbf16, #tpu.memory_space<vmem>>, vector<256x512xbf16>
    tpu.vector_store %arg6[%c0_16, %c0_17], %33 {strides = array<i32>} : memref<256x512xbf16, #tpu.memory_space<vmem>>, vector<256x512xbf16>,
    %35 = arith.truncf %23 : vector<256x512xf32> to vector<256x512xbf16>
    %c0_18 = arith.constant 0 : index
    %c0_19 = arith.constant 0 : index
    %36 = vector.load %arg7[%c0_18, %c0_19] : memref<256x512xbf16, #tpu.memory_space<vmem>>, vector<256x512xbf16>
    tpu.vector_store %arg7[%c0_18, %c0_19], %35 {strides = array<i32>} : memref<256x512xbf16, #tpu.memory_space<vmem>>, vector<256x512xbf16>,
    return
  }
  func.func @transform_0(%arg0: i32) -> (i32, i32) {
    %c0_i32 = arith.constant 0 : i32
    %c0_i32_0 = arith.constant 0 : i32
    return %arg0, %c0_i32 : i32, i32
  }
  func.func @transform_1(%arg0: i32) -> (i32, i32) {
    %c0_i32 = arith.constant 0 : i32
    %c0_i32_0 = arith.constant 0 : i32
    %c0_i32_1 = arith.constant 0 : i32
    return %c0_i32, %c0_i32_0 : i32, i32
  }
  func.func @transform_2(%arg0: i32) -> (i32, i32) {
    %c0_i32 = arith.constant 0 : i32
    %c0_i32_0 = arith.constant 0 : i32
    %c0_i32_1 = arith.constant 0 : i32
    return %c0_i32, %c0_i32_0 : i32, i32
  }
  func.func @transform_3(%arg0: i32) -> (i32, i32) {
    %c0_i32 = arith.constant 0 : i32
    %c0_i32_0 = arith.constant 0 : i32
    %c0_i32_1 = arith.constant 0 : i32
    return %c0_i32, %c0_i32_0 : i32, i32
  }
  func.func @transform_4(%arg0: i32) -> (i32, i32) {
    %c0_i32 = arith.constant 0 : i32
    %c0_i32_0 = arith.constant 0 : i32
    %c0_i32_1 = arith.constant 0 : i32
    return %c0_i32, %c0_i32_0 : i32, i32
  }
  func.func @transform_5(%arg0: i32) -> (i32, i32) {
    %c0_i32 = arith.constant 0 : i32
    %c0_i32_0 = arith.constant 0 : i32
    return %arg0, %c0_i32 : i32, i32
  }
  func.func @transform_6(%arg0: i32) -> (i32, i32) {
    %c0_i32 = arith.constant 0 : i32
    %c0_i32_0 = arith.constant 0 : i32
    return %arg0, %c0_i32 : i32, i32
  }
}

</mosaic_0001>

<llo_original>
// kernel: tpu_custom_call.1
$region0: #{tpu_custom_call.1}
  #allocation0 [shape = 'u32[]', space=smem, size = 0x4, offset = 0x4, fixed_abs, tag = 'smem constant byte address 0x4 - core index']
  #allocation1 [shape = 'u32[144,128]{1,0:T(1,128)}', space=vmem, size = 0x12000, scoped, tag = 'internal scratch']
  %s0 = inlined_call_operand.hbm [shape: bf16[512,512], index: 0, kind: input, shape index: {}]
  %s1 = inlined_call_operand.hbm [shape: bf16[512,512], index: 1, kind: input, shape index: {}]
  %s2 = inlined_call_operand.vmem [shape: f32[1,512], index: 2, kind: input, shape index: {}]
  %s3 = inlined_call_operand.hbm [shape: bf16[512,512], index: 3, kind: input, shape index: {}]
  %s4 = inlined_call_operand.vmem [shape: f32[1,512], index: 4, kind: input, shape index: {}]
  %s5 = inlined_call_operand.hbm [shape: bf16[512,512], index: 5, kind: output, shape index: {0}]
  %s6 = inlined_call_operand.hbm [shape: bf16[512,512], index: 6, kind: output, shape index: {1}]
  %7 = xla_tuple %s5, %s6
  %s8 = sld [smem:[#allocation0]]
  $region73: #{tpu_custom_call.1} parent=0
    _
  %s10 = ssub.s32 1, %s8
  %s11 = scalar_select 0, %s10, %s8
  $region1: #{tpu_custom_call.1} parent=0
    #allocation2 [shape = 'u8[524288]{0}', space=vmem, size = 0x80000, scoped, tag = 'input window, operand 0']
    #allocation3 [shape = 's32[2]{0}', space=sflag, size = 0x8, scoped, tag = 'scoped memory for tpu_custom_call.1']
    #allocation4 [shape = 's32[2]{0}', space=sflag, size = 0x8, scoped, tag = 'scoped memory for tpu_custom_call.1']
    #allocation5 [shape = 'u8[524288]{0}', space=vmem, size = 0x80000, scoped, tag = 'input window, operand 1, single buffered']
    #allocation6 [shape = 's32[1]{0}', space=sflag, size = 0x4, scoped, tag = 'scoped memory for tpu_custom_call.1']
    #allocation7 [shape = 'u8[524288]{0}', space=vmem, size = 0x80000, scoped, tag = 'input window, operand 3, single buffered']
    #allocation8 [shape = 'u8[524288]{0}', space=vmem, size = 0x80000, scoped, tag = 'output window, operand 0']
    #allocation9 [shape = 'u8[524288]{0}', space=vmem, size = 0x80000, scoped, tag = 'output window, operand 1']
    #allocation10 [shape = 's32[2]{0}', space=sflag, size = 0x8, scoped, tag = 'scoped memory for tpu_custom_call.1']
    %12 = vsyncpa [#allocation3], 0
    %s13 = scalar_lea.sflag [#allocation3], 1
    %14 = vsyncpa %s13, 0
    %15 = vsyncpa [#allocation6], 0
    %16 = vsyncpa [#allocation4], 0
    %s17 = scalar_lea.sflag [#allocation4], 1
    %18 = vsyncpa %s17, 0
    %19 = vsyncpa [#allocation10], 0
    %s20 = scalar_lea.sflag [#allocation10], 1
    %21 = vsyncpa %s20, 0
    loop: start=0, step=1, limit=4
    $region2: #{tpu_custom_call.1} parent=1 // loop_pre_header
      _
    $region3: #{tpu_custom_call.1} parent=1 // loop_header
      %s23 = sphi 0, %s27
      %p24 = scmp.ge.s32.totalorder %s23, 4
      %s33 = sphi 0, %s35
      %s36 = sphi 0, %s33
      %s37 = sphi 0, %s36
      %s53 = sphi 0, %s37
      %s57 = sphi 0, %s57
      %s59 = sphi 0, %s57
      %s60 = sphi 0, %s59
      %s74 = sphi 0, %s60
      %s78 = sphi 0, %s78
      %s80 = sphi 0, %s78
      %s81 = sphi 0, %s80
      %s95 = sphi 0, %s81
      %s99 = sphi 0, %s99
      %s101 = sphi 0, %s99
      %s102 = sphi 0, %s101
      %s116 = sphi 0, %s102
      %s120 = sphi 0, %s120
      %s122 = sphi 0, %s120
      %s123 = sphi 0, %s122
      %s137 = sphi 0, %s123
      %s143 = sphi 0, %s145
      %s146 = sphi 0, %s143
      %s147 = sphi 0, %s146
      %s163 = sphi 0, %s147
      %s169 = sphi 0, %s171
      %s172 = sphi 0, %s169
      %s173 = sphi 0, %s172
      %s189 = sphi 0, %s173
    $region4: #{tpu_custom_call.1} parent=1 // loop_header_branch
      %26 = sbr.rel (%p24) target = $region8
    $region5: #{tpu_custom_call.1} parent=1 // loop_body
      %s28 = ssub.s32 %s23, 1
      %s29 = ssub.s32 %s23, 2
      %s30 = sadd.s32 %s23, 1
      %s31 = ssub.s32 %s23, %s30
      %p32 = scmp.eq.s32.totalorder %s31, 0
      %s34 = sadd.s32 %s33, 1
      %s35 = scalar_select %p32, %s33, %s34
      %p38 = pneg %p32
      %p39 = scmp.eq.s32.totalorder %s23, 1
      %p40 = por %p38, %p39
      %p41 = scmp.ne.s32.totalorder %s33, %s36
      %p42 = scmp.eq.s32.totalorder %s23, 0
      %p43 = por %p41, %p42
      %p44 = scmp.ne.s32.totalorder %s33, %s36
      %p45 = scmp.eq.s32.totalorder %s28, 1
      %p46 = por %p44, %p45
      %p47 = scmp.ne.s32.totalorder %s36, %s37
      %p48 = scmp.eq.s32.totalorder %s28, 0
      %p49 = por %p47, %p48
      %p50 = scmp.ne.s32.totalorder %s36, %s37
      %p51 = scmp.eq.s32.totalorder %s29, 1
      %p52 = por %p50, %p51
      %p54 = scmp.ne.s32.totalorder %s37, %s53
      %p55 = scmp.eq.s32.totalorder %s29, 0
      %p56 = por %p54, %p55
      %s58 = sadd.s32 %s57, 1
      %p61 = scmp.eq.s32.totalorder %s23, 1
      %p62 = scmp.ne.s32.totalorder %s57, %s59
      %p63 = scmp.eq.s32.totalorder %s23, 0
      %p64 = por %p62, %p63
      %p65 = scmp.ne.s32.totalorder %s57, %s59
      %p66 = scmp.eq.s32.totalorder %s28, 1
      %p67 = por %p65, %p66
      %p68 = scmp.ne.s32.totalorder %s59, %s60
      %p69 = scmp.eq.s32.totalorder %s28, 0
      %p70 = por %p68, %p69
      %p71 = scmp.ne.s32.totalorder %s59, %s60
      %p72 = scmp.eq.s32.totalorder %s29, 1
      %p73 = por %p71, %p72
      %p75 = scmp.ne.s32.totalorder %s60, %s74
      %p76 = scmp.eq.s32.totalorder %s29, 0
      %p77 = por %p75, %p76
      %s79 = sadd.s32 %s78, 1
      %p82 = scmp.eq.s32.totalorder %s23, 1
      %p83 = scmp.ne.s32.totalorder %s78, %s80
      %p84 = scmp.eq.s32.totalorder %s23, 0
      %p85 = por %p83, %p84
      %p86 = scmp.ne.s32.totalorder %s78, %s80
      %p87 = scmp.eq.s32.totalorder %s28, 1
      %p88 = por %p86, %p87
      %p89 = scmp.ne.s32.totalorder %s80, %s81
      %p90 = scmp.eq.s32.totalorder %s28, 0
      %p91 = por %p89, %p90
      %p92 = scmp.ne.s32.totalorder %s80, %s81
      %p93 = scmp.eq.s32.totalorder %s29, 1
      %p94 = por %p92, %p93
      %p96 = scmp.ne.s32.totalorder %s81, %s95
      %p97 = scmp.eq.s32.totalorder %s29, 0
      %p98 = por %p96, %p97
      %s100 = sadd.s32 %s99, 1
      %p103 = scmp.eq.s32.totalorder %s23, 1
      %p104 = scmp.ne.s32.totalorder %s99, %s101
      %p105 = scmp.eq.s32.totalorder %s23, 0
      %p106 = por %p104, %p105
      %p107 = scmp.ne.s32.totalorder %s99, %s101
      %p108 = scmp.eq.s32.totalorder %s28, 1
      %p109 = por %p107, %p108
      %p110 = scmp.ne.s32.totalorder %s101, %s102
      %p111 = scmp.eq.s32.totalorder %s28, 0
      %p112 = por %p110, %p111
      %p113 = scmp.ne.s32.totalorder %s101, %s102
      %p114 = scmp.eq.s32.totalorder %s29, 1
      %p115 = por %p113, %p114
      %p117 = scmp.ne.s32.totalorder %s102, %s116
      %p118 = scmp.eq.s32.totalorder %s29, 0
      %p119 = por %p117, %p118
      %s121 = sadd.s32 %s120, 1
      %p124 = scmp.eq.s32.totalorder %s23, 1
      %p125 = scmp.ne.s32.totalorder %s120, %s122
      %p126 = scmp.eq.s32.totalorder %s23, 0
      %p127 = por %p125, %p126
      %p128 = scmp.ne.s32.totalorder %s120, %s122
      %p129 = scmp.eq.s32.totalorder %s28, 1
      %p130 = por %p128, %p129
      %p131 = scmp.ne.s32.totalorder %s122, %s123
      %p132 = scmp.eq.s32.totalorder %s28, 0
      %p133 = por %p131, %p132
      %p134 = scmp.ne.s32.totalorder %s122, %s123
      %p135 = scmp.eq.s32.totalorder %s29, 1
      %p136 = por %p134, %p135
      %p138 = scmp.ne.s32.totalorder %s123, %s137
      %p139 = scmp.eq.s32.totalorder %s29, 0
      %p140 = por %p138, %p139
      %s141 = ssub.s32 %s23, %s30
      %p142 = scmp.eq.s32.totalorder %s141, 0
      %s144 = sadd.s32 %s143, 1
      %s145 = scalar_select %p142, %s143, %s144
      %p148 = pneg %p142
      %p149 = scmp.eq.s32.totalorder %s23, 1
      %p150 = por %p148, %p149
      %p151 = scmp.ne.s32.totalorder %s143, %s146
      %p152 = scmp.eq.s32.totalorder %s23, 0
      %p153 = por %p151, %p152
      %p154 = scmp.ne.s32.totalorder %s143, %s146
      %p155 = scmp.eq.s32.totalorder %s28, 1
      %p156 = por %p154, %p155
      %p157 = scmp.ne.s32.totalorder %s146, %s147
      %p158 = scmp.eq.s32.totalorder %s28, 0
      %p159 = por %p157, %p158
      %p160 = scmp.ne.s32.totalorder %s146, %s147
      %p161 = scmp.eq.s32.totalorder %s29, 1
      %p162 = por %p160, %p161
      %p164 = scmp.ne.s32.totalorder %s147, %s163
      %p165 = scmp.eq.s32.totalorder %s29, 0
      %p166 = por %p164, %p165
      %s167 = ssub.s32 %s23, %s30
      %p168 = scmp.eq.s32.totalorder %s167, 0
      %s170 = sadd.s32 %s169, 1
      %s171 = scalar_select %p168, %s169, %s170
      %p174 = pneg %p168
      %p175 = scmp.eq.s32.totalorder %s23, 1
      %p176 = por %p174, %p175
      %p177 = scmp.ne.s32.totalorder %s169, %s172
      %p178 = scmp.eq.s32.totalorder %s23, 0
      %p179 = por %p177, %p178
      %p180 = scmp.ne.s32.totalorder %s169, %s172
      %p181 = scmp.eq.s32.totalorder %s28, 1
      %p182 = por %p180, %p181
      %p183 = scmp.ne.s32.totalorder %s172, %s173
      %p184 = scmp.eq.s32.totalorder %s28, 0
      %p185 = por %p183, %p184
      %p186 = scmp.ne.s32.totalorder %s172, %s173
      %p187 = scmp.eq.s32.totalorder %s29, 1
      %p188 = por %p186, %p187
      %p190 = scmp.ne.s32.totalorder %s173, %s189
      %p191 = scmp.eq.s32.totalorder %s29, 0
      %p192 = por %p190, %p191
      %p193 = scmp.le.s32.totalorder 1, %s23
      %p194 = scmp.lt.s32.totalorder %s23, 3
      %p195 = pnand %p193, %p194
      %p196 = pneg %p195
      // Predicated region
      $region9: #{tpu_custom_call.1} parent=5 // pred_check
        _
      $region10: #{tpu_custom_call.1} parent=5 // pred_check_branch
        %198 = sbr.rel (%p195) target = $region12
      $region11: #{tpu_custom_call.1} parent=5 // pred_region
        %s199 = ssub.s32 %s23, 1
        // Predicated region
        $region13: #{tpu_custom_call.1} parent=11 // pred_check
          %p200 = pneg %p70
        $region14: #{tpu_custom_call.1} parent=11 // pred_check_branch
          %202 = sbr.rel (%p200) target = $region16
        $region15: #{tpu_custom_call.1} parent=11 // pred_region
          %s204 = ssub.s32 16384, 16384
          %205 = vsyncadd [#allocation6], %s204
          %s206 = sshll.u32 [#allocation5], 4
          %s207 = int_to_ptr.vmem [resolvable:$true] %s206
          %212 = dma.hbm_to_vmem [thread:$0]  %s1, 16384, %s207, [#allocation6], 256, 256, 16
        $region16: #{tpu_custom_call.1} parent=11 // pred_fallthru
          _
        // Predicated region
        $region17: #{tpu_custom_call.1} parent=11 // pred_check
          %p213 = pneg %p91
        $region18: #{tpu_custom_call.1} parent=11 // pred_check_branch
          %215 = sbr.rel (%p213) target = $region20
        $region19: #{tpu_custom_call.1} parent=11 // pred_region
          _
        $region20: #{tpu_custom_call.1} parent=11 // pred_fallthru
          _
        // Predicated region
        $region21: #{tpu_custom_call.1} parent=11 // pred_check
          %p216 = pneg %p112
        $region22: #{tpu_custom_call.1} parent=11 // pred_check_branch
          %218 = sbr.rel (%p216) target = $region24
        $region23: #{tpu_custom_call.1} parent=11 // pred_region
          %s220 = ssub.s32 16384, 16384
          %221 = vsyncadd [#allocation6], %s220
          %s222 = sshll.u32 [#allocation7], 4
          %s223 = int_to_ptr.vmem [resolvable:$true] %s222
          %228 = dma.hbm_to_vmem [thread:$0]  %s3, 16384, %s223, [#allocation6], 256, 256, 16
        $region24: #{tpu_custom_call.1} parent=11 // pred_fallthru
          _
        // Predicated region
        $region25: #{tpu_custom_call.1} parent=11 // pred_check
          %p229 = pneg %p133
        $region26: #{tpu_custom_call.1} parent=11 // pred_check_branch
          %231 = sbr.rel (%p229) target = $region28
        $region27: #{tpu_custom_call.1} parent=11 // pred_region
          _
        $region28: #{tpu_custom_call.1} parent=11 // pred_fallthru
          _
      $region12: #{tpu_custom_call.1} parent=5 // pred_fallthru
        _
      %p232 = scmp.lt.s32.totalorder %s23, 2
      // Predicated region
      $region29: #{tpu_custom_call.1} parent=5 // pred_check
        %p233 = pneg %p232
      $region30: #{tpu_custom_call.1} parent=5 // pred_check_branch
        %235 = sbr.rel (%p233) target = $region32
      $region31: #{tpu_custom_call.1} parent=5 // pred_region
        // Predicated region
        $region33: #{tpu_custom_call.1} parent=31 // pred_check
          %p236 = pneg %p43
        $region34: #{tpu_custom_call.1} parent=31 // pred_check_branch
          %238 = sbr.rel (%p236) target = $region36
        $region35: #{tpu_custom_call.1} parent=31 // pred_region
          %s239 = sand.u32 %s33, 1
          %s240 = scalar_lea.sflag [#allocation3], %s239
          %s241 = sand.u32 %s33, 1
          %s242 = smul.addr %s241, 512
          %s243 = scalar_lea.vmem [#allocation2], %s242
          %s244 = smul.u32 32, %s23
          %s246 = ssub.s32 8192, 8192
          %247 = vsyncadd %s240, %s246
          %s248 = smul.addr %s244, 4
          %s249 = smul.addr %s248, 64
          %s250 = scalar_lea.hbm %s0, %s249
          %s251 = sshll.u32 %s243, 4
          %s252 = int_to_ptr.vmem [resolvable:$true] %s251
          %257 = dma.hbm_to_vmem [thread:$0]  %s250, 8192, %s252, %s240, 256, 256, 16
        $region36: #{tpu_custom_call.1} parent=31 // pred_fallthru
          _
      $region32: #{tpu_custom_call.1} parent=5 // pred_fallthru
        _
      %p258 = scmp.le.s32.totalorder 1, %s23
      %p259 = scmp.lt.s32.totalorder %s23, 3
      %p260 = pnand %p258, %p259
      %p261 = pneg %p260
      // Predicated region
      $region37: #{tpu_custom_call.1} parent=5 // pred_check
        _
      $region38: #{tpu_custom_call.1} parent=5 // pred_check_branch
        %263 = sbr.rel (%p260) target = $region40
      $region39: #{tpu_custom_call.1} parent=5 // pred_region
        %s264 = ssub.s32 %s23, 1
        %s265 = sand.u32 %s36, 1
        %s266 = scalar_lea.sflag [#allocation3], %s265
        %s267 = sand.u32 %s36, 1
        %s268 = smul.addr %s267, 512
        %s269 = scalar_lea.vmem [#allocation2], %s268
        // Predicated region
        $region41: #{tpu_custom_call.1} parent=39 // pred_check
          %p270 = pneg %p49
        $region42: #{tpu_custom_call.1} parent=39 // pred_check_branch
          %272 = sbr.rel (%p270) target = $region44
        $region43: #{tpu_custom_call.1} parent=39 // pred_region
          %273 = dma.done %s266, 8192
        $region44: #{tpu_custom_call.1} parent=39 // pred_fallthru
          _
        // Predicated region
        $region45: #{tpu_custom_call.1} parent=39 // pred_check
          %p274 = pneg %p70
        $region46: #{tpu_custom_call.1} parent=39 // pred_check_branch
          %276 = sbr.rel (%p274) target = $region48
        $region47: #{tpu_custom_call.1} parent=39 // pred_region
          %277 = dma.done [#allocation6], 16384
        $region48: #{tpu_custom_call.1} parent=39 // pred_fallthru
          _
        // Predicated region
        $region49: #{tpu_custom_call.1} parent=39 // pred_check
          %p278 = pneg %p112
        $region50: #{tpu_custom_call.1} parent=39 // pred_check_branch
          %280 = sbr.rel (%p278) target = $region52
        $region51: #{tpu_custom_call.1} parent=39 // pred_region
          %281 = dma.done [#allocation6], 16384
        $region52: #{tpu_custom_call.1} parent=39 // pred_fallthru
          _
        %s282 = sand.u32 %s36, 1
        %s283 = scalar_lea.sflag [#allocation3], %s282
        %s284 = sand.u32 %s36, 1
        %s285 = smul.addr %s284, 512
        %s286 = scalar_lea.vmem [#allocation2], %s285
        %p287 = pneg %p49
        %p288 = pneg %p46
        %p289 = pneg %p70
        %p290 = pneg %p67
        %p291 = pneg %p91
        %p292 = pneg %p88
        %p293 = pneg %p112
        %p294 = pneg %p109
        %p295 = pneg %p133
        %p296 = pneg %p130
        %p297 = pneg %p159
        %p298 = pneg %p156
        %s299 = sand.u32 %s146, 1
        %s300 = scalar_lea.sflag [#allocation4], %s299
        %s301 = sand.u32 %s146, 1
        %s302 = smul.addr %s301, 512
        %s303 = scalar_lea.vmem [#allocation8], %s302
        %p304 = pneg %p185
        %p305 = pneg %p182
        %s306 = sand.u32 %s172, 1
        %s307 = scalar_lea.sflag [#allocation10], %s306
        %s308 = sand.u32 %s172, 1
        %s309 = smul.addr %s308, 512
        %s310 = scalar_lea.vmem [#allocation9], %s309
        %s311 = smul.u32 32, %s28
        %s312 = smul.u32 32, %s28
        %s313 = smul.u32 32, %s28
        %v314 = vld [vmem:[%s269] sm:$0xff]
        %v315 = vld [vmem:[%s269 + $0x8] sm:$0xff]
        %v316 = vld [vmem:[%s269 + $0x10] sm:$0xff]
        %v317 = vld [vmem:[%s269 + $0x18] sm:$0xff]
        %v318 = vld [vmem:[%s269 + $0x20] sm:$0xff]
        %v319 = vld [vmem:[%s269 + $0x28] sm:$0xff]
        %v320 = vld [vmem:[%s269 + $0x30] sm:$0xff]
        %v321 = vld [vmem:[%s269 + $0x38] sm:$0xff]
        %v322 = vld [vmem:[%s269 + $0x40] sm:$0xff]
        %v323 = vld [vmem:[%s269 + $0x48] sm:$0xff]
        %v324 = vld [vmem:[%s269 + $0x50] sm:$0xff]
        %v325 = vld [vmem:[%s269 + $0x58] sm:$0xff]
        %v326 = vld [vmem:[%s269 + $0x60] sm:$0xff]
        %v327 = vld [vmem:[%s269 + $0x68] sm:$0xff]
        %v328 = vld [vmem:[%s269 + $0x70] sm:$0xff]
        %v329 = vld [vmem:[%s269 + $0x78] sm:$0xff]
        %v330 = vld [vmem:[%s269 + $0x80] sm:$0xff]
        %v331 = vld [vmem:[%s269 + $0x88] sm:$0xff]
        %v332 = vld [vmem:[%s269 + $0x90] sm:$0xff]
        %v333 = vld [vmem:[%s269 + $0x98] sm:$0xff]
        %v334 = vld [vmem:[%s269 + $0xa0] sm:$0xff]
        %v335 = vld [vmem:[%s269 + $0xa8] sm:$0xff]
        %v336 = vld [vmem:[%s269 + $0xb0] sm:$0xff]
        %v337 = vld [vmem:[%s269 + $0xb8] sm:$0xff]
        %v338 = vld [vmem:[%s269 + $0xc0] sm:$0xff]
        %v339 = vld [vmem:[%s269 + $0xc8] sm:$0xff]
        %v340 = vld [vmem:[%s269 + $0xd0] sm:$0xff]
        %v341 = vld [vmem:[%s269 + $0xd8] sm:$0xff]
        %v342 = vld [vmem:[%s269 + $0xe0] sm:$0xff]
        %v343 = vld [vmem:[%s269 + $0xe8] sm:$0xff]
        %v344 = vld [vmem:[%s269 + $0xf0] sm:$0xff]
        %v345 = vld [vmem:[%s269 + $0xf8] sm:$0xff]
        %v346 = vld [vmem:[%s269 + $0x100] sm:$0xff]
        %v347 = vld [vmem:[%s269 + $0x108] sm:$0xff]
        %v348 = vld [vmem:[%s269 + $0x110] sm:$0xff]
        %v349 = vld [vmem:[%s269 + $0x118] sm:$0xff]
        %v350 = vld [vmem:[%s269 + $0x120] sm:$0xff]
        %v351 = vld [vmem:[%s269 + $0x128] sm:$0xff]
        %v352 = vld [vmem:[%s269 + $0x130] sm:$0xff]
        %v353 = vld [vmem:[%s269 + $0x138] sm:$0xff]
        %v354 = vld [vmem:[%s269 + $0x140] sm:$0xff]
        %v355 = vld [vmem:[%s269 + $0x148] sm:$0xff]
        %v356 = vld [vmem:[%s269 + $0x150] sm:$0xff]
        %v357 = vld [vmem:[%s269 + $0x158] sm:$0xff]
        %v358 = vld [vmem:[%s269 + $0x160] sm:$0xff]
        %v359 = vld [vmem:[%s269 + $0x168] sm:$0xff]
        %v360 = vld [vmem:[%s269 + $0x170] sm:$0xff]
        %v361 = vld [vmem:[%s269 + $0x178] sm:$0xff]
        %v362 = vld [vmem:[%s269 + $0x180] sm:$0xff]
        %v363 = vld [vmem:[%s269 + $0x188] sm:$0xff]
        %v364 = vld [vmem:[%s269 + $0x190] sm:$0xff]
        %v365 = vld [vmem:[%s269 + $0x198] sm:$0xff]
        %v366 = vld [vmem:[%s269 + $0x1a0] sm:$0xff]
        %v367 = vld [vmem:[%s269 + $0x1a8] sm:$0xff]
        %v368 = vld [vmem:[%s269 + $0x1b0] sm:$0xff]
        %v369 = vld [vmem:[%s269 + $0x1b8] sm:$0xff]
        %v370 = vld [vmem:[%s269 + $0x1c0] sm:$0xff]
        %v371 = vld [vmem:[%s269 + $0x1c8] sm:$0xff]
        %v372 = vld [vmem:[%s269 + $0x1d0] sm:$0xff]
        %v373 = vld [vmem:[%s269 + $0x1d8] sm:$0xff]
        %v374 = vld [vmem:[%s269 + $0x1e0] sm:$0xff]
        %v375 = vld [vmem:[%s269 + $0x1e8] sm:$0xff]
        %v376 = vld [vmem:[%s269 + $0x1f0] sm:$0xff]
        %v377 = vld [vmem:[%s269 + $0x1f8] sm:$0xff]
        %v378 = vunpack.c.l.bf16 %v314
        %v379 = vunpack.c.h.bf16 %v314
        %v380 = vunpack.c.l.bf16 %v315
        %v381 = vunpack.c.h.bf16 %v315
        %v382 = vunpack.c.l.bf16 %v316
        %v383 = vunpack.c.h.bf16 %v316
        %v384 = vunpack.c.l.bf16 %v317
        %v385 = vunpack.c.h.bf16 %v317
        %v386 = vunpack.c.l.bf16 %v318
        %v387 = vunpack.c.h.bf16 %v318
        %v388 = vunpack.c.l.bf16 %v319
        %v389 = vunpack.c.h.bf16 %v319
        %v390 = vunpack.c.l.bf16 %v320
        %v391 = vunpack.c.h.bf16 %v320
        %v392 = vunpack.c.l.bf16 %v321
        %v393 = vunpack.c.h.bf16 %v321
        %v394 = vunpack.c.l.bf16 %v322
        %v395 = vunpack.c.h.bf16 %v322
        %v396 = vunpack.c.l.bf16 %v323
        %v397 = vunpack.c.h.bf16 %v323
        %v398 = vunpack.c.l.bf16 %v324
        %v399 = vunpack.c.h.bf16 %v324
        %v400 = vunpack.c.l.bf16 %v325
        %v401 = vunpack.c.h.bf16 %v325
        %v402 = vunpack.c.l.bf16 %v326
        %v403 = vunpack.c.h.bf16 %v326
        %v404 = vunpack.c.l.bf16 %v327
        %v405 = vunpack.c.h.bf16 %v327
        %v406 = vunpack.c.l.bf16 %v328
        %v407 = vunpack.c.h.bf16 %v328
        %v408 = vunpack.c.l.bf16 %v329
        %v409 = vunpack.c.h.bf16 %v329
        %v410 = vunpack.c.l.bf16 %v330
        %v411 = vunpack.c.h.bf16 %v330
        %v412 = vunpack.c.l.bf16 %v331
        %v413 = vunpack.c.h.bf16 %v331
        %v414 = vunpack.c.l.bf16 %v332
        %v415 = vunpack.c.h.bf16 %v332
        %v416 = vunpack.c.l.bf16 %v333
        %v417 = vunpack.c.h.bf16 %v333
        %v418 = vunpack.c.l.bf16 %v334
        %v419 = vunpack.c.h.bf16 %v334
        %v420 = vunpack.c.l.bf16 %v335
        %v421 = vunpack.c.h.bf16 %v335
        %v422 = vunpack.c.l.bf16 %v336
        %v423 = vunpack.c.h.bf16 %v336
        %v424 = vunpack.c.l.bf16 %v337
        %v425 = vunpack.c.h.bf16 %v337
        %v426 = vunpack.c.l.bf16 %v338
        %v427 = vunpack.c.h.bf16 %v338
        %v428 = vunpack.c.l.bf16 %v339
        %v429 = vunpack.c.h.bf16 %v339
        %v430 = vunpack.c.l.bf16 %v340
        %v431 = vunpack.c.h.bf16 %v340
        %v432 = vunpack.c.l.bf16 %v341
        %v433 = vunpack.c.h.bf16 %v341
        %v434 = vunpack.c.l.bf16 %v342
        %v435 = vunpack.c.h.bf16 %v342
        %v436 = vunpack.c.l.bf16 %v343
        %v437 = vunpack.c.h.bf16 %v343
        %v438 = vunpack.c.l.bf16 %v344
        %v439 = vunpack.c.h.bf16 %v344
        %v440 = vunpack.c.l.bf16 %v345
        %v441 = vunpack.c.h.bf16 %v345
        %v442 = vunpack.c.l.bf16 %v346
        %v443 = vunpack.c.h.bf16 %v346
        %v444 = vunpack.c.l.bf16 %v347
        %v445 = vunpack.c.h.bf16 %v347
        %v446 = vunpack.c.l.bf16 %v348
        %v447 = vunpack.c.h.bf16 %v348
        %v448 = vunpack.c.l.bf16 %v349
        %v449 = vunpack.c.h.bf16 %v349
        %v450 = vunpack.c.l.bf16 %v350
        %v451 = vunpack.c.h.bf16 %v350
        %v452 = vunpack.c.l.bf16 %v351
        %v453 = vunpack.c.h.bf16 %v351
        %v454 = vunpack.c.l.bf16 %v352
        %v455 = vunpack.c.h.bf16 %v352
        %v456 = vunpack.c.l.bf16 %v353
        %v457 = vunpack.c.h.bf16 %v353
        %v458 = vunpack.c.l.bf16 %v354
        %v459 = vunpack.c.h.bf16 %v354
        %v460 = vunpack.c.l.bf16 %v355
        %v461 = vunpack.c.h.bf16 %v355
        %v462 = vunpack.c.l.bf16 %v356
        %v463 = vunpack.c.h.bf16 %v356
        %v464 = vunpack.c.l.bf16 %v357
        %v465 = vunpack.c.h.bf16 %v357
        %v466 = vunpack.c.l.bf16 %v358
        %v467 = vunpack.c.h.bf16 %v358
        %v468 = vunpack.c.l.bf16 %v359
        %v469 = vunpack.c.h.bf16 %v359
        %v470 = vunpack.c.l.bf16 %v360
        %v471 = vunpack.c.h.bf16 %v360
        %v472 = vunpack.c.l.bf16 %v361
        %v473 = vunpack.c.h.bf16 %v361
        %v474 = vunpack.c.l.bf16 %v362
        %v475 = vunpack.c.h.bf16 %v362
        %v476 = vunpack.c.l.bf16 %v363
        %v477 = vunpack.c.h.bf16 %v363
        %v478 = vunpack.c.l.bf16 %v364
        %v479 = vunpack.c.h.bf16 %v364
        %v480 = vunpack.c.l.bf16 %v365
        %v481 = vunpack.c.h.bf16 %v365
        %v482 = vunpack.c.l.bf16 %v366
        %v483 = vunpack.c.h.bf16 %v366
        %v484 = vunpack.c.l.bf16 %v367
        %v485 = vunpack.c.h.bf16 %v367
        %v486 = vunpack.c.l.bf16 %v368
        %v487 = vunpack.c.h.bf16 %v368
        %v488 = vunpack.c.l.bf16 %v369
        %v489 = vunpack.c.h.bf16 %v369
        %v490 = vunpack.c.l.bf16 %v370
        %v491 = vunpack.c.h.bf16 %v370
        %v492 = vunpack.c.l.bf16 %v371
        %v493 = vunpack.c.h.bf16 %v371
        %v494 = vunpack.c.l.bf16 %v372
        %v495 = vunpack.c.h.bf16 %v372
        %v496 = vunpack.c.l.bf16 %v373
        %v497 = vunpack.c.h.bf16 %v373
        %v498 = vunpack.c.l.bf16 %v374
        %v499 = vunpack.c.h.bf16 %v374
        %v500 = vunpack.c.l.bf16 %v375
        %v501 = vunpack.c.h.bf16 %v375
        %v502 = vunpack.c.l.bf16 %v376
        %v503 = vunpack.c.h.bf16 %v376
        %v504 = vunpack.c.l.bf16 %v377
        %v505 = vunpack.c.h.bf16 %v377
        %v506 = vmul.f32 %v378, %v378
        %v507 = vmul.f32 %v379, %v379
        %v508 = vmul.f32 %v380, %v380
        %v509 = vmul.f32 %v381, %v381
        %v510 = vmul.f32 %v382, %v382
        %v511 = vmul.f32 %v383, %v383
        %v512 = vmul.f32 %v384, %v384
        %v513 = vmul.f32 %v385, %v385
        %v514 = vmul.f32 %v386, %v386
        %v515 = vmul.f32 %v387, %v387
        %v516 = vmul.f32 %v388, %v388
        %v517 = vmul.f32 %v389, %v389
        %v518 = vmul.f32 %v390, %v390
        %v519 = vmul.f32 %v391, %v391
        %v520 = vmul.f32 %v392, %v392
        %v521 = vmul.f32 %v393, %v393
        %v522 = vmul.f32 %v394, %v394
        %v523 = vmul.f32 %v395, %v395
        %v524 = vmul.f32 %v396, %v396
        %v525 = vmul.f32 %v397, %v397
        %v526 = vmul.f32 %v398, %v398
        %v527 = vmul.f32 %v399, %v399
        %v528 = vmul.f32 %v400, %v400
        %v529 = vmul.f32 %v401, %v401
        %v530 = vmul.f32 %v402, %v402
        %v531 = vmul.f32 %v403, %v403
        %v532 = vmul.f32 %v404, %v404
        %v533 = vmul.f32 %v405, %v405
        %v534 = vmul.f32 %v406, %v406
        %v535 = vmul.f32 %v407, %v407
        %v536 = vmul.f32 %v408, %v408
        %v537 = vmul.f32 %v409, %v409
        %v538 = vmul.f32 %v410, %v410
        %v539 = vmul.f32 %v411, %v411
        %v540 = vmul.f32 %v412, %v412
        %v541 = vmul.f32 %v413, %v413
        %v542 = vmul.f32 %v414, %v414
        %v543 = vmul.f32 %v415, %v415
        %v544 = vmul.f32 %v416, %v416
        %v545 = vmul.f32 %v417, %v417
        %v546 = vmul.f32 %v418, %v418
        %v547 = vmul.f32 %v419, %v419
        %v548 = vmul.f32 %v420, %v420
        %v549 = vmul.f32 %v421, %v421
        %v550 = vmul.f32 %v422, %v422
        %v551 = vmul.f32 %v423, %v423
        %v552 = vmul.f32 %v424, %v424
        %v553 = vmul.f32 %v425, %v425
        %v554 = vmul.f32 %v426, %v426
        %v555 = vmul.f32 %v427, %v427
        %v556 = vmul.f32 %v428, %v428
        %v557 = vmul.f32 %v429, %v429
        %v558 = vmul.f32 %v430, %v430
        %v559 = vmul.f32 %v431, %v431
        %v560 = vmul.f32 %v432, %v432
        %v561 = vmul.f32 %v433, %v433
        %v562 = vmul.f32 %v434, %v434
        %v563 = vmul.f32 %v435, %v435
        %v564 = vmul.f32 %v436, %v436
        %v565 = vmul.f32 %v437, %v437
        %v566 = vmul.f32 %v438, %v438
        %v567 = vmul.f32 %v439, %v439
        %v568 = vmul.f32 %v440, %v440
        %v569 = vmul.f32 %v441, %v441
        %v570 = vmul.f32 %v442, %v442
        %v571 = vmul.f32 %v443, %v443
        %v572 = vmul.f32 %v444, %v444
        %v573 = vmul.f32 %v445, %v445
        %v574 = vmul.f32 %v446, %v446
        %v575 = vmul.f32 %v447, %v447
        %v576 = vmul.f32 %v448, %v448
        %v577 = vmul.f32 %v449, %v449
        %v578 = vmul.f32 %v450, %v450
        %v579 = vmul.f32 %v451, %v451
        %v580 = vmul.f32 %v452, %v452
        %v581 = vmul.f32 %v453, %v453
        %v582 = vmul.f32 %v454, %v454
        %v583 = vmul.f32 %v455, %v455
        %v584 = vmul.f32 %v456, %v456
        %v585 = vmul.f32 %v457, %v457
        %v586 = vmul.f32 %v458, %v458
        %v587 = vmul.f32 %v459, %v459
        %v588 = vmul.f32 %v460, %v460
        %v589 = vmul.f32 %v461, %v461
        %v590 = vmul.f32 %v462, %v462
        %v591 = vmul.f32 %v463, %v463
        %v592 = vmul.f32 %v464, %v464
        %v593 = vmul.f32 %v465, %v465
        %v594 = vmul.f32 %v466, %v466
        %v595 = vmul.f32 %v467, %v467
        %v596 = vmul.f32 %v468, %v468
        %v597 = vmul.f32 %v469, %v469
        %v598 = vmul.f32 %v470, %v470
        %v599 = vmul.f32 %v471, %v471
        %v600 = vmul.f32 %v472, %v472
        %v601 = vmul.f32 %v473, %v473
        %v602 = vmul.f32 %v474, %v474
        %v603 = vmul.f32 %v475, %v475
        %v604 = vmul.f32 %v476, %v476
        %v605 = vmul.f32 %v477, %v477
        %v606 = vmul.f32 %v478, %v478
        %v607 = vmul.f32 %v479, %v479
        %v608 = vmul.f32 %v480, %v480
        %v609 = vmul.f32 %v481, %v481
        %v610 = vmul.f32 %v482, %v482
        %v611 = vmul.f32 %v483, %v483
        %v612 = vmul.f32 %v484, %v484
        %v613 = vmul.f32 %v485, %v485
        %v614 = vmul.f32 %v486, %v486
        %v615 = vmul.f32 %v487, %v487
        %v616 = vmul.f32 %v488, %v488
        %v617 = vmul.f32 %v489, %v489
        %v618 = vmul.f32 %v490, %v490
        %v619 = vmul.f32 %v491, %v491
        %v620 = vmul.f32 %v492, %v492
        %v621 = vmul.f32 %v493, %v493
        %v622 = vmul.f32 %v494, %v494
        %v623 = vmul.f32 %v495, %v495
        %v624 = vmul.f32 %v496, %v496
        %v625 = vmul.f32 %v497, %v497
        %v626 = vmul.f32 %v498, %v498
        %v627 = vmul.f32 %v499, %v499
        %v628 = vmul.f32 %v500, %v500
        %v629 = vmul.f32 %v501, %v501
        %v630 = vmul.f32 %v502, %v502
        %v631 = vmul.f32 %v503, %v503
        %v632 = vmul.f32 %v504, %v504
        %v633 = vmul.f32 %v505, %v505
        %v634 = vadd.f32 %v506, %v507
        %v635 = vadd.f32 %v634, %v508
        %v636 = vadd.f32 %v635, %v509
        %637 = vadd.xlane.f32.xlu0 %v636
        %v638 = vpop.xlane.xlu0 %637
        %v639 = vadd.f32 %v510, %v511
        %v640 = vadd.f32 %v639, %v512
        %v641 = vadd.f32 %v640, %v513
        %642 = vadd.xlane.f32.xlu0 %v641
        %v643 = vpop.xlane.xlu0 %642
        %v644 = vadd.f32 %v514, %v515
        %v645 = vadd.f32 %v644, %v516
        %v646 = vadd.f32 %v645, %v517
        %647 = vadd.xlane.f32.xlu0 %v646
        %v648 = vpop.xlane.xlu0 %647
        %v649 = vadd.f32 %v518, %v519
        %v650 = vadd.f32 %v649, %v520
        %v651 = vadd.f32 %v650, %v521
        %652 = vadd.xlane.f32.xlu0 %v651
        %v653 = vpop.xlane.xlu0 %652
        %v654 = vadd.f32 %v522, %v523
        %v655 = vadd.f32 %v654, %v524
        %v656 = vadd.f32 %v655, %v525
        %657 = vadd.xlane.f32.xlu0 %v656
        %v658 = vpop.xlane.xlu0 %657
        %v659 = vadd.f32 %v526, %v527
        %v660 = vadd.f32 %v659, %v528
        %v661 = vadd.f32 %v660, %v529
        %662 = vadd.xlane.f32.xlu0 %v661
        %v663 = vpop.xlane.xlu0 %662
        %v664 = vadd.f32 %v530, %v531
        %v665 = vadd.f32 %v664, %v532
        %v666 = vadd.f32 %v665, %v533
        %667 = vadd.xlane.f32.xlu0 %v666
        %v668 = vpop.xlane.xlu0 %667
        %v669 = vadd.f32 %v534, %v535
        %v670 = vadd.f32 %v669, %v536
        %v671 = vadd.f32 %v670, %v537
        %672 = vadd.xlane.f32.xlu0 %v671
        %v673 = vpop.xlane.xlu0 %672
        %v674 = vadd.f32 %v538, %v539
        %v675 = vadd.f32 %v674, %v540
        %v676 = vadd.f32 %v675, %v541
        %677 = vadd.xlane.f32.xlu0 %v676
        %v678 = vpop.xlane.xlu0 %677
        %v679 = vadd.f32 %v542, %v543
        %v680 = vadd.f32 %v679, %v544
        %v681 = vadd.f32 %v680, %v545
        %682 = vadd.xlane.f32.xlu0 %v681
        %v683 = vpop.xlane.xlu0 %682
        %v684 = vadd.f32 %v546, %v547
        %v685 = vadd.f32 %v684, %v548
        %v686 = vadd.f32 %v685, %v549
        %687 = vadd.xlane.f32.xlu0 %v686
        %v688 = vpop.xlane.xlu0 %687
        %v689 = vadd.f32 %v550, %v551
        %v690 = vadd.f32 %v689, %v552
        %v691 = vadd.f32 %v690, %v553
        %692 = vadd.xlane.f32.xlu0 %v691
        %v693 = vpop.xlane.xlu0 %692
        %v694 = vadd.f32 %v554, %v555
        %v695 = vadd.f32 %v694, %v556
        %v696 = vadd.f32 %v695, %v557
        %697 = vadd.xlane.f32.xlu0 %v696
        %v698 = vpop.xlane.xlu0 %697
        %v699 = vadd.f32 %v558, %v559
        %v700 = vadd.f32 %v699, %v560
        %v701 = vadd.f32 %v700, %v561
        %702 = vadd.xlane.f32.xlu0 %v701
        %v703 = vpop.xlane.xlu0 %702
        %v704 = vadd.f32 %v562, %v563
        %v705 = vadd.f32 %v704, %v564
        %v706 = vadd.f32 %v705, %v565
        %707 = vadd.xlane.f32.xlu0 %v706
        %v708 = vpop.xlane.xlu0 %707
        %v709 = vadd.f32 %v566, %v567
        %v710 = vadd.f32 %v709, %v568
        %v711 = vadd.f32 %v710, %v569
        %712 = vadd.xlane.f32.xlu0 %v711
        %v713 = vpop.xlane.xlu0 %712
        %v714 = vadd.f32 %v570, %v571
        %v715 = vadd.f32 %v714, %v572
        %v716 = vadd.f32 %v715, %v573
        %717 = vadd.xlane.f32.xlu0 %v716
        %v718 = vpop.xlane.xlu0 %717
        %v719 = vadd.f32 %v574, %v575
        %v720 = vadd.f32 %v719, %v576
        %v721 = vadd.f32 %v720, %v577
        %722 = vadd.xlane.f32.xlu0 %v721
        %v723 = vpop.xlane.xlu0 %722
        %v724 = vadd.f32 %v578, %v579
        %v725 = vadd.f32 %v724, %v580
        %v726 = vadd.f32 %v725, %v581
        %727 = vadd.xlane.f32.xlu0 %v726
        %v728 = vpop.xlane.xlu0 %727
        %v729 = vadd.f32 %v582, %v583
        %v730 = vadd.f32 %v729, %v584
        %v731 = vadd.f32 %v730, %v585
        %732 = vadd.xlane.f32.xlu0 %v731
        %v733 = vpop.xlane.xlu0 %732
        %v734 = vadd.f32 %v586, %v587
        %v735 = vadd.f32 %v734, %v588
        %v736 = vadd.f32 %v735, %v589
        %737 = vadd.xlane.f32.xlu0 %v736
        %v738 = vpop.xlane.xlu0 %737
        %v739 = vadd.f32 %v590, %v591
        %v740 = vadd.f32 %v739, %v592
        %v741 = vadd.f32 %v740, %v593
        %742 = vadd.xlane.f32.xlu0 %v741
        %v743 = vpop.xlane.xlu0 %742
        %v744 = vadd.f32 %v594, %v595
        %v745 = vadd.f32 %v744, %v596
        %v746 = vadd.f32 %v745, %v597
        %747 = vadd.xlane.f32.xlu0 %v746
        %v748 = vpop.xlane.xlu0 %747
        %v749 = vadd.f32 %v598, %v599
        %v750 = vadd.f32 %v749, %v600
        %v751 = vadd.f32 %v750, %v601
        %752 = vadd.xlane.f32.xlu0 %v751
        %v753 = vpop.xlane.xlu0 %752
        %v754 = vadd.f32 %v602, %v603
        %v755 = vadd.f32 %v754, %v604
        %v756 = vadd.f32 %v755, %v605
        %757 = vadd.xlane.f32.xlu0 %v756
        %v758 = vpop.xlane.xlu0 %757
        %v759 = vadd.f32 %v606, %v607
        %v760 = vadd.f32 %v759, %v608
        %v761 = vadd.f32 %v760, %v609
        %762 = vadd.xlane.f32.xlu0 %v761
        %v763 = vpop.xlane.xlu0 %762
        %v764 = vadd.f32 %v610, %v611
        %v765 = vadd.f32 %v764, %v612
        %v766 = vadd.f32 %v765, %v613
        %767 = vadd.xlane.f32.xlu0 %v766
        %v768 = vpop.xlane.xlu0 %767
        %v769 = vadd.f32 %v614, %v615
        %v770 = vadd.f32 %v769, %v616
        %v771 = vadd.f32 %v770, %v617
        %772 = vadd.xlane.f32.xlu0 %v771
        %v773 = vpop.xlane.xlu0 %772
        %v774 = vadd.f32 %v618, %v619
        %v775 = vadd.f32 %v774, %v620
        %v776 = vadd.f32 %v775, %v621
        %777 = vadd.xlane.f32.xlu0 %v776
        %v778 = vpop.xlane.xlu0 %777
        %v779 = vadd.f32 %v622, %v623
        %v780 = vadd.f32 %v779, %v624
        %v781 = vadd.f32 %v780, %v625
        %782 = vadd.xlane.f32.xlu0 %v781
        %v783 = vpop.xlane.xlu0 %782
        %v784 = vadd.f32 %v626, %v627
        %v785 = vadd.f32 %v784, %v628
        %v786 = vadd.f32 %v785, %v629
        %787 = vadd.xlane.f32.xlu0 %v786
        %v788 = vpop.xlane.xlu0 %787
        %v789 = vadd.f32 %v630, %v631
        %v790 = vadd.f32 %v789, %v632
        %v791 = vadd.f32 %v790, %v633
        %792 = vadd.xlane.f32.xlu0 %v791
        %v793 = vpop.xlane.xlu0 %792
        %v794 = vrsqrt.pop %v638
        %v795 = vrsqrt.pop %v643
        %v796 = vrsqrt.pop %v648
        %v797 = vrsqrt.pop %v653
        %v798 = vrsqrt.pop %v658
        %v799 = vrsqrt.pop %v663
        %v800 = vrsqrt.pop %v668
        %v801 = vrsqrt.pop %v673
        %v802 = vrsqrt.pop %v678
        %v803 = vrsqrt.pop %v683
        %v804 = vrsqrt.pop %v688
        %v805 = vrsqrt.pop %v693
        %v806 = vrsqrt.pop %v698
        %v807 = vrsqrt.pop %v703
        %v808 = vrsqrt.pop %v708
        %v809 = vrsqrt.pop %v713
        %v810 = vrsqrt.pop %v718
        %v811 = vrsqrt.pop %v723
        %v812 = vrsqrt.pop %v728
        %v813 = vrsqrt.pop %v733
        %v814 = vrsqrt.pop %v738
        %v815 = vrsqrt.pop %v743
        %v816 = vrsqrt.pop %v748
        %v817 = vrsqrt.pop %v753
        %v818 = vrsqrt.pop %v758
        %v819 = vrsqrt.pop %v763
        %v820 = vrsqrt.pop %v768
        %v821 = vrsqrt.pop %v773
        %v822 = vrsqrt.pop %v778
        %v823 = vrsqrt.pop %v783
        %v824 = vrsqrt.pop %v788
        %v825 = vrsqrt.pop %v793
        %v826 = vmul.f32 %v378, %v794
        %v827 = vmul.f32 %v379, %v794
        %v828 = vmul.f32 %v380, %v794
        %v829 = vmul.f32 %v381, %v794
        %v830 = vmul.f32 %v382, %v795
        %v831 = vmul.f32 %v383, %v795
        %v832 = vmul.f32 %v384, %v795
        %v833 = vmul.f32 %v385, %v795
        %v834 = vmul.f32 %v386, %v796
        %v835 = vmul.f32 %v387, %v796
        %v836 = vmul.f32 %v388, %v796
        %v837 = vmul.f32 %v389, %v796
        %v838 = vmul.f32 %v390, %v797
        %v839 = vmul.f32 %v391, %v797
        %v840 = vmul.f32 %v392, %v797
        %v841 = vmul.f32 %v393, %v797
        %v842 = vmul.f32 %v394, %v798
        %v843 = vmul.f32 %v395, %v798
        %v844 = vmul.f32 %v396, %v798
        %v845 = vmul.f32 %v397, %v798
        %v846 = vmul.f32 %v398, %v799
        %v847 = vmul.f32 %v399, %v799
        %v848 = vmul.f32 %v400, %v799
        %v849 = vmul.f32 %v401, %v799
        %v850 = vmul.f32 %v402, %v800
        %v851 = vmul.f32 %v403, %v800
        %v852 = vmul.f32 %v404, %v800
        %v853 = vmul.f32 %v405, %v800
        %v854 = vmul.f32 %v406, %v801
        %v855 = vmul.f32 %v407, %v801
        %v856 = vmul.f32 %v408, %v801
        %v857 = vmul.f32 %v409, %v801
        %v858 = vmul.f32 %v410, %v802
        %v859 = vmul.f32 %v411, %v802
        %v860 = vmul.f32 %v412, %v802
        %v861 = vmul.f32 %v413, %v802
        %v862 = vmul.f32 %v414, %v803
        %v863 = vmul.f32 %v415, %v803
        %v864 = vmul.f32 %v416, %v803
        %v865 = vmul.f32 %v417, %v803
        %v866 = vmul.f32 %v418, %v804
        %v867 = vmul.f32 %v419, %v804
        %v868 = vmul.f32 %v420, %v804
        %v869 = vmul.f32 %v421, %v804
        %v870 = vmul.f32 %v422, %v805
        %v871 = vmul.f32 %v423, %v805
        %v872 = vmul.f32 %v424, %v805
        %v873 = vmul.f32 %v425, %v805
        %v874 = vmul.f32 %v426, %v806
        %v875 = vmul.f32 %v427, %v806
        %v876 = vmul.f32 %v428, %v806
        %v877 = vmul.f32 %v429, %v806
        %v878 = vmul.f32 %v430, %v807
        %v879 = vmul.f32 %v431, %v807
        %v880 = vmul.f32 %v432, %v807
        %v881 = vmul.f32 %v433, %v807
        %v882 = vmul.f32 %v434, %v808
        %v883 = vmul.f32 %v435, %v808
        %v884 = vmul.f32 %v436, %v808
        %v885 = vmul.f32 %v437, %v808
        %v886 = vmul.f32 %v438, %v809
        %v887 = vmul.f32 %v439, %v809
        %v888 = vmul.f32 %v440, %v809
        %v889 = vmul.f32 %v441, %v809
        %v890 = vmul.f32 %v442, %v810
        %v891 = vmul.f32 %v443, %v810
        %v892 = vmul.f32 %v444, %v810
        %v893 = vmul.f32 %v445, %v810
        %v894 = vmul.f32 %v446, %v811
        %v895 = vmul.f32 %v447, %v811
        %v896 = vmul.f32 %v448, %v811
        %v897 = vmul.f32 %v449, %v811
        %v898 = vmul.f32 %v450, %v812
        %v899 = vmul.f32 %v451, %v812
        %v900 = vmul.f32 %v452, %v812
        %v901 = vmul.f32 %v453, %v812
        %v902 = vmul.f32 %v454, %v813
        %v903 = vmul.f32 %v455, %v813
        %v904 = vmul.f32 %v456, %v813
        %v905 = vmul.f32 %v457, %v813
        %v906 = vmul.f32 %v458, %v814
        %v907 = vmul.f32 %v459, %v814
        %v908 = vmul.f32 %v460, %v814
        %v909 = vmul.f32 %v461, %v814
        %v910 = vmul.f32 %v462, %v815
        %v911 = vmul.f32 %v463, %v815
        %v912 = vmul.f32 %v464, %v815
        %v913 = vmul.f32 %v465, %v815
        %v914 = vmul.f32 %v466, %v816
        %v915 = vmul.f32 %v467, %v816
        %v916 = vmul.f32 %v468, %v816
        %v917 = vmul.f32 %v469, %v816
        %v918 = vmul.f32 %v470, %v817
        %v919 = vmul.f32 %v471, %v817
        %v920 = vmul.f32 %v472, %v817
        %v921 = vmul.f32 %v473, %v817
        %v922 = vmul.f32 %v474, %v818
        %v923 = vmul.f32 %v475, %v818
        %v924 = vmul.f32 %v476, %v818
        %v925 = vmul.f32 %v477, %v818
        %v926 = vmul.f32 %v478, %v819
        %v927 = vmul.f32 %v479, %v819
        %v928 = vmul.f32 %v480, %v819
        %v929 = vmul.f32 %v481, %v819
        %v930 = vmul.f32 %v482, %v820
        %v931 = vmul.f32 %v483, %v820
        %v932 = vmul.f32 %v484, %v820
        %v933 = vmul.f32 %v485, %v820
        %v934 = vmul.f32 %v486, %v821
        %v935 = vmul.f32 %v487, %v821
        %v936 = vmul.f32 %v488, %v821
        %v937 = vmul.f32 %v489, %v821
        %v938 = vmul.f32 %v490, %v822
        %v939 = vmul.f32 %v491, %v822
        %v940 = vmul.f32 %v492, %v822
        %v941 = vmul.f32 %v493, %v822
        %v942 = vmul.f32 %v494, %v823
        %v943 = vmul.f32 %v495, %v823
        %v944 = vmul.f32 %v496, %v823
        %v945 = vmul.f32 %v497, %v823
        %v946 = vmul.f32 %v498, %v824
        %v947 = vmul.f32 %v499, %v824
        %v948 = vmul.f32 %v500, %v824
        %v949 = vmul.f32 %v501, %v824
        %v950 = vmul.f32 %v502, %v825
        %v951 = vmul.f32 %v503, %v825
        %v952 = vmul.f32 %v504, %v825
        %v953 = vmul.f32 %v505, %v825
        %v954 = vpack.c.bf16 %v830, %v826
        %v955 = vpack.c.bf16 %v831, %v827
        %v956 = vpack.c.bf16 %v832, %v828
        %v957 = vpack.c.bf16 %v833, %v829
        %v958 = vpack.c.bf16 %v838, %v834
        %v959 = vpack.c.bf16 %v839, %v835
        %v960 = vpack.c.bf16 %v840, %v836
        %v961 = vpack.c.bf16 %v841, %v837
        %v962 = vpack.c.bf16 %v846, %v842
        %v963 = vpack.c.bf16 %v847, %v843
        %v964 = vpack.c.bf16 %v848, %v844
        %v965 = vpack.c.bf16 %v849, %v845
        %v966 = vpack.c.bf16 %v854, %v850
        %v967 = vpack.c.bf16 %v855, %v851
        %v968 = vpack.c.bf16 %v856, %v852
        %v969 = vpack.c.bf16 %v857, %v853
        %v970 = vpack.c.bf16 %v862, %v858
        %v971 = vpack.c.bf16 %v863, %v859
        %v972 = vpack.c.bf16 %v864, %v860
        %v973 = vpack.c.bf16 %v865, %v861
        %v974 = vpack.c.bf16 %v870, %v866
        %v975 = vpack.c.bf16 %v871, %v867
        %v976 = vpack.c.bf16 %v872, %v868
        %v977 = vpack.c.bf16 %v873, %v869
        %v978 = vpack.c.bf16 %v878, %v874
        %v979 = vpack.c.bf16 %v879, %v875
        %v980 = vpack.c.bf16 %v880, %v876
        %v981 = vpack.c.bf16 %v881, %v877
        %v982 = vpack.c.bf16 %v886, %v882
        %v983 = vpack.c.bf16 %v887, %v883
        %v984 = vpack.c.bf16 %v888, %v884
        %v985 = vpack.c.bf16 %v889, %v885
        %v986 = vpack.c.bf16 %v894, %v890
        %v987 = vpack.c.bf16 %v895, %v891
        %v988 = vpack.c.bf16 %v896, %v892
        %v989 = vpack.c.bf16 %v897, %v893
        %v990 = vpack.c.bf16 %v902, %v898
        %v991 = vpack.c.bf16 %v903, %v899
        %v992 = vpack.c.bf16 %v904, %v900
        %v993 = vpack.c.bf16 %v905, %v901
        %v994 = vpack.c.bf16 %v910, %v906
        %v995 = vpack.c.bf16 %v911, %v907
        %v996 = vpack.c.bf16 %v912, %v908
        %v997 = vpack.c.bf16 %v913, %v909
        %v998 = vpack.c.bf16 %v918, %v914
        %v999 = vpack.c.bf16 %v919, %v915
        %v1000 = vpack.c.bf16 %v920, %v916
        %v1001 = vpack.c.bf16 %v921, %v917
        %v1002 = vpack.c.bf16 %v926, %v922
        %v1003 = vpack.c.bf16 %v927, %v923
        %v1004 = vpack.c.bf16 %v928, %v924
        %v1005 = vpack.c.bf16 %v929, %v925
        %v1006 = vpack.c.bf16 %v934, %v930
        %v1007 = vpack.c.bf16 %v935, %v931
        %v1008 = vpack.c.bf16 %v936, %v932
        %v1009 = vpack.c.bf16 %v937, %v933
        %v1010 = vpack.c.bf16 %v942, %v938
        %v1011 = vpack.c.bf16 %v943, %v939
        %v1012 = vpack.c.bf16 %v944, %v940
        %v1013 = vpack.c.bf16 %v945, %v941
        %v1014 = vpack.c.bf16 %v950, %v946
        %v1015 = vpack.c.bf16 %v951, %v947
        %v1016 = vpack.c.bf16 %v952, %v948
        %v1017 = vpack.c.bf16 %v953, %v949
        %v1018 = vld [vmem:[#allocation5] sm:$0xff]
        %v1019 = vld [vmem:[#allocation5 + $0x8] sm:$0xff]
        %v1020 = vld [vmem:[#allocation5 + $0x10] sm:$0xff]
        %v1021 = vld [vmem:[#allocation5 + $0x18] sm:$0xff]
        %v1022 = vld [vmem:[#allocation5 + $0x20] sm:$0xff]
        %v1023 = vld [vmem:[#allocation5 + $0x28] sm:$0xff]
        %v1024 = vld [vmem:[#allocation5 + $0x30] sm:$0xff]
        %v1025 = vld [vmem:[#allocation5 + $0x38] sm:$0xff]
        %v1026 = vld [vmem:[#allocation5 + $0x40] sm:$0xff]
        %v1027 = vld [vmem:[#allocation5 + $0x48] sm:$0xff]
        %v1028 = vld [vmem:[#allocation5 + $0x50] sm:$0xff]
        %v1029 = vld [vmem:[#allocation5 + $0x58] sm:$0xff]
        %v1030 = vld [vmem:[#allocation5 + $0x60] sm:$0xff]
        %v1031 = vld [vmem:[#allocation5 + $0x68] sm:$0xff]
        %v1032 = vld [vmem:[#allocation5 + $0x70] sm:$0xff]
        %v1033 = vld [vmem:[#allocation5 + $0x78] sm:$0xff]
        %v1034 = vld [vmem:[#allocation5 + $0x80] sm:$0xff]
        %v1035 = vld [vmem:[#allocation5 + $0x88] sm:$0xff]
        %v1036 = vld [vmem:[#allocation5 + $0x90] sm:$0xff]
        %v1037 = vld [vmem:[#allocation5 + $0x98] sm:$0xff]
        %v1038 = vld [vmem:[#allocation5 + $0xa0] sm:$0xff]
        %v1039 = vld [vmem:[#allocation5 + $0xa8] sm:$0xff]
        %v1040 = vld [vmem:[#allocation5 + $0xb0] sm:$0xff]
        %v1041 = vld [vmem:[#allocation5 + $0xb8] sm:$0xff]
        %v1042 = vld [vmem:[#allocation5 + $0xc0] sm:$0xff]
        %v1043 = vld [vmem:[#allocation5 + $0xc8] sm:$0xff]
        %v1044 = vld [vmem:[#allocation5 + $0xd0] sm:$0xff]
        %v1045 = vld [vmem:[#allocation5 + $0xd8] sm:$0xff]
        %v1046 = vld [vmem:[#allocation5 + $0xe0] sm:$0xff]
        %v1047 = vld [vmem:[#allocation5 + $0xe8] sm:$0xff]
        %v1048 = vld [vmem:[#allocation5 + $0xf0] sm:$0xff]
        %v1049 = vld [vmem:[#allocation5 + $0xf8] sm:$0xff]
        %v1050 = vld [vmem:[#allocation5 + $0x100] sm:$0xff]
        %v1051 = vld [vmem:[#allocation5 + $0x108] sm:$0xff]
        %v1052 = vld [vmem:[#allocation5 + $0x110] sm:$0xff]
        %v1053 = vld [vmem:[#allocation5 + $0x118] sm:$0xff]
        %v1054 = vld [vmem:[#allocation5 + $0x120] sm:$0xff]
        %v1055 = vld [vmem:[#allocation5 + $0x128] sm:$0xff]
        %v1056 = vld [vmem:[#allocation5 + $0x130] sm:$0xff]
        %v1057 = vld [vmem:[#allocation5 + $0x138] sm:$0xff]
        %v1058 = vld [vmem:[#allocation5 + $0x140] sm:$0xff]
        %v1059 = vld [vmem:[#allocation5 + $0x148] sm:$0xff]
        %v1060 = vld [vmem:[#allocation5 + $0x150] sm:$0xff]
        %v1061 = vld [vmem:[#allocation5 + $0x158] sm:$0xff]
        %v1062 = vld [vmem:[#allocation5 + $0x160] sm:$0xff]
        %v1063 = vld [vmem:[#allocation5 + $0x168] sm:$0xff]
        %v1064 = vld [vmem:[#allocation5 + $0x170] sm:$0xff]
        %v1065 = vld [vmem:[#allocation5 + $0x178] sm:$0xff]
        %v1066 = vld [vmem:[#allocation5 + $0x180] sm:$0xff]
        %v1067 = vld [vmem:[#allocation5 + $0x188] sm:$0xff]
        %v1068 = vld [vmem:[#allocation5 + $0x190] sm:$0xff]
        %v1069 = vld [vmem:[#allocation5 + $0x198] sm:$0xff]
        %v1070 = vld [vmem:[#allocation5 + $0x1a0] sm:$0xff]
        %v1071 = vld [vmem:[#allocation5 + $0x1a8] sm:$0xff]
        %v1072 = vld [vmem:[#allocation5 + $0x1b0] sm:$0xff]
        %v1073 = vld [vmem:[#allocation5 + $0x1b8] sm:$0xff]
        %v1074 = vld [vmem:[#allocation5 + $0x1c0] sm:$0xff]
        %v1075 = vld [vmem:[#allocation5 + $0x1c8] sm:$0xff]
        %v1076 = vld [vmem:[#allocation5 + $0x1d0] sm:$0xff]
        %v1077 = vld [vmem:[#allocation5 + $0x1d8] sm:$0xff]
        %v1078 = vld [vmem:[#allocation5 + $0x1e0] sm:$0xff]
        %v1079 = vld [vmem:[#allocation5 + $0x1e8] sm:$0xff]
        %v1080 = vld [vmem:[#allocation5 + $0x1f0] sm:$0xff]
        %v1081 = vld [vmem:[#allocation5 + $0x1f8] sm:$0xff]
        %v1082 = vld [vmem:[#allocation5 + $0x200] sm:$0xff]
        %v1083 = vld [vmem:[#allocation5 + $0x208] sm:$0xff]
        %v1084 = vld [vmem:[#allocation5 + $0x210] sm:$0xff]
        %v1085 = vld [vmem:[#allocation5 + $0x218] sm:$0xff]
        %v1086 = vld [vmem:[#allocation5 + $0x220] sm:$0xff]
        %v1087 = vld [vmem:[#allocation5 + $0x228] sm:$0xff]
        %v1088 = vld [vmem:[#allocation5 + $0x230] sm:$0xff]
        %v1089 = vld [vmem:[#allocation5 + $0x238] sm:$0xff]
        %v1090 = vld [vmem:[#allocation5 + $0x240] sm:$0xff]
        %v1091 = vld [vmem:[#allocation5 + $0x248] sm:$0xff]
        %v1092 = vld [vmem:[#allocation5 + $0x250] sm:$0xff]
        %v1093 = vld [vmem:[#allocation5 + $0x258] sm:$0xff]
        %v1094 = vld [vmem:[#allocation5 + $0x260] sm:$0xff]
        %v1095 = vld [vmem:[#allocation5 + $0x268] sm:$0xff]
        %v1096 = vld [vmem:[#allocation5 + $0x270] sm:$0xff]
        %v1097 = vld [vmem:[#allocation5 + $0x278] sm:$0xff]
        %v1098 = vld [vmem:[#allocation5 + $0x280] sm:$0xff]
        %v1099 = vld [vmem:[#allocation5 + $0x288] sm:$0xff]
        %v1100 = vld [vmem:[#allocation5 + $0x290] sm:$0xff]
        %v1101 = vld [vmem:[#allocation5 + $0x298] sm:$0xff]
        %v1102 = vld [vmem:[#allocation5 + $0x2a0] sm:$0xff]
        %v1103 = vld [vmem:[#allocation5 + $0x2a8] sm:$0xff]
        %v1104 = vld [vmem:[#allocation5 + $0x2b0] sm:$0xff]
        %v1105 = vld [vmem:[#allocation5 + $0x2b8] sm:$0xff]
        %v1106 = vld [vmem:[#allocation5 + $0x2c0] sm:$0xff]
        %v1107 = vld [vmem:[#allocation5 + $0x2c8] sm:$0xff]
        %v1108 = vld [vmem:[#allocation5 + $0x2d0] sm:$0xff]
        %v1109 = vld [vmem:[#allocation5 + $0x2d8] sm:$0xff]
        %v1110 = vld [vmem:[#allocation5 + $0x2e0] sm:$0xff]
        %v1111 = vld [vmem:[#allocation5 + $0x2e8] sm:$0xff]
        %v1112 = vld [vmem:[#allocation5 + $0x2f0] sm:$0xff]
        %v1113 = vld [vmem:[#allocation5 + $0x2f8] sm:$0xff]
        %v1114 = vld [vmem:[#allocation5 + $0x300] sm:$0xff]
        %v1115 = vld [vmem:[#allocation5 + $0x308] sm:$0xff]
        %v1116 = vld [vmem:[#allocation5 + $0x310] sm:$0xff]
        %v1117 = vld [vmem:[#allocation5 + $0x318] sm:$0xff]
        %v1118 = vld [vmem:[#allocation5 + $0x320] sm:$0xff]
        %v1119 = vld [vmem:[#allocation5 + $0x328] sm:$0xff]
        %v1120 = vld [vmem:[#allocation5 + $0x330] sm:$0xff]
        %v1121 = vld [vmem:[#allocation5 + $0x338] sm:$0xff]
        %v1122 = vld [vmem:[#allocation5 + $0x340] sm:$0xff]
        %v1123 = vld [vmem:[#allocation5 + $0x348] sm:$0xff]
        %v1124 = vld [vmem:[#allocation5 + $0x350] sm:$0xff]
        %v1125 = vld [vmem:[#allocation5 + $0x358] sm:$0xff]
        %v1126 = vld [vmem:[#allocation5 + $0x360] sm:$0xff]
        %v1127 = vld [vmem:[#allocation5 + $0x368] sm:$0xff]
        %v1128 = vld [vmem:[#allocation5 + $0x370] sm:$0xff]
        %v1129 = vld [vmem:[#allocation5 + $0x378] sm:$0xff]
        %v1130 = vld [vmem:[#allocation5 + $0x380] sm:$0xff]
        %v1131 = vld [vmem:[#allocation5 + $0x388] sm:$0xff]
        %v1132 = vld [vmem:[#allocation5 + $0x390] sm:$0xff]
        %v1133 = vld [vmem:[#allocation5 + $0x398] sm:$0xff]
        %v1134 = vld [vmem:[#allocation5 + $0x3a0] sm:$0xff]
        %v1135 = vld [vmem:[#allocation5 + $0x3a8] sm:$0xff]
        %v1136 = vld [vmem:[#allocation5 + $0x3b0] sm:$0xff]
        %v1137 = vld [vmem:[#allocation5 + $0x3b8] sm:$0xff]
        %v1138 = vld [vmem:[#allocation5 + $0x3c0] sm:$0xff]
        %v1139 = vld [vmem:[#allocation5 + $0x3c8] sm:$0xff]
        %v1140 = vld [vmem:[#allocation5 + $0x3d0] sm:$0xff]
        %v1141 = vld [vmem:[#allocation5 + $0x3d8] sm:$0xff]
        %v1142 = vld [vmem:[#allocation5 + $0x3e0] sm:$0xff]
        %v1143 = vld [vmem:[#allocation5 + $0x3e8] sm:$0xff]
        %v1144 = vld [vmem:[#allocation5 + $0x3f0] sm:$0xff]
        %v1145 = vld [vmem:[#allocation5 + $0x3f8] sm:$0xff]
        %v1146 = vld [vmem:[%s2] sm:$0xf]
        %v1148 = vlaneseq
        %v1149 = vshrl.u32 %v1148, 7
        %v1150 = vsub.s32 0, %v1149
        %v1151 = vrot.slane %v1146, %v1150
        %v1152 = vlaneseq
        %v1153 = vshrl.u32 %v1152, 7
        %v1154 = vsub.s32 1, %v1153
        %v1155 = vrot.slane %v1146, %v1154
        %v1156 = vlaneseq
        %v1157 = vshrl.u32 %v1156, 7
        %v1158 = vsub.s32 2, %v1157
        %v1159 = vrot.slane %v1146, %v1158
        %v1160 = vlaneseq
        %v1161 = vshrl.u32 %v1160, 7
        %v1162 = vsub.s32 3, %v1161
        %v1163 = vrot.slane %v1146, %v1162
        %v1296 = vunpack.c.l.b16 %v1018
        %v1297 = vunpack.c.h.b16 %v1018
        %v1298 = vunpack.c.l.b16 %v1019
        %v1299 = vunpack.c.h.b16 %v1019
        %v1300 = vunpack.c.l.b16 %v1020
        %v1301 = vunpack.c.h.b16 %v1020
        %v1302 = vunpack.c.l.b16 %v1021
        %v1303 = vunpack.c.h.b16 %v1021
        %v1304 = vunpack.c.l.b16 %v1022
        %v1305 = vunpack.c.h.b16 %v1022
        %v1306 = vunpack.c.l.b16 %v1023
        %v1307 = vunpack.c.h.b16 %v1023
        %v1308 = vunpack.c.l.b16 %v1024
        %v1309 = vunpack.c.h.b16 %v1024
        %v1310 = vunpack.c.l.b16 %v1025
        %v1311 = vunpack.c.h.b16 %v1025
        %v1312 = vunpack.c.l.b16 %v1026
        %v1313 = vunpack.c.h.b16 %v1026
        %v1314 = vunpack.c.l.b16 %v1027
        %v1315 = vunpack.c.h.b16 %v1027
        %v1316 = vunpack.c.l.b16 %v1028
        %v1317 = vunpack.c.h.b16 %v1028
        %v1318 = vunpack.c.l.b16 %v1029
        %v1319 = vunpack.c.h.b16 %v1029
        %v1320 = vunpack.c.l.b16 %v1030
        %v1321 = vunpack.c.h.b16 %v1030
        %v1322 = vunpack.c.l.b16 %v1031
        %v1323 = vunpack.c.h.b16 %v1031
        %v1324 = vunpack.c.l.b16 %v1032
        %v1325 = vunpack.c.h.b16 %v1032
        %v1326 = vunpack.c.l.b16 %v1033
        %v1327 = vunpack.c.h.b16 %v1033
        %v1328 = vunpack.c.l.b16 %v1034
        %v1329 = vunpack.c.h.b16 %v1034
        %v1330 = vunpack.c.l.b16 %v1035
        %v1331 = vunpack.c.h.b16 %v1035
        %v1332 = vunpack.c.l.b16 %v1036
        %v1333 = vunpack.c.h.b16 %v1036
        %v1334 = vunpack.c.l.b16 %v1037
        %v1335 = vunpack.c.h.b16 %v1037
        %v1336 = vunpack.c.l.b16 %v1038
        %v1337 = vunpack.c.h.b16 %v1038
        %v1338 = vunpack.c.l.b16 %v1039
        %v1339 = vunpack.c.h.b16 %v1039
        %v1340 = vunpack.c.l.b16 %v1040
        %v1341 = vunpack.c.h.b16 %v1040
        %v1342 = vunpack.c.l.b16 %v1041
        %v1343 = vunpack.c.h.b16 %v1041
        %v1344 = vunpack.c.l.b16 %v1042
        %v1345 = vunpack.c.h.b16 %v1042
        %v1346 = vunpack.c.l.b16 %v1043
        %v1347 = vunpack.c.h.b16 %v1043
        %v1348 = vunpack.c.l.b16 %v1044
        %v1349 = vunpack.c.h.b16 %v1044
        %v1350 = vunpack.c.l.b16 %v1045
        %v1351 = vunpack.c.h.b16 %v1045
        %v1352 = vunpack.c.l.b16 %v1046
        %v1353 = vunpack.c.h.b16 %v1046
        %v1354 = vunpack.c.l.b16 %v1047
        %v1355 = vunpack.c.h.b16 %v1047
        %v1356 = vunpack.c.l.b16 %v1048
        %v1357 = vunpack.c.h.b16 %v1048
        %v1358 = vunpack.c.l.b16 %v1049
        %v1359 = vunpack.c.h.b16 %v1049
        %v1360 = vunpack.c.l.b16 %v1050
        %v1361 = vunpack.c.h.b16 %v1050
        %v1362 = vunpack.c.l.b16 %v1051
        %v1363 = vunpack.c.h.b16 %v1051
        %v1364 = vunpack.c.l.b16 %v1052
        %v1365 = vunpack.c.h.b16 %v1052
        %v1366 = vunpack.c.l.b16 %v1053
        %v1367 = vunpack.c.h.b16 %v1053
        %v1368 = vunpack.c.l.b16 %v1054
        %v1369 = vunpack.c.h.b16 %v1054
        %v1370 = vunpack.c.l.b16 %v1055
        %v1371 = vunpack.c.h.b16 %v1055
        %v1372 = vunpack.c.l.b16 %v1056
        %v1373 = vunpack.c.h.b16 %v1056
        %v1374 = vunpack.c.l.b16 %v1057
        %v1375 = vunpack.c.h.b16 %v1057
        %v1376 = vunpack.c.l.b16 %v1058
        %v1377 = vunpack.c.h.b16 %v1058
        %v1378 = vunpack.c.l.b16 %v1059
        %v1379 = vunpack.c.h.b16 %v1059
        %v1380 = vunpack.c.l.b16 %v1060
        %v1381 = vunpack.c.h.b16 %v1060
        %v1382 = vunpack.c.l.b16 %v1061
        %v1383 = vunpack.c.h.b16 %v1061
        %v1384 = vunpack.c.l.b16 %v1062
        %v1385 = vunpack.c.h.b16 %v1062
        %v1386 = vunpack.c.l.b16 %v1063
        %v1387 = vunpack.c.h.b16 %v1063
        %v1388 = vunpack.c.l.b16 %v1064
        %v1389 = vunpack.c.h.b16 %v1064
        %v1390 = vunpack.c.l.b16 %v1065
        %v1391 = vunpack.c.h.b16 %v1065
        %v1392 = vunpack.c.l.b16 %v1066
        %v1393 = vunpack.c.h.b16 %v1066
        %v1394 = vunpack.c.l.b16 %v1067
        %v1395 = vunpack.c.h.b16 %v1067
        %v1396 = vunpack.c.l.b16 %v1068
        %v1397 = vunpack.c.h.b16 %v1068
        %v1398 = vunpack.c.l.b16 %v1069
        %v1399 = vunpack.c.h.b16 %v1069
        %v1400 = vunpack.c.l.b16 %v1070
        %v1401 = vunpack.c.h.b16 %v1070
        %v1402 = vunpack.c.l.b16 %v1071
        %v1403 = vunpack.c.h.b16 %v1071
        %v1404 = vunpack.c.l.b16 %v1072
        %v1405 = vunpack.c.h.b16 %v1072
        %v1406 = vunpack.c.l.b16 %v1073
        %v1407 = vunpack.c.h.b16 %v1073
        %v1408 = vunpack.c.l.b16 %v1074
        %v1409 = vunpack.c.h.b16 %v1074
        %v1410 = vunpack.c.l.b16 %v1075
        %v1411 = vunpack.c.h.b16 %v1075
        %v1412 = vunpack.c.l.b16 %v1076
        %v1413 = vunpack.c.h.b16 %v1076
        %v1414 = vunpack.c.l.b16 %v1077
        %v1415 = vunpack.c.h.b16 %v1077
        %v1416 = vunpack.c.l.b16 %v1078
        %v1417 = vunpack.c.h.b16 %v1078
        %v1418 = vunpack.c.l.b16 %v1079
        %v1419 = vunpack.c.h.b16 %v1079
        %v1420 = vunpack.c.l.b16 %v1080
        %v1421 = vunpack.c.h.b16 %v1080
        %v1422 = vunpack.c.l.b16 %v1081
        %v1423 = vunpack.c.h.b16 %v1081
        %v1424 = vunpack.c.l.b16 %v1082
        %v1425 = vunpack.c.h.b16 %v1082
        %v1426 = vunpack.c.l.b16 %v1083
        %v1427 = vunpack.c.h.b16 %v1083
        %v1428 = vunpack.c.l.b16 %v1084
        %v1429 = vunpack.c.h.b16 %v1084
        %v1430 = vunpack.c.l.b16 %v1085
        %v1431 = vunpack.c.h.b16 %v1085
        %v1432 = vunpack.c.l.b16 %v1086
        %v1433 = vunpack.c.h.b16 %v1086
        %v1434 = vunpack.c.l.b16 %v1087
        %v1435 = vunpack.c.h.b16 %v1087
        %v1436 = vunpack.c.l.b16 %v1088
        %v1437 = vunpack.c.h.b16 %v1088
        %v1438 = vunpack.c.l.b16 %v1089
        %v1439 = vunpack.c.h.b16 %v1089
        %v1440 = vunpack.c.l.b16 %v1090
        %v1441 = vunpack.c.h.b16 %v1090
        %v1442 = vunpack.c.l.b16 %v1091
        %v1443 = vunpack.c.h.b16 %v1091
        %v1444 = vunpack.c.l.b16 %v1092
        %v1445 = vunpack.c.h.b16 %v1092
        %v1446 = vunpack.c.l.b16 %v1093
        %v1447 = vunpack.c.h.b16 %v1093
        %v1448 = vunpack.c.l.b16 %v1094
        %v1449 = vunpack.c.h.b16 %v1094
        %v1450 = vunpack.c.l.b16 %v1095
        %v1451 = vunpack.c.h.b16 %v1095
        %v1452 = vunpack.c.l.b16 %v1096
        %v1453 = vunpack.c.h.b16 %v1096
        %v1454 = vunpack.c.l.b16 %v1097
        %v1455 = vunpack.c.h.b16 %v1097
        %v1456 = vunpack.c.l.b16 %v1098
        %v1457 = vunpack.c.h.b16 %v1098
        %v1458 = vunpack.c.l.b16 %v1099
        %v1459 = vunpack.c.h.b16 %v1099
        %v1460 = vunpack.c.l.b16 %v1100
        %v1461 = vunpack.c.h.b16 %v1100
        %v1462 = vunpack.c.l.b16 %v1101
        %v1463 = vunpack.c.h.b16 %v1101
        %v1464 = vunpack.c.l.b16 %v1102
        %v1465 = vunpack.c.h.b16 %v1102
        %v1466 = vunpack.c.l.b16 %v1103
        %v1467 = vunpack.c.h.b16 %v1103
        %v1468 = vunpack.c.l.b16 %v1104
        %v1469 = vunpack.c.h.b16 %v1104
        %v1470 = vunpack.c.l.b16 %v1105
        %v1471 = vunpack.c.h.b16 %v1105
        %v1472 = vunpack.c.l.b16 %v1106
        %v1473 = vunpack.c.h.b16 %v1106
        %v1474 = vunpack.c.l.b16 %v1107
        %v1475 = vunpack.c.h.b16 %v1107
        %v1476 = vunpack.c.l.b16 %v1108
        %v1477 = vunpack.c.h.b16 %v1108
        %v1478 = vunpack.c.l.b16 %v1109
        %v1479 = vunpack.c.h.b16 %v1109
        %v1480 = vunpack.c.l.b16 %v1110
        %v1481 = vunpack.c.h.b16 %v1110
        %v1482 = vunpack.c.l.b16 %v1111
        %v1483 = vunpack.c.h.b16 %v1111
        %v1484 = vunpack.c.l.b16 %v1112
        %v1485 = vunpack.c.h.b16 %v1112
        %v1486 = vunpack.c.l.b16 %v1113
        %v1487 = vunpack.c.h.b16 %v1113
        %v1488 = vunpack.c.l.b16 %v1114
        %v1489 = vunpack.c.h.b16 %v1114
        %v1490 = vunpack.c.l.b16 %v1115
        %v1491 = vunpack.c.h.b16 %v1115
        %v1492 = vunpack.c.l.b16 %v1116
        %v1493 = vunpack.c.h.b16 %v1116
        %v1494 = vunpack.c.l.b16 %v1117
        %v1495 = vunpack.c.h.b16 %v1117
        %v1496 = vunpack.c.l.b16 %v1118
        %v1497 = vunpack.c.h.b16 %v1118
        %v1498 = vunpack.c.l.b16 %v1119
        %v1499 = vunpack.c.h.b16 %v1119
        %v1500 = vunpack.c.l.b16 %v1120
        %v1501 = vunpack.c.h.b16 %v1120
        %v1502 = vunpack.c.l.b16 %v1121
        %v1503 = vunpack.c.h.b16 %v1121
        %v1504 = vunpack.c.l.b16 %v1122
        %v1505 = vunpack.c.h.b16 %v1122
        %v1506 = vunpack.c.l.b16 %v1123
        %v1507 = vunpack.c.h.b16 %v1123
        %v1508 = vunpack.c.l.b16 %v1124
        %v1509 = vunpack.c.h.b16 %v1124
        %v1510 = vunpack.c.l.b16 %v1125
        %v1511 = vunpack.c.h.b16 %v1125
        %v1512 = vunpack.c.l.b16 %v1126
        %v1513 = vunpack.c.h.b16 %v1126
        %v1514 = vunpack.c.l.b16 %v1127
        %v1515 = vunpack.c.h.b16 %v1127
        %v1516 = vunpack.c.l.b16 %v1128
        %v1517 = vunpack.c.h.b16 %v1128
        %v1518 = vunpack.c.l.b16 %v1129
        %v1519 = vunpack.c.h.b16 %v1129
        %v1520 = vunpack.c.l.b16 %v1130
        %v1521 = vunpack.c.h.b16 %v1130
        %v1522 = vunpack.c.l.b16 %v1131
        %v1523 = vunpack.c.h.b16 %v1131
        %v1524 = vunpack.c.l.b16 %v1132
        %v1525 = vunpack.c.h.b16 %v1132
        %v1526 = vunpack.c.l.b16 %v1133
        %v1527 = vunpack.c.h.b16 %v1133
        %v1528 = vunpack.c.l.b16 %v1134
        %v1529 = vunpack.c.h.b16 %v1134
        %v1530 = vunpack.c.l.b16 %v1135
        %v1531 = vunpack.c.h.b16 %v1135
        %v1532 = vunpack.c.l.b16 %v1136
        %v1533 = vunpack.c.h.b16 %v1136
        %v1534 = vunpack.c.l.b16 %v1137
        %v1535 = vunpack.c.h.b16 %v1137
        %v1536 = vunpack.c.l.b16 %v1138
        %v1537 = vunpack.c.h.b16 %v1138
        %v1538 = vunpack.c.l.b16 %v1139
        %v1539 = vunpack.c.h.b16 %v1139
        %v1540 = vunpack.c.l.b16 %v1140
        %v1541 = vunpack.c.h.b16 %v1140
        %v1542 = vunpack.c.l.b16 %v1141
        %v1543 = vunpack.c.h.b16 %v1141
        %v1544 = vunpack.c.l.b16 %v1142
        %v1545 = vunpack.c.h.b16 %v1142
        %v1546 = vunpack.c.l.b16 %v1143
        %v1547 = vunpack.c.h.b16 %v1143
        %v1548 = vunpack.c.l.b16 %v1144
        %v1549 = vunpack.c.h.b16 %v1144
        %v1550 = vunpack.c.l.b16 %v1145
        %v1551 = vunpack.c.h.b16 %v1145
        %v1552 = vpack.c.b16 %v1300, %v1296
        %v1553 = vpack.c.b16 %v1301, %v1297
        %v1554 = vpack.c.b16 %v1302, %v1298
        %v1555 = vpack.c.b16 %v1303, %v1299
        %v1556 = vpack.c.b16 %v1308, %v1304
        %v1557 = vpack.c.b16 %v1309, %v1305
        %v1558 = vpack.c.b16 %v1310, %v1306
        %v1559 = vpack.c.b16 %v1311, %v1307
        %v1560 = vpack.c.b16 %v1316, %v1312
        %v1561 = vpack.c.b16 %v1317, %v1313
        %v1562 = vpack.c.b16 %v1318, %v1314
        %v1563 = vpack.c.b16 %v1319, %v1315
        %v1564 = vpack.c.b16 %v1324, %v1320
        %v1565 = vpack.c.b16 %v1325, %v1321
        %v1566 = vpack.c.b16 %v1326, %v1322
        %v1567 = vpack.c.b16 %v1327, %v1323
        %v1568 = vpack.c.b16 %v1332, %v1328
        %v1569 = vpack.c.b16 %v1333, %v1329
        %v1570 = vpack.c.b16 %v1334, %v1330
        %v1571 = vpack.c.b16 %v1335, %v1331
        %v1572 = vpack.c.b16 %v1340, %v1336
        %v1573 = vpack.c.b16 %v1341, %v1337
        %v1574 = vpack.c.b16 %v1342, %v1338
        %v1575 = vpack.c.b16 %v1343, %v1339
        %v1576 = vpack.c.b16 %v1348, %v1344
        %v1577 = vpack.c.b16 %v1349, %v1345
        %v1578 = vpack.c.b16 %v1350, %v1346
        %v1579 = vpack.c.b16 %v1351, %v1347
        %v1580 = vpack.c.b16 %v1356, %v1352
        %v1581 = vpack.c.b16 %v1357, %v1353
        %v1582 = vpack.c.b16 %v1358, %v1354
        %v1583 = vpack.c.b16 %v1359, %v1355
        %v1584 = vpack.c.b16 %v1364, %v1360
        %v1585 = vpack.c.b16 %v1365, %v1361
        %v1586 = vpack.c.b16 %v1366, %v1362
        %v1587 = vpack.c.b16 %v1367, %v1363
        %v1588 = vpack.c.b16 %v1372, %v1368
        %v1589 = vpack.c.b16 %v1373, %v1369
        %v1590 = vpack.c.b16 %v1374, %v1370
        %v1591 = vpack.c.b16 %v1375, %v1371
        %v1592 = vpack.c.b16 %v1380, %v1376
        %v1593 = vpack.c.b16 %v1381, %v1377
        %v1594 = vpack.c.b16 %v1382, %v1378
        %v1595 = vpack.c.b16 %v1383, %v1379
        %v1596 = vpack.c.b16 %v1388, %v1384
        %v1597 = vpack.c.b16 %v1389, %v1385
        %v1598 = vpack.c.b16 %v1390, %v1386
        %v1599 = vpack.c.b16 %v1391, %v1387
        %v1600 = vpack.c.b16 %v1396, %v1392
        %v1601 = vpack.c.b16 %v1397, %v1393
        %v1602 = vpack.c.b16 %v1398, %v1394
        %v1603 = vpack.c.b16 %v1399, %v1395
        %v1604 = vpack.c.b16 %v1404, %v1400
        %v1605 = vpack.c.b16 %v1405, %v1401
        %v1606 = vpack.c.b16 %v1406, %v1402
        %v1607 = vpack.c.b16 %v1407, %v1403
        %v1608 = vpack.c.b16 %v1412, %v1408
        %v1609 = vpack.c.b16 %v1413, %v1409
        %v1610 = vpack.c.b16 %v1414, %v1410
        %v1611 = vpack.c.b16 %v1415, %v1411
        %v1612 = vpack.c.b16 %v1420, %v1416
        %v1613 = vpack.c.b16 %v1421, %v1417
        %v1614 = vpack.c.b16 %v1422, %v1418
        %v1615 = vpack.c.b16 %v1423, %v1419
        %v1616 = vpack.c.b16 %v1428, %v1424
        %v1617 = vpack.c.b16 %v1429, %v1425
        %v1618 = vpack.c.b16 %v1430, %v1426
        %v1619 = vpack.c.b16 %v1431, %v1427
        %v1620 = vpack.c.b16 %v1436, %v1432
        %v1621 = vpack.c.b16 %v1437, %v1433
        %v1622 = vpack.c.b16 %v1438, %v1434
        %v1623 = vpack.c.b16 %v1439, %v1435
        %v1624 = vpack.c.b16 %v1444, %v1440
        %v1625 = vpack.c.b16 %v1445, %v1441
        %v1626 = vpack.c.b16 %v1446, %v1442
        %v1627 = vpack.c.b16 %v1447, %v1443
        %v1628 = vpack.c.b16 %v1452, %v1448
        %v1629 = vpack.c.b16 %v1453, %v1449
        %v1630 = vpack.c.b16 %v1454, %v1450
        %v1631 = vpack.c.b16 %v1455, %v1451
        %v1632 = vpack.c.b16 %v1460, %v1456
        %v1633 = vpack.c.b16 %v1461, %v1457
        %v1634 = vpack.c.b16 %v1462, %v1458
        %v1635 = vpack.c.b16 %v1463, %v1459
        %v1636 = vpack.c.b16 %v1468, %v1464
        %v1637 = vpack.c.b16 %v1469, %v1465
        %v1638 = vpack.c.b16 %v1470, %v1466
        %v1639 = vpack.c.b16 %v1471, %v1467
        %v1640 = vpack.c.b16 %v1476, %v1472
        %v1641 = vpack.c.b16 %v1477, %v1473
        %v1642 = vpack.c.b16 %v1478, %v1474
        %v1643 = vpack.c.b16 %v1479, %v1475
        %v1644 = vpack.c.b16 %v1484, %v1480
        %v1645 = vpack.c.b16 %v1485, %v1481
        %v1646 = vpack.c.b16 %v1486, %v1482
        %v1647 = vpack.c.b16 %v1487, %v1483
        %v1648 = vpack.c.b16 %v1492, %v1488
        %v1649 = vpack.c.b16 %v1493, %v1489
        %v1650 = vpack.c.b16 %v1494, %v1490
        %v1651 = vpack.c.b16 %v1495, %v1491
        %v1652 = vpack.c.b16 %v1500, %v1496
        %v1653 = vpack.c.b16 %v1501, %v1497
        %v1654 = vpack.c.b16 %v1502, %v1498
        %v1655 = vpack.c.b16 %v1503, %v1499
        %v1656 = vpack.c.b16 %v1508, %v1504
        %v1657 = vpack.c.b16 %v1509, %v1505
        %v1658 = vpack.c.b16 %v1510, %v1506
        %v1659 = vpack.c.b16 %v1511, %v1507
        %v1660 = vpack.c.b16 %v1516, %v1512
        %v1661 = vpack.c.b16 %v1517, %v1513
        %v1662 = vpack.c.b16 %v1518, %v1514
        %v1663 = vpack.c.b16 %v1519, %v1515
        %v1664 = vpack.c.b16 %v1524, %v1520
        %v1665 = vpack.c.b16 %v1525, %v1521
        %v1666 = vpack.c.b16 %v1526, %v1522
        %v1667 = vpack.c.b16 %v1527, %v1523
        %v1668 = vpack.c.b16 %v1532, %v1528
        %v1669 = vpack.c.b16 %v1533, %v1529
        %v1670 = vpack.c.b16 %v1534, %v1530
        %v1671 = vpack.c.b16 %v1535, %v1531
        %v1672 = vpack.c.b16 %v1540, %v1536
        %v1673 = vpack.c.b16 %v1541, %v1537
        %v1674 = vpack.c.b16 %v1542, %v1538
        %v1675 = vpack.c.b16 %v1543, %v1539
        %v1676 = vpack.c.b16 %v1548, %v1544
        %v1677 = vpack.c.b16 %v1549, %v1545
        %v1678 = vpack.c.b16 %v1550, %v1546
        %v1679 = vpack.c.b16 %v1551, %v1547
        %1808 = vmatprep.subr.bf16.mxu0 %v1553
        %1809 = vmatpush1.bf16.msra.mxu0 %v1552
        %1810 = vmatprep.subr.bf16.mxu0 %v1557
        %1811 = vmatpush1.bf16.msra.mxu0 %v1556
        %1812 = vmatprep.subr.bf16.mxu0 %v1561
        %1813 = vmatpush1.bf16.msra.mxu0 %v1560
        %1814 = vmatprep.subr.bf16.mxu0 %v1565
        %1815 = vmatpush1.bf16.msra.mxu0 %v1564
        %1816 = vmatprep.subr.bf16.mxu0 %v1569
        %1817 = vmatpush1.bf16.msra.mxu0 %v1568
        %1818 = vmatprep.subr.bf16.mxu0 %v1573
        %1819 = vmatpush1.bf16.msra.mxu0 %v1572
        %1820 = vmatprep.subr.bf16.mxu0 %v1577
        %1821 = vmatpush1.bf16.msra.mxu0 %v1576
        %1822 = vmatprep.subr.bf16.mxu0 %v1581
        %1823 = vmatpush1.bf16.msra.mxu0 %v1580
        %1824 = vmatprep.subr.bf16.mxu0 %v1585
        %1825 = vmatpush1.bf16.msra.mxu0 %v1584
        %1826 = vmatprep.subr.bf16.mxu0 %v1589
        %1827 = vmatpush1.bf16.msra.mxu0 %v1588
        %1828 = vmatprep.subr.bf16.mxu0 %v1593
        %1829 = vmatpush1.bf16.msra.mxu0 %v1592
        %1830 = vmatprep.subr.bf16.mxu0 %v1597
        %1831 = vmatpush1.bf16.msra.mxu0 %v1596
        %1832 = vmatprep.subr.bf16.mxu0 %v1601
        %1833 = vmatpush1.bf16.msra.mxu0 %v1600
        %1834 = vmatprep.subr.bf16.mxu0 %v1605
        %1835 = vmatpush1.bf16.msra.mxu0 %v1604
        %1836 = vmatprep.subr.bf16.mxu0 %v1609
        %1837 = vmatpush1.bf16.msra.mxu0 %v1608
        %1838 = vmatprep.subr.bf16.mxu0 %v1613
        %1839 = vmatpush1.bf16.msra.mxu0 %v1612
        %1840 = vmatprep.mubr.bf16.mxu0 %v955
        %1841 = vmatmul.mubr.bf16.gmra.mrb[0].mxu0 %v954
        %v1842 = vpop.f32.mrb[0].mxu0
        %v1843 = vadd.f32 %v1151, %v1842
        %v1844 = vpop.f32.mrb[0].mxu0
        %v1845 = vadd.f32 %v1155, %v1844
        %v1846 = vpop.f32.mrb[0].mxu0
        %v1847 = vadd.f32 %v1151, %v1846
        %v1848 = vpop.f32.mrb[0].mxu0
        %v1849 = vadd.f32 %v1155, %v1848
        %1850 = vmatprep.mubr.bf16.mxu0 %v959
        %1851 = vmatmul.mubr.bf16.gmra.mrb[0].mxu0 %v958
        %v1852 = vpop.f32.mrb[0].mxu0
        %v1853 = vadd.f32 %v1151, %v1852
        %v1854 = vpop.f32.mrb[0].mxu0
        %v1855 = vadd.f32 %v1155, %v1854
        %v1856 = vpop.f32.mrb[0].mxu0
        %v1857 = vadd.f32 %v1151, %v1856
        %v1858 = vpop.f32.mrb[0].mxu0
        %v1859 = vadd.f32 %v1155, %v1858
        %1860 = vmatprep.mubr.bf16.mxu0 %v963
        %1861 = vmatmul.mubr.bf16.gmra.mrb[0].mxu0 %v962
        %v1862 = vpop.f32.mrb[0].mxu0
        %v1863 = vadd.f32 %v1151, %v1862
        %v1864 = vpop.f32.mrb[0].mxu0
        %v1865 = vadd.f32 %v1155, %v1864
        %v1866 = vpop.f32.mrb[0].mxu0
        %v1867 = vadd.f32 %v1151, %v1866
        %v1868 = vpop.f32.mrb[0].mxu0
        %v1869 = vadd.f32 %v1155, %v1868
        %1870 = vmatprep.mubr.bf16.mxu0 %v967
        %1871 = vmatmul.mubr.bf16.gmra.mrb[0].mxu0 %v966
        %v1872 = vpop.f32.mrb[0].mxu0
        %v1873 = vadd.f32 %v1151, %v1872
        %v1874 = vpop.f32.mrb[0].mxu0
        %v1875 = vadd.f32 %v1155, %v1874
        %v1876 = vpop.f32.mrb[0].mxu0
        %v1877 = vadd.f32 %v1151, %v1876
        %v1878 = vpop.f32.mrb[0].mxu0
        %v1879 = vadd.f32 %v1155, %v1878
        %1880 = vmatprep.mubr.bf16.mxu0 %v971
        %1881 = vmatmul.mubr.bf16.gmra.mrb[0].mxu0 %v970
        %v1882 = vpop.f32.mrb[0].mxu0
        %v1883 = vadd.f32 %v1151, %v1882
        %v1884 = vpop.f32.mrb[0].mxu0
        %v1885 = vadd.f32 %v1155, %v1884
        %v1886 = vpop.f32.mrb[0].mxu0
        %v1887 = vadd.f32 %v1151, %v1886
        %v1888 = vpop.f32.mrb[0].mxu0
        %v1889 = vadd.f32 %v1155, %v1888
        %1890 = vmatprep.mubr.bf16.mxu0 %v975
        %1891 = vmatmul.mubr.bf16.gmra.mrb[0].mxu0 %v974
        %v1892 = vpop.f32.mrb[0].mxu0
        %v1893 = vadd.f32 %v1151, %v1892
        %v1894 = vpop.f32.mrb[0].mxu0
        %v1895 = vadd.f32 %v1155, %v1894
        %v1896 = vpop.f32.mrb[0].mxu0
        %v1897 = vadd.f32 %v1151, %v1896
        %v1898 = vpop.f32.mrb[0].mxu0
        %v1899 = vadd.f32 %v1155, %v1898
        %1900 = vmatprep.mubr.bf16.mxu0 %v979
        %1901 = vmatmul.mubr.bf16.gmra.mrb[0].mxu0 %v978
        %v1902 = vpop.f32.mrb[0].mxu0
        %v1903 = vadd.f32 %v1151, %v1902
        %v1904 = vpop.f32.mrb[0].mxu0
        %v1905 = vadd.f32 %v1155, %v1904
        %v1906 = vpop.f32.mrb[0].mxu0
        %v1907 = vadd.f32 %v1151, %v1906
        %v1908 = vpop.f32.mrb[0].mxu0
        %v1909 = vadd.f32 %v1155, %v1908
        %1910 = vmatprep.mubr.bf16.mxu0 %v983
        %1911 = vmatmul.mubr.bf16.gmra.mrb[0].mxu0 %v982
        %v1912 = vpop.f32.mrb[0].mxu0
        %v1913 = vadd.f32 %v1151, %v1912
        %v1914 = vpop.f32.mrb[0].mxu0
        %v1915 = vadd.f32 %v1155, %v1914
        %v1916 = vpop.f32.mrb[0].mxu0
        %v1917 = vadd.f32 %v1151, %v1916
        %v1918 = vpop.f32.mrb[0].mxu0
        %v1919 = vadd.f32 %v1155, %v1918
        %1920 = vmatprep.mubr.bf16.mxu0 %v987
        %1921 = vmatmul.mubr.bf16.gmra.mrb[0].mxu0 %v986
        %v1922 = vpop.f32.mrb[0].mxu0
        %v1923 = vadd.f32 %v1151, %v1922
        %v1924 = vpop.f32.mrb[0].mxu0
        %v1925 = vadd.f32 %v1155, %v1924
        %v1926 = vpop.f32.mrb[0].mxu0
        %v1927 = vadd.f32 %v1151, %v1926
        %v1928 = vpop.f32.mrb[0].mxu0
        %v1929 = vadd.f32 %v1155, %v1928
        %1930 = vmatprep.mubr.bf16.mxu0 %v991
        %1931 = vmatmul.mubr.bf16.gmra.mrb[0].mxu0 %v990
        %v1932 = vpop.f32.mrb[0].mxu0
        %v1933 = vadd.f32 %v1151, %v1932
        %v1934 = vpop.f32.mrb[0].mxu0
        %v1935 = vadd.f32 %v1155, %v1934
        %v1936 = vpop.f32.mrb[0].mxu0
        %v1937 = vadd.f32 %v1151, %v1936
        %v1938 = vpop.f32.mrb[0].mxu0
        %v1939 = vadd.f32 %v1155, %v1938
        %1940 = vmatprep.mubr.bf16.mxu0 %v995
        %1941 = vmatmul.mubr.bf16.gmra.mrb[0].mxu0 %v994
        %v1942 = vpop.f32.mrb[0].mxu0
        %v1943 = vadd.f32 %v1151, %v1942
        %v1944 = vpop.f32.mrb[0].mxu0
        %v1945 = vadd.f32 %v1155, %v1944
        %v1946 = vpop.f32.mrb[0].mxu0
        %v1947 = vadd.f32 %v1151, %v1946
        %v1948 = vpop.f32.mrb[0].mxu0
        %v1949 = vadd.f32 %v1155, %v1948
        %1950 = vmatprep.mubr.bf16.mxu0 %v999
        %1951 = vmatmul.mubr.bf16.gmra.mrb[0].mxu0 %v998
        %v1952 = vpop.f32.mrb[0].mxu0
        %v1953 = vadd.f32 %v1151, %v1952
        %v1954 = vpop.f32.mrb[0].mxu0
        %v1955 = vadd.f32 %v1155, %v1954
        %v1956 = vpop.f32.mrb[0].mxu0
        %v1957 = vadd.f32 %v1151, %v1956
        %v1958 = vpop.f32.mrb[0].mxu0
        %v1959 = vadd.f32 %v1155, %v1958
        %1960 = vmatprep.mubr.bf16.mxu0 %v1003
        %1961 = vmatmul.mubr.bf16.gmra.mrb[0].mxu0 %v1002
        %v1962 = vpop.f32.mrb[0].mxu0
        %v1963 = vadd.f32 %v1151, %v1962
        %v1964 = vpop.f32.mrb[0].mxu0
        %v1965 = vadd.f32 %v1155, %v1964
        %v1966 = vpop.f32.mrb[0].mxu0
        %v1967 = vadd.f32 %v1151, %v1966
        %v1968 = vpop.f32.mrb[0].mxu0
        %v1969 = vadd.f32 %v1155, %v1968
        %1970 = vmatprep.mubr.bf16.mxu0 %v1007
        %1971 = vmatmul.mubr.bf16.gmra.mrb[0].mxu0 %v1006
        %v1972 = vpop.f32.mrb[0].mxu0
        %v1973 = vadd.f32 %v1151, %v1972
        %v1974 = vpop.f32.mrb[0].mxu0
        %v1975 = vadd.f32 %v1155, %v1974
        %v1976 = vpop.f32.mrb[0].mxu0
        %v1977 = vadd.f32 %v1151, %v1976
        %v1978 = vpop.f32.mrb[0].mxu0
        %v1979 = vadd.f32 %v1155, %v1978
        %1980 = vmatprep.mubr.bf16.mxu0 %v1011
        %1981 = vmatmul.mubr.bf16.gmra.mrb[0].mxu0 %v1010
        %v1982 = vpop.f32.mrb[0].mxu0
        %v1983 = vadd.f32 %v1151, %v1982
        %v1984 = vpop.f32.mrb[0].mxu0
        %v1985 = vadd.f32 %v1155, %v1984
        %v1986 = vpop.f32.mrb[0].mxu0
        %v1987 = vadd.f32 %v1151, %v1986
        %v1988 = vpop.f32.mrb[0].mxu0
        %v1989 = vadd.f32 %v1155, %v1988
        %1990 = vmatprep.mubr.bf16.mxu0 %v1015
        %1991 = vmatmul.mubr.bf16.gmra.mrb[0].mxu0 %v1014
        %v1992 = vpop.f32.mrb[0].mxu0
        %v1993 = vadd.f32 %v1151, %v1992
        %v1994 = vpop.f32.mrb[0].mxu0
        %v1995 = vadd.f32 %v1155, %v1994
        %v1996 = vpop.f32.mrb[0].mxu0
        %v1997 = vadd.f32 %v1151, %v1996
        %v1998 = vpop.f32.mrb[0].mxu0
        %v1999 = vadd.f32 %v1155, %v1998
        %2000 = vdwg.mxu0
        %2001 = vmatprep.subr.bf16.mxu0 %v1617
        %2002 = vmatpush1.bf16.msra.mxu0 %v1616
        %2003 = vmatprep.subr.bf16.mxu0 %v1621
        %2004 = vmatpush1.bf16.msra.mxu0 %v1620
        %2005 = vmatprep.subr.bf16.mxu0 %v1625
        %2006 = vmatpush1.bf16.msra.mxu0 %v1624
        %2007 = vmatprep.subr.bf16.mxu0 %v1629
        %2008 = vmatpush1.bf16.msra.mxu0 %v1628
        %2009 = vmatprep.subr.bf16.mxu0 %v1633
        %2010 = vmatpush1.bf16.msra.mxu0 %v1632
        %2011 = vmatprep.subr.bf16.mxu0 %v1637
        %2012 = vmatpush1.bf16.msra.mxu0 %v1636
        %2013 = vmatprep.subr.bf16.mxu0 %v1641
        %2014 = vmatpush1.bf16.msra.mxu0 %v1640
        %2015 = vmatprep.subr.bf16.mxu0 %v1645
        %2016 = vmatpush1.bf16.msra.mxu0 %v1644
        %2017 = vmatprep.subr.bf16.mxu0 %v1649
        %2018 = vmatpush1.bf16.msra.mxu0 %v1648
        %2019 = vmatprep.subr.bf16.mxu0 %v1653
        %2020 = vmatpush1.bf16.msra.mxu0 %v1652
        %2021 = vmatprep.subr.bf16.mxu0 %v1657
        %2022 = vmatpush1.bf16.msra.mxu0 %v1656
        %2023 = vmatprep.subr.bf16.mxu0 %v1661
        %2024 = vmatpush1.bf16.msra.mxu0 %v1660
        %2025 = vmatprep.subr.bf16.mxu0 %v1665
        %2026 = vmatpush1.bf16.msra.mxu0 %v1664
        %2027 = vmatprep.subr.bf16.mxu0 %v1669
        %2028 = vmatpush1.bf16.msra.mxu0 %v1668
        %2029 = vmatprep.subr.bf16.mxu0 %v1673
        %2030 = vmatpush1.bf16.msra.mxu0 %v1672
        %2031 = vmatprep.subr.bf16.mxu0 %v1677
        %2032 = vmatpush1.bf16.msra.mxu0 %v1676
        %2033 = vmatprep.mubr.bf16.mxu0 %v957
        %2034 = vmatmul.mubr.bf16.gmra.mrb[0].mxu0 %v956
        %v2035 = vpop.f32.mrb[0].mxu0
        %v2036 = vadd.f32 %v1843, %v2035
        %v2037 = vpop.f32.mrb[0].mxu0
        %v2038 = vadd.f32 %v1845, %v2037
        %v2039 = vpop.f32.mrb[0].mxu0
        %v2040 = vadd.f32 %v1847, %v2039
        %v2041 = vpop.f32.mrb[0].mxu0
        %v2042 = vadd.f32 %v1849, %v2041
        %2043 = vmatprep.mubr.bf16.mxu0 %v961
        %2044 = vmatmul.mubr.bf16.gmra.mrb[0].mxu0 %v960
        %v2045 = vpop.f32.mrb[0].mxu0
        %v2046 = vadd.f32 %v1853, %v2045
        %v2047 = vpop.f32.mrb[0].mxu0
        %v2048 = vadd.f32 %v1855, %v2047
        %v2049 = vpop.f32.mrb[0].mxu0
        %v2050 = vadd.f32 %v1857, %v2049
        %v2051 = vpop.f32.mrb[0].mxu0
        %v2052 = vadd.f32 %v1859, %v2051
        %2053 = vmatprep.mubr.bf16.mxu0 %v965
        %2054 = vmatmul.mubr.bf16.gmra.mrb[0].mxu0 %v964
        %v2055 = vpop.f32.mrb[0].mxu0
        %v2056 = vadd.f32 %v1863, %v2055
        %v2057 = vpop.f32.mrb[0].mxu0
        %v2058 = vadd.f32 %v1865, %v2057
        %v2059 = vpop.f32.mrb[0].mxu0
        %v2060 = vadd.f32 %v1867, %v2059
        %v2061 = vpop.f32.mrb[0].mxu0
        %v2062 = vadd.f32 %v1869, %v2061
        %2063 = vmatprep.mubr.bf16.mxu0 %v969
        %2064 = vmatmul.mubr.bf16.gmra.mrb[0].mxu0 %v968
        %v2065 = vpop.f32.mrb[0].mxu0
        %v2066 = vadd.f32 %v1873, %v2065
        %v2067 = vpop.f32.mrb[0].mxu0
        %v2068 = vadd.f32 %v1875, %v2067
        %v2069 = vpop.f32.mrb[0].mxu0
        %v2070 = vadd.f32 %v1877, %v2069
        %v2071 = vpop.f32.mrb[0].mxu0
        %v2072 = vadd.f32 %v1879, %v2071
        %2073 = vmatprep.mubr.bf16.mxu0 %v973
        %2074 = vmatmul.mubr.bf16.gmra.mrb[0].mxu0 %v972
        %v2075 = vpop.f32.mrb[0].mxu0
        %v2076 = vadd.f32 %v1883, %v2075
        %v2077 = vpop.f32.mrb[0].mxu0
        %v2078 = vadd.f32 %v1885, %v2077
        %v2079 = vpop.f32.mrb[0].mxu0
        %v2080 = vadd.f32 %v1887, %v2079
        %v2081 = vpop.f32.mrb[0].mxu0
        %v2082 = vadd.f32 %v1889, %v2081
        %2083 = vmatprep.mubr.bf16.mxu0 %v977
        %2084 = vmatmul.mubr.bf16.gmra.mrb[0].mxu0 %v976
        %v2085 = vpop.f32.mrb[0].mxu0
        %v2086 = vadd.f32 %v1893, %v2085
        %v2087 = vpop.f32.mrb[0].mxu0
        %v2088 = vadd.f32 %v1895, %v2087
        %v2089 = vpop.f32.mrb[0].mxu0
        %v2090 = vadd.f32 %v1897, %v2089
        %v2091 = vpop.f32.mrb[0].mxu0
        %v2092 = vadd.f32 %v1899, %v2091
        %2093 = vmatprep.mubr.bf16.mxu0 %v981
        %2094 = vmatmul.mubr.bf16.gmra.mrb[0].mxu0 %v980
        %v2095 = vpop.f32.mrb[0].mxu0
        %v2096 = vadd.f32 %v1903, %v2095
        %v2097 = vpop.f32.mrb[0].mxu0
        %v2098 = vadd.f32 %v1905, %v2097
        %v2099 = vpop.f32.mrb[0].mxu0
        %v2100 = vadd.f32 %v1907, %v2099
        %v2101 = vpop.f32.mrb[0].mxu0
        %v2102 = vadd.f32 %v1909, %v2101
        %2103 = vmatprep.mubr.bf16.mxu0 %v985
        %2104 = vmatmul.mubr.bf16.gmra.mrb[0].mxu0 %v984
        %v2105 = vpop.f32.mrb[0].mxu0
        %v2106 = vadd.f32 %v1913, %v2105
        %v2107 = vpop.f32.mrb[0].mxu0
        %v2108 = vadd.f32 %v1915, %v2107
        %v2109 = vpop.f32.mrb[0].mxu0
        %v2110 = vadd.f32 %v1917, %v2109
        %v2111 = vpop.f32.mrb[0].mxu0
        %v2112 = vadd.f32 %v1919, %v2111
        %2113 = vmatprep.mubr.bf16.mxu0 %v989
        %2114 = vmatmul.mubr.bf16.gmra.mrb[0].mxu0 %v988
        %v2115 = vpop.f32.mrb[0].mxu0
        %v2116 = vadd.f32 %v1923, %v2115
        %v2117 = vpop.f32.mrb[0].mxu0
        %v2118 = vadd.f32 %v1925, %v2117
        %v2119 = vpop.f32.mrb[0].mxu0
        %v2120 = vadd.f32 %v1927, %v2119
        %v2121 = vpop.f32.mrb[0].mxu0
        %v2122 = vadd.f32 %v1929, %v2121
        %2123 = vmatprep.mubr.bf16.mxu0 %v993
        %2124 = vmatmul.mubr.bf16.gmra.mrb[0].mxu0 %v992
        %v2125 = vpop.f32.mrb[0].mxu0
        %v2126 = vadd.f32 %v1933, %v2125
        %v2127 = vpop.f32.mrb[0].mxu0
        %v2128 = vadd.f32 %v1935, %v2127
        %v2129 = vpop.f32.mrb[0].mxu0
        %v2130 = vadd.f32 %v1937, %v2129
        %v2131 = vpop.f32.mrb[0].mxu0
        %v2132 = vadd.f32 %v1939, %v2131
        %2133 = vmatprep.mubr.bf16.mxu0 %v997
        %2134 = vmatmul.mubr.bf16.gmra.mrb[0].mxu0 %v996
        %v2135 = vpop.f32.mrb[0].mxu0
        %v2136 = vadd.f32 %v1943, %v2135
        %v2137 = vpop.f32.mrb[0].mxu0
        %v2138 = vadd.f32 %v1945, %v2137
        %v2139 = vpop.f32.mrb[0].mxu0
        %v2140 = vadd.f32 %v1947, %v2139
        %v2141 = vpop.f32.mrb[0].mxu0
        %v2142 = vadd.f32 %v1949, %v2141
        %2143 = vmatprep.mubr.bf16.mxu0 %v1001
        %2144 = vmatmul.mubr.bf16.gmra.mrb[0].mxu0 %v1000
        %v2145 = vpop.f32.mrb[0].mxu0
        %v2146 = vadd.f32 %v1953, %v2145
        %v2147 = vpop.f32.mrb[0].mxu0
        %v2148 = vadd.f32 %v1955, %v2147
        %v2149 = vpop.f32.mrb[0].mxu0
        %v2150 = vadd.f32 %v1957, %v2149
        %v2151 = vpop.f32.mrb[0].mxu0
        %v2152 = vadd.f32 %v1959, %v2151
        %2153 = vmatprep.mubr.bf16.mxu0 %v1005
        %2154 = vmatmul.mubr.bf16.gmra.mrb[0].mxu0 %v1004
        %v2155 = vpop.f32.mrb[0].mxu0
        %v2156 = vadd.f32 %v1963, %v2155
        %v2157 = vpop.f32.mrb[0].mxu0
        %v2158 = vadd.f32 %v1965, %v2157
        %v2159 = vpop.f32.mrb[0].mxu0
        %v2160 = vadd.f32 %v1967, %v2159
        %v2161 = vpop.f32.mrb[0].mxu0
        %v2162 = vadd.f32 %v1969, %v2161
        %2163 = vmatprep.mubr.bf16.mxu0 %v1009
        %2164 = vmatmul.mubr.bf16.gmra.mrb[0].mxu0 %v1008
        %v2165 = vpop.f32.mrb[0].mxu0
        %v2166 = vadd.f32 %v1973, %v2165
        %v2167 = vpop.f32.mrb[0].mxu0
        %v2168 = vadd.f32 %v1975, %v2167
        %v2169 = vpop.f32.mrb[0].mxu0
        %v2170 = vadd.f32 %v1977, %v2169
        %v2171 = vpop.f32.mrb[0].mxu0
        %v2172 = vadd.f32 %v1979, %v2171
        %2173 = vmatprep.mubr.bf16.mxu0 %v1013
        %2174 = vmatmul.mubr.bf16.gmra.mrb[0].mxu0 %v1012
        %v2175 = vpop.f32.mrb[0].mxu0
        %v2176 = vadd.f32 %v1983, %v2175
        %v2177 = vpop.f32.mrb[0].mxu0
        %v2178 = vadd.f32 %v1985, %v2177
        %v2179 = vpop.f32.mrb[0].mxu0
        %v2180 = vadd.f32 %v1987, %v2179
        %v2181 = vpop.f32.mrb[0].mxu0
        %v2182 = vadd.f32 %v1989, %v2181
        %2183 = vmatprep.mubr.bf16.mxu0 %v1017
        %2184 = vmatmul.mubr.bf16.gmra.mrb[0].mxu0 %v1016
        %v2185 = vpop.f32.mrb[0].mxu0
        %v2186 = vadd.f32 %v1993, %v2185
        %v2187 = vpop.f32.mrb[0].mxu0
        %v2188 = vadd.f32 %v1995, %v2187
        %v2189 = vpop.f32.mrb[0].mxu0
        %v2190 = vadd.f32 %v1997, %v2189
        %v2191 = vpop.f32.mrb[0].mxu0
        %v2192 = vadd.f32 %v1999, %v2191
        %2193 = vdwg.mxu0
        %2194 = vmatprep.subr.bf16.mxu0 %v1555
        %2195 = vmatpush1.bf16.msra.mxu0 %v1554
        %2196 = vmatprep.subr.bf16.mxu0 %v1559
        %2197 = vmatpush1.bf16.msra.mxu0 %v1558
        %2198 = vmatprep.subr.bf16.mxu0 %v1563
        %2199 = vmatpush1.bf16.msra.mxu0 %v1562
        %2200 = vmatprep.subr.bf16.mxu0 %v1567
        %2201 = vmatpush1.bf16.msra.mxu0 %v1566
        %2202 = vmatprep.subr.bf16.mxu0 %v1571
        %2203 = vmatpush1.bf16.msra.mxu0 %v1570
        %2204 = vmatprep.subr.bf16.mxu0 %v1575
        %2205 = vmatpush1.bf16.msra.mxu0 %v1574
        %2206 = vmatprep.subr.bf16.mxu0 %v1579
        %2207 = vmatpush1.bf16.msra.mxu0 %v1578
        %2208 = vmatprep.subr.bf16.mxu0 %v1583
        %2209 = vmatpush1.bf16.msra.mxu0 %v1582
        %2210 = vmatprep.subr.bf16.mxu0 %v1587
        %2211 = vmatpush1.bf16.msra.mxu0 %v1586
        %2212 = vmatprep.subr.bf16.mxu0 %v1591
        %2213 = vmatpush1.bf16.msra.mxu0 %v1590
        %2214 = vmatprep.subr.bf16.mxu0 %v1595
        %2215 = vmatpush1.bf16.msra.mxu0 %v1594
        %2216 = vmatprep.subr.bf16.mxu0 %v1599
        %2217 = vmatpush1.bf16.msra.mxu0 %v1598
        %2218 = vmatprep.subr.bf16.mxu0 %v1603
        %2219 = vmatpush1.bf16.msra.mxu0 %v1602
        %2220 = vmatprep.subr.bf16.mxu0 %v1607
        %2221 = vmatpush1.bf16.msra.mxu0 %v1606
        %2222 = vmatprep.subr.bf16.mxu0 %v1611
        %2223 = vmatpush1.bf16.msra.mxu0 %v1610
        %2224 = vmatprep.subr.bf16.mxu0 %v1615
        %2225 = vmatpush1.bf16.msra.mxu0 %v1614
        %2226 = vmatprep.mubr.bf16.mxu0 %v955
        %2227 = vmatmul.mubr.bf16.gmra.mrb[0].mxu0 %v954
        %v2228 = vpop.f32.mrb[0].mxu0
        %v2229 = vadd.f32 %v1159, %v2228
        %v2230 = vpop.f32.mrb[0].mxu0
        %v2231 = vadd.f32 %v1163, %v2230
        %v2232 = vpop.f32.mrb[0].mxu0
        %v2233 = vadd.f32 %v1159, %v2232
        %v2234 = vpop.f32.mrb[0].mxu0
        %v2235 = vadd.f32 %v1163, %v2234
        %2236 = vmatprep.mubr.bf16.mxu0 %v959
        %2237 = vmatmul.mubr.bf16.gmra.mrb[0].mxu0 %v958
        %v2238 = vpop.f32.mrb[0].mxu0
        %v2239 = vadd.f32 %v1159, %v2238
        %v2240 = vpop.f32.mrb[0].mxu0
        %v2241 = vadd.f32 %v1163, %v2240
        %v2242 = vpop.f32.mrb[0].mxu0
        %v2243 = vadd.f32 %v1159, %v2242
        %v2244 = vpop.f32.mrb[0].mxu0
        %v2245 = vadd.f32 %v1163, %v2244
        %2246 = vmatprep.mubr.bf16.mxu0 %v963
        %2247 = vmatmul.mubr.bf16.gmra.mrb[0].mxu0 %v962
        %v2248 = vpop.f32.mrb[0].mxu0
        %v2249 = vadd.f32 %v1159, %v2248
        %v2250 = vpop.f32.mrb[0].mxu0
        %v2251 = vadd.f32 %v1163, %v2250
        %v2252 = vpop.f32.mrb[0].mxu0
        %v2253 = vadd.f32 %v1159, %v2252
        %v2254 = vpop.f32.mrb[0].mxu0
        %v2255 = vadd.f32 %v1163, %v2254
        %2256 = vmatprep.mubr.bf16.mxu0 %v967
        %2257 = vmatmul.mubr.bf16.gmra.mrb[0].mxu0 %v966
        %v2258 = vpop.f32.mrb[0].mxu0
        %v2259 = vadd.f32 %v1159, %v2258
        %v2260 = vpop.f32.mrb[0].mxu0
        %v2261 = vadd.f32 %v1163, %v2260
        %v2262 = vpop.f32.mrb[0].mxu0
        %v2263 = vadd.f32 %v1159, %v2262
        %v2264 = vpop.f32.mrb[0].mxu0
        %v2265 = vadd.f32 %v1163, %v2264
        %2266 = vmatprep.mubr.bf16.mxu0 %v971
        %2267 = vmatmul.mubr.bf16.gmra.mrb[0].mxu0 %v970
        %v2268 = vpop.f32.mrb[0].mxu0
        %v2269 = vadd.f32 %v1159, %v2268
        %v2270 = vpop.f32.mrb[0].mxu0
        %v2271 = vadd.f32 %v1163, %v2270
        %v2272 = vpop.f32.mrb[0].mxu0
        %v2273 = vadd.f32 %v1159, %v2272
        %v2274 = vpop.f32.mrb[0].mxu0
        %v2275 = vadd.f32 %v1163, %v2274
        %2276 = vmatprep.mubr.bf16.mxu0 %v975
        %2277 = vmatmul.mubr.bf16.gmra.mrb[0].mxu0 %v974
        %v2278 = vpop.f32.mrb[0].mxu0
        %v2279 = vadd.f32 %v1159, %v2278
        %v2280 = vpop.f32.mrb[0].mxu0
        %v2281 = vadd.f32 %v1163, %v2280
        %v2282 = vpop.f32.mrb[0].mxu0
        %v2283 = vadd.f32 %v1159, %v2282
        %v2284 = vpop.f32.mrb[0].mxu0
        %v2285 = vadd.f32 %v1163, %v2284
        %2286 = vmatprep.mubr.bf16.mxu0 %v979
        %2287 = vmatmul.mubr.bf16.gmra.mrb[0].mxu0 %v978
        %v2288 = vpop.f32.mrb[0].mxu0
        %v2289 = vadd.f32 %v1159, %v2288
        %v2290 = vpop.f32.mrb[0].mxu0
        %v2291 = vadd.f32 %v1163, %v2290
        %v2292 = vpop.f32.mrb[0].mxu0
        %v2293 = vadd.f32 %v1159, %v2292
        %v2294 = vpop.f32.mrb[0].mxu0
        %v2295 = vadd.f32 %v1163, %v2294
        %2296 = vmatprep.mubr.bf16.mxu0 %v983
        %2297 = vmatmul.mubr.bf16.gmra.mrb[0].mxu0 %v982
        %v2298 = vpop.f32.mrb[0].mxu0
        %v2299 = vadd.f32 %v1159, %v2298
        %v2300 = vpop.f32.mrb[0].mxu0
        %v2301 = vadd.f32 %v1163, %v2300
        %v2302 = vpop.f32.mrb[0].mxu0
        %v2303 = vadd.f32 %v1159, %v2302
        %v2304 = vpop.f32.mrb[0].mxu0
        %v2305 = vadd.f32 %v1163, %v2304
        %2306 = vmatprep.mubr.bf16.mxu0 %v987
        %2307 = vmatmul.mubr.bf16.gmra.mrb[0].mxu0 %v986
        %v2308 = vpop.f32.mrb[0].mxu0
        %v2309 = vadd.f32 %v1159, %v2308
        %v2310 = vpop.f32.mrb[0].mxu0
        %v2311 = vadd.f32 %v1163, %v2310
        %v2312 = vpop.f32.mrb[0].mxu0
        %v2313 = vadd.f32 %v1159, %v2312
        %v2314 = vpop.f32.mrb[0].mxu0
        %v2315 = vadd.f32 %v1163, %v2314
        %2316 = vmatprep.mubr.bf16.mxu0 %v991
        %2317 = vmatmul.mubr.bf16.gmra.mrb[0].mxu0 %v990
        %v2318 = vpop.f32.mrb[0].mxu0
        %v2319 = vadd.f32 %v1159, %v2318
        %v2320 = vpop.f32.mrb[0].mxu0
        %v2321 = vadd.f32 %v1163, %v2320
        %v2322 = vpop.f32.mrb[0].mxu0
        %v2323 = vadd.f32 %v1159, %v2322
        %v2324 = vpop.f32.mrb[0].mxu0
        %v2325 = vadd.f32 %v1163, %v2324
        %2326 = vmatprep.mubr.bf16.mxu0 %v995
        %2327 = vmatmul.mubr.bf16.gmra.mrb[0].mxu0 %v994
        %v2328 = vpop.f32.mrb[0].mxu0
        %v2329 = vadd.f32 %v1159, %v2328
        %v2330 = vpop.f32.mrb[0].mxu0
        %v2331 = vadd.f32 %v1163, %v2330
        %v2332 = vpop.f32.mrb[0].mxu0
        %v2333 = vadd.f32 %v1159, %v2332
        %v2334 = vpop.f32.mrb[0].mxu0
        %v2335 = vadd.f32 %v1163, %v2334
        %2336 = vmatprep.mubr.bf16.mxu0 %v999
        %2337 = vmatmul.mubr.bf16.gmra.mrb[0].mxu0 %v998
        %v2338 = vpop.f32.mrb[0].mxu0
        %v2339 = vadd.f32 %v1159, %v2338
        %v2340 = vpop.f32.mrb[0].mxu0
        %v2341 = vadd.f32 %v1163, %v2340
        %v2342 = vpop.f32.mrb[0].mxu0
        %v2343 = vadd.f32 %v1159, %v2342
        %v2344 = vpop.f32.mrb[0].mxu0
        %v2345 = vadd.f32 %v1163, %v2344
        %2346 = vmatprep.mubr.bf16.mxu0 %v1003
        %2347 = vmatmul.mubr.bf16.gmra.mrb[0].mxu0 %v1002
        %v2348 = vpop.f32.mrb[0].mxu0
        %v2349 = vadd.f32 %v1159, %v2348
        %v2350 = vpop.f32.mrb[0].mxu0
        %v2351 = vadd.f32 %v1163, %v2350
        %v2352 = vpop.f32.mrb[0].mxu0
        %v2353 = vadd.f32 %v1159, %v2352
        %v2354 = vpop.f32.mrb[0].mxu0
        %v2355 = vadd.f32 %v1163, %v2354
        %2356 = vmatprep.mubr.bf16.mxu0 %v1007
        %2357 = vmatmul.mubr.bf16.gmra.mrb[0].mxu0 %v1006
        %v2358 = vpop.f32.mrb[0].mxu0
        %v2359 = vadd.f32 %v1159, %v2358
        %v2360 = vpop.f32.mrb[0].mxu0
        %v2361 = vadd.f32 %v1163, %v2360
        %v2362 = vpop.f32.mrb[0].mxu0
        %v2363 = vadd.f32 %v1159, %v2362
        %v2364 = vpop.f32.mrb[0].mxu0
        %v2365 = vadd.f32 %v1163, %v2364
        %2366 = vmatprep.mubr.bf16.mxu0 %v1011
        %2367 = vmatmul.mubr.bf16.gmra.mrb[0].mxu0 %v1010
        %v2368 = vpop.f32.mrb[0].mxu0
        %v2369 = vadd.f32 %v1159, %v2368
        %v2370 = vpop.f32.mrb[0].mxu0
        %v2371 = vadd.f32 %v1163, %v2370
        %v2372 = vpop.f32.mrb[0].mxu0
        %v2373 = vadd.f32 %v1159, %v2372
        %v2374 = vpop.f32.mrb[0].mxu0
        %v2375 = vadd.f32 %v1163, %v2374
        %2376 = vmatprep.mubr.bf16.mxu0 %v1015
        %2377 = vmatmul.mubr.bf16.gmra.mrb[0].mxu0 %v1014
        %v2378 = vpop.f32.mrb[0].mxu0
        %v2379 = vadd.f32 %v1159, %v2378
        %v2380 = vpop.f32.mrb[0].mxu0
        %v2381 = vadd.f32 %v1163, %v2380
        %v2382 = vpop.f32.mrb[0].mxu0
        %v2383 = vadd.f32 %v1159, %v2382
        %v2384 = vpop.f32.mrb[0].mxu0
        %v2385 = vadd.f32 %v1163, %v2384
        %2386 = vdwg.mxu0
        %2387 = vmatprep.subr.bf16.mxu0 %v1619
        %2388 = vmatpush1.bf16.msra.mxu0 %v1618
        %2389 = vmatprep.subr.bf16.mxu0 %v1623
        %2390 = vmatpush1.bf16.msra.mxu0 %v1622
        %2391 = vmatprep.subr.bf16.mxu0 %v1627
        %2392 = vmatpush1.bf16.msra.mxu0 %v1626
        %2393 = vmatprep.subr.bf16.mxu0 %v1631
        %2394 = vmatpush1.bf16.msra.mxu0 %v1630
        %2395 = vmatprep.subr.bf16.mxu0 %v1635
        %2396 = vmatpush1.bf16.msra.mxu0 %v1634
        %2397 = vmatprep.subr.bf16.mxu0 %v1639
        %2398 = vmatpush1.bf16.msra.mxu0 %v1638
        %2399 = vmatprep.subr.bf16.mxu0 %v1643
        %2400 = vmatpush1.bf16.msra.mxu0 %v1642
        %2401 = vmatprep.subr.bf16.mxu0 %v1647
        %2402 = vmatpush1.bf16.msra.mxu0 %v1646
        %2403 = vmatprep.subr.bf16.mxu0 %v1651
        %2404 = vmatpush1.bf16.msra.mxu0 %v1650
        %2405 = vmatprep.subr.bf16.mxu0 %v1655
        %2406 = vmatpush1.bf16.msra.mxu0 %v1654
        %2407 = vmatprep.subr.bf16.mxu0 %v1659
        %2408 = vmatpush1.bf16.msra.mxu0 %v1658
        %2409 = vmatprep.subr.bf16.mxu0 %v1663
        %2410 = vmatpush1.bf16.msra.mxu0 %v1662
        %2411 = vmatprep.subr.bf16.mxu0 %v1667
        %2412 = vmatpush1.bf16.msra.mxu0 %v1666
        %2413 = vmatprep.subr.bf16.mxu0 %v1671
        %2414 = vmatpush1.bf16.msra.mxu0 %v1670
        %2415 = vmatprep.subr.bf16.mxu0 %v1675
        %2416 = vmatpush1.bf16.msra.mxu0 %v1674
        %2417 = vmatprep.subr.bf16.mxu0 %v1679
        %2418 = vmatpush1.bf16.msra.mxu0 %v1678
        %2419 = vmatprep.mubr.bf16.mxu0 %v957
        %2420 = vmatmul.mubr.bf16.gmra.mrb[0].mxu0 %v956
        %v2421 = vpop.f32.mrb[0].mxu0
        %v2422 = vadd.f32 %v2229, %v2421
        %v2423 = vpop.f32.mrb[0].mxu0
        %v2424 = vadd.f32 %v2231, %v2423
        %v2425 = vpop.f32.mrb[0].mxu0
        %v2426 = vadd.f32 %v2233, %v2425
        %v2427 = vpop.f32.mrb[0].mxu0
        %v2428 = vadd.f32 %v2235, %v2427
        %2429 = vmatprep.mubr.bf16.mxu0 %v961
        %2430 = vmatmul.mubr.bf16.gmra.mrb[0].mxu0 %v960
        %v2431 = vpop.f32.mrb[0].mxu0
        %v2432 = vadd.f32 %v2239, %v2431
        %v2433 = vpop.f32.mrb[0].mxu0
        %v2434 = vadd.f32 %v2241, %v2433
        %v2435 = vpop.f32.mrb[0].mxu0
        %v2436 = vadd.f32 %v2243, %v2435
        %v2437 = vpop.f32.mrb[0].mxu0
        %v2438 = vadd.f32 %v2245, %v2437
        %2439 = vmatprep.mubr.bf16.mxu0 %v965
        %2440 = vmatmul.mubr.bf16.gmra.mrb[0].mxu0 %v964
        %v2441 = vpop.f32.mrb[0].mxu0
        %v2442 = vadd.f32 %v2249, %v2441
        %v2443 = vpop.f32.mrb[0].mxu0
        %v2444 = vadd.f32 %v2251, %v2443
        %v2445 = vpop.f32.mrb[0].mxu0
        %v2446 = vadd.f32 %v2253, %v2445
        %v2447 = vpop.f32.mrb[0].mxu0
        %v2448 = vadd.f32 %v2255, %v2447
        %2449 = vmatprep.mubr.bf16.mxu0 %v969
        %2450 = vmatmul.mubr.bf16.gmra.mrb[0].mxu0 %v968
        %v2451 = vpop.f32.mrb[0].mxu0
        %v2452 = vadd.f32 %v2259, %v2451
        %v2453 = vpop.f32.mrb[0].mxu0
        %v2454 = vadd.f32 %v2261, %v2453
        %v2455 = vpop.f32.mrb[0].mxu0
        %v2456 = vadd.f32 %v2263, %v2455
        %v2457 = vpop.f32.mrb[0].mxu0
        %v2458 = vadd.f32 %v2265, %v2457
        %2459 = vmatprep.mubr.bf16.mxu0 %v973
        %2460 = vmatmul.mubr.bf16.gmra.mrb[0].mxu0 %v972
        %v2461 = vpop.f32.mrb[0].mxu0
        %v2462 = vadd.f32 %v2269, %v2461
        %v2463 = vpop.f32.mrb[0].mxu0
        %v2464 = vadd.f32 %v2271, %v2463
        %v2465 = vpop.f32.mrb[0].mxu0
        %v2466 = vadd.f32 %v2273, %v2465
        %v2467 = vpop.f32.mrb[0].mxu0
        %v2468 = vadd.f32 %v2275, %v2467
        %2469 = vmatprep.mubr.bf16.mxu0 %v977
        %2470 = vmatmul.mubr.bf16.gmra.mrb[0].mxu0 %v976
        %v2471 = vpop.f32.mrb[0].mxu0
        %v2472 = vadd.f32 %v2279, %v2471
        %v2473 = vpop.f32.mrb[0].mxu0
        %v2474 = vadd.f32 %v2281, %v2473
        %v2475 = vpop.f32.mrb[0].mxu0
        %v2476 = vadd.f32 %v2283, %v2475
        %v2477 = vpop.f32.mrb[0].mxu0
        %v2478 = vadd.f32 %v2285, %v2477
        %2479 = vmatprep.mubr.bf16.mxu0 %v981
        %2480 = vmatmul.mubr.bf16.gmra.mrb[0].mxu0 %v980
        %v2481 = vpop.f32.mrb[0].mxu0
        %v2482 = vadd.f32 %v2289, %v2481
        %v2483 = vpop.f32.mrb[0].mxu0
        %v2484 = vadd.f32 %v2291, %v2483
        %v2485 = vpop.f32.mrb[0].mxu0
        %v2486 = vadd.f32 %v2293, %v2485
        %v2487 = vpop.f32.mrb[0].mxu0
        %v2488 = vadd.f32 %v2295, %v2487
        %2489 = vmatprep.mubr.bf16.mxu0 %v985
        %2490 = vmatmul.mubr.bf16.gmra.mrb[0].mxu0 %v984
        %v2491 = vpop.f32.mrb[0].mxu0
        %v2492 = vadd.f32 %v2299, %v2491
        %v2493 = vpop.f32.mrb[0].mxu0
        %v2494 = vadd.f32 %v2301, %v2493
        %v2495 = vpop.f32.mrb[0].mxu0
        %v2496 = vadd.f32 %v2303, %v2495
        %v2497 = vpop.f32.mrb[0].mxu0
        %v2498 = vadd.f32 %v2305, %v2497
        %2499 = vmatprep.mubr.bf16.mxu0 %v989
        %2500 = vmatmul.mubr.bf16.gmra.mrb[0].mxu0 %v988
        %v2501 = vpop.f32.mrb[0].mxu0
        %v2502 = vadd.f32 %v2309, %v2501
        %v2503 = vpop.f32.mrb[0].mxu0
        %v2504 = vadd.f32 %v2311, %v2503
        %v2505 = vpop.f32.mrb[0].mxu0
        %v2506 = vadd.f32 %v2313, %v2505
        %v2507 = vpop.f32.mrb[0].mxu0
        %v2508 = vadd.f32 %v2315, %v2507
        %2509 = vmatprep.mubr.bf16.mxu0 %v993
        %2510 = vmatmul.mubr.bf16.gmra.mrb[0].mxu0 %v992
        %v2511 = vpop.f32.mrb[0].mxu0
        %v2512 = vadd.f32 %v2319, %v2511
        %v2513 = vpop.f32.mrb[0].mxu0
        %v2514 = vadd.f32 %v2321, %v2513
        %v2515 = vpop.f32.mrb[0].mxu0
        %v2516 = vadd.f32 %v2323, %v2515
        %v2517 = vpop.f32.mrb[0].mxu0
        %v2518 = vadd.f32 %v2325, %v2517
        %2519 = vmatprep.mubr.bf16.mxu0 %v997
        %2520 = vmatmul.mubr.bf16.gmra.mrb[0].mxu0 %v996
        %v2521 = vpop.f32.mrb[0].mxu0
        %v2522 = vadd.f32 %v2329, %v2521
        %v2523 = vpop.f32.mrb[0].mxu0
        %v2524 = vadd.f32 %v2331, %v2523
        %v2525 = vpop.f32.mrb[0].mxu0
        %v2526 = vadd.f32 %v2333, %v2525
        %v2527 = vpop.f32.mrb[0].mxu0
        %v2528 = vadd.f32 %v2335, %v2527
        %2529 = vmatprep.mubr.bf16.mxu0 %v1001
        %2530 = vmatmul.mubr.bf16.gmra.mrb[0].mxu0 %v1000
        %v2531 = vpop.f32.mrb[0].mxu0
        %v2532 = vadd.f32 %v2339, %v2531
        %v2533 = vpop.f32.mrb[0].mxu0
        %v2534 = vadd.f32 %v2341, %v2533
        %v2535 = vpop.f32.mrb[0].mxu0
        %v2536 = vadd.f32 %v2343, %v2535
        %v2537 = vpop.f32.mrb[0].mxu0
        %v2538 = vadd.f32 %v2345, %v2537
        %2539 = vmatprep.mubr.bf16.mxu0 %v1005
        %2540 = vmatmul.mubr.bf16.gmra.mrb[0].mxu0 %v1004
        %v2541 = vpop.f32.mrb[0].mxu0
        %v2542 = vadd.f32 %v2349, %v2541
        %v2543 = vpop.f32.mrb[0].mxu0
        %v2544 = vadd.f32 %v2351, %v2543
        %v2545 = vpop.f32.mrb[0].mxu0
        %v2546 = vadd.f32 %v2353, %v2545
        %v2547 = vpop.f32.mrb[0].mxu0
        %v2548 = vadd.f32 %v2355, %v2547
        %2549 = vmatprep.mubr.bf16.mxu0 %v1009
        %2550 = vmatmul.mubr.bf16.gmra.mrb[0].mxu0 %v1008
        %v2551 = vpop.f32.mrb[0].mxu0
        %v2552 = vadd.f32 %v2359, %v2551
        %v2553 = vpop.f32.mrb[0].mxu0
        %v2554 = vadd.f32 %v2361, %v2553
        %v2555 = vpop.f32.mrb[0].mxu0
        %v2556 = vadd.f32 %v2363, %v2555
        %v2557 = vpop.f32.mrb[0].mxu0
        %v2558 = vadd.f32 %v2365, %v2557
        %2559 = vmatprep.mubr.bf16.mxu0 %v1013
        %2560 = vmatmul.mubr.bf16.gmra.mrb[0].mxu0 %v1012
        %v2561 = vpop.f32.mrb[0].mxu0
        %v2562 = vadd.f32 %v2369, %v2561
        %v2563 = vpop.f32.mrb[0].mxu0
        %v2564 = vadd.f32 %v2371, %v2563
        %v2565 = vpop.f32.mrb[0].mxu0
        %v2566 = vadd.f32 %v2373, %v2565
        %v2567 = vpop.f32.mrb[0].mxu0
        %v2568 = vadd.f32 %v2375, %v2567
        %2569 = vmatprep.mubr.bf16.mxu0 %v1017
        %2570 = vmatmul.mubr.bf16.gmra.mrb[0].mxu0 %v1016
        %v2571 = vpop.f32.mrb[0].mxu0
        %v2572 = vadd.f32 %v2379, %v2571
        %v2573 = vpop.f32.mrb[0].mxu0
        %v2574 = vadd.f32 %v2381, %v2573
        %v2575 = vpop.f32.mrb[0].mxu0
        %v2576 = vadd.f32 %v2383, %v2575
        %v2577 = vpop.f32.mrb[0].mxu0
        %v2578 = vadd.f32 %v2385, %v2577
        %2579 = vdwg.mxu0
        %v2580 = vmax.f32 %v2036, 0.0
        %v2581 = vmax.f32 %v2038, 0.0
        %v2582 = vmax.f32 %v2422, 0.0
        %v2583 = vmax.f32 %v2424, 0.0
        %v2584 = vmax.f32 %v2040, 0.0
        %v2585 = vmax.f32 %v2042, 0.0
        %v2586 = vmax.f32 %v2426, 0.0
        %v2587 = vmax.f32 %v2428, 0.0
        %v2588 = vmax.f32 %v2046, 0.0
        %v2589 = vmax.f32 %v2048, 0.0
        %v2590 = vmax.f32 %v2432, 0.0
        %v2591 = vmax.f32 %v2434, 0.0
        %v2592 = vmax.f32 %v2050, 0.0
        %v2593 = vmax.f32 %v2052, 0.0
        %v2594 = vmax.f32 %v2436, 0.0
        %v2595 = vmax.f32 %v2438, 0.0
        %v2596 = vmax.f32 %v2056, 0.0
        %v2597 = vmax.f32 %v2058, 0.0
        %v2598 = vmax.f32 %v2442, 0.0
        %v2599 = vmax.f32 %v2444, 0.0
        %v2600 = vmax.f32 %v2060, 0.0
        %v2601 = vmax.f32 %v2062, 0.0
        %v2602 = vmax.f32 %v2446, 0.0
        %v2603 = vmax.f32 %v2448, 0.0
        %v2604 = vmax.f32 %v2066, 0.0
        %v2605 = vmax.f32 %v2068, 0.0
        %v2606 = vmax.f32 %v2452, 0.0
        %v2607 = vmax.f32 %v2454, 0.0
        %v2608 = vmax.f32 %v2070, 0.0
        %v2609 = vmax.f32 %v2072, 0.0
        %v2610 = vmax.f32 %v2456, 0.0
        %v2611 = vmax.f32 %v2458, 0.0
        %v2612 = vmax.f32 %v2076, 0.0
        %v2613 = vmax.f32 %v2078, 0.0
        %v2614 = vmax.f32 %v2462, 0.0
        %v2615 = vmax.f32 %v2464, 0.0
        %v2616 = vmax.f32 %v2080, 0.0
        %v2617 = vmax.f32 %v2082, 0.0
        %v2618 = vmax.f32 %v2466, 0.0
        %v2619 = vmax.f32 %v2468, 0.0
        %v2620 = vmax.f32 %v2086, 0.0
        %v2621 = vmax.f32 %v2088, 0.0
        %v2622 = vmax.f32 %v2472, 0.0
        %v2623 = vmax.f32 %v2474, 0.0
        %v2624 = vmax.f32 %v2090, 0.0
        %v2625 = vmax.f32 %v2092, 0.0
        %v2626 = vmax.f32 %v2476, 0.0
        %v2627 = vmax.f32 %v2478, 0.0
        %v2628 = vmax.f32 %v2096, 0.0
        %v2629 = vmax.f32 %v2098, 0.0
        %v2630 = vmax.f32 %v2482, 0.0
        %v2631 = vmax.f32 %v2484, 0.0
        %v2632 = vmax.f32 %v2100, 0.0
        %v2633 = vmax.f32 %v2102, 0.0
        %v2634 = vmax.f32 %v2486, 0.0
        %v2635 = vmax.f32 %v2488, 0.0
        %v2636 = vmax.f32 %v2106, 0.0
        %v2637 = vmax.f32 %v2108, 0.0
        %v2638 = vmax.f32 %v2492, 0.0
        %v2639 = vmax.f32 %v2494, 0.0
        %v2640 = vmax.f32 %v2110, 0.0
        %v2641 = vmax.f32 %v2112, 0.0
        %v2642 = vmax.f32 %v2496, 0.0
        %v2643 = vmax.f32 %v2498, 0.0
        %v2644 = vmax.f32 %v2116, 0.0
        %v2645 = vmax.f32 %v2118, 0.0
        %v2646 = vmax.f32 %v2502, 0.0
        %v2647 = vmax.f32 %v2504, 0.0
        %v2648 = vmax.f32 %v2120, 0.0
        %v2649 = vmax.f32 %v2122, 0.0
        %v2650 = vmax.f32 %v2506, 0.0
        %v2651 = vmax.f32 %v2508, 0.0
        %v2652 = vmax.f32 %v2126, 0.0
        %v2653 = vmax.f32 %v2128, 0.0
        %v2654 = vmax.f32 %v2512, 0.0
        %v2655 = vmax.f32 %v2514, 0.0
        %v2656 = vmax.f32 %v2130, 0.0
        %v2657 = vmax.f32 %v2132, 0.0
        %v2658 = vmax.f32 %v2516, 0.0
        %v2659 = vmax.f32 %v2518, 0.0
        %v2660 = vmax.f32 %v2136, 0.0
        %v2661 = vmax.f32 %v2138, 0.0
        %v2662 = vmax.f32 %v2522, 0.0
        %v2663 = vmax.f32 %v2524, 0.0
        %v2664 = vmax.f32 %v2140, 0.0
        %v2665 = vmax.f32 %v2142, 0.0
        %v2666 = vmax.f32 %v2526, 0.0
        %v2667 = vmax.f32 %v2528, 0.0
        %v2668 = vmax.f32 %v2146, 0.0
        %v2669 = vmax.f32 %v2148, 0.0
        %v2670 = vmax.f32 %v2532, 0.0
        %v2671 = vmax.f32 %v2534, 0.0
        %v2672 = vmax.f32 %v2150, 0.0
        %v2673 = vmax.f32 %v2152, 0.0
        %v2674 = vmax.f32 %v2536, 0.0
        %v2675 = vmax.f32 %v2538, 0.0
        %v2676 = vmax.f32 %v2156, 0.0
        %v2677 = vmax.f32 %v2158, 0.0
        %v2678 = vmax.f32 %v2542, 0.0
        %v2679 = vmax.f32 %v2544, 0.0
        %v2680 = vmax.f32 %v2160, 0.0
        %v2681 = vmax.f32 %v2162, 0.0
        %v2682 = vmax.f32 %v2546, 0.0
        %v2683 = vmax.f32 %v2548, 0.0
        %v2684 = vmax.f32 %v2166, 0.0
        %v2685 = vmax.f32 %v2168, 0.0
        %v2686 = vmax.f32 %v2552, 0.0
        %v2687 = vmax.f32 %v2554, 0.0
        %v2688 = vmax.f32 %v2170, 0.0
        %v2689 = vmax.f32 %v2172, 0.0
        %v2690 = vmax.f32 %v2556, 0.0
        %v2691 = vmax.f32 %v2558, 0.0
        %v2692 = vmax.f32 %v2176, 0.0
        %v2693 = vmax.f32 %v2178, 0.0
        %v2694 = vmax.f32 %v2562, 0.0
        %v2695 = vmax.f32 %v2564, 0.0
        %v2696 = vmax.f32 %v2180, 0.0
        %v2697 = vmax.f32 %v2182, 0.0
        %v2698 = vmax.f32 %v2566, 0.0
        %v2699 = vmax.f32 %v2568, 0.0
        %v2700 = vmax.f32 %v2186, 0.0
        %v2701 = vmax.f32 %v2188, 0.0
        %v2702 = vmax.f32 %v2572, 0.0
        %v2703 = vmax.f32 %v2574, 0.0
        %v2704 = vmax.f32 %v2190, 0.0
        %v2705 = vmax.f32 %v2192, 0.0
        %v2706 = vmax.f32 %v2576, 0.0
        %v2707 = vmax.f32 %v2578, 0.0
        %v2708 = vpack.c.bf16 %v2584, %v2580
        %v2709 = vpack.c.bf16 %v2585, %v2581
        %v2710 = vpack.c.bf16 %v2586, %v2582
        %v2711 = vpack.c.bf16 %v2587, %v2583
        %v2712 = vpack.c.bf16 %v2592, %v2588
        %v2713 = vpack.c.bf16 %v2593, %v2589
        %v2714 = vpack.c.bf16 %v2594, %v2590
        %v2715 = vpack.c.bf16 %v2595, %v2591
        %v2716 = vpack.c.bf16 %v2600, %v2596
        %v2717 = vpack.c.bf16 %v2601, %v2597
        %v2718 = vpack.c.bf16 %v2602, %v2598
        %v2719 = vpack.c.bf16 %v2603, %v2599
        %v2720 = vpack.c.bf16 %v2608, %v2604
        %v2721 = vpack.c.bf16 %v2609, %v2605
        %v2722 = vpack.c.bf16 %v2610, %v2606
        %v2723 = vpack.c.bf16 %v2611, %v2607
        %v2724 = vpack.c.bf16 %v2616, %v2612
        %v2725 = vpack.c.bf16 %v2617, %v2613
        %v2726 = vpack.c.bf16 %v2618, %v2614
        %v2727 = vpack.c.bf16 %v2619, %v2615
        %v2728 = vpack.c.bf16 %v2624, %v2620
        %v2729 = vpack.c.bf16 %v2625, %v2621
        %v2730 = vpack.c.bf16 %v2626, %v2622
        %v2731 = vpack.c.bf16 %v2627, %v2623
        %v2732 = vpack.c.bf16 %v2632, %v2628
        %v2733 = vpack.c.bf16 %v2633, %v2629
        %v2734 = vpack.c.bf16 %v2634, %v2630
        %v2735 = vpack.c.bf16 %v2635, %v2631
        %v2736 = vpack.c.bf16 %v2640, %v2636
        %v2737 = vpack.c.bf16 %v2641, %v2637
        %v2738 = vpack.c.bf16 %v2642, %v2638
        %v2739 = vpack.c.bf16 %v2643, %v2639
        %v2740 = vpack.c.bf16 %v2648, %v2644
        %v2741 = vpack.c.bf16 %v2649, %v2645
        %v2742 = vpack.c.bf16 %v2650, %v2646
        %v2743 = vpack.c.bf16 %v2651, %v2647
        %v2744 = vpack.c.bf16 %v2656, %v2652
        %v2745 = vpack.c.bf16 %v2657, %v2653
        %v2746 = vpack.c.bf16 %v2658, %v2654
        %v2747 = vpack.c.bf16 %v2659, %v2655
        %v2748 = vpack.c.bf16 %v2664, %v2660
        %v2749 = vpack.c.bf16 %v2665, %v2661
        %v2750 = vpack.c.bf16 %v2666, %v2662
        %v2751 = vpack.c.bf16 %v2667, %v2663
        %v2752 = vpack.c.bf16 %v2672, %v2668
        %v2753 = vpack.c.bf16 %v2673, %v2669
        %v2754 = vpack.c.bf16 %v2674, %v2670
        %v2755 = vpack.c.bf16 %v2675, %v2671
        %v2756 = vpack.c.bf16 %v2680, %v2676
        %v2757 = vpack.c.bf16 %v2681, %v2677
        %v2758 = vpack.c.bf16 %v2682, %v2678
        %v2759 = vpack.c.bf16 %v2683, %v2679
        %v2760 = vpack.c.bf16 %v2688, %v2684
        %v2761 = vpack.c.bf16 %v2689, %v2685
        %v2762 = vpack.c.bf16 %v2690, %v2686
        %v2763 = vpack.c.bf16 %v2691, %v2687
        %v2764 = vpack.c.bf16 %v2696, %v2692
        %v2765 = vpack.c.bf16 %v2697, %v2693
        %v2766 = vpack.c.bf16 %v2698, %v2694
        %v2767 = vpack.c.bf16 %v2699, %v2695
        %v2768 = vpack.c.bf16 %v2704, %v2700
        %v2769 = vpack.c.bf16 %v2705, %v2701
        %v2770 = vpack.c.bf16 %v2706, %v2702
        %v2771 = vpack.c.bf16 %v2707, %v2703
        %v2772 = vld [vmem:[#allocation7] sm:$0xff]
        %v2773 = vld [vmem:[#allocation7 + $0x8] sm:$0xff]
        %v2774 = vld [vmem:[#allocation7 + $0x10] sm:$0xff]
        %v2775 = vld [vmem:[#allocation7 + $0x18] sm:$0xff]
        %v2776 = vld [vmem:[#allocation7 + $0x20] sm:$0xff]
        %v2777 = vld [vmem:[#allocation7 + $0x28] sm:$0xff]
        %v2778 = vld [vmem:[#allocation7 + $0x30] sm:$0xff]
        %v2779 = vld [vmem:[#allocation7 + $0x38] sm:$0xff]
        %v2780 = vld [vmem:[#allocation7 + $0x40] sm:$0xff]
        %v2781 = vld [vmem:[#allocation7 + $0x48] sm:$0xff]
        %v2782 = vld [vmem:[#allocation7 + $0x50] sm:$0xff]
        %v2783 = vld [vmem:[#allocation7 + $0x58] sm:$0xff]
        %v2784 = vld [vmem:[#allocation7 + $0x60] sm:$0xff]
        %v2785 = vld [vmem:[#allocation7 + $0x68] sm:$0xff]
        %v2786 = vld [vmem:[#allocation7 + $0x70] sm:$0xff]
        %v2787 = vld [vmem:[#allocation7 + $0x78] sm:$0xff]
        %v2788 = vld [vmem:[#allocation7 + $0x80] sm:$0xff]
        %v2789 = vld [vmem:[#allocation7 + $0x88] sm:$0xff]
        %v2790 = vld [vmem:[#allocation7 + $0x90] sm:$0xff]
        %v2791 = vld [vmem:[#allocation7 + $0x98] sm:$0xff]
        %v2792 = vld [vmem:[#allocation7 + $0xa0] sm:$0xff]
        %v2793 = vld [vmem:[#allocation7 + $0xa8] sm:$0xff]
        %v2794 = vld [vmem:[#allocation7 + $0xb0] sm:$0xff]
        %v2795 = vld [vmem:[#allocation7 + $0xb8] sm:$0xff]
        %v2796 = vld [vmem:[#allocation7 + $0xc0] sm:$0xff]
        %v2797 = vld [vmem:[#allocation7 + $0xc8] sm:$0xff]
        %v2798 = vld [vmem:[#allocation7 + $0xd0] sm:$0xff]
        %v2799 = vld [vmem:[#allocation7 + $0xd8] sm:$0xff]
        %v2800 = vld [vmem:[#allocation7 + $0xe0] sm:$0xff]
        %v2801 = vld [vmem:[#allocation7 + $0xe8] sm:$0xff]
        %v2802 = vld [vmem:[#allocation7 + $0xf0] sm:$0xff]
        %v2803 = vld [vmem:[#allocation7 + $0xf8] sm:$0xff]
        %v2804 = vld [vmem:[#allocation7 + $0x100] sm:$0xff]
        %v2805 = vld [vmem:[#allocation7 + $0x108] sm:$0xff]
        %v2806 = vld [vmem:[#allocation7 + $0x110] sm:$0xff]
        %v2807 = vld [vmem:[#allocation7 + $0x118] sm:$0xff]
        %v2808 = vld [vmem:[#allocation7 + $0x120] sm:$0xff]
        %v2809 = vld [vmem:[#allocation7 + $0x128] sm:$0xff]
        %v2810 = vld [vmem:[#allocation7 + $0x130] sm:$0xff]
        %v2811 = vld [vmem:[#allocation7 + $0x138] sm:$0xff]
        %v2812 = vld [vmem:[#allocation7 + $0x140] sm:$0xff]
        %v2813 = vld [vmem:[#allocation7 + $0x148] sm:$0xff]
        %v2814 = vld [vmem:[#allocation7 + $0x150] sm:$0xff]
        %v2815 = vld [vmem:[#allocation7 + $0x158] sm:$0xff]
        %v2816 = vld [vmem:[#allocation7 + $0x160] sm:$0xff]
        %v2817 = vld [vmem:[#allocation7 + $0x168] sm:$0xff]
        %v2818 = vld [vmem:[#allocation7 + $0x170] sm:$0xff]
        %v2819 = vld [vmem:[#allocation7 + $0x178] sm:$0xff]
        %v2820 = vld [vmem:[#allocation7 + $0x180] sm:$0xff]
        %v2821 = vld [vmem:[#allocation7 + $0x188] sm:$0xff]
        %v2822 = vld [vmem:[#allocation7 + $0x190] sm:$0xff]
        %v2823 = vld [vmem:[#allocation7 + $0x198] sm:$0xff]
        %v2824 = vld [vmem:[#allocation7 + $0x1a0] sm:$0xff]
        %v2825 = vld [vmem:[#allocation7 + $0x1a8] sm:$0xff]
        %v2826 = vld [vmem:[#allocation7 + $0x1b0] sm:$0xff]
        %v2827 = vld [vmem:[#allocation7 + $0x1b8] sm:$0xff]
        %v2828 = vld [vmem:[#allocation7 + $0x1c0] sm:$0xff]
        %v2829 = vld [vmem:[#allocation7 + $0x1c8] sm:$0xff]
        %v2830 = vld [vmem:[#allocation7 + $0x1d0] sm:$0xff]
        %v2831 = vld [vmem:[#allocation7 + $0x1d8] sm:$0xff]
        %v2832 = vld [vmem:[#allocation7 + $0x1e0] sm:$0xff]
        %v2833 = vld [vmem:[#allocation7 + $0x1e8] sm:$0xff]
        %v2834 = vld [vmem:[#allocation7 + $0x1f0] sm:$0xff]
        %v2835 = vld [vmem:[#allocation7 + $0x1f8] sm:$0xff]
        %v2836 = vld [vmem:[#allocation7 + $0x200] sm:$0xff]
        %v2837 = vld [vmem:[#allocation7 + $0x208] sm:$0xff]
        %v2838 = vld [vmem:[#allocation7 + $0x210] sm:$0xff]
        %v2839 = vld [vmem:[#allocation7 + $0x218] sm:$0xff]
        %v2840 = vld [vmem:[#allocation7 + $0x220] sm:$0xff]
        %v2841 = vld [vmem:[#allocation7 + $0x228] sm:$0xff]
        %v2842 = vld [vmem:[#allocation7 + $0x230] sm:$0xff]
        %v2843 = vld [vmem:[#allocation7 + $0x238] sm:$0xff]
        %v2844 = vld [vmem:[#allocation7 + $0x240] sm:$0xff]
        %v2845 = vld [vmem:[#allocation7 + $0x248] sm:$0xff]
        %v2846 = vld [vmem:[#allocation7 + $0x250] sm:$0xff]
        %v2847 = vld [vmem:[#allocation7 + $0x258] sm:$0xff]
        %v2848 = vld [vmem:[#allocation7 + $0x260] sm:$0xff]
        %v2849 = vld [vmem:[#allocation7 + $0x268] sm:$0xff]
        %v2850 = vld [vmem:[#allocation7 + $0x270] sm:$0xff]
        %v2851 = vld [vmem:[#allocation7 + $0x278] sm:$0xff]
        %v2852 = vld [vmem:[#allocation7 + $0x280] sm:$0xff]
        %v2853 = vld [vmem:[#allocation7 + $0x288] sm:$0xff]
        %v2854 = vld [vmem:[#allocation7 + $0x290] sm:$0xff]
        %v2855 = vld [vmem:[#allocation7 + $0x298] sm:$0xff]
        %v2856 = vld [vmem:[#allocation7 + $0x2a0] sm:$0xff]
        %v2857 = vld [vmem:[#allocation7 + $0x2a8] sm:$0xff]
        %v2858 = vld [vmem:[#allocation7 + $0x2b0] sm:$0xff]
        %v2859 = vld [vmem:[#allocation7 + $0x2b8] sm:$0xff]
        %v2860 = vld [vmem:[#allocation7 + $0x2c0] sm:$0xff]
        %v2861 = vld [vmem:[#allocation7 + $0x2c8] sm:$0xff]
        %v2862 = vld [vmem:[#allocation7 + $0x2d0] sm:$0xff]
        %v2863 = vld [vmem:[#allocation7 + $0x2d8] sm:$0xff]
        %v2864 = vld [vmem:[#allocation7 + $0x2e0] sm:$0xff]
        %v2865 = vld [vmem:[#allocation7 + $0x2e8] sm:$0xff]
        %v2866 = vld [vmem:[#allocation7 + $0x2f0] sm:$0xff]
        %v2867 = vld [vmem:[#allocation7 + $0x2f8] sm:$0xff]
        %v2868 = vld [vmem:[#allocation7 + $0x300] sm:$0xff]
        %v2869 = vld [vmem:[#allocation7 + $0x308] sm:$0xff]
        %v2870 = vld [vmem:[#allocation7 + $0x310] sm:$0xff]
        %v2871 = vld [vmem:[#allocation7 + $0x318] sm:$0xff]
        %v2872 = vld [vmem:[#allocation7 + $0x320] sm:$0xff]
        %v2873 = vld [vmem:[#allocation7 + $0x328] sm:$0xff]
        %v2874 = vld [vmem:[#allocation7 + $0x330] sm:$0xff]
        %v2875 = vld [vmem:[#allocation7 + $0x338] sm:$0xff]
        %v2876 = vld [vmem:[#allocation7 + $0x340] sm:$0xff]
        %v2877 = vld [vmem:[#allocation7 + $0x348] sm:$0xff]
        %v2878 = vld [vmem:[#allocation7 + $0x350] sm:$0xff]
        %v2879 = vld [vmem:[#allocation7 + $0x358] sm:$0xff]
        %v2880 = vld [vmem:[#allocation7 + $0x360] sm:$0xff]
        %v2881 = vld [vmem:[#allocation7 + $0x368] sm:$0xff]
        %v2882 = vld [vmem:[#allocation7 + $0x370] sm:$0xff]
        %v2883 = vld [vmem:[#allocation7 + $0x378] sm:$0xff]
        %v2884 = vld [vmem:[#allocation7 + $0x380] sm:$0xff]
        %v2885 = vld [vmem:[#allocation7 + $0x388] sm:$0xff]
        %v2886 = vld [vmem:[#allocation7 + $0x390] sm:$0xff]
        %v2887 = vld [vmem:[#allocation7 + $0x398] sm:$0xff]
        %v2888 = vld [vmem:[#allocation7 + $0x3a0] sm:$0xff]
        %v2889 = vld [vmem:[#allocation7 + $0x3a8] sm:$0xff]
        %v2890 = vld [vmem:[#allocation7 + $0x3b0] sm:$0xff]
        %v2891 = vld [vmem:[#allocation7 + $0x3b8] sm:$0xff]
        %v2892 = vld [vmem:[#allocation7 + $0x3c0] sm:$0xff]
        %v2893 = vld [vmem:[#allocation7 + $0x3c8] sm:$0xff]
        %v2894 = vld [vmem:[#allocation7 + $0x3d0] sm:$0xff]
        %v2895 = vld [vmem:[#allocation7 + $0x3d8] sm:$0xff]
        %v2896 = vld [vmem:[#allocation7 + $0x3e0] sm:$0xff]
        %v2897 = vld [vmem:[#allocation7 + $0x3e8] sm:$0xff]
        %v2898 = vld [vmem:[#allocation7 + $0x3f0] sm:$0xff]
        %v2899 = vld [vmem:[#allocation7 + $0x3f8] sm:$0xff]
        %v2900 = vld [vmem:[%s4] sm:$0xf]
        %v2902 = vlaneseq
        %v2903 = vshrl.u32 %v2902, 7
        %v2904 = vsub.s32 0, %v2903
        %v2905 = vrot.slane %v2900, %v2904
        %v2906 = vlaneseq
        %v2907 = vshrl.u32 %v2906, 7
        %v2908 = vsub.s32 1, %v2907
        %v2909 = vrot.slane %v2900, %v2908
        %v2910 = vlaneseq
        %v2911 = vshrl.u32 %v2910, 7
        %v2912 = vsub.s32 2, %v2911
        %v2913 = vrot.slane %v2900, %v2912
        %v2914 = vlaneseq
        %v2915 = vshrl.u32 %v2914, 7
        %v2916 = vsub.s32 3, %v2915
        %v2917 = vrot.slane %v2900, %v2916
        %v3050 = vunpack.c.l.b16 %v2772
        %v3051 = vunpack.c.h.b16 %v2772
        %v3052 = vunpack.c.l.b16 %v2773
        %v3053 = vunpack.c.h.b16 %v2773
        %v3054 = vunpack.c.l.b16 %v2774
        %v3055 = vunpack.c.h.b16 %v2774
        %v3056 = vunpack.c.l.b16 %v2775
        %v3057 = vunpack.c.h.b16 %v2775
        %v3058 = vunpack.c.l.b16 %v2776
        %v3059 = vunpack.c.h.b16 %v2776
        %v3060 = vunpack.c.l.b16 %v2777
        %v3061 = vunpack.c.h.b16 %v2777
        %v3062 = vunpack.c.l.b16 %v2778
        %v3063 = vunpack.c.h.b16 %v2778
        %v3064 = vunpack.c.l.b16 %v2779
        %v3065 = vunpack.c.h.b16 %v2779
        %v3066 = vunpack.c.l.b16 %v2780
        %v3067 = vunpack.c.h.b16 %v2780
        %v3068 = vunpack.c.l.b16 %v2781
        %v3069 = vunpack.c.h.b16 %v2781
        %v3070 = vunpack.c.l.b16 %v2782
        %v3071 = vunpack.c.h.b16 %v2782
        %v3072 = vunpack.c.l.b16 %v2783
        %v3073 = vunpack.c.h.b16 %v2783
        %v3074 = vunpack.c.l.b16 %v2784
        %v3075 = vunpack.c.h.b16 %v2784
        %v3076 = vunpack.c.l.b16 %v2785
        %v3077 = vunpack.c.h.b16 %v2785
        %v3078 = vunpack.c.l.b16 %v2786
        %v3079 = vunpack.c.h.b16 %v2786
        %v3080 = vunpack.c.l.b16 %v2787
        %v3081 = vunpack.c.h.b16 %v2787
        %v3082 = vunpack.c.l.b16 %v2788
        %v3083 = vunpack.c.h.b16 %v2788
        %v3084 = vunpack.c.l.b16 %v2789
        %v3085 = vunpack.c.h.b16 %v2789
        %v3086 = vunpack.c.l.b16 %v2790
        %v3087 = vunpack.c.h.b16 %v2790
        %v3088 = vunpack.c.l.b16 %v2791
        %v3089 = vunpack.c.h.b16 %v2791
        %v3090 = vunpack.c.l.b16 %v2792
        %v3091 = vunpack.c.h.b16 %v2792
        %v3092 = vunpack.c.l.b16 %v2793
        %v3093 = vunpack.c.h.b16 %v2793
        %v3094 = vunpack.c.l.b16 %v2794
        %v3095 = vunpack.c.h.b16 %v2794
        %v3096 = vunpack.c.l.b16 %v2795
        %v3097 = vunpack.c.h.b16 %v2795
        %v3098 = vunpack.c.l.b16 %v2796
        %v3099 = vunpack.c.h.b16 %v2796
        %v3100 = vunpack.c.l.b16 %v2797
        %v3101 = vunpack.c.h.b16 %v2797
        %v3102 = vunpack.c.l.b16 %v2798
        %v3103 = vunpack.c.h.b16 %v2798
        %v3104 = vunpack.c.l.b16 %v2799
        %v3105 = vunpack.c.h.b16 %v2799
        %v3106 = vunpack.c.l.b16 %v2800
        %v3107 = vunpack.c.h.b16 %v2800
        %v3108 = vunpack.c.l.b16 %v2801
        %v3109 = vunpack.c.h.b16 %v2801
        %v3110 = vunpack.c.l.b16 %v2802
        %v3111 = vunpack.c.h.b16 %v2802
        %v3112 = vunpack.c.l.b16 %v2803
        %v3113 = vunpack.c.h.b16 %v2803
        %v3114 = vunpack.c.l.b16 %v2804
        %v3115 = vunpack.c.h.b16 %v2804
        %v3116 = vunpack.c.l.b16 %v2805
        %v3117 = vunpack.c.h.b16 %v2805
        %v3118 = vunpack.c.l.b16 %v2806
        %v3119 = vunpack.c.h.b16 %v2806
        %v3120 = vunpack.c.l.b16 %v2807
        %v3121 = vunpack.c.h.b16 %v2807
        %v3122 = vunpack.c.l.b16 %v2808
        %v3123 = vunpack.c.h.b16 %v2808
        %v3124 = vunpack.c.l.b16 %v2809
        %v3125 = vunpack.c.h.b16 %v2809
        %v3126 = vunpack.c.l.b16 %v2810
        %v3127 = vunpack.c.h.b16 %v2810
        %v3128 = vunpack.c.l.b16 %v2811
        %v3129 = vunpack.c.h.b16 %v2811
        %v3130 = vunpack.c.l.b16 %v2812
        %v3131 = vunpack.c.h.b16 %v2812
        %v3132 = vunpack.c.l.b16 %v2813
        %v3133 = vunpack.c.h.b16 %v2813
        %v3134 = vunpack.c.l.b16 %v2814
        %v3135 = vunpack.c.h.b16 %v2814
        %v3136 = vunpack.c.l.b16 %v2815
        %v3137 = vunpack.c.h.b16 %v2815
        %v3138 = vunpack.c.l.b16 %v2816
        %v3139 = vunpack.c.h.b16 %v2816
        %v3140 = vunpack.c.l.b16 %v2817
        %v3141 = vunpack.c.h.b16 %v2817
        %v3142 = vunpack.c.l.b16 %v2818
        %v3143 = vunpack.c.h.b16 %v2818
        %v3144 = vunpack.c.l.b16 %v2819
        %v3145 = vunpack.c.h.b16 %v2819
        %v3146 = vunpack.c.l.b16 %v2820
        %v3147 = vunpack.c.h.b16 %v2820
        %v3148 = vunpack.c.l.b16 %v2821
        %v3149 = vunpack.c.h.b16 %v2821
        %v3150 = vunpack.c.l.b16 %v2822
        %v3151 = vunpack.c.h.b16 %v2822
        %v3152 = vunpack.c.l.b16 %v2823
        %v3153 = vunpack.c.h.b16 %v2823
        %v3154 = vunpack.c.l.b16 %v2824
        %v3155 = vunpack.c.h.b16 %v2824
        %v3156 = vunpack.c.l.b16 %v2825
        %v3157 = vunpack.c.h.b16 %v2825
        %v3158 = vunpack.c.l.b16 %v2826
        %v3159 = vunpack.c.h.b16 %v2826
        %v3160 = vunpack.c.l.b16 %v2827
        %v3161 = vunpack.c.h.b16 %v2827
        %v3162 = vunpack.c.l.b16 %v2828
        %v3163 = vunpack.c.h.b16 %v2828
        %v3164 = vunpack.c.l.b16 %v2829
        %v3165 = vunpack.c.h.b16 %v2829
        %v3166 = vunpack.c.l.b16 %v2830
        %v3167 = vunpack.c.h.b16 %v2830
        %v3168 = vunpack.c.l.b16 %v2831
        %v3169 = vunpack.c.h.b16 %v2831
        %v3170 = vunpack.c.l.b16 %v2832
        %v3171 = vunpack.c.h.b16 %v2832
        %v3172 = vunpack.c.l.b16 %v2833
        %v3173 = vunpack.c.h.b16 %v2833
        %v3174 = vunpack.c.l.b16 %v2834
        %v3175 = vunpack.c.h.b16 %v2834
        %v3176 = vunpack.c.l.b16 %v2835
        %v3177 = vunpack.c.h.b16 %v2835
        %v3178 = vunpack.c.l.b16 %v2836
        %v3179 = vunpack.c.h.b16 %v2836
        %v3180 = vunpack.c.l.b16 %v2837
        %v3181 = vunpack.c.h.b16 %v2837
        %v3182 = vunpack.c.l.b16 %v2838
        %v3183 = vunpack.c.h.b16 %v2838
        %v3184 = vunpack.c.l.b16 %v2839
        %v3185 = vunpack.c.h.b16 %v2839
        %v3186 = vunpack.c.l.b16 %v2840
        %v3187 = vunpack.c.h.b16 %v2840
        %v3188 = vunpack.c.l.b16 %v2841
        %v3189 = vunpack.c.h.b16 %v2841
        %v3190 = vunpack.c.l.b16 %v2842
        %v3191 = vunpack.c.h.b16 %v2842
        %v3192 = vunpack.c.l.b16 %v2843
        %v3193 = vunpack.c.h.b16 %v2843
        %v3194 = vunpack.c.l.b16 %v2844
        %v3195 = vunpack.c.h.b16 %v2844
        %v3196 = vunpack.c.l.b16 %v2845
        %v3197 = vunpack.c.h.b16 %v2845
        %v3198 = vunpack.c.l.b16 %v2846
        %v3199 = vunpack.c.h.b16 %v2846
        %v3200 = vunpack.c.l.b16 %v2847
        %v3201 = vunpack.c.h.b16 %v2847
        %v3202 = vunpack.c.l.b16 %v2848
        %v3203 = vunpack.c.h.b16 %v2848
        %v3204 = vunpack.c.l.b16 %v2849
        %v3205 = vunpack.c.h.b16 %v2849
        %v3206 = vunpack.c.l.b16 %v2850
        %v3207 = vunpack.c.h.b16 %v2850
        %v3208 = vunpack.c.l.b16 %v2851
        %v3209 = vunpack.c.h.b16 %v2851
        %v3210 = vunpack.c.l.b16 %v2852
        %v3211 = vunpack.c.h.b16 %v2852
        %v3212 = vunpack.c.l.b16 %v2853
        %v3213 = vunpack.c.h.b16 %v2853
        %v3214 = vunpack.c.l.b16 %v2854
        %v3215 = vunpack.c.h.b16 %v2854
        %v3216 = vunpack.c.l.b16 %v2855
        %v3217 = vunpack.c.h.b16 %v2855
        %v3218 = vunpack.c.l.b16 %v2856
        %v3219 = vunpack.c.h.b16 %v2856
        %v3220 = vunpack.c.l.b16 %v2857
        %v3221 = vunpack.c.h.b16 %v2857
        %v3222 = vunpack.c.l.b16 %v2858
        %v3223 = vunpack.c.h.b16 %v2858
        %v3224 = vunpack.c.l.b16 %v2859
        %v3225 = vunpack.c.h.b16 %v2859
        %v3226 = vunpack.c.l.b16 %v2860
        %v3227 = vunpack.c.h.b16 %v2860
        %v3228 = vunpack.c.l.b16 %v2861
        %v3229 = vunpack.c.h.b16 %v2861
        %v3230 = vunpack.c.l.b16 %v2862
        %v3231 = vunpack.c.h.b16 %v2862
        %v3232 = vunpack.c.l.b16 %v2863
        %v3233 = vunpack.c.h.b16 %v2863
        %v3234 = vunpack.c.l.b16 %v2864
        %v3235 = vunpack.c.h.b16 %v2864
        %v3236 = vunpack.c.l.b16 %v2865
        %v3237 = vunpack.c.h.b16 %v2865
        %v3238 = vunpack.c.l.b16 %v2866
        %v3239 = vunpack.c.h.b16 %v2866
        %v3240 = vunpack.c.l.b16 %v2867
        %v3241 = vunpack.c.h.b16 %v2867
        %v3242 = vunpack.c.l.b16 %v2868
        %v3243 = vunpack.c.h.b16 %v2868
        %v3244 = vunpack.c.l.b16 %v2869
        %v3245 = vunpack.c.h.b16 %v2869
        %v3246 = vunpack.c.l.b16 %v2870
        %v3247 = vunpack.c.h.b16 %v2870
        %v3248 = vunpack.c.l.b16 %v2871
        %v3249 = vunpack.c.h.b16 %v2871
        %v3250 = vunpack.c.l.b16 %v2872
        %v3251 = vunpack.c.h.b16 %v2872
        %v3252 = vunpack.c.l.b16 %v2873
        %v3253 = vunpack.c.h.b16 %v2873
        %v3254 = vunpack.c.l.b16 %v2874
        %v3255 = vunpack.c.h.b16 %v2874
        %v3256 = vunpack.c.l.b16 %v2875
        %v3257 = vunpack.c.h.b16 %v2875
        %v3258 = vunpack.c.l.b16 %v2876
        %v3259 = vunpack.c.h.b16 %v2876
        %v3260 = vunpack.c.l.b16 %v2877
        %v3261 = vunpack.c.h.b16 %v2877
        %v3262 = vunpack.c.l.b16 %v2878
        %v3263 = vunpack.c.h.b16 %v2878
        %v3264 = vunpack.c.l.b16 %v2879
        %v3265 = vunpack.c.h.b16 %v2879
        %v3266 = vunpack.c.l.b16 %v2880
        %v3267 = vunpack.c.h.b16 %v2880
        %v3268 = vunpack.c.l.b16 %v2881
        %v3269 = vunpack.c.h.b16 %v2881
        %v3270 = vunpack.c.l.b16 %v2882
        %v3271 = vunpack.c.h.b16 %v2882
        %v3272 = vunpack.c.l.b16 %v2883
        %v3273 = vunpack.c.h.b16 %v2883
        %v3274 = vunpack.c.l.b16 %v2884
        %v3275 = vunpack.c.h.b16 %v2884
        %v3276 = vunpack.c.l.b16 %v2885
        %v3277 = vunpack.c.h.b16 %v2885
        %v3278 = vunpack.c.l.b16 %v2886
        %v3279 = vunpack.c.h.b16 %v2886
        %v3280 = vunpack.c.l.b16 %v2887
        %v3281 = vunpack.c.h.b16 %v2887
        %v3282 = vunpack.c.l.b16 %v2888
        %v3283 = vunpack.c.h.b16 %v2888
        %v3284 = vunpack.c.l.b16 %v2889
        %v3285 = vunpack.c.h.b16 %v2889
        %v3286 = vunpack.c.l.b16 %v2890
        %v3287 = vunpack.c.h.b16 %v2890
        %v3288 = vunpack.c.l.b16 %v2891
        %v3289 = vunpack.c.h.b16 %v2891
        %v3290 = vunpack.c.l.b16 %v2892
        %v3291 = vunpack.c.h.b16 %v2892
        %v3292 = vunpack.c.l.b16 %v2893
        %v3293 = vunpack.c.h.b16 %v2893
        %v3294 = vunpack.c.l.b16 %v2894
        %v3295 = vunpack.c.h.b16 %v2894
        %v3296 = vunpack.c.l.b16 %v2895
        %v3297 = vunpack.c.h.b16 %v2895
        %v3298 = vunpack.c.l.b16 %v2896
        %v3299 = vunpack.c.h.b16 %v2896
        %v3300 = vunpack.c.l.b16 %v2897
        %v3301 = vunpack.c.h.b16 %v2897
        %v3302 = vunpack.c.l.b16 %v2898
        %v3303 = vunpack.c.h.b16 %v2898
        %v3304 = vunpack.c.l.b16 %v2899
        %v3305 = vunpack.c.h.b16 %v2899
        %v3306 = vpack.c.b16 %v3054, %v3050
        %v3307 = vpack.c.b16 %v3055, %v3051
        %v3308 = vpack.c.b16 %v3056, %v3052
        %v3309 = vpack.c.b16 %v3057, %v3053
        %v3310 = vpack.c.b16 %v3062, %v3058
        %v3311 = vpack.c.b16 %v3063, %v3059
        %v3312 = vpack.c.b16 %v3064, %v3060
        %v3313 = vpack.c.b16 %v3065, %v3061
        %v3314 = vpack.c.b16 %v3070, %v3066
        %v3315 = vpack.c.b16 %v3071, %v3067
        %v3316 = vpack.c.b16 %v3072, %v3068
        %v3317 = vpack.c.b16 %v3073, %v3069
        %v3318 = vpack.c.b16 %v3078, %v3074
        %v3319 = vpack.c.b16 %v3079, %v3075
        %v3320 = vpack.c.b16 %v3080, %v3076
        %v3321 = vpack.c.b16 %v3081, %v3077
        %v3322 = vpack.c.b16 %v3086, %v3082
        %v3323 = vpack.c.b16 %v3087, %v3083
        %v3324 = vpack.c.b16 %v3088, %v3084
        %v3325 = vpack.c.b16 %v3089, %v3085
        %v3326 = vpack.c.b16 %v3094, %v3090
        %v3327 = vpack.c.b16 %v3095, %v3091
        %v3328 = vpack.c.b16 %v3096, %v3092
        %v3329 = vpack.c.b16 %v3097, %v3093
        %v3330 = vpack.c.b16 %v3102, %v3098
        %v3331 = vpack.c.b16 %v3103, %v3099
        %v3332 = vpack.c.b16 %v3104, %v3100
        %v3333 = vpack.c.b16 %v3105, %v3101
        %v3334 = vpack.c.b16 %v3110, %v3106
        %v3335 = vpack.c.b16 %v3111, %v3107
        %v3336 = vpack.c.b16 %v3112, %v3108
        %v3337 = vpack.c.b16 %v3113, %v3109
        %v3338 = vpack.c.b16 %v3118, %v3114
        %v3339 = vpack.c.b16 %v3119, %v3115
        %v3340 = vpack.c.b16 %v3120, %v3116
        %v3341 = vpack.c.b16 %v3121, %v3117
        %v3342 = vpack.c.b16 %v3126, %v3122
        %v3343 = vpack.c.b16 %v3127, %v3123
        %v3344 = vpack.c.b16 %v3128, %v3124
        %v3345 = vpack.c.b16 %v3129, %v3125
        %v3346 = vpack.c.b16 %v3134, %v3130
        %v3347 = vpack.c.b16 %v3135, %v3131
        %v3348 = vpack.c.b16 %v3136, %v3132
        %v3349 = vpack.c.b16 %v3137, %v3133
        %v3350 = vpack.c.b16 %v3142, %v3138
        %v3351 = vpack.c.b16 %v3143, %v3139
        %v3352 = vpack.c.b16 %v3144, %v3140
        %v3353 = vpack.c.b16 %v3145, %v3141
        %v3354 = vpack.c.b16 %v3150, %v3146
        %v3355 = vpack.c.b16 %v3151, %v3147
        %v3356 = vpack.c.b16 %v3152, %v3148
        %v3357 = vpack.c.b16 %v3153, %v3149
        %v3358 = vpack.c.b16 %v3158, %v3154
        %v3359 = vpack.c.b16 %v3159, %v3155
        %v3360 = vpack.c.b16 %v3160, %v3156
        %v3361 = vpack.c.b16 %v3161, %v3157
        %v3362 = vpack.c.b16 %v3166, %v3162
        %v3363 = vpack.c.b16 %v3167, %v3163
        %v3364 = vpack.c.b16 %v3168, %v3164
        %v3365 = vpack.c.b16 %v3169, %v3165
        %v3366 = vpack.c.b16 %v3174, %v3170
        %v3367 = vpack.c.b16 %v3175, %v3171
        %v3368 = vpack.c.b16 %v3176, %v3172
        %v3369 = vpack.c.b16 %v3177, %v3173
        %v3370 = vpack.c.b16 %v3182, %v3178
        %v3371 = vpack.c.b16 %v3183, %v3179
        %v3372 = vpack.c.b16 %v3184, %v3180
        %v3373 = vpack.c.b16 %v3185, %v3181
        %v3374 = vpack.c.b16 %v3190, %v3186
        %v3375 = vpack.c.b16 %v3191, %v3187
        %v3376 = vpack.c.b16 %v3192, %v3188
        %v3377 = vpack.c.b16 %v3193, %v3189
        %v3378 = vpack.c.b16 %v3198, %v3194
        %v3379 = vpack.c.b16 %v3199, %v3195
        %v3380 = vpack.c.b16 %v3200, %v3196
        %v3381 = vpack.c.b16 %v3201, %v3197
        %v3382 = vpack.c.b16 %v3206, %v3202
        %v3383 = vpack.c.b16 %v3207, %v3203
        %v3384 = vpack.c.b16 %v3208, %v3204
        %v3385 = vpack.c.b16 %v3209, %v3205
        %v3386 = vpack.c.b16 %v3214, %v3210
        %v3387 = vpack.c.b16 %v3215, %v3211
        %v3388 = vpack.c.b16 %v3216, %v3212
        %v3389 = vpack.c.b16 %v3217, %v3213
        %v3390 = vpack.c.b16 %v3222, %v3218
        %v3391 = vpack.c.b16 %v3223, %v3219
        %v3392 = vpack.c.b16 %v3224, %v3220
        %v3393 = vpack.c.b16 %v3225, %v3221
        %v3394 = vpack.c.b16 %v3230, %v3226
        %v3395 = vpack.c.b16 %v3231, %v3227
        %v3396 = vpack.c.b16 %v3232, %v3228
        %v3397 = vpack.c.b16 %v3233, %v3229
        %v3398 = vpack.c.b16 %v3238, %v3234
        %v3399 = vpack.c.b16 %v3239, %v3235
        %v3400 = vpack.c.b16 %v3240, %v3236
        %v3401 = vpack.c.b16 %v3241, %v3237
        %v3402 = vpack.c.b16 %v3246, %v3242
        %v3403 = vpack.c.b16 %v3247, %v3243
        %v3404 = vpack.c.b16 %v3248, %v3244
        %v3405 = vpack.c.b16 %v3249, %v3245
        %v3406 = vpack.c.b16 %v3254, %v3250
        %v3407 = vpack.c.b16 %v3255, %v3251
        %v3408 = vpack.c.b16 %v3256, %v3252
        %v3409 = vpack.c.b16 %v3257, %v3253
        %v3410 = vpack.c.b16 %v3262, %v3258
        %v3411 = vpack.c.b16 %v3263, %v3259
        %v3412 = vpack.c.b16 %v3264, %v3260
        %v3413 = vpack.c.b16 %v3265, %v3261
        %v3414 = vpack.c.b16 %v3270, %v3266
        %v3415 = vpack.c.b16 %v3271, %v3267
        %v3416 = vpack.c.b16 %v3272, %v3268
        %v3417 = vpack.c.b16 %v3273, %v3269
        %v3418 = vpack.c.b16 %v3278, %v3274
        %v3419 = vpack.c.b16 %v3279, %v3275
        %v3420 = vpack.c.b16 %v3280, %v3276
        %v3421 = vpack.c.b16 %v3281, %v3277
        %v3422 = vpack.c.b16 %v3286, %v3282
        %v3423 = vpack.c.b16 %v3287, %v3283
        %v3424 = vpack.c.b16 %v3288, %v3284
        %v3425 = vpack.c.b16 %v3289, %v3285
        %v3426 = vpack.c.b16 %v3294, %v3290
        %v3427 = vpack.c.b16 %v3295, %v3291
        %v3428 = vpack.c.b16 %v3296, %v3292
        %v3429 = vpack.c.b16 %v3297, %v3293
        %v3430 = vpack.c.b16 %v3302, %v3298
        %v3431 = vpack.c.b16 %v3303, %v3299
        %v3432 = vpack.c.b16 %v3304, %v3300
        %v3433 = vpack.c.b16 %v3305, %v3301
        %3562 = vmatprep.subr.bf16.mxu0 %v3307
        %3563 = vmatpush1.bf16.msra.mxu0 %v3306
        %3564 = vmatprep.subr.bf16.mxu0 %v3311
        %3565 = vmatpush1.bf16.msra.mxu0 %v3310
        %3566 = vmatprep.subr.bf16.mxu0 %v3315
        %3567 = vmatpush1.bf16.msra.mxu0 %v3314
        %3568 = vmatprep.subr.bf16.mxu0 %v3319
        %3569 = vmatpush1.bf16.msra.mxu0 %v3318
        %3570 = vmatprep.subr.bf16.mxu0 %v3323
        %3571 = vmatpush1.bf16.msra.mxu0 %v3322
        %3572 = vmatprep.subr.bf16.mxu0 %v3327
        %3573 = vmatpush1.bf16.msra.mxu0 %v3326
        %3574 = vmatprep.subr.bf16.mxu0 %v3331
        %3575 = vmatpush1.bf16.msra.mxu0 %v3330
        %3576 = vmatprep.subr.bf16.mxu0 %v3335
        %3577 = vmatpush1.bf16.msra.mxu0 %v3334
        %3578 = vmatprep.subr.bf16.mxu0 %v3339
        %3579 = vmatpush1.bf16.msra.mxu0 %v3338
        %3580 = vmatprep.subr.bf16.mxu0 %v3343
        %3581 = vmatpush1.bf16.msra.mxu0 %v3342
        %3582 = vmatprep.subr.bf16.mxu0 %v3347
        %3583 = vmatpush1.bf16.msra.mxu0 %v3346
        %3584 = vmatprep.subr.bf16.mxu0 %v3351
        %3585 = vmatpush1.bf16.msra.mxu0 %v3350
        %3586 = vmatprep.subr.bf16.mxu0 %v3355
        %3587 = vmatpush1.bf16.msra.mxu0 %v3354
        %3588 = vmatprep.subr.bf16.mxu0 %v3359
        %3589 = vmatpush1.bf16.msra.mxu0 %v3358
        %3590 = vmatprep.subr.bf16.mxu0 %v3363
        %3591 = vmatpush1.bf16.msra.mxu0 %v3362
        %3592 = vmatprep.subr.bf16.mxu0 %v3367
        %3593 = vmatpush1.bf16.msra.mxu0 %v3366
        %3594 = vmatprep.mubr.bf16.mxu0 %v2709
        %3595 = vmatmul.mubr.bf16.gmra.mrb[0].mxu0 %v2708
        %v3596 = vpop.f32.mrb[0].mxu0
        %v3597 = vadd.f32 %v2905, %v3596
        %v3598 = vpop.f32.mrb[0].mxu0
        %v3599 = vadd.f32 %v2909, %v3598
        %v3600 = vpop.f32.mrb[0].mxu0
        %v3601 = vadd.f32 %v2905, %v3600
        %v3602 = vpop.f32.mrb[0].mxu0
        %v3603 = vadd.f32 %v2909, %v3602
        %3604 = vmatprep.mubr.bf16.mxu0 %v2713
        %3605 = vmatmul.mubr.bf16.gmra.mrb[0].mxu0 %v2712
        %v3606 = vpop.f32.mrb[0].mxu0
        %v3607 = vadd.f32 %v2905, %v3606
        %v3608 = vpop.f32.mrb[0].mxu0
        %v3609 = vadd.f32 %v2909, %v3608
        %v3610 = vpop.f32.mrb[0].mxu0
        %v3611 = vadd.f32 %v2905, %v3610
        %v3612 = vpop.f32.mrb[0].mxu0
        %v3613 = vadd.f32 %v2909, %v3612
        %3614 = vmatprep.mubr.bf16.mxu0 %v2717
        %3615 = vmatmul.mubr.bf16.gmra.mrb[0].mxu0 %v2716
        %v3616 = vpop.f32.mrb[0].mxu0
        %v3617 = vadd.f32 %v2905, %v3616
        %v3618 = vpop.f32.mrb[0].mxu0
        %v3619 = vadd.f32 %v2909, %v3618
        %v3620 = vpop.f32.mrb[0].mxu0
        %v3621 = vadd.f32 %v2905, %v3620
        %v3622 = vpop.f32.mrb[0].mxu0
        %v3623 = vadd.f32 %v2909, %v3622
        %3624 = vmatprep.mubr.bf16.mxu0 %v2721
        %3625 = vmatmul.mubr.bf16.gmra.mrb[0].mxu0 %v2720
        %v3626 = vpop.f32.mrb[0].mxu0
        %v3627 = vadd.f32 %v2905, %v3626
        %v3628 = vpop.f32.mrb[0].mxu0
        %v3629 = vadd.f32 %v2909, %v3628
        %v3630 = vpop.f32.mrb[0].mxu0
        %v3631 = vadd.f32 %v2905, %v3630
        %v3632 = vpop.f32.mrb[0].mxu0
        %v3633 = vadd.f32 %v2909, %v3632
        %3634 = vmatprep.mubr.bf16.mxu0 %v2725
        %3635 = vmatmul.mubr.bf16.gmra.mrb[0].mxu0 %v2724
        %v3636 = vpop.f32.mrb[0].mxu0
        %v3637 = vadd.f32 %v2905, %v3636
        %v3638 = vpop.f32.mrb[0].mxu0
        %v3639 = vadd.f32 %v2909, %v3638
        %v3640 = vpop.f32.mrb[0].mxu0
        %v3641 = vadd.f32 %v2905, %v3640
        %v3642 = vpop.f32.mrb[0].mxu0
        %v3643 = vadd.f32 %v2909, %v3642
        %3644 = vmatprep.mubr.bf16.mxu0 %v2729
        %3645 = vmatmul.mubr.bf16.gmra.mrb[0].mxu0 %v2728
        %v3646 = vpop.f32.mrb[0].mxu0
        %v3647 = vadd.f32 %v2905, %v3646
        %v3648 = vpop.f32.mrb[0].mxu0
        %v3649 = vadd.f32 %v2909, %v3648
        %v3650 = vpop.f32.mrb[0].mxu0
        %v3651 = vadd.f32 %v2905, %v3650
        %v3652 = vpop.f32.mrb[0].mxu0
        %v3653 = vadd.f32 %v2909, %v3652
        %3654 = vmatprep.mubr.bf16.mxu0 %v2733
        %3655 = vmatmul.mubr.bf16.gmra.mrb[0].mxu0 %v2732
        %v3656 = vpop.f32.mrb[0].mxu0
        %v3657 = vadd.f32 %v2905, %v3656
        %v3658 = vpop.f32.mrb[0].mxu0
        %v3659 = vadd.f32 %v2909, %v3658
        %v3660 = vpop.f32.mrb[0].mxu0
        %v3661 = vadd.f32 %v2905, %v3660
        %v3662 = vpop.f32.mrb[0].mxu0
        %v3663 = vadd.f32 %v2909, %v3662
        %3664 = vmatprep.mubr.bf16.mxu0 %v2737
        %3665 = vmatmul.mubr.bf16.gmra.mrb[0].mxu0 %v2736
        %v3666 = vpop.f32.mrb[0].mxu0
        %v3667 = vadd.f32 %v2905, %v3666
        %v3668 = vpop.f32.mrb[0].mxu0
        %v3669 = vadd.f32 %v2909, %v3668
        %v3670 = vpop.f32.mrb[0].mxu0
        %v3671 = vadd.f32 %v2905, %v3670
        %v3672 = vpop.f32.mrb[0].mxu0
        %v3673 = vadd.f32 %v2909, %v3672
        %3674 = vmatprep.mubr.bf16.mxu0 %v2741
        %3675 = vmatmul.mubr.bf16.gmra.mrb[0].mxu0 %v2740
        %v3676 = vpop.f32.mrb[0].mxu0
        %v3677 = vadd.f32 %v2905, %v3676
        %v3678 = vpop.f32.mrb[0].mxu0
        %v3679 = vadd.f32 %v2909, %v3678
        %v3680 = vpop.f32.mrb[0].mxu0
        %v3681 = vadd.f32 %v2905, %v3680
        %v3682 = vpop.f32.mrb[0].mxu0
        %v3683 = vadd.f32 %v2909, %v3682
        %3684 = vmatprep.mubr.bf16.mxu0 %v2745
        %3685 = vmatmul.mubr.bf16.gmra.mrb[0].mxu0 %v2744
        %v3686 = vpop.f32.mrb[0].mxu0
        %v3687 = vadd.f32 %v2905, %v3686
        %v3688 = vpop.f32.mrb[0].mxu0
        %v3689 = vadd.f32 %v2909, %v3688
        %v3690 = vpop.f32.mrb[0].mxu0
        %v3691 = vadd.f32 %v2905, %v3690
        %v3692 = vpop.f32.mrb[0].mxu0
        %v3693 = vadd.f32 %v2909, %v3692
        %3694 = vmatprep.mubr.bf16.mxu0 %v2749
        %3695 = vmatmul.mubr.bf16.gmra.mrb[0].mxu0 %v2748
        %v3696 = vpop.f32.mrb[0].mxu0
        %v3697 = vadd.f32 %v2905, %v3696
        %v3698 = vpop.f32.mrb[0].mxu0
        %v3699 = vadd.f32 %v2909, %v3698
        %v3700 = vpop.f32.mrb[0].mxu0
        %v3701 = vadd.f32 %v2905, %v3700
        %v3702 = vpop.f32.mrb[0].mxu0
        %v3703 = vadd.f32 %v2909, %v3702
        %3704 = vmatprep.mubr.bf16.mxu0 %v2753
        %3705 = vmatmul.mubr.bf16.gmra.mrb[0].mxu0 %v2752
        %v3706 = vpop.f32.mrb[0].mxu0
        %v3707 = vadd.f32 %v2905, %v3706
        %v3708 = vpop.f32.mrb[0].mxu0
        %v3709 = vadd.f32 %v2909, %v3708
        %v3710 = vpop.f32.mrb[0].mxu0
        %v3711 = vadd.f32 %v2905, %v3710
        %v3712 = vpop.f32.mrb[0].mxu0
        %v3713 = vadd.f32 %v2909, %v3712
        %3714 = vmatprep.mubr.bf16.mxu0 %v2757
        %3715 = vmatmul.mubr.bf16.gmra.mrb[0].mxu0 %v2756
        %v3716 = vpop.f32.mrb[0].mxu0
        %v3717 = vadd.f32 %v2905, %v3716
        %v3718 = vpop.f32.mrb[0].mxu0
        %v3719 = vadd.f32 %v2909, %v3718
        %v3720 = vpop.f32.mrb[0].mxu0
        %v3721 = vadd.f32 %v2905, %v3720
        %v3722 = vpop.f32.mrb[0].mxu0
        %v3723 = vadd.f32 %v2909, %v3722
        %3724 = vmatprep.mubr.bf16.mxu0 %v2761
        %3725 = vmatmul.mubr.bf16.gmra.mrb[0].mxu0 %v2760
        %v3726 = vpop.f32.mrb[0].mxu0
        %v3727 = vadd.f32 %v2905, %v3726
        %v3728 = vpop.f32.mrb[0].mxu0
        %v3729 = vadd.f32 %v2909, %v3728
        %v3730 = vpop.f32.mrb[0].mxu0
        %v3731 = vadd.f32 %v2905, %v3730
        %v3732 = vpop.f32.mrb[0].mxu0
        %v3733 = vadd.f32 %v2909, %v3732
        %3734 = vmatprep.mubr.bf16.mxu0 %v2765
        %3735 = vmatmul.mubr.bf16.gmra.mrb[0].mxu0 %v2764
        %v3736 = vpop.f32.mrb[0].mxu0
        %v3737 = vadd.f32 %v2905, %v3736
        %v3738 = vpop.f32.mrb[0].mxu0
        %v3739 = vadd.f32 %v2909, %v3738
        %v3740 = vpop.f32.mrb[0].mxu0
        %v3741 = vadd.f32 %v2905, %v3740
        %v3742 = vpop.f32.mrb[0].mxu0
        %v3743 = vadd.f32 %v2909, %v3742
        %3744 = vmatprep.mubr.bf16.mxu0 %v2769
        %3745 = vmatmul.mubr.bf16.gmra.mrb[0].mxu0 %v2768
        %v3746 = vpop.f32.mrb[0].mxu0
        %v3747 = vadd.f32 %v2905, %v3746
        %v3748 = vpop.f32.mrb[0].mxu0
        %v3749 = vadd.f32 %v2909, %v3748
        %v3750 = vpop.f32.mrb[0].mxu0
        %v3751 = vadd.f32 %v2905, %v3750
        %v3752 = vpop.f32.mrb[0].mxu0
        %v3753 = vadd.f32 %v2909, %v3752
        %3754 = vdwg.mxu0
        %3755 = vmatprep.subr.bf16.mxu0 %v3371
        %3756 = vmatpush1.bf16.msra.mxu0 %v3370
        %3757 = vmatprep.subr.bf16.mxu0 %v3375
        %3758 = vmatpush1.bf16.msra.mxu0 %v3374
        %3759 = vmatprep.subr.bf16.mxu0 %v3379
        %3760 = vmatpush1.bf16.msra.mxu0 %v3378
        %3761 = vmatprep.subr.bf16.mxu0 %v3383
        %3762 = vmatpush1.bf16.msra.mxu0 %v3382
        %3763 = vmatprep.subr.bf16.mxu0 %v3387
        %3764 = vmatpush1.bf16.msra.mxu0 %v3386
        %3765 = vmatprep.subr.bf16.mxu0 %v3391
        %3766 = vmatpush1.bf16.msra.mxu0 %v3390
        %3767 = vmatprep.subr.bf16.mxu0 %v3395
        %3768 = vmatpush1.bf16.msra.mxu0 %v3394
        %3769 = vmatprep.subr.bf16.mxu0 %v3399
        %3770 = vmatpush1.bf16.msra.mxu0 %v3398
        %3771 = vmatprep.subr.bf16.mxu0 %v3403
        %3772 = vmatpush1.bf16.msra.mxu0 %v3402
        %3773 = vmatprep.subr.bf16.mxu0 %v3407
        %3774 = vmatpush1.bf16.msra.mxu0 %v3406
        %3775 = vmatprep.subr.bf16.mxu0 %v3411
        %3776 = vmatpush1.bf16.msra.mxu0 %v3410
        %3777 = vmatprep.subr.bf16.mxu0 %v3415
        %3778 = vmatpush1.bf16.msra.mxu0 %v3414
        %3779 = vmatprep.subr.bf16.mxu0 %v3419
        %3780 = vmatpush1.bf16.msra.mxu0 %v3418
        %3781 = vmatprep.subr.bf16.mxu0 %v3423
        %3782 = vmatpush1.bf16.msra.mxu0 %v3422
        %3783 = vmatprep.subr.bf16.mxu0 %v3427
        %3784 = vmatpush1.bf16.msra.mxu0 %v3426
        %3785 = vmatprep.subr.bf16.mxu0 %v3431
        %3786 = vmatpush1.bf16.msra.mxu0 %v3430
        %3787 = vmatprep.mubr.bf16.mxu0 %v2711
        %3788 = vmatmul.mubr.bf16.gmra.mrb[0].mxu0 %v2710
        %v3789 = vpop.f32.mrb[0].mxu0
        %v3790 = vadd.f32 %v3597, %v3789
        %v3791 = vpop.f32.mrb[0].mxu0
        %v3792 = vadd.f32 %v3599, %v3791
        %v3793 = vpop.f32.mrb[0].mxu0
        %v3794 = vadd.f32 %v3601, %v3793
        %v3795 = vpop.f32.mrb[0].mxu0
        %v3796 = vadd.f32 %v3603, %v3795
        %3797 = vmatprep.mubr.bf16.mxu0 %v2715
        %3798 = vmatmul.mubr.bf16.gmra.mrb[0].mxu0 %v2714
        %v3799 = vpop.f32.mrb[0].mxu0
        %v3800 = vadd.f32 %v3607, %v3799
        %v3801 = vpop.f32.mrb[0].mxu0
        %v3802 = vadd.f32 %v3609, %v3801
        %v3803 = vpop.f32.mrb[0].mxu0
        %v3804 = vadd.f32 %v3611, %v3803
        %v3805 = vpop.f32.mrb[0].mxu0
        %v3806 = vadd.f32 %v3613, %v3805
        %3807 = vmatprep.mubr.bf16.mxu0 %v2719
        %3808 = vmatmul.mubr.bf16.gmra.mrb[0].mxu0 %v2718
        %v3809 = vpop.f32.mrb[0].mxu0
        %v3810 = vadd.f32 %v3617, %v3809
        %v3811 = vpop.f32.mrb[0].mxu0
        %v3812 = vadd.f32 %v3619, %v3811
        %v3813 = vpop.f32.mrb[0].mxu0
        %v3814 = vadd.f32 %v3621, %v3813
        %v3815 = vpop.f32.mrb[0].mxu0
        %v3816 = vadd.f32 %v3623, %v3815
        %3817 = vmatprep.mubr.bf16.mxu0 %v2723
        %3818 = vmatmul.mubr.bf16.gmra.mrb[0].mxu0 %v2722
        %v3819 = vpop.f32.mrb[0].mxu0
        %v3820 = vadd.f32 %v3627, %v3819
        %v3821 = vpop.f32.mrb[0].mxu0
        %v3822 = vadd.f32 %v3629, %v3821
        %v3823 = vpop.f32.mrb[0].mxu0
        %v3824 = vadd.f32 %v3631, %v3823
        %v3825 = vpop.f32.mrb[0].mxu0
        %v3826 = vadd.f32 %v3633, %v3825
        %3827 = vmatprep.mubr.bf16.mxu0 %v2727
        %3828 = vmatmul.mubr.bf16.gmra.mrb[0].mxu0 %v2726
        %v3829 = vpop.f32.mrb[0].mxu0
        %v3830 = vadd.f32 %v3637, %v3829
        %v3831 = vpop.f32.mrb[0].mxu0
        %v3832 = vadd.f32 %v3639, %v3831
        %v3833 = vpop.f32.mrb[0].mxu0
        %v3834 = vadd.f32 %v3641, %v3833
        %v3835 = vpop.f32.mrb[0].mxu0
        %v3836 = vadd.f32 %v3643, %v3835
        %3837 = vmatprep.mubr.bf16.mxu0 %v2731
        %3838 = vmatmul.mubr.bf16.gmra.mrb[0].mxu0 %v2730
        %v3839 = vpop.f32.mrb[0].mxu0
        %v3840 = vadd.f32 %v3647, %v3839
        %v3841 = vpop.f32.mrb[0].mxu0
        %v3842 = vadd.f32 %v3649, %v3841
        %v3843 = vpop.f32.mrb[0].mxu0
        %v3844 = vadd.f32 %v3651, %v3843
        %v3845 = vpop.f32.mrb[0].mxu0
        %v3846 = vadd.f32 %v3653, %v3845
        %3847 = vmatprep.mubr.bf16.mxu0 %v2735
        %3848 = vmatmul.mubr.bf16.gmra.mrb[0].mxu0 %v2734
        %v3849 = vpop.f32.mrb[0].mxu0
        %v3850 = vadd.f32 %v3657, %v3849
        %v3851 = vpop.f32.mrb[0].mxu0
        %v3852 = vadd.f32 %v3659, %v3851
        %v3853 = vpop.f32.mrb[0].mxu0
        %v3854 = vadd.f32 %v3661, %v3853
        %v3855 = vpop.f32.mrb[0].mxu0
        %v3856 = vadd.f32 %v3663, %v3855
        %3857 = vmatprep.mubr.bf16.mxu0 %v2739
        %3858 = vmatmul.mubr.bf16.gmra.mrb[0].mxu0 %v2738
        %v3859 = vpop.f32.mrb[0].mxu0
        %v3860 = vadd.f32 %v3667, %v3859
        %v3861 = vpop.f32.mrb[0].mxu0
        %v3862 = vadd.f32 %v3669, %v3861
        %v3863 = vpop.f32.mrb[0].mxu0
        %v3864 = vadd.f32 %v3671, %v3863
        %v3865 = vpop.f32.mrb[0].mxu0
        %v3866 = vadd.f32 %v3673, %v3865
        %3867 = vmatprep.mubr.bf16.mxu0 %v2743
        %3868 = vmatmul.mubr.bf16.gmra.mrb[0].mxu0 %v2742
        %v3869 = vpop.f32.mrb[0].mxu0
        %v3870 = vadd.f32 %v3677, %v3869
        %v3871 = vpop.f32.mrb[0].mxu0
        %v3872 = vadd.f32 %v3679, %v3871
        %v3873 = vpop.f32.mrb[0].mxu0
        %v3874 = vadd.f32 %v3681, %v3873
        %v3875 = vpop.f32.mrb[0].mxu0
        %v3876 = vadd.f32 %v3683, %v3875
        %3877 = vmatprep.mubr.bf16.mxu0 %v2747
        %3878 = vmatmul.mubr.bf16.gmra.mrb[0].mxu0 %v2746
        %v3879 = vpop.f32.mrb[0].mxu0
        %v3880 = vadd.f32 %v3687, %v3879
        %v3881 = vpop.f32.mrb[0].mxu0
        %v3882 = vadd.f32 %v3689, %v3881
        %v3883 = vpop.f32.mrb[0].mxu0
        %v3884 = vadd.f32 %v3691, %v3883
        %v3885 = vpop.f32.mrb[0].mxu0
        %v3886 = vadd.f32 %v3693, %v3885
        %3887 = vmatprep.mubr.bf16.mxu0 %v2751
        %3888 = vmatmul.mubr.bf16.gmra.mrb[0].mxu0 %v2750
        %v3889 = vpop.f32.mrb[0].mxu0
        %v3890 = vadd.f32 %v3697, %v3889
        %v3891 = vpop.f32.mrb[0].mxu0
        %v3892 = vadd.f32 %v3699, %v3891
        %v3893 = vpop.f32.mrb[0].mxu0
        %v3894 = vadd.f32 %v3701, %v3893
        %v3895 = vpop.f32.mrb[0].mxu0
        %v3896 = vadd.f32 %v3703, %v3895
        %3897 = vmatprep.mubr.bf16.mxu0 %v2755
        %3898 = vmatmul.mubr.bf16.gmra.mrb[0].mxu0 %v2754
        %v3899 = vpop.f32.mrb[0].mxu0
        %v3900 = vadd.f32 %v3707, %v3899
        %v3901 = vpop.f32.mrb[0].mxu0
        %v3902 = vadd.f32 %v3709, %v3901
        %v3903 = vpop.f32.mrb[0].mxu0
        %v3904 = vadd.f32 %v3711, %v3903
        %v3905 = vpop.f32.mrb[0].mxu0
        %v3906 = vadd.f32 %v3713, %v3905
        %3907 = vmatprep.mubr.bf16.mxu0 %v2759
        %3908 = vmatmul.mubr.bf16.gmra.mrb[0].mxu0 %v2758
        %v3909 = vpop.f32.mrb[0].mxu0
        %v3910 = vadd.f32 %v3717, %v3909
        %v3911 = vpop.f32.mrb[0].mxu0
        %v3912 = vadd.f32 %v3719, %v3911
        %v3913 = vpop.f32.mrb[0].mxu0
        %v3914 = vadd.f32 %v3721, %v3913
        %v3915 = vpop.f32.mrb[0].mxu0
        %v3916 = vadd.f32 %v3723, %v3915
        %3917 = vmatprep.mubr.bf16.mxu0 %v2763
        %3918 = vmatmul.mubr.bf16.gmra.mrb[0].mxu0 %v2762
        %v3919 = vpop.f32.mrb[0].mxu0
        %v3920 = vadd.f32 %v3727, %v3919
        %v3921 = vpop.f32.mrb[0].mxu0
        %v3922 = vadd.f32 %v3729, %v3921
        %v3923 = vpop.f32.mrb[0].mxu0
        %v3924 = vadd.f32 %v3731, %v3923
        %v3925 = vpop.f32.mrb[0].mxu0
        %v3926 = vadd.f32 %v3733, %v3925
        %3927 = vmatprep.mubr.bf16.mxu0 %v2767
        %3928 = vmatmul.mubr.bf16.gmra.mrb[0].mxu0 %v2766
        %v3929 = vpop.f32.mrb[0].mxu0
        %v3930 = vadd.f32 %v3737, %v3929
        %v3931 = vpop.f32.mrb[0].mxu0
        %v3932 = vadd.f32 %v3739, %v3931
        %v3933 = vpop.f32.mrb[0].mxu0
        %v3934 = vadd.f32 %v3741, %v3933
        %v3935 = vpop.f32.mrb[0].mxu0
        %v3936 = vadd.f32 %v3743, %v3935
        %3937 = vmatprep.mubr.bf16.mxu0 %v2771
        %3938 = vmatmul.mubr.bf16.gmra.mrb[0].mxu0 %v2770
        %v3939 = vpop.f32.mrb[0].mxu0
        %v3940 = vadd.f32 %v3747, %v3939
        %v3941 = vpop.f32.mrb[0].mxu0
        %v3942 = vadd.f32 %v3749, %v3941
        %v3943 = vpop.f32.mrb[0].mxu0
        %v3944 = vadd.f32 %v3751, %v3943
        %v3945 = vpop.f32.mrb[0].mxu0
        %v3946 = vadd.f32 %v3753, %v3945
        %3947 = vdwg.mxu0
        %3948 = vmatprep.subr.bf16.mxu0 %v3309
        %3949 = vmatpush1.bf16.msra.mxu0 %v3308
        %3950 = vmatprep.subr.bf16.mxu0 %v3313
        %3951 = vmatpush1.bf16.msra.mxu0 %v3312
        %3952 = vmatprep.subr.bf16.mxu0 %v3317
        %3953 = vmatpush1.bf16.msra.mxu0 %v3316
        %3954 = vmatprep.subr.bf16.mxu0 %v3321
        %3955 = vmatpush1.bf16.msra.mxu0 %v3320
        %3956 = vmatprep.subr.bf16.mxu0 %v3325
        %3957 = vmatpush1.bf16.msra.mxu0 %v3324
        %3958 = vmatprep.subr.bf16.mxu0 %v3329
        %3959 = vmatpush1.bf16.msra.mxu0 %v3328
        %3960 = vmatprep.subr.bf16.mxu0 %v3333
        %3961 = vmatpush1.bf16.msra.mxu0 %v3332
        %3962 = vmatprep.subr.bf16.mxu0 %v3337
        %3963 = vmatpush1.bf16.msra.mxu0 %v3336
        %3964 = vmatprep.subr.bf16.mxu0 %v3341
        %3965 = vmatpush1.bf16.msra.mxu0 %v3340
        %3966 = vmatprep.subr.bf16.mxu0 %v3345
        %3967 = vmatpush1.bf16.msra.mxu0 %v3344
        %3968 = vmatprep.subr.bf16.mxu0 %v3349
        %3969 = vmatpush1.bf16.msra.mxu0 %v3348
        %3970 = vmatprep.subr.bf16.mxu0 %v3353
        %3971 = vmatpush1.bf16.msra.mxu0 %v3352
        %3972 = vmatprep.subr.bf16.mxu0 %v3357
        %3973 = vmatpush1.bf16.msra.mxu0 %v3356
        %3974 = vmatprep.subr.bf16.mxu0 %v3361
        %3975 = vmatpush1.bf16.msra.mxu0 %v3360
        %3976 = vmatprep.subr.bf16.mxu0 %v3365
        %3977 = vmatpush1.bf16.msra.mxu0 %v3364
        %3978 = vmatprep.subr.bf16.mxu0 %v3369
        %3979 = vmatpush1.bf16.msra.mxu0 %v3368
        %3980 = vmatprep.mubr.bf16.mxu0 %v2709
        %3981 = vmatmul.mubr.bf16.gmra.mrb[0].mxu0 %v2708
        %v3982 = vpop.f32.mrb[0].mxu0
        %v3983 = vadd.f32 %v2913, %v3982
        %v3984 = vpop.f32.mrb[0].mxu0
        %v3985 = vadd.f32 %v2917, %v3984
        %v3986 = vpop.f32.mrb[0].mxu0
        %v3987 = vadd.f32 %v2913, %v3986
        %v3988 = vpop.f32.mrb[0].mxu0
        %v3989 = vadd.f32 %v2917, %v3988
        %3990 = vmatprep.mubr.bf16.mxu0 %v2713
        %3991 = vmatmul.mubr.bf16.gmra.mrb[0].mxu0 %v2712
        %v3992 = vpop.f32.mrb[0].mxu0
        %v3993 = vadd.f32 %v2913, %v3992
        %v3994 = vpop.f32.mrb[0].mxu0
        %v3995 = vadd.f32 %v2917, %v3994
        %v3996 = vpop.f32.mrb[0].mxu0
        %v3997 = vadd.f32 %v2913, %v3996
        %v3998 = vpop.f32.mrb[0].mxu0
        %v3999 = vadd.f32 %v2917, %v3998
        %4000 = vmatprep.mubr.bf16.mxu0 %v2717
        %4001 = vmatmul.mubr.bf16.gmra.mrb[0].mxu0 %v2716
        %v4002 = vpop.f32.mrb[0].mxu0
        %v4003 = vadd.f32 %v2913, %v4002
        %v4004 = vpop.f32.mrb[0].mxu0
        %v4005 = vadd.f32 %v2917, %v4004
        %v4006 = vpop.f32.mrb[0].mxu0
        %v4007 = vadd.f32 %v2913, %v4006
        %v4008 = vpop.f32.mrb[0].mxu0
        %v4009 = vadd.f32 %v2917, %v4008
        %4010 = vmatprep.mubr.bf16.mxu0 %v2721
        %4011 = vmatmul.mubr.bf16.gmra.mrb[0].mxu0 %v2720
        %v4012 = vpop.f32.mrb[0].mxu0
        %v4013 = vadd.f32 %v2913, %v4012
        %v4014 = vpop.f32.mrb[0].mxu0
        %v4015 = vadd.f32 %v2917, %v4014
        %v4016 = vpop.f32.mrb[0].mxu0
        %v4017 = vadd.f32 %v2913, %v4016
        %v4018 = vpop.f32.mrb[0].mxu0
        %v4019 = vadd.f32 %v2917, %v4018
        %4020 = vmatprep.mubr.bf16.mxu0 %v2725
        %4021 = vmatmul.mubr.bf16.gmra.mrb[0].mxu0 %v2724
        %v4022 = vpop.f32.mrb[0].mxu0
        %v4023 = vadd.f32 %v2913, %v4022
        %v4024 = vpop.f32.mrb[0].mxu0
        %v4025 = vadd.f32 %v2917, %v4024
        %v4026 = vpop.f32.mrb[0].mxu0
        %v4027 = vadd.f32 %v2913, %v4026
        %v4028 = vpop.f32.mrb[0].mxu0
        %v4029 = vadd.f32 %v2917, %v4028
        %4030 = vmatprep.mubr.bf16.mxu0 %v2729
        %4031 = vmatmul.mubr.bf16.gmra.mrb[0].mxu0 %v2728
        %v4032 = vpop.f32.mrb[0].mxu0
        %v4033 = vadd.f32 %v2913, %v4032
        %v4034 = vpop.f32.mrb[0].mxu0
        %v4035 = vadd.f32 %v2917, %v4034
        %v4036 = vpop.f32.mrb[0].mxu0
        %v4037 = vadd.f32 %v2913, %v4036
        %v4038 = vpop.f32.mrb[0].mxu0
        %v4039 = vadd.f32 %v2917, %v4038
        %4040 = vmatprep.mubr.bf16.mxu0 %v2733
        %4041 = vmatmul.mubr.bf16.gmra.mrb[0].mxu0 %v2732
        %v4042 = vpop.f32.mrb[0].mxu0
        %v4043 = vadd.f32 %v2913, %v4042
        %v4044 = vpop.f32.mrb[0].mxu0
        %v4045 = vadd.f32 %v2917, %v4044
        %v4046 = vpop.f32.mrb[0].mxu0
        %v4047 = vadd.f32 %v2913, %v4046
        %v4048 = vpop.f32.mrb[0].mxu0
        %v4049 = vadd.f32 %v2917, %v4048
        %4050 = vmatprep.mubr.bf16.mxu0 %v2737
        %4051 = vmatmul.mubr.bf16.gmra.mrb[0].mxu0 %v2736
        %v4052 = vpop.f32.mrb[0].mxu0
        %v4053 = vadd.f32 %v2913, %v4052
        %v4054 = vpop.f32.mrb[0].mxu0
        %v4055 = vadd.f32 %v2917, %v4054
        %v4056 = vpop.f32.mrb[0].mxu0
        %v4057 = vadd.f32 %v2913, %v4056
        %v4058 = vpop.f32.mrb[0].mxu0
        %v4059 = vadd.f32 %v2917, %v4058
        %4060 = vmatprep.mubr.bf16.mxu0 %v2741
        %4061 = vmatmul.mubr.bf16.gmra.mrb[0].mxu0 %v2740
        %v4062 = vpop.f32.mrb[0].mxu0
        %v4063 = vadd.f32 %v2913, %v4062
        %v4064 = vpop.f32.mrb[0].mxu0
        %v4065 = vadd.f32 %v2917, %v4064
        %v4066 = vpop.f32.mrb[0].mxu0
        %v4067 = vadd.f32 %v2913, %v4066
        %v4068 = vpop.f32.mrb[0].mxu0
        %v4069 = vadd.f32 %v2917, %v4068
        %4070 = vmatprep.mubr.bf16.mxu0 %v2745
        %4071 = vmatmul.mubr.bf16.gmra.mrb[0].mxu0 %v2744
        %v4072 = vpop.f32.mrb[0].mxu0
        %v4073 = vadd.f32 %v2913, %v4072
        %v4074 = vpop.f32.mrb[0].mxu0
        %v4075 = vadd.f32 %v2917, %v4074
        %v4076 = vpop.f32.mrb[0].mxu0
        %v4077 = vadd.f32 %v2913, %v4076
        %v4078 = vpop.f32.mrb[0].mxu0
        %v4079 = vadd.f32 %v2917, %v4078
        %4080 = vmatprep.mubr.bf16.mxu0 %v2749
        %4081 = vmatmul.mubr.bf16.gmra.mrb[0].mxu0 %v2748
        %v4082 = vpop.f32.mrb[0].mxu0
        %v4083 = vadd.f32 %v2913, %v4082
        %v4084 = vpop.f32.mrb[0].mxu0
        %v4085 = vadd.f32 %v2917, %v4084
        %v4086 = vpop.f32.mrb[0].mxu0
        %v4087 = vadd.f32 %v2913, %v4086
        %v4088 = vpop.f32.mrb[0].mxu0
        %v4089 = vadd.f32 %v2917, %v4088
        %4090 = vmatprep.mubr.bf16.mxu0 %v2753
        %4091 = vmatmul.mubr.bf16.gmra.mrb[0].mxu0 %v2752
        %v4092 = vpop.f32.mrb[0].mxu0
        %v4093 = vadd.f32 %v2913, %v4092
        %v4094 = vpop.f32.mrb[0].mxu0
        %v4095 = vadd.f32 %v2917, %v4094
        %v4096 = vpop.f32.mrb[0].mxu0
        %v4097 = vadd.f32 %v2913, %v4096
        %v4098 = vpop.f32.mrb[0].mxu0
        %v4099 = vadd.f32 %v2917, %v4098
        %4100 = vmatprep.mubr.bf16.mxu0 %v2757
        %4101 = vmatmul.mubr.bf16.gmra.mrb[0].mxu0 %v2756
        %v4102 = vpop.f32.mrb[0].mxu0
        %v4103 = vadd.f32 %v2913, %v4102
        %v4104 = vpop.f32.mrb[0].mxu0
        %v4105 = vadd.f32 %v2917, %v4104
        %v4106 = vpop.f32.mrb[0].mxu0
        %v4107 = vadd.f32 %v2913, %v4106
        %v4108 = vpop.f32.mrb[0].mxu0
        %v4109 = vadd.f32 %v2917, %v4108
        %4110 = vmatprep.mubr.bf16.mxu0 %v2761
        %4111 = vmatmul.mubr.bf16.gmra.mrb[0].mxu0 %v2760
        %v4112 = vpop.f32.mrb[0].mxu0
        %v4113 = vadd.f32 %v2913, %v4112
        %v4114 = vpop.f32.mrb[0].mxu0
        %v4115 = vadd.f32 %v2917, %v4114
        %v4116 = vpop.f32.mrb[0].mxu0
        %v4117 = vadd.f32 %v2913, %v4116
        %v4118 = vpop.f32.mrb[0].mxu0
        %v4119 = vadd.f32 %v2917, %v4118
        %4120 = vmatprep.mubr.bf16.mxu0 %v2765
        %4121 = vmatmul.mubr.bf16.gmra.mrb[0].mxu0 %v2764
        %v4122 = vpop.f32.mrb[0].mxu0
        %v4123 = vadd.f32 %v2913, %v4122
        %v4124 = vpop.f32.mrb[0].mxu0
        %v4125 = vadd.f32 %v2917, %v4124
        %v4126 = vpop.f32.mrb[0].mxu0
        %v4127 = vadd.f32 %v2913, %v4126
        %v4128 = vpop.f32.mrb[0].mxu0
        %v4129 = vadd.f32 %v2917, %v4128
        %4130 = vmatprep.mubr.bf16.mxu0 %v2769
        %4131 = vmatmul.mubr.bf16.gmra.mrb[0].mxu0 %v2768
        %v4132 = vpop.f32.mrb[0].mxu0
        %v4133 = vadd.f32 %v2913, %v4132
        %v4134 = vpop.f32.mrb[0].mxu0
        %v4135 = vadd.f32 %v2917, %v4134
        %v4136 = vpop.f32.mrb[0].mxu0
        %v4137 = vadd.f32 %v2913, %v4136
        %v4138 = vpop.f32.mrb[0].mxu0
        %v4139 = vadd.f32 %v2917, %v4138
        %4140 = vdwg.mxu0
        %4141 = vmatprep.subr.bf16.mxu0 %v3373
        %4142 = vmatpush1.bf16.msra.mxu0 %v3372
        %4143 = vmatprep.subr.bf16.mxu0 %v3377
        %4144 = vmatpush1.bf16.msra.mxu0 %v3376
        %4145 = vmatprep.subr.bf16.mxu0 %v3381
        %4146 = vmatpush1.bf16.msra.mxu0 %v3380
        %4147 = vmatprep.subr.bf16.mxu0 %v3385
        %4148 = vmatpush1.bf16.msra.mxu0 %v3384
        %4149 = vmatprep.subr.bf16.mxu0 %v3389
        %4150 = vmatpush1.bf16.msra.mxu0 %v3388
        %4151 = vmatprep.subr.bf16.mxu0 %v3393
        %4152 = vmatpush1.bf16.msra.mxu0 %v3392
        %4153 = vmatprep.subr.bf16.mxu0 %v3397
        %4154 = vmatpush1.bf16.msra.mxu0 %v3396
        %4155 = vmatprep.subr.bf16.mxu0 %v3401
        %4156 = vmatpush1.bf16.msra.mxu0 %v3400
        %4157 = vmatprep.subr.bf16.mxu0 %v3405
        %4158 = vmatpush1.bf16.msra.mxu0 %v3404
        %4159 = vmatprep.subr.bf16.mxu0 %v3409
        %4160 = vmatpush1.bf16.msra.mxu0 %v3408
        %4161 = vmatprep.subr.bf16.mxu0 %v3413
        %4162 = vmatpush1.bf16.msra.mxu0 %v3412
        %4163 = vmatprep.subr.bf16.mxu0 %v3417
        %4164 = vmatpush1.bf16.msra.mxu0 %v3416
        %4165 = vmatprep.subr.bf16.mxu0 %v3421
        %4166 = vmatpush1.bf16.msra.mxu0 %v3420
        %4167 = vmatprep.subr.bf16.mxu0 %v3425
        %4168 = vmatpush1.bf16.msra.mxu0 %v3424
        %4169 = vmatprep.subr.bf16.mxu0 %v3429
        %4170 = vmatpush1.bf16.msra.mxu0 %v3428
        %4171 = vmatprep.subr.bf16.mxu0 %v3433
        %4172 = vmatpush1.bf16.msra.mxu0 %v3432
        %4173 = vmatprep.mubr.bf16.mxu0 %v2711
        %4174 = vmatmul.mubr.bf16.gmra.mrb[0].mxu0 %v2710
        %v4175 = vpop.f32.mrb[0].mxu0
        %v4176 = vadd.f32 %v3983, %v4175
        %v4177 = vpop.f32.mrb[0].mxu0
        %v4178 = vadd.f32 %v3985, %v4177
        %v4179 = vpop.f32.mrb[0].mxu0
        %v4180 = vadd.f32 %v3987, %v4179
        %v4181 = vpop.f32.mrb[0].mxu0
        %v4182 = vadd.f32 %v3989, %v4181
        %4183 = vmatprep.mubr.bf16.mxu0 %v2715
        %4184 = vmatmul.mubr.bf16.gmra.mrb[0].mxu0 %v2714
        %v4185 = vpop.f32.mrb[0].mxu0
        %v4186 = vadd.f32 %v3993, %v4185
        %v4187 = vpop.f32.mrb[0].mxu0
        %v4188 = vadd.f32 %v3995, %v4187
        %v4189 = vpop.f32.mrb[0].mxu0
        %v4190 = vadd.f32 %v3997, %v4189
        %v4191 = vpop.f32.mrb[0].mxu0
        %v4192 = vadd.f32 %v3999, %v4191
        %4193 = vmatprep.mubr.bf16.mxu0 %v2719
        %4194 = vmatmul.mubr.bf16.gmra.mrb[0].mxu0 %v2718
        %v4195 = vpop.f32.mrb[0].mxu0
        %v4196 = vadd.f32 %v4003, %v4195
        %v4197 = vpop.f32.mrb[0].mxu0
        %v4198 = vadd.f32 %v4005, %v4197
        %v4199 = vpop.f32.mrb[0].mxu0
        %v4200 = vadd.f32 %v4007, %v4199
        %v4201 = vpop.f32.mrb[0].mxu0
        %v4202 = vadd.f32 %v4009, %v4201
        %4203 = vmatprep.mubr.bf16.mxu0 %v2723
        %4204 = vmatmul.mubr.bf16.gmra.mrb[0].mxu0 %v2722
        %v4205 = vpop.f32.mrb[0].mxu0
        %v4206 = vadd.f32 %v4013, %v4205
        %v4207 = vpop.f32.mrb[0].mxu0
        %v4208 = vadd.f32 %v4015, %v4207
        %v4209 = vpop.f32.mrb[0].mxu0
        %v4210 = vadd.f32 %v4017, %v4209
        %v4211 = vpop.f32.mrb[0].mxu0
        %v4212 = vadd.f32 %v4019, %v4211
        %4213 = vmatprep.mubr.bf16.mxu0 %v2727
        %4214 = vmatmul.mubr.bf16.gmra.mrb[0].mxu0 %v2726
        %v4215 = vpop.f32.mrb[0].mxu0
        %v4216 = vadd.f32 %v4023, %v4215
        %v4217 = vpop.f32.mrb[0].mxu0
        %v4218 = vadd.f32 %v4025, %v4217
        %v4219 = vpop.f32.mrb[0].mxu0
        %v4220 = vadd.f32 %v4027, %v4219
        %v4221 = vpop.f32.mrb[0].mxu0
        %v4222 = vadd.f32 %v4029, %v4221
        %4223 = vmatprep.mubr.bf16.mxu0 %v2731
        %4224 = vmatmul.mubr.bf16.gmra.mrb[0].mxu0 %v2730
        %v4225 = vpop.f32.mrb[0].mxu0
        %v4226 = vadd.f32 %v4033, %v4225
        %v4227 = vpop.f32.mrb[0].mxu0
        %v4228 = vadd.f32 %v4035, %v4227
        %v4229 = vpop.f32.mrb[0].mxu0
        %v4230 = vadd.f32 %v4037, %v4229
        %v4231 = vpop.f32.mrb[0].mxu0
        %v4232 = vadd.f32 %v4039, %v4231
        %4233 = vmatprep.mubr.bf16.mxu0 %v2735
        %4234 = vmatmul.mubr.bf16.gmra.mrb[0].mxu0 %v2734
        %v4235 = vpop.f32.mrb[0].mxu0
        %v4236 = vadd.f32 %v4043, %v4235
        %v4237 = vpop.f32.mrb[0].mxu0
        %v4238 = vadd.f32 %v4045, %v4237
        %v4239 = vpop.f32.mrb[0].mxu0
        %v4240 = vadd.f32 %v4047, %v4239
        %v4241 = vpop.f32.mrb[0].mxu0
        %v4242 = vadd.f32 %v4049, %v4241
        %4243 = vmatprep.mubr.bf16.mxu0 %v2739
        %4244 = vmatmul.mubr.bf16.gmra.mrb[0].mxu0 %v2738
        %v4245 = vpop.f32.mrb[0].mxu0
        %v4246 = vadd.f32 %v4053, %v4245
        %v4247 = vpop.f32.mrb[0].mxu0
        %v4248 = vadd.f32 %v4055, %v4247
        %v4249 = vpop.f32.mrb[0].mxu0
        %v4250 = vadd.f32 %v4057, %v4249
        %v4251 = vpop.f32.mrb[0].mxu0
        %v4252 = vadd.f32 %v4059, %v4251
        %4253 = vmatprep.mubr.bf16.mxu0 %v2743
        %4254 = vmatmul.mubr.bf16.gmra.mrb[0].mxu0 %v2742
        %v4255 = vpop.f32.mrb[0].mxu0
        %v4256 = vadd.f32 %v4063, %v4255
        %v4257 = vpop.f32.mrb[0].mxu0
        %v4258 = vadd.f32 %v4065, %v4257
        %v4259 = vpop.f32.mrb[0].mxu0
        %v4260 = vadd.f32 %v4067, %v4259
        %v4261 = vpop.f32.mrb[0].mxu0
        %v4262 = vadd.f32 %v4069, %v4261
        %4263 = vmatprep.mubr.bf16.mxu0 %v2747
        %4264 = vmatmul.mubr.bf16.gmra.mrb[0].mxu0 %v2746
        %v4265 = vpop.f32.mrb[0].mxu0
        %v4266 = vadd.f32 %v4073, %v4265
        %v4267 = vpop.f32.mrb[0].mxu0
        %v4268 = vadd.f32 %v4075, %v4267
        %v4269 = vpop.f32.mrb[0].mxu0
        %v4270 = vadd.f32 %v4077, %v4269
        %v4271 = vpop.f32.mrb[0].mxu0
        %v4272 = vadd.f32 %v4079, %v4271
        %4273 = vmatprep.mubr.bf16.mxu0 %v2751
        %4274 = vmatmul.mubr.bf16.gmra.mrb[0].mxu0 %v2750
        %v4275 = vpop.f32.mrb[0].mxu0
        %v4276 = vadd.f32 %v4083, %v4275
        %v4277 = vpop.f32.mrb[0].mxu0
        %v4278 = vadd.f32 %v4085, %v4277
        %v4279 = vpop.f32.mrb[0].mxu0
        %v4280 = vadd.f32 %v4087, %v4279
        %v4281 = vpop.f32.mrb[0].mxu0
        %v4282 = vadd.f32 %v4089, %v4281
        %4283 = vmatprep.mubr.bf16.mxu0 %v2755
        %4284 = vmatmul.mubr.bf16.gmra.mrb[0].mxu0 %v2754
        %v4285 = vpop.f32.mrb[0].mxu0
        %v4286 = vadd.f32 %v4093, %v4285
        %v4287 = vpop.f32.mrb[0].mxu0
        %v4288 = vadd.f32 %v4095, %v4287
        %v4289 = vpop.f32.mrb[0].mxu0
        %v4290 = vadd.f32 %v4097, %v4289
        %v4291 = vpop.f32.mrb[0].mxu0
        %v4292 = vadd.f32 %v4099, %v4291
        %4293 = vmatprep.mubr.bf16.mxu0 %v2759
        %4294 = vmatmul.mubr.bf16.gmra.mrb[0].mxu0 %v2758
        %v4295 = vpop.f32.mrb[0].mxu0
        %v4296 = vadd.f32 %v4103, %v4295
        %v4297 = vpop.f32.mrb[0].mxu0
        %v4298 = vadd.f32 %v4105, %v4297
        %v4299 = vpop.f32.mrb[0].mxu0
        %v4300 = vadd.f32 %v4107, %v4299
        %v4301 = vpop.f32.mrb[0].mxu0
        %v4302 = vadd.f32 %v4109, %v4301
        %4303 = vmatprep.mubr.bf16.mxu0 %v2763
        %4304 = vmatmul.mubr.bf16.gmra.mrb[0].mxu0 %v2762
        %v4305 = vpop.f32.mrb[0].mxu0
        %v4306 = vadd.f32 %v4113, %v4305
        %v4307 = vpop.f32.mrb[0].mxu0
        %v4308 = vadd.f32 %v4115, %v4307
        %v4309 = vpop.f32.mrb[0].mxu0
        %v4310 = vadd.f32 %v4117, %v4309
        %v4311 = vpop.f32.mrb[0].mxu0
        %v4312 = vadd.f32 %v4119, %v4311
        %4313 = vmatprep.mubr.bf16.mxu0 %v2767
        %4314 = vmatmul.mubr.bf16.gmra.mrb[0].mxu0 %v2766
        %v4315 = vpop.f32.mrb[0].mxu0
        %v4316 = vadd.f32 %v4123, %v4315
        %v4317 = vpop.f32.mrb[0].mxu0
        %v4318 = vadd.f32 %v4125, %v4317
        %v4319 = vpop.f32.mrb[0].mxu0
        %v4320 = vadd.f32 %v4127, %v4319
        %v4321 = vpop.f32.mrb[0].mxu0
        %v4322 = vadd.f32 %v4129, %v4321
        %4323 = vmatprep.mubr.bf16.mxu0 %v2771
        %4324 = vmatmul.mubr.bf16.gmra.mrb[0].mxu0 %v2770
        %v4325 = vpop.f32.mrb[0].mxu0
        %v4326 = vadd.f32 %v4133, %v4325
        %v4327 = vpop.f32.mrb[0].mxu0
        %v4328 = vadd.f32 %v4135, %v4327
        %v4329 = vpop.f32.mrb[0].mxu0
        %v4330 = vadd.f32 %v4137, %v4329
        %v4331 = vpop.f32.mrb[0].mxu0
        %v4332 = vadd.f32 %v4139, %v4331
        %4333 = vdwg.mxu0
        %v4334 = vmax.f32 %v3790, 0.0
        %v4335 = vmax.f32 %v3792, 0.0
        %v4336 = vmax.f32 %v4176, 0.0
        %v4337 = vmax.f32 %v4178, 0.0
        %v4338 = vmax.f32 %v3794, 0.0
        %v4339 = vmax.f32 %v3796, 0.0
        %v4340 = vmax.f32 %v4180, 0.0
        %v4341 = vmax.f32 %v4182, 0.0
        %v4342 = vmax.f32 %v3800, 0.0
        %v4343 = vmax.f32 %v3802, 0.0
        %v4344 = vmax.f32 %v4186, 0.0
        %v4345 = vmax.f32 %v4188, 0.0
        %v4346 = vmax.f32 %v3804, 0.0
        %v4347 = vmax.f32 %v3806, 0.0
        %v4348 = vmax.f32 %v4190, 0.0
        %v4349 = vmax.f32 %v4192, 0.0
        %v4350 = vmax.f32 %v3810, 0.0
        %v4351 = vmax.f32 %v3812, 0.0
        %v4352 = vmax.f32 %v4196, 0.0
        %v4353 = vmax.f32 %v4198, 0.0
        %v4354 = vmax.f32 %v3814, 0.0
        %v4355 = vmax.f32 %v3816, 0.0
        %v4356 = vmax.f32 %v4200, 0.0
        %v4357 = vmax.f32 %v4202, 0.0
        %v4358 = vmax.f32 %v3820, 0.0
        %v4359 = vmax.f32 %v3822, 0.0
        %v4360 = vmax.f32 %v4206, 0.0
        %v4361 = vmax.f32 %v4208, 0.0
        %v4362 = vmax.f32 %v3824, 0.0
        %v4363 = vmax.f32 %v3826, 0.0
        %v4364 = vmax.f32 %v4210, 0.0
        %v4365 = vmax.f32 %v4212, 0.0
        %v4366 = vmax.f32 %v3830, 0.0
        %v4367 = vmax.f32 %v3832, 0.0
        %v4368 = vmax.f32 %v4216, 0.0
        %v4369 = vmax.f32 %v4218, 0.0
        %v4370 = vmax.f32 %v3834, 0.0
        %v4371 = vmax.f32 %v3836, 0.0
        %v4372 = vmax.f32 %v4220, 0.0
        %v4373 = vmax.f32 %v4222, 0.0
        %v4374 = vmax.f32 %v3840, 0.0
        %v4375 = vmax.f32 %v3842, 0.0
        %v4376 = vmax.f32 %v4226, 0.0
        %v4377 = vmax.f32 %v4228, 0.0
        %v4378 = vmax.f32 %v3844, 0.0
        %v4379 = vmax.f32 %v3846, 0.0
        %v4380 = vmax.f32 %v4230, 0.0
        %v4381 = vmax.f32 %v4232, 0.0
        %v4382 = vmax.f32 %v3850, 0.0
        %v4383 = vmax.f32 %v3852, 0.0
        %v4384 = vmax.f32 %v4236, 0.0
        %v4385 = vmax.f32 %v4238, 0.0
        %v4386 = vmax.f32 %v3854, 0.0
        %v4387 = vmax.f32 %v3856, 0.0
        %v4388 = vmax.f32 %v4240, 0.0
        %v4389 = vmax.f32 %v4242, 0.0
        %v4390 = vmax.f32 %v3860, 0.0
        %v4391 = vmax.f32 %v3862, 0.0
        %v4392 = vmax.f32 %v4246, 0.0
        %v4393 = vmax.f32 %v4248, 0.0
        %v4394 = vmax.f32 %v3864, 0.0
        %v4395 = vmax.f32 %v3866, 0.0
        %v4396 = vmax.f32 %v4250, 0.0
        %v4397 = vmax.f32 %v4252, 0.0
        %v4398 = vmax.f32 %v3870, 0.0
        %v4399 = vmax.f32 %v3872, 0.0
        %v4400 = vmax.f32 %v4256, 0.0
        %v4401 = vmax.f32 %v4258, 0.0
        %v4402 = vmax.f32 %v3874, 0.0
        %v4403 = vmax.f32 %v3876, 0.0
        %v4404 = vmax.f32 %v4260, 0.0
        %v4405 = vmax.f32 %v4262, 0.0
        %v4406 = vmax.f32 %v3880, 0.0
        %v4407 = vmax.f32 %v3882, 0.0
        %v4408 = vmax.f32 %v4266, 0.0
        %v4409 = vmax.f32 %v4268, 0.0
        %v4410 = vmax.f32 %v3884, 0.0
        %v4411 = vmax.f32 %v3886, 0.0
        %v4412 = vmax.f32 %v4270, 0.0
        %v4413 = vmax.f32 %v4272, 0.0
        %v4414 = vmax.f32 %v3890, 0.0
        %v4415 = vmax.f32 %v3892, 0.0
        %v4416 = vmax.f32 %v4276, 0.0
        %v4417 = vmax.f32 %v4278, 0.0
        %v4418 = vmax.f32 %v3894, 0.0
        %v4419 = vmax.f32 %v3896, 0.0
        %v4420 = vmax.f32 %v4280, 0.0
        %v4421 = vmax.f32 %v4282, 0.0
        %v4422 = vmax.f32 %v3900, 0.0
        %v4423 = vmax.f32 %v3902, 0.0
        %v4424 = vmax.f32 %v4286, 0.0
        %v4425 = vmax.f32 %v4288, 0.0
        %v4426 = vmax.f32 %v3904, 0.0
        %v4427 = vmax.f32 %v3906, 0.0
        %v4428 = vmax.f32 %v4290, 0.0
        %v4429 = vmax.f32 %v4292, 0.0
        %v4430 = vmax.f32 %v3910, 0.0
        %v4431 = vmax.f32 %v3912, 0.0
        %v4432 = vmax.f32 %v4296, 0.0
        %v4433 = vmax.f32 %v4298, 0.0
        %v4434 = vmax.f32 %v3914, 0.0
        %v4435 = vmax.f32 %v3916, 0.0
        %v4436 = vmax.f32 %v4300, 0.0
        %v4437 = vmax.f32 %v4302, 0.0
        %v4438 = vmax.f32 %v3920, 0.0
        %v4439 = vmax.f32 %v3922, 0.0
        %v4440 = vmax.f32 %v4306, 0.0
        %v4441 = vmax.f32 %v4308, 0.0
        %v4442 = vmax.f32 %v3924, 0.0
        %v4443 = vmax.f32 %v3926, 0.0
        %v4444 = vmax.f32 %v4310, 0.0
        %v4445 = vmax.f32 %v4312, 0.0
        %v4446 = vmax.f32 %v3930, 0.0
        %v4447 = vmax.f32 %v3932, 0.0
        %v4448 = vmax.f32 %v4316, 0.0
        %v4449 = vmax.f32 %v4318, 0.0
        %v4450 = vmax.f32 %v3934, 0.0
        %v4451 = vmax.f32 %v3936, 0.0
        %v4452 = vmax.f32 %v4320, 0.0
        %v4453 = vmax.f32 %v4322, 0.0
        %v4454 = vmax.f32 %v3940, 0.0
        %v4455 = vmax.f32 %v3942, 0.0
        %v4456 = vmax.f32 %v4326, 0.0
        %v4457 = vmax.f32 %v4328, 0.0
        %v4458 = vmax.f32 %v3944, 0.0
        %v4459 = vmax.f32 %v3946, 0.0
        %v4460 = vmax.f32 %v4330, 0.0
        %v4461 = vmax.f32 %v4332, 0.0
        %v4462 = vsub.f32 %v378, %v4334
        %v4463 = vsub.f32 %v379, %v4335
        %v4464 = vsub.f32 %v380, %v4336
        %v4465 = vsub.f32 %v381, %v4337
        %v4466 = vsub.f32 %v382, %v4338
        %v4467 = vsub.f32 %v383, %v4339
        %v4468 = vsub.f32 %v384, %v4340
        %v4469 = vsub.f32 %v385, %v4341
        %v4470 = vsub.f32 %v386, %v4342
        %v4471 = vsub.f32 %v387, %v4343
        %v4472 = vsub.f32 %v388, %v4344
        %v4473 = vsub.f32 %v389, %v4345
        %v4474 = vsub.f32 %v390, %v4346
        %v4475 = vsub.f32 %v391, %v4347
        %v4476 = vsub.f32 %v392, %v4348
        %v4477 = vsub.f32 %v393, %v4349
        %v4478 = vsub.f32 %v394, %v4350
        %v4479 = vsub.f32 %v395, %v4351
        %v4480 = vsub.f32 %v396, %v4352
        %v4481 = vsub.f32 %v397, %v4353
        %v4482 = vsub.f32 %v398, %v4354
        %v4483 = vsub.f32 %v399, %v4355
        %v4484 = vsub.f32 %v400, %v4356
        %v4485 = vsub.f32 %v401, %v4357
        %v4486 = vsub.f32 %v402, %v4358
        %v4487 = vsub.f32 %v403, %v4359
        %v4488 = vsub.f32 %v404, %v4360
        %v4489 = vsub.f32 %v405, %v4361
        %v4490 = vsub.f32 %v406, %v4362
        %v4491 = vsub.f32 %v407, %v4363
        %v4492 = vsub.f32 %v408, %v4364
        %v4493 = vsub.f32 %v409, %v4365
        %v4494 = vsub.f32 %v410, %v4366
        %v4495 = vsub.f32 %v411, %v4367
        %v4496 = vsub.f32 %v412, %v4368
        %v4497 = vsub.f32 %v413, %v4369
        %v4498 = vsub.f32 %v414, %v4370
        %v4499 = vsub.f32 %v415, %v4371
        %v4500 = vsub.f32 %v416, %v4372
        %v4501 = vsub.f32 %v417, %v4373
        %v4502 = vsub.f32 %v418, %v4374
        %v4503 = vsub.f32 %v419, %v4375
        %v4504 = vsub.f32 %v420, %v4376
        %v4505 = vsub.f32 %v421, %v4377
        %v4506 = vsub.f32 %v422, %v4378
        %v4507 = vsub.f32 %v423, %v4379
        %v4508 = vsub.f32 %v424, %v4380
        %v4509 = vsub.f32 %v425, %v4381
        %v4510 = vsub.f32 %v426, %v4382
        %v4511 = vsub.f32 %v427, %v4383
        %v4512 = vsub.f32 %v428, %v4384
        %v4513 = vsub.f32 %v429, %v4385
        %v4514 = vsub.f32 %v430, %v4386
        %v4515 = vsub.f32 %v431, %v4387
        %v4516 = vsub.f32 %v432, %v4388
        %v4517 = vsub.f32 %v433, %v4389
        %v4518 = vsub.f32 %v434, %v4390
        %v4519 = vsub.f32 %v435, %v4391
        %v4520 = vsub.f32 %v436, %v4392
        %v4521 = vsub.f32 %v437, %v4393
        %v4522 = vsub.f32 %v438, %v4394
        %v4523 = vsub.f32 %v439, %v4395
        %v4524 = vsub.f32 %v440, %v4396
        %v4525 = vsub.f32 %v441, %v4397
        %v4526 = vsub.f32 %v442, %v4398
        %v4527 = vsub.f32 %v443, %v4399
        %v4528 = vsub.f32 %v444, %v4400
        %v4529 = vsub.f32 %v445, %v4401
        %v4530 = vsub.f32 %v446, %v4402
        %v4531 = vsub.f32 %v447, %v4403
        %v4532 = vsub.f32 %v448, %v4404
        %v4533 = vsub.f32 %v449, %v4405
        %v4534 = vsub.f32 %v450, %v4406
        %v4535 = vsub.f32 %v451, %v4407
        %v4536 = vsub.f32 %v452, %v4408
        %v4537 = vsub.f32 %v453, %v4409
        %v4538 = vsub.f32 %v454, %v4410
        %v4539 = vsub.f32 %v455, %v4411
        %v4540 = vsub.f32 %v456, %v4412
        %v4541 = vsub.f32 %v457, %v4413
        %v4542 = vsub.f32 %v458, %v4414
        %v4543 = vsub.f32 %v459, %v4415
        %v4544 = vsub.f32 %v460, %v4416
        %v4545 = vsub.f32 %v461, %v4417
        %v4546 = vsub.f32 %v462, %v4418
        %v4547 = vsub.f32 %v463, %v4419
        %v4548 = vsub.f32 %v464, %v4420
        %v4549 = vsub.f32 %v465, %v4421
        %v4550 = vsub.f32 %v466, %v4422
        %v4551 = vsub.f32 %v467, %v4423
        %v4552 = vsub.f32 %v468, %v4424
        %v4553 = vsub.f32 %v469, %v4425
        %v4554 = vsub.f32 %v470, %v4426
        %v4555 = vsub.f32 %v471, %v4427
        %v4556 = vsub.f32 %v472, %v4428
        %v4557 = vsub.f32 %v473, %v4429
        %v4558 = vsub.f32 %v474, %v4430
        %v4559 = vsub.f32 %v475, %v4431
        %v4560 = vsub.f32 %v476, %v4432
        %v4561 = vsub.f32 %v477, %v4433
        %v4562 = vsub.f32 %v478, %v4434
        %v4563 = vsub.f32 %v479, %v4435
        %v4564 = vsub.f32 %v480, %v4436
        %v4565 = vsub.f32 %v481, %v4437
        %v4566 = vsub.f32 %v482, %v4438
        %v4567 = vsub.f32 %v483, %v4439
        %v4568 = vsub.f32 %v484, %v4440
        %v4569 = vsub.f32 %v485, %v4441
        %v4570 = vsub.f32 %v486, %v4442
        %v4571 = vsub.f32 %v487, %v4443
        %v4572 = vsub.f32 %v488, %v4444
        %v4573 = vsub.f32 %v489, %v4445
        %v4574 = vsub.f32 %v490, %v4446
        %v4575 = vsub.f32 %v491, %v4447
        %v4576 = vsub.f32 %v492, %v4448
        %v4577 = vsub.f32 %v493, %v4449
        %v4578 = vsub.f32 %v494, %v4450
        %v4579 = vsub.f32 %v495, %v4451
        %v4580 = vsub.f32 %v496, %v4452
        %v4581 = vsub.f32 %v497, %v4453
        %v4582 = vsub.f32 %v498, %v4454
        %v4583 = vsub.f32 %v499, %v4455
        %v4584 = vsub.f32 %v500, %v4456
        %v4585 = vsub.f32 %v501, %v4457
        %v4586 = vsub.f32 %v502, %v4458
        %v4587 = vsub.f32 %v503, %v4459
        %v4588 = vsub.f32 %v504, %v4460
        %v4589 = vsub.f32 %v505, %v4461
        %v4590 = vmul.f32 %v4462, %v4462
        %v4591 = vmul.f32 %v4463, %v4463
        %v4592 = vmul.f32 %v4464, %v4464
        %v4593 = vmul.f32 %v4465, %v4465
        %v4594 = vmul.f32 %v4466, %v4466
        %v4595 = vmul.f32 %v4467, %v4467
        %v4596 = vmul.f32 %v4468, %v4468
        %v4597 = vmul.f32 %v4469, %v4469
        %v4598 = vmul.f32 %v4470, %v4470
        %v4599 = vmul.f32 %v4471, %v4471
        %v4600 = vmul.f32 %v4472, %v4472
        %v4601 = vmul.f32 %v4473, %v4473
        %v4602 = vmul.f32 %v4474, %v4474
        %v4603 = vmul.f32 %v4475, %v4475
        %v4604 = vmul.f32 %v4476, %v4476
        %v4605 = vmul.f32 %v4477, %v4477
        %v4606 = vmul.f32 %v4478, %v4478
        %v4607 = vmul.f32 %v4479, %v4479
        %v4608 = vmul.f32 %v4480, %v4480
        %v4609 = vmul.f32 %v4481, %v4481
        %v4610 = vmul.f32 %v4482, %v4482
        %v4611 = vmul.f32 %v4483, %v4483
        %v4612 = vmul.f32 %v4484, %v4484
        %v4613 = vmul.f32 %v4485, %v4485
        %v4614 = vmul.f32 %v4486, %v4486
        %v4615 = vmul.f32 %v4487, %v4487
        %v4616 = vmul.f32 %v4488, %v4488
        %v4617 = vmul.f32 %v4489, %v4489
        %v4618 = vmul.f32 %v4490, %v4490
        %v4619 = vmul.f32 %v4491, %v4491
        %v4620 = vmul.f32 %v4492, %v4492
        %v4621 = vmul.f32 %v4493, %v4493
        %v4622 = vmul.f32 %v4494, %v4494
        %v4623 = vmul.f32 %v4495, %v4495
        %v4624 = vmul.f32 %v4496, %v4496
        %v4625 = vmul.f32 %v4497, %v4497
        %v4626 = vmul.f32 %v4498, %v4498
        %v4627 = vmul.f32 %v4499, %v4499
        %v4628 = vmul.f32 %v4500, %v4500
        %v4629 = vmul.f32 %v4501, %v4501
        %v4630 = vmul.f32 %v4502, %v4502
        %v4631 = vmul.f32 %v4503, %v4503
        %v4632 = vmul.f32 %v4504, %v4504
        %v4633 = vmul.f32 %v4505, %v4505
        %v4634 = vmul.f32 %v4506, %v4506
        %v4635 = vmul.f32 %v4507, %v4507
        %v4636 = vmul.f32 %v4508, %v4508
        %v4637 = vmul.f32 %v4509, %v4509
        %v4638 = vmul.f32 %v4510, %v4510
        %v4639 = vmul.f32 %v4511, %v4511
        %v4640 = vmul.f32 %v4512, %v4512
        %v4641 = vmul.f32 %v4513, %v4513
        %v4642 = vmul.f32 %v4514, %v4514
        %v4643 = vmul.f32 %v4515, %v4515
        %v4644 = vmul.f32 %v4516, %v4516
        %v4645 = vmul.f32 %v4517, %v4517
        %v4646 = vmul.f32 %v4518, %v4518
        %v4647 = vmul.f32 %v4519, %v4519
        %v4648 = vmul.f32 %v4520, %v4520
        %v4649 = vmul.f32 %v4521, %v4521
        %v4650 = vmul.f32 %v4522, %v4522
        %v4651 = vmul.f32 %v4523, %v4523
        %v4652 = vmul.f32 %v4524, %v4524
        %v4653 = vmul.f32 %v4525, %v4525
        %v4654 = vmul.f32 %v4526, %v4526
        %v4655 = vmul.f32 %v4527, %v4527
        %v4656 = vmul.f32 %v4528, %v4528
        %v4657 = vmul.f32 %v4529, %v4529
        %v4658 = vmul.f32 %v4530, %v4530
        %v4659 = vmul.f32 %v4531, %v4531
        %v4660 = vmul.f32 %v4532, %v4532
        %v4661 = vmul.f32 %v4533, %v4533
        %v4662 = vmul.f32 %v4534, %v4534
        %v4663 = vmul.f32 %v4535, %v4535
        %v4664 = vmul.f32 %v4536, %v4536
        %v4665 = vmul.f32 %v4537, %v4537
        %v4666 = vmul.f32 %v4538, %v4538
        %v4667 = vmul.f32 %v4539, %v4539
        %v4668 = vmul.f32 %v4540, %v4540
        %v4669 = vmul.f32 %v4541, %v4541
        %v4670 = vmul.f32 %v4542, %v4542
        %v4671 = vmul.f32 %v4543, %v4543
        %v4672 = vmul.f32 %v4544, %v4544
        %v4673 = vmul.f32 %v4545, %v4545
        %v4674 = vmul.f32 %v4546, %v4546
        %v4675 = vmul.f32 %v4547, %v4547
        %v4676 = vmul.f32 %v4548, %v4548
        %v4677 = vmul.f32 %v4549, %v4549
        %v4678 = vmul.f32 %v4550, %v4550
        %v4679 = vmul.f32 %v4551, %v4551
        %v4680 = vmul.f32 %v4552, %v4552
        %v4681 = vmul.f32 %v4553, %v4553
        %v4682 = vmul.f32 %v4554, %v4554
        %v4683 = vmul.f32 %v4555, %v4555
        %v4684 = vmul.f32 %v4556, %v4556
        %v4685 = vmul.f32 %v4557, %v4557
        %v4686 = vmul.f32 %v4558, %v4558
        %v4687 = vmul.f32 %v4559, %v4559
        %v4688 = vmul.f32 %v4560, %v4560
        %v4689 = vmul.f32 %v4561, %v4561
        %v4690 = vmul.f32 %v4562, %v4562
        %v4691 = vmul.f32 %v4563, %v4563
        %v4692 = vmul.f32 %v4564, %v4564
        %v4693 = vmul.f32 %v4565, %v4565
        %v4694 = vmul.f32 %v4566, %v4566
        %v4695 = vmul.f32 %v4567, %v4567
        %v4696 = vmul.f32 %v4568, %v4568
        %v4697 = vmul.f32 %v4569, %v4569
        %v4698 = vmul.f32 %v4570, %v4570
        %v4699 = vmul.f32 %v4571, %v4571
        %v4700 = vmul.f32 %v4572, %v4572
        %v4701 = vmul.f32 %v4573, %v4573
        %v4702 = vmul.f32 %v4574, %v4574
        %v4703 = vmul.f32 %v4575, %v4575
        %v4704 = vmul.f32 %v4576, %v4576
        %v4705 = vmul.f32 %v4577, %v4577
        %v4706 = vmul.f32 %v4578, %v4578
        %v4707 = vmul.f32 %v4579, %v4579
        %v4708 = vmul.f32 %v4580, %v4580
        %v4709 = vmul.f32 %v4581, %v4581
        %v4710 = vmul.f32 %v4582, %v4582
        %v4711 = vmul.f32 %v4583, %v4583
        %v4712 = vmul.f32 %v4584, %v4584
        %v4713 = vmul.f32 %v4585, %v4585
        %v4714 = vmul.f32 %v4586, %v4586
        %v4715 = vmul.f32 %v4587, %v4587
        %v4716 = vmul.f32 %v4588, %v4588
        %v4717 = vmul.f32 %v4589, %v4589
        %v4718 = vadd.f32 %v4590, %v4591
        %v4719 = vadd.f32 %v4718, %v4592
        %v4720 = vadd.f32 %v4719, %v4593
        %4721 = vadd.xlane.f32.xlu0 %v4720
        %v4722 = vpop.xlane.xlu0 %4721
        %v4723 = vadd.f32 %v4594, %v4595
        %v4724 = vadd.f32 %v4723, %v4596
        %v4725 = vadd.f32 %v4724, %v4597
        %4726 = vadd.xlane.f32.xlu0 %v4725
        %v4727 = vpop.xlane.xlu0 %4726
        %v4728 = vadd.f32 %v4598, %v4599
        %v4729 = vadd.f32 %v4728, %v4600
        %v4730 = vadd.f32 %v4729, %v4601
        %4731 = vadd.xlane.f32.xlu0 %v4730
        %v4732 = vpop.xlane.xlu0 %4731
        %v4733 = vadd.f32 %v4602, %v4603
        %v4734 = vadd.f32 %v4733, %v4604
        %v4735 = vadd.f32 %v4734, %v4605
        %4736 = vadd.xlane.f32.xlu0 %v4735
        %v4737 = vpop.xlane.xlu0 %4736
        %v4738 = vadd.f32 %v4606, %v4607
        %v4739 = vadd.f32 %v4738, %v4608
        %v4740 = vadd.f32 %v4739, %v4609
        %4741 = vadd.xlane.f32.xlu0 %v4740
        %v4742 = vpop.xlane.xlu0 %4741
        %v4743 = vadd.f32 %v4610, %v4611
        %v4744 = vadd.f32 %v4743, %v4612
        %v4745 = vadd.f32 %v4744, %v4613
        %4746 = vadd.xlane.f32.xlu0 %v4745
        %v4747 = vpop.xlane.xlu0 %4746
        %v4748 = vadd.f32 %v4614, %v4615
        %v4749 = vadd.f32 %v4748, %v4616
        %v4750 = vadd.f32 %v4749, %v4617
        %4751 = vadd.xlane.f32.xlu0 %v4750
        %v4752 = vpop.xlane.xlu0 %4751
        %v4753 = vadd.f32 %v4618, %v4619
        %v4754 = vadd.f32 %v4753, %v4620
        %v4755 = vadd.f32 %v4754, %v4621
        %4756 = vadd.xlane.f32.xlu0 %v4755
        %v4757 = vpop.xlane.xlu0 %4756
        %v4758 = vadd.f32 %v4622, %v4623
        %v4759 = vadd.f32 %v4758, %v4624
        %v4760 = vadd.f32 %v4759, %v4625
        %4761 = vadd.xlane.f32.xlu0 %v4760
        %v4762 = vpop.xlane.xlu0 %4761
        %v4763 = vadd.f32 %v4626, %v4627
        %v4764 = vadd.f32 %v4763, %v4628
        %v4765 = vadd.f32 %v4764, %v4629
        %4766 = vadd.xlane.f32.xlu0 %v4765
        %v4767 = vpop.xlane.xlu0 %4766
        %v4768 = vadd.f32 %v4630, %v4631
        %v4769 = vadd.f32 %v4768, %v4632
        %v4770 = vadd.f32 %v4769, %v4633
        %4771 = vadd.xlane.f32.xlu0 %v4770
        %v4772 = vpop.xlane.xlu0 %4771
        %v4773 = vadd.f32 %v4634, %v4635
        %v4774 = vadd.f32 %v4773, %v4636
        %v4775 = vadd.f32 %v4774, %v4637
        %4776 = vadd.xlane.f32.xlu0 %v4775
        %v4777 = vpop.xlane.xlu0 %4776
        %v4778 = vadd.f32 %v4638, %v4639
        %v4779 = vadd.f32 %v4778, %v4640
        %v4780 = vadd.f32 %v4779, %v4641
        %4781 = vadd.xlane.f32.xlu0 %v4780
        %v4782 = vpop.xlane.xlu0 %4781
        %v4783 = vadd.f32 %v4642, %v4643
        %v4784 = vadd.f32 %v4783, %v4644
        %v4785 = vadd.f32 %v4784, %v4645
        %4786 = vadd.xlane.f32.xlu0 %v4785
        %v4787 = vpop.xlane.xlu0 %4786
        %v4788 = vadd.f32 %v4646, %v4647
        %v4789 = vadd.f32 %v4788, %v4648
        %v4790 = vadd.f32 %v4789, %v4649
        %4791 = vadd.xlane.f32.xlu0 %v4790
        %v4792 = vpop.xlane.xlu0 %4791
        %v4793 = vadd.f32 %v4650, %v4651
        %v4794 = vadd.f32 %v4793, %v4652
        %v4795 = vadd.f32 %v4794, %v4653
        %4796 = vadd.xlane.f32.xlu0 %v4795
        %v4797 = vpop.xlane.xlu0 %4796
        %v4798 = vadd.f32 %v4654, %v4655
        %v4799 = vadd.f32 %v4798, %v4656
        %v4800 = vadd.f32 %v4799, %v4657
        %4801 = vadd.xlane.f32.xlu0 %v4800
        %v4802 = vpop.xlane.xlu0 %4801
        %v4803 = vadd.f32 %v4658, %v4659
        %v4804 = vadd.f32 %v4803, %v4660
        %v4805 = vadd.f32 %v4804, %v4661
        %4806 = vadd.xlane.f32.xlu0 %v4805
        %v4807 = vpop.xlane.xlu0 %4806
        %v4808 = vadd.f32 %v4662, %v4663
        %v4809 = vadd.f32 %v4808, %v4664
        %v4810 = vadd.f32 %v4809, %v4665
        %4811 = vadd.xlane.f32.xlu0 %v4810
        %v4812 = vpop.xlane.xlu0 %4811
        %v4813 = vadd.f32 %v4666, %v4667
        %v4814 = vadd.f32 %v4813, %v4668
        %v4815 = vadd.f32 %v4814, %v4669
        %4816 = vadd.xlane.f32.xlu0 %v4815
        %v4817 = vpop.xlane.xlu0 %4816
        %v4818 = vadd.f32 %v4670, %v4671
        %v4819 = vadd.f32 %v4818, %v4672
        %v4820 = vadd.f32 %v4819, %v4673
        %4821 = vadd.xlane.f32.xlu0 %v4820
        %v4822 = vpop.xlane.xlu0 %4821
        %v4823 = vadd.f32 %v4674, %v4675
        %v4824 = vadd.f32 %v4823, %v4676
        %v4825 = vadd.f32 %v4824, %v4677
        %4826 = vadd.xlane.f32.xlu0 %v4825
        %v4827 = vpop.xlane.xlu0 %4826
        %v4828 = vadd.f32 %v4678, %v4679
        %v4829 = vadd.f32 %v4828, %v4680
        %v4830 = vadd.f32 %v4829, %v4681
        %4831 = vadd.xlane.f32.xlu0 %v4830
        %v4832 = vpop.xlane.xlu0 %4831
        %v4833 = vadd.f32 %v4682, %v4683
        %v4834 = vadd.f32 %v4833, %v4684
        %v4835 = vadd.f32 %v4834, %v4685
        %4836 = vadd.xlane.f32.xlu0 %v4835
        %v4837 = vpop.xlane.xlu0 %4836
        %v4838 = vadd.f32 %v4686, %v4687
        %v4839 = vadd.f32 %v4838, %v4688
        %v4840 = vadd.f32 %v4839, %v4689
        %4841 = vadd.xlane.f32.xlu0 %v4840
        %v4842 = vpop.xlane.xlu0 %4841
        %v4843 = vadd.f32 %v4690, %v4691
        %v4844 = vadd.f32 %v4843, %v4692
        %v4845 = vadd.f32 %v4844, %v4693
        %4846 = vadd.xlane.f32.xlu0 %v4845
        %v4847 = vpop.xlane.xlu0 %4846
        %v4848 = vadd.f32 %v4694, %v4695
        %v4849 = vadd.f32 %v4848, %v4696
        %v4850 = vadd.f32 %v4849, %v4697
        %4851 = vadd.xlane.f32.xlu0 %v4850
        %v4852 = vpop.xlane.xlu0 %4851
        %v4853 = vadd.f32 %v4698, %v4699
        %v4854 = vadd.f32 %v4853, %v4700
        %v4855 = vadd.f32 %v4854, %v4701
        %4856 = vadd.xlane.f32.xlu0 %v4855
        %v4857 = vpop.xlane.xlu0 %4856
        %v4858 = vadd.f32 %v4702, %v4703
        %v4859 = vadd.f32 %v4858, %v4704
        %v4860 = vadd.f32 %v4859, %v4705
        %4861 = vadd.xlane.f32.xlu0 %v4860
        %v4862 = vpop.xlane.xlu0 %4861
        %v4863 = vadd.f32 %v4706, %v4707
        %v4864 = vadd.f32 %v4863, %v4708
        %v4865 = vadd.f32 %v4864, %v4709
        %4866 = vadd.xlane.f32.xlu0 %v4865
        %v4867 = vpop.xlane.xlu0 %4866
        %v4868 = vadd.f32 %v4710, %v4711
        %v4869 = vadd.f32 %v4868, %v4712
        %v4870 = vadd.f32 %v4869, %v4713
        %4871 = vadd.xlane.f32.xlu0 %v4870
        %v4872 = vpop.xlane.xlu0 %4871
        %v4873 = vadd.f32 %v4714, %v4715
        %v4874 = vadd.f32 %v4873, %v4716
        %v4875 = vadd.f32 %v4874, %v4717
        %4876 = vadd.xlane.f32.xlu0 %v4875
        %v4877 = vpop.xlane.xlu0 %4876
        %v4878 = vrsqrt.pop %v4722
        %v4879 = vrsqrt.pop %v4727
        %v4880 = vrsqrt.pop %v4732
        %v4881 = vrsqrt.pop %v4737
        %v4882 = vrsqrt.pop %v4742
        %v4883 = vrsqrt.pop %v4747
        %v4884 = vrsqrt.pop %v4752
        %v4885 = vrsqrt.pop %v4757
        %v4886 = vrsqrt.pop %v4762
        %v4887 = vrsqrt.pop %v4767
        %v4888 = vrsqrt.pop %v4772
        %v4889 = vrsqrt.pop %v4777
        %v4890 = vrsqrt.pop %v4782
        %v4891 = vrsqrt.pop %v4787
        %v4892 = vrsqrt.pop %v4792
        %v4893 = vrsqrt.pop %v4797
        %v4894 = vrsqrt.pop %v4802
        %v4895 = vrsqrt.pop %v4807
        %v4896 = vrsqrt.pop %v4812
        %v4897 = vrsqrt.pop %v4817
        %v4898 = vrsqrt.pop %v4822
        %v4899 = vrsqrt.pop %v4827
        %v4900 = vrsqrt.pop %v4832
        %v4901 = vrsqrt.pop %v4837
        %v4902 = vrsqrt.pop %v4842
        %v4903 = vrsqrt.pop %v4847
        %v4904 = vrsqrt.pop %v4852
        %v4905 = vrsqrt.pop %v4857
        %v4906 = vrsqrt.pop %v4862
        %v4907 = vrsqrt.pop %v4867
        %v4908 = vrsqrt.pop %v4872
        %v4909 = vrsqrt.pop %v4877
        %v4910 = vmul.f32 %v4462, %v4878
        %v4911 = vmul.f32 %v4463, %v4878
        %v4912 = vmul.f32 %v4464, %v4878
        %v4913 = vmul.f32 %v4465, %v4878
        %v4914 = vmul.f32 %v4466, %v4879
        %v4915 = vmul.f32 %v4467, %v4879
        %v4916 = vmul.f32 %v4468, %v4879
        %v4917 = vmul.f32 %v4469, %v4879
        %v4918 = vmul.f32 %v4470, %v4880
        %v4919 = vmul.f32 %v4471, %v4880
        %v4920 = vmul.f32 %v4472, %v4880
        %v4921 = vmul.f32 %v4473, %v4880
        %v4922 = vmul.f32 %v4474, %v4881
        %v4923 = vmul.f32 %v4475, %v4881
        %v4924 = vmul.f32 %v4476, %v4881
        %v4925 = vmul.f32 %v4477, %v4881
        %v4926 = vmul.f32 %v4478, %v4882
        %v4927 = vmul.f32 %v4479, %v4882
        %v4928 = vmul.f32 %v4480, %v4882
        %v4929 = vmul.f32 %v4481, %v4882
        %v4930 = vmul.f32 %v4482, %v4883
        %v4931 = vmul.f32 %v4483, %v4883
        %v4932 = vmul.f32 %v4484, %v4883
        %v4933 = vmul.f32 %v4485, %v4883
        %v4934 = vmul.f32 %v4486, %v4884
        %v4935 = vmul.f32 %v4487, %v4884
        %v4936 = vmul.f32 %v4488, %v4884
        %v4937 = vmul.f32 %v4489, %v4884
        %v4938 = vmul.f32 %v4490, %v4885
        %v4939 = vmul.f32 %v4491, %v4885
        %v4940 = vmul.f32 %v4492, %v4885
        %v4941 = vmul.f32 %v4493, %v4885
        %v4942 = vmul.f32 %v4494, %v4886
        %v4943 = vmul.f32 %v4495, %v4886
        %v4944 = vmul.f32 %v4496, %v4886
        %v4945 = vmul.f32 %v4497, %v4886
        %v4946 = vmul.f32 %v4498, %v4887
        %v4947 = vmul.f32 %v4499, %v4887
        %v4948 = vmul.f32 %v4500, %v4887
        %v4949 = vmul.f32 %v4501, %v4887
        %v4950 = vmul.f32 %v4502, %v4888
        %v4951 = vmul.f32 %v4503, %v4888
        %v4952 = vmul.f32 %v4504, %v4888
        %v4953 = vmul.f32 %v4505, %v4888
        %v4954 = vmul.f32 %v4506, %v4889
        %v4955 = vmul.f32 %v4507, %v4889
        %v4956 = vmul.f32 %v4508, %v4889
        %v4957 = vmul.f32 %v4509, %v4889
        %v4958 = vmul.f32 %v4510, %v4890
        %v4959 = vmul.f32 %v4511, %v4890
        %v4960 = vmul.f32 %v4512, %v4890
        %v4961 = vmul.f32 %v4513, %v4890
        %v4962 = vmul.f32 %v4514, %v4891
        %v4963 = vmul.f32 %v4515, %v4891
        %v4964 = vmul.f32 %v4516, %v4891
        %v4965 = vmul.f32 %v4517, %v4891
        %v4966 = vmul.f32 %v4518, %v4892
        %v4967 = vmul.f32 %v4519, %v4892
        %v4968 = vmul.f32 %v4520, %v4892
        %v4969 = vmul.f32 %v4521, %v4892
        %v4970 = vmul.f32 %v4522, %v4893
        %v4971 = vmul.f32 %v4523, %v4893
        %v4972 = vmul.f32 %v4524, %v4893
        %v4973 = vmul.f32 %v4525, %v4893
        %v4974 = vmul.f32 %v4526, %v4894
        %v4975 = vmul.f32 %v4527, %v4894
        %v4976 = vmul.f32 %v4528, %v4894
        %v4977 = vmul.f32 %v4529, %v4894
        %v4978 = vmul.f32 %v4530, %v4895
        %v4979 = vmul.f32 %v4531, %v4895
        %v4980 = vmul.f32 %v4532, %v4895
        %v4981 = vmul.f32 %v4533, %v4895
        %v4982 = vmul.f32 %v4534, %v4896
        %v4983 = vmul.f32 %v4535, %v4896
        %v4984 = vmul.f32 %v4536, %v4896
        %v4985 = vmul.f32 %v4537, %v4896
        %v4986 = vmul.f32 %v4538, %v4897
        %v4987 = vmul.f32 %v4539, %v4897
        %v4988 = vmul.f32 %v4540, %v4897
        %v4989 = vmul.f32 %v4541, %v4897
        %v4990 = vmul.f32 %v4542, %v4898
        %v4991 = vmul.f32 %v4543, %v4898
        %v4992 = vmul.f32 %v4544, %v4898
        %v4993 = vmul.f32 %v4545, %v4898
        %v4994 = vmul.f32 %v4546, %v4899
        %v4995 = vmul.f32 %v4547, %v4899
        %v4996 = vmul.f32 %v4548, %v4899
        %v4997 = vmul.f32 %v4549, %v4899
        %v4998 = vmul.f32 %v4550, %v4900
        %v4999 = vmul.f32 %v4551, %v4900
        %v5000 = vmul.f32 %v4552, %v4900
        %v5001 = vmul.f32 %v4553, %v4900
        %v5002 = vmul.f32 %v4554, %v4901
        %v5003 = vmul.f32 %v4555, %v4901
        %v5004 = vmul.f32 %v4556, %v4901
        %v5005 = vmul.f32 %v4557, %v4901
        %v5006 = vmul.f32 %v4558, %v4902
        %v5007 = vmul.f32 %v4559, %v4902
        %v5008 = vmul.f32 %v4560, %v4902
        %v5009 = vmul.f32 %v4561, %v4902
        %v5010 = vmul.f32 %v4562, %v4903
        %v5011 = vmul.f32 %v4563, %v4903
        %v5012 = vmul.f32 %v4564, %v4903
        %v5013 = vmul.f32 %v4565, %v4903
        %v5014 = vmul.f32 %v4566, %v4904
        %v5015 = vmul.f32 %v4567, %v4904
        %v5016 = vmul.f32 %v4568, %v4904
        %v5017 = vmul.f32 %v4569, %v4904
        %v5018 = vmul.f32 %v4570, %v4905
        %v5019 = vmul.f32 %v4571, %v4905
        %v5020 = vmul.f32 %v4572, %v4905
        %v5021 = vmul.f32 %v4573, %v4905
        %v5022 = vmul.f32 %v4574, %v4906
        %v5023 = vmul.f32 %v4575, %v4906
        %v5024 = vmul.f32 %v4576, %v4906
        %v5025 = vmul.f32 %v4577, %v4906
        %v5026 = vmul.f32 %v4578, %v4907
        %v5027 = vmul.f32 %v4579, %v4907
        %v5028 = vmul.f32 %v4580, %v4907
        %v5029 = vmul.f32 %v4581, %v4907
        %v5030 = vmul.f32 %v4582, %v4908
        %v5031 = vmul.f32 %v4583, %v4908
        %v5032 = vmul.f32 %v4584, %v4908
        %v5033 = vmul.f32 %v4585, %v4908
        %v5034 = vmul.f32 %v4586, %v4909
        %v5035 = vmul.f32 %v4587, %v4909
        %v5036 = vmul.f32 %v4588, %v4909
        %v5037 = vmul.f32 %v4589, %v4909
        %v5038 = vpack.c.bf16 %v4914, %v4910
        %v5039 = vpack.c.bf16 %v4915, %v4911
        %v5040 = vpack.c.bf16 %v4916, %v4912
        %v5041 = vpack.c.bf16 %v4917, %v4913
        %v5042 = vpack.c.bf16 %v4922, %v4918
        %v5043 = vpack.c.bf16 %v4923, %v4919
        %v5044 = vpack.c.bf16 %v4924, %v4920
        %v5045 = vpack.c.bf16 %v4925, %v4921
        %v5046 = vpack.c.bf16 %v4930, %v4926
        %v5047 = vpack.c.bf16 %v4931, %v4927
        %v5048 = vpack.c.bf16 %v4932, %v4928
        %v5049 = vpack.c.bf16 %v4933, %v4929
        %v5050 = vpack.c.bf16 %v4938, %v4934
        %v5051 = vpack.c.bf16 %v4939, %v4935
        %v5052 = vpack.c.bf16 %v4940, %v4936
        %v5053 = vpack.c.bf16 %v4941, %v4937
        %v5054 = vpack.c.bf16 %v4946, %v4942
        %v5055 = vpack.c.bf16 %v4947, %v4943
        %v5056 = vpack.c.bf16 %v4948, %v4944
        %v5057 = vpack.c.bf16 %v4949, %v4945
        %v5058 = vpack.c.bf16 %v4954, %v4950
        %v5059 = vpack.c.bf16 %v4955, %v4951
        %v5060 = vpack.c.bf16 %v4956, %v4952
        %v5061 = vpack.c.bf16 %v4957, %v4953
        %v5062 = vpack.c.bf16 %v4962, %v4958
        %v5063 = vpack.c.bf16 %v4963, %v4959
        %v5064 = vpack.c.bf16 %v4964, %v4960
        %v5065 = vpack.c.bf16 %v4965, %v4961
        %v5066 = vpack.c.bf16 %v4970, %v4966
        %v5067 = vpack.c.bf16 %v4971, %v4967
        %v5068 = vpack.c.bf16 %v4972, %v4968
        %v5069 = vpack.c.bf16 %v4973, %v4969
        %v5070 = vpack.c.bf16 %v4978, %v4974
        %v5071 = vpack.c.bf16 %v4979, %v4975
        %v5072 = vpack.c.bf16 %v4980, %v4976
        %v5073 = vpack.c.bf16 %v4981, %v4977
        %v5074 = vpack.c.bf16 %v4986, %v4982
        %v5075 = vpack.c.bf16 %v4987, %v4983
        %v5076 = vpack.c.bf16 %v4988, %v4984
        %v5077 = vpack.c.bf16 %v4989, %v4985
        %v5078 = vpack.c.bf16 %v4994, %v4990
        %v5079 = vpack.c.bf16 %v4995, %v4991
        %v5080 = vpack.c.bf16 %v4996, %v4992
        %v5081 = vpack.c.bf16 %v4997, %v4993
        %v5082 = vpack.c.bf16 %v5002, %v4998
        %v5083 = vpack.c.bf16 %v5003, %v4999
        %v5084 = vpack.c.bf16 %v5004, %v5000
        %v5085 = vpack.c.bf16 %v5005, %v5001
        %v5086 = vpack.c.bf16 %v5010, %v5006
        %v5087 = vpack.c.bf16 %v5011, %v5007
        %v5088 = vpack.c.bf16 %v5012, %v5008
        %v5089 = vpack.c.bf16 %v5013, %v5009
        %v5090 = vpack.c.bf16 %v5018, %v5014
        %v5091 = vpack.c.bf16 %v5019, %v5015
        %v5092 = vpack.c.bf16 %v5020, %v5016
        %v5093 = vpack.c.bf16 %v5021, %v5017
        %v5094 = vpack.c.bf16 %v5026, %v5022
        %v5095 = vpack.c.bf16 %v5027, %v5023
        %v5096 = vpack.c.bf16 %v5028, %v5024
        %v5097 = vpack.c.bf16 %v5029, %v5025
        %v5098 = vpack.c.bf16 %v5034, %v5030
        %v5099 = vpack.c.bf16 %v5035, %v5031
        %v5100 = vpack.c.bf16 %v5036, %v5032
        %v5101 = vpack.c.bf16 %v5037, %v5033
        %v5166 = vunpack.c.l.b16 %v5038
        %v5167 = vunpack.c.l.b16 %v5039
        %v5168 = vunpack.c.l.b16 %v5040
        %v5169 = vunpack.c.l.b16 %v5041
        %v5170 = vunpack.c.h.b16 %v5038
        %v5171 = vunpack.c.h.b16 %v5039
        %v5172 = vunpack.c.h.b16 %v5040
        %v5173 = vunpack.c.h.b16 %v5041
        %v5174 = vunpack.c.l.b16 %v5042
        %v5175 = vunpack.c.l.b16 %v5043
        %v5176 = vunpack.c.l.b16 %v5044
        %v5177 = vunpack.c.l.b16 %v5045
        %v5178 = vunpack.c.h.b16 %v5042
        %v5179 = vunpack.c.h.b16 %v5043
        %v5180 = vunpack.c.h.b16 %v5044
        %v5181 = vunpack.c.h.b16 %v5045
        %v5182 = vunpack.c.l.b16 %v5046
        %v5183 = vunpack.c.l.b16 %v5047
        %v5184 = vunpack.c.l.b16 %v5048
        %v5185 = vunpack.c.l.b16 %v5049
        %v5186 = vunpack.c.h.b16 %v5046
        %v5187 = vunpack.c.h.b16 %v5047
        %v5188 = vunpack.c.h.b16 %v5048
        %v5189 = vunpack.c.h.b16 %v5049
        %v5190 = vunpack.c.l.b16 %v5050
        %v5191 = vunpack.c.l.b16 %v5051
        %v5192 = vunpack.c.l.b16 %v5052
        %v5193 = vunpack.c.l.b16 %v5053
        %v5194 = vunpack.c.h.b16 %v5050
        %v5195 = vunpack.c.h.b16 %v5051
        %v5196 = vunpack.c.h.b16 %v5052
        %v5197 = vunpack.c.h.b16 %v5053
        %v5198 = vunpack.c.l.b16 %v5054
        %v5199 = vunpack.c.l.b16 %v5055
        %v5200 = vunpack.c.l.b16 %v5056
        %v5201 = vunpack.c.l.b16 %v5057
        %v5202 = vunpack.c.h.b16 %v5054
        %v5203 = vunpack.c.h.b16 %v5055
        %v5204 = vunpack.c.h.b16 %v5056
        %v5205 = vunpack.c.h.b16 %v5057
        %v5206 = vunpack.c.l.b16 %v5058
        %v5207 = vunpack.c.l.b16 %v5059
        %v5208 = vunpack.c.l.b16 %v5060
        %v5209 = vunpack.c.l.b16 %v5061
        %v5210 = vunpack.c.h.b16 %v5058
        %v5211 = vunpack.c.h.b16 %v5059
        %v5212 = vunpack.c.h.b16 %v5060
        %v5213 = vunpack.c.h.b16 %v5061
        %v5214 = vunpack.c.l.b16 %v5062
        %v5215 = vunpack.c.l.b16 %v5063
        %v5216 = vunpack.c.l.b16 %v5064
        %v5217 = vunpack.c.l.b16 %v5065
        %v5218 = vunpack.c.h.b16 %v5062
        %v5219 = vunpack.c.h.b16 %v5063
        %v5220 = vunpack.c.h.b16 %v5064
        %v5221 = vunpack.c.h.b16 %v5065
        %v5222 = vunpack.c.l.b16 %v5066
        %v5223 = vunpack.c.l.b16 %v5067
        %v5224 = vunpack.c.l.b16 %v5068
        %v5225 = vunpack.c.l.b16 %v5069
        %v5226 = vunpack.c.h.b16 %v5066
        %v5227 = vunpack.c.h.b16 %v5067
        %v5228 = vunpack.c.h.b16 %v5068
        %v5229 = vunpack.c.h.b16 %v5069
        %v5230 = vunpack.c.l.b16 %v5070
        %v5231 = vunpack.c.l.b16 %v5071
        %v5232 = vunpack.c.l.b16 %v5072
        %v5233 = vunpack.c.l.b16 %v5073
        %v5234 = vunpack.c.h.b16 %v5070
        %v5235 = vunpack.c.h.b16 %v5071
        %v5236 = vunpack.c.h.b16 %v5072
        %v5237 = vunpack.c.h.b16 %v5073
        %v5238 = vunpack.c.l.b16 %v5074
        %v5239 = vunpack.c.l.b16 %v5075
        %v5240 = vunpack.c.l.b16 %v5076
        %v5241 = vunpack.c.l.b16 %v5077
        %v5242 = vunpack.c.h.b16 %v5074
        %v5243 = vunpack.c.h.b16 %v5075
        %v5244 = vunpack.c.h.b16 %v5076
        %v5245 = vunpack.c.h.b16 %v5077
        %v5246 = vunpack.c.l.b16 %v5078
        %v5247 = vunpack.c.l.b16 %v5079
        %v5248 = vunpack.c.l.b16 %v5080
        %v5249 = vunpack.c.l.b16 %v5081
        %v5250 = vunpack.c.h.b16 %v5078
        %v5251 = vunpack.c.h.b16 %v5079
        %v5252 = vunpack.c.h.b16 %v5080
        %v5253 = vunpack.c.h.b16 %v5081
        %v5254 = vunpack.c.l.b16 %v5082
        %v5255 = vunpack.c.l.b16 %v5083
        %v5256 = vunpack.c.l.b16 %v5084
        %v5257 = vunpack.c.l.b16 %v5085
        %v5258 = vunpack.c.h.b16 %v5082
        %v5259 = vunpack.c.h.b16 %v5083
        %v5260 = vunpack.c.h.b16 %v5084
        %v5261 = vunpack.c.h.b16 %v5085
        %v5262 = vunpack.c.l.b16 %v5086
        %v5263 = vunpack.c.l.b16 %v5087
        %v5264 = vunpack.c.l.b16 %v5088
        %v5265 = vunpack.c.l.b16 %v5089
        %v5266 = vunpack.c.h.b16 %v5086
        %v5267 = vunpack.c.h.b16 %v5087
        %v5268 = vunpack.c.h.b16 %v5088
        %v5269 = vunpack.c.h.b16 %v5089
        %v5270 = vunpack.c.l.b16 %v5090
        %v5271 = vunpack.c.l.b16 %v5091
        %v5272 = vunpack.c.l.b16 %v5092
        %v5273 = vunpack.c.l.b16 %v5093
        %v5274 = vunpack.c.h.b16 %v5090
        %v5275 = vunpack.c.h.b16 %v5091
        %v5276 = vunpack.c.h.b16 %v5092
        %v5277 = vunpack.c.h.b16 %v5093
        %v5278 = vunpack.c.l.b16 %v5094
        %v5279 = vunpack.c.l.b16 %v5095
        %v5280 = vunpack.c.l.b16 %v5096
        %v5281 = vunpack.c.l.b16 %v5097
        %v5282 = vunpack.c.h.b16 %v5094
        %v5283 = vunpack.c.h.b16 %v5095
        %v5284 = vunpack.c.h.b16 %v5096
        %v5285 = vunpack.c.h.b16 %v5097
        %v5286 = vunpack.c.l.b16 %v5098
        %v5287 = vunpack.c.l.b16 %v5099
        %v5288 = vunpack.c.l.b16 %v5100
        %v5289 = vunpack.c.l.b16 %v5101
        %v5290 = vunpack.c.h.b16 %v5098
        %v5291 = vunpack.c.h.b16 %v5099
        %v5292 = vunpack.c.h.b16 %v5100
        %v5293 = vunpack.c.h.b16 %v5101
        %v5294 = vpack.c.b16 %v5167, %v5166
        %v5295 = vpack.c.b16 %v5169, %v5168
        %v5296 = vpack.c.b16 %v5171, %v5170
        %v5297 = vpack.c.b16 %v5173, %v5172
        %v5298 = vpack.c.b16 %v5175, %v5174
        %v5299 = vpack.c.b16 %v5177, %v5176
        %v5300 = vpack.c.b16 %v5179, %v5178
        %v5301 = vpack.c.b16 %v5181, %v5180
        %v5302 = vpack.c.b16 %v5183, %v5182
        %v5303 = vpack.c.b16 %v5185, %v5184
        %v5304 = vpack.c.b16 %v5187, %v5186
        %v5305 = vpack.c.b16 %v5189, %v5188
        %v5306 = vpack.c.b16 %v5191, %v5190
        %v5307 = vpack.c.b16 %v5193, %v5192
        %v5308 = vpack.c.b16 %v5195, %v5194
        %v5309 = vpack.c.b16 %v5197, %v5196
        %v5310 = vpack.c.b16 %v5199, %v5198
        %v5311 = vpack.c.b16 %v5201, %v5200
        %v5312 = vpack.c.b16 %v5203, %v5202
        %v5313 = vpack.c.b16 %v5205, %v5204
        %v5314 = vpack.c.b16 %v5207, %v5206
        %v5315 = vpack.c.b16 %v5209, %v5208
        %v5316 = vpack.c.b16 %v5211, %v5210
        %v5317 = vpack.c.b16 %v5213, %v5212
        %v5318 = vpack.c.b16 %v5215, %v5214
        %v5319 = vpack.c.b16 %v5217, %v5216
        %v5320 = vpack.c.b16 %v5219, %v5218
        %v5321 = vpack.c.b16 %v5221, %v5220
        %v5322 = vpack.c.b16 %v5223, %v5222
        %v5323 = vpack.c.b16 %v5225, %v5224
        %v5324 = vpack.c.b16 %v5227, %v5226
        %v5325 = vpack.c.b16 %v5229, %v5228
        %v5326 = vpack.c.b16 %v5231, %v5230
        %v5327 = vpack.c.b16 %v5233, %v5232
        %v5328 = vpack.c.b16 %v5235, %v5234
        %v5329 = vpack.c.b16 %v5237, %v5236
        %v5330 = vpack.c.b16 %v5239, %v5238
        %v5331 = vpack.c.b16 %v5241, %v5240
        %v5332 = vpack.c.b16 %v5243, %v5242
        %v5333 = vpack.c.b16 %v5245, %v5244
        %v5334 = vpack.c.b16 %v5247, %v5246
        %v5335 = vpack.c.b16 %v5249, %v5248
        %v5336 = vpack.c.b16 %v5251, %v5250
        %v5337 = vpack.c.b16 %v5253, %v5252
        %v5338 = vpack.c.b16 %v5255, %v5254
        %v5339 = vpack.c.b16 %v5257, %v5256
        %v5340 = vpack.c.b16 %v5259, %v5258
        %v5341 = vpack.c.b16 %v5261, %v5260
        %v5342 = vpack.c.b16 %v5263, %v5262
        %v5343 = vpack.c.b16 %v5265, %v5264
        %v5344 = vpack.c.b16 %v5267, %v5266
        %v5345 = vpack.c.b16 %v5269, %v5268
        %v5346 = vpack.c.b16 %v5271, %v5270
        %v5347 = vpack.c.b16 %v5273, %v5272
        %v5348 = vpack.c.b16 %v5275, %v5274
        %v5349 = vpack.c.b16 %v5277, %v5276
        %v5350 = vpack.c.b16 %v5279, %v5278
        %v5351 = vpack.c.b16 %v5281, %v5280
        %v5352 = vpack.c.b16 %v5283, %v5282
        %v5353 = vpack.c.b16 %v5285, %v5284
        %v5354 = vpack.c.b16 %v5287, %v5286
        %v5355 = vpack.c.b16 %v5289, %v5288
        %v5356 = vpack.c.b16 %v5291, %v5290
        %v5357 = vpack.c.b16 %v5293, %v5292
        %5422 = vst [vmem:[%s303] sm:$0xff] %v5294
        %5423 = vst [vmem:[%s303 + $0x8] sm:$0xff] %v5295
        %5424 = vst [vmem:[%s303 + $0x10] sm:$0xff] %v5296
        %5425 = vst [vmem:[%s303 + $0x18] sm:$0xff] %v5297
        %5426 = vst [vmem:[%s303 + $0x20] sm:$0xff] %v5298
        %5427 = vst [vmem:[%s303 + $0x28] sm:$0xff] %v5299
        %5428 = vst [vmem:[%s303 + $0x30] sm:$0xff] %v5300
        %5429 = vst [vmem:[%s303 + $0x38] sm:$0xff] %v5301
        %5430 = vst [vmem:[%s303 + $0x40] sm:$0xff] %v5302
        %5431 = vst [vmem:[%s303 + $0x48] sm:$0xff] %v5303
        %5432 = vst [vmem:[%s303 + $0x50] sm:$0xff] %v5304
        %5433 = vst [vmem:[%s303 + $0x58] sm:$0xff] %v5305
        %5434 = vst [vmem:[%s303 + $0x60] sm:$0xff] %v5306
        %5435 = vst [vmem:[%s303 + $0x68] sm:$0xff] %v5307
        %5436 = vst [vmem:[%s303 + $0x70] sm:$0xff] %v5308
        %5437 = vst [vmem:[%s303 + $0x78] sm:$0xff] %v5309
        %5438 = vst [vmem:[%s303 + $0x80] sm:$0xff] %v5310
        %5439 = vst [vmem:[%s303 + $0x88] sm:$0xff] %v5311
        %5440 = vst [vmem:[%s303 + $0x90] sm:$0xff] %v5312
        %5441 = vst [vmem:[%s303 + $0x98] sm:$0xff] %v5313
        %5442 = vst [vmem:[%s303 + $0xa0] sm:$0xff] %v5314
        %5443 = vst [vmem:[%s303 + $0xa8] sm:$0xff] %v5315
        %5444 = vst [vmem:[%s303 + $0xb0] sm:$0xff] %v5316
        %5445 = vst [vmem:[%s303 + $0xb8] sm:$0xff] %v5317
        %5446 = vst [vmem:[%s303 + $0xc0] sm:$0xff] %v5318
        %5447 = vst [vmem:[%s303 + $0xc8] sm:$0xff] %v5319
        %5448 = vst [vmem:[%s303 + $0xd0] sm:$0xff] %v5320
        %5449 = vst [vmem:[%s303 + $0xd8] sm:$0xff] %v5321
        %5450 = vst [vmem:[%s303 + $0xe0] sm:$0xff] %v5322
        %5451 = vst [vmem:[%s303 + $0xe8] sm:$0xff] %v5323
        %5452 = vst [vmem:[%s303 + $0xf0] sm:$0xff] %v5324
        %5453 = vst [vmem:[%s303 + $0xf8] sm:$0xff] %v5325
        %5454 = vst [vmem:[%s303 + $0x100] sm:$0xff] %v5326
        %5455 = vst [vmem:[%s303 + $0x108] sm:$0xff] %v5327
        %5456 = vst [vmem:[%s303 + $0x110] sm:$0xff] %v5328
        %5457 = vst [vmem:[%s303 + $0x118] sm:$0xff] %v5329
        %5458 = vst [vmem:[%s303 + $0x120] sm:$0xff] %v5330
        %5459 = vst [vmem:[%s303 + $0x128] sm:$0xff] %v5331
        %5460 = vst [vmem:[%s303 + $0x130] sm:$0xff] %v5332
        %5461 = vst [vmem:[%s303 + $0x138] sm:$0xff] %v5333
        %5462 = vst [vmem:[%s303 + $0x140] sm:$0xff] %v5334
        %5463 = vst [vmem:[%s303 + $0x148] sm:$0xff] %v5335
        %5464 = vst [vmem:[%s303 + $0x150] sm:$0xff] %v5336
        %5465 = vst [vmem:[%s303 + $0x158] sm:$0xff] %v5337
        %5466 = vst [vmem:[%s303 + $0x160] sm:$0xff] %v5338
        %5467 = vst [vmem:[%s303 + $0x168] sm:$0xff] %v5339
        %5468 = vst [vmem:[%s303 + $0x170] sm:$0xff] %v5340
        %5469 = vst [vmem:[%s303 + $0x178] sm:$0xff] %v5341
        %5470 = vst [vmem:[%s303 + $0x180] sm:$0xff] %v5342
        %5471 = vst [vmem:[%s303 + $0x188] sm:$0xff] %v5343
        %5472 = vst [vmem:[%s303 + $0x190] sm:$0xff] %v5344
        %5473 = vst [vmem:[%s303 + $0x198] sm:$0xff] %v5345
        %5474 = vst [vmem:[%s303 + $0x1a0] sm:$0xff] %v5346
        %5475 = vst [vmem:[%s303 + $0x1a8] sm:$0xff] %v5347
        %5476 = vst [vmem:[%s303 + $0x1b0] sm:$0xff] %v5348
        %5477 = vst [vmem:[%s303 + $0x1b8] sm:$0xff] %v5349
        %5478 = vst [vmem:[%s303 + $0x1c0] sm:$0xff] %v5350
        %5479 = vst [vmem:[%s303 + $0x1c8] sm:$0xff] %v5351
        %5480 = vst [vmem:[%s303 + $0x1d0] sm:$0xff] %v5352
        %5481 = vst [vmem:[%s303 + $0x1d8] sm:$0xff] %v5353
        %5482 = vst [vmem:[%s303 + $0x1e0] sm:$0xff] %v5354
        %5483 = vst [vmem:[%s303 + $0x1e8] sm:$0xff] %v5355
        %5484 = vst [vmem:[%s303 + $0x1f0] sm:$0xff] %v5356
        %5485 = vst [vmem:[%s303 + $0x1f8] sm:$0xff] %v5357
        %v5486 = vpack.c.bf16 %v4338, %v4334
        %v5487 = vpack.c.bf16 %v4339, %v4335
        %v5488 = vpack.c.bf16 %v4340, %v4336
        %v5489 = vpack.c.bf16 %v4341, %v4337
        %v5490 = vpack.c.bf16 %v4346, %v4342
        %v5491 = vpack.c.bf16 %v4347, %v4343
        %v5492 = vpack.c.bf16 %v4348, %v4344
        %v5493 = vpack.c.bf16 %v4349, %v4345
        %v5494 = vpack.c.bf16 %v4354, %v4350
        %v5495 = vpack.c.bf16 %v4355, %v4351
        %v5496 = vpack.c.bf16 %v4356, %v4352
        %v5497 = vpack.c.bf16 %v4357, %v4353
        %v5498 = vpack.c.bf16 %v4362, %v4358
        %v5499 = vpack.c.bf16 %v4363, %v4359
        %v5500 = vpack.c.bf16 %v4364, %v4360
        %v5501 = vpack.c.bf16 %v4365, %v4361
        %v5502 = vpack.c.bf16 %v4370, %v4366
        %v5503 = vpack.c.bf16 %v4371, %v4367
        %v5504 = vpack.c.bf16 %v4372, %v4368
        %v5505 = vpack.c.bf16 %v4373, %v4369
        %v5506 = vpack.c.bf16 %v4378, %v4374
        %v5507 = vpack.c.bf16 %v4379, %v4375
        %v5508 = vpack.c.bf16 %v4380, %v4376
        %v5509 = vpack.c.bf16 %v4381, %v4377
        %v5510 = vpack.c.bf16 %v4386, %v4382
        %v5511 = vpack.c.bf16 %v4387, %v4383
        %v5512 = vpack.c.bf16 %v4388, %v4384
        %v5513 = vpack.c.bf16 %v4389, %v4385
        %v5514 = vpack.c.bf16 %v4394, %v4390
        %v5515 = vpack.c.bf16 %v4395, %v4391
        %v5516 = vpack.c.bf16 %v4396, %v4392
        %v5517 = vpack.c.bf16 %v4397, %v4393
        %v5518 = vpack.c.bf16 %v4402, %v4398
        %v5519 = vpack.c.bf16 %v4403, %v4399
        %v5520 = vpack.c.bf16 %v4404, %v4400
        %v5521 = vpack.c.bf16 %v4405, %v4401
        %v5522 = vpack.c.bf16 %v4410, %v4406
        %v5523 = vpack.c.bf16 %v4411, %v4407
        %v5524 = vpack.c.bf16 %v4412, %v4408
        %v5525 = vpack.c.bf16 %v4413, %v4409
        %v5526 = vpack.c.bf16 %v4418, %v4414
        %v5527 = vpack.c.bf16 %v4419, %v4415
        %v5528 = vpack.c.bf16 %v4420, %v4416
        %v5529 = vpack.c.bf16 %v4421, %v4417
        %v5530 = vpack.c.bf16 %v4426, %v4422
        %v5531 = vpack.c.bf16 %v4427, %v4423
        %v5532 = vpack.c.bf16 %v4428, %v4424
        %v5533 = vpack.c.bf16 %v4429, %v4425
        %v5534 = vpack.c.bf16 %v4434, %v4430
        %v5535 = vpack.c.bf16 %v4435, %v4431
        %v5536 = vpack.c.bf16 %v4436, %v4432
        %v5537 = vpack.c.bf16 %v4437, %v4433
        %v5538 = vpack.c.bf16 %v4442, %v4438
        %v5539 = vpack.c.bf16 %v4443, %v4439
        %v5540 = vpack.c.bf16 %v4444, %v4440
        %v5541 = vpack.c.bf16 %v4445, %v4441
        %v5542 = vpack.c.bf16 %v4450, %v4446
        %v5543 = vpack.c.bf16 %v4451, %v4447
        %v5544 = vpack.c.bf16 %v4452, %v4448
        %v5545 = vpack.c.bf16 %v4453, %v4449
        %v5546 = vpack.c.bf16 %v4458, %v4454
        %v5547 = vpack.c.bf16 %v4459, %v4455
        %v5548 = vpack.c.bf16 %v4460, %v4456
        %v5549 = vpack.c.bf16 %v4461, %v4457
        %v5614 = vunpack.c.l.b16 %v5486
        %v5615 = vunpack.c.l.b16 %v5487
        %v5616 = vunpack.c.l.b16 %v5488
        %v5617 = vunpack.c.l.b16 %v5489
        %v5618 = vunpack.c.h.b16 %v5486
        %v5619 = vunpack.c.h.b16 %v5487
        %v5620 = vunpack.c.h.b16 %v5488
        %v5621 = vunpack.c.h.b16 %v5489
        %v5622 = vunpack.c.l.b16 %v5490
        %v5623 = vunpack.c.l.b16 %v5491
        %v5624 = vunpack.c.l.b16 %v5492
        %v5625 = vunpack.c.l.b16 %v5493
        %v5626 = vunpack.c.h.b16 %v5490
        %v5627 = vunpack.c.h.b16 %v5491
        %v5628 = vunpack.c.h.b16 %v5492
        %v5629 = vunpack.c.h.b16 %v5493
        %v5630 = vunpack.c.l.b16 %v5494
        %v5631 = vunpack.c.l.b16 %v5495
        %v5632 = vunpack.c.l.b16 %v5496
        %v5633 = vunpack.c.l.b16 %v5497
        %v5634 = vunpack.c.h.b16 %v5494
        %v5635 = vunpack.c.h.b16 %v5495
        %v5636 = vunpack.c.h.b16 %v5496
        %v5637 = vunpack.c.h.b16 %v5497
        %v5638 = vunpack.c.l.b16 %v5498
        %v5639 = vunpack.c.l.b16 %v5499
        %v5640 = vunpack.c.l.b16 %v5500
        %v5641 = vunpack.c.l.b16 %v5501
        %v5642 = vunpack.c.h.b16 %v5498
        %v5643 = vunpack.c.h.b16 %v5499
        %v5644 = vunpack.c.h.b16 %v5500
        %v5645 = vunpack.c.h.b16 %v5501
        %v5646 = vunpack.c.l.b16 %v5502
        %v5647 = vunpack.c.l.b16 %v5503
        %v5648 = vunpack.c.l.b16 %v5504
        %v5649 = vunpack.c.l.b16 %v5505
        %v5650 = vunpack.c.h.b16 %v5502
        %v5651 = vunpack.c.h.b16 %v5503
        %v5652 = vunpack.c.h.b16 %v5504
        %v5653 = vunpack.c.h.b16 %v5505
        %v5654 = vunpack.c.l.b16 %v5506
        %v5655 = vunpack.c.l.b16 %v5507
        %v5656 = vunpack.c.l.b16 %v5508
        %v5657 = vunpack.c.l.b16 %v5509
        %v5658 = vunpack.c.h.b16 %v5506
        %v5659 = vunpack.c.h.b16 %v5507
        %v5660 = vunpack.c.h.b16 %v5508
        %v5661 = vunpack.c.h.b16 %v5509
        %v5662 = vunpack.c.l.b16 %v5510
        %v5663 = vunpack.c.l.b16 %v5511
        %v5664 = vunpack.c.l.b16 %v5512
        %v5665 = vunpack.c.l.b16 %v5513
        %v5666 = vunpack.c.h.b16 %v5510
        %v5667 = vunpack.c.h.b16 %v5511
        %v5668 = vunpack.c.h.b16 %v5512
        %v5669 = vunpack.c.h.b16 %v5513
        %v5670 = vunpack.c.l.b16 %v5514
        %v5671 = vunpack.c.l.b16 %v5515
        %v5672 = vunpack.c.l.b16 %v5516
        %v5673 = vunpack.c.l.b16 %v5517
        %v5674 = vunpack.c.h.b16 %v5514
        %v5675 = vunpack.c.h.b16 %v5515
        %v5676 = vunpack.c.h.b16 %v5516
        %v5677 = vunpack.c.h.b16 %v5517
        %v5678 = vunpack.c.l.b16 %v5518
        %v5679 = vunpack.c.l.b16 %v5519
        %v5680 = vunpack.c.l.b16 %v5520
        %v5681 = vunpack.c.l.b16 %v5521
        %v5682 = vunpack.c.h.b16 %v5518
        %v5683 = vunpack.c.h.b16 %v5519
        %v5684 = vunpack.c.h.b16 %v5520
        %v5685 = vunpack.c.h.b16 %v5521
        %v5686 = vunpack.c.l.b16 %v5522
        %v5687 = vunpack.c.l.b16 %v5523
        %v5688 = vunpack.c.l.b16 %v5524
        %v5689 = vunpack.c.l.b16 %v5525
        %v5690 = vunpack.c.h.b16 %v5522
        %v5691 = vunpack.c.h.b16 %v5523
        %v5692 = vunpack.c.h.b16 %v5524
        %v5693 = vunpack.c.h.b16 %v5525
        %v5694 = vunpack.c.l.b16 %v5526
        %v5695 = vunpack.c.l.b16 %v5527
        %v5696 = vunpack.c.l.b16 %v5528
        %v5697 = vunpack.c.l.b16 %v5529
        %v5698 = vunpack.c.h.b16 %v5526
        %v5699 = vunpack.c.h.b16 %v5527
        %v5700 = vunpack.c.h.b16 %v5528
        %v5701 = vunpack.c.h.b16 %v5529
        %v5702 = vunpack.c.l.b16 %v5530
        %v5703 = vunpack.c.l.b16 %v5531
        %v5704 = vunpack.c.l.b16 %v5532
        %v5705 = vunpack.c.l.b16 %v5533
        %v5706 = vunpack.c.h.b16 %v5530
        %v5707 = vunpack.c.h.b16 %v5531
        %v5708 = vunpack.c.h.b16 %v5532
        %v5709 = vunpack.c.h.b16 %v5533
        %v5710 = vunpack.c.l.b16 %v5534
        %v5711 = vunpack.c.l.b16 %v5535
        %v5712 = vunpack.c.l.b16 %v5536
        %v5713 = vunpack.c.l.b16 %v5537
        %v5714 = vunpack.c.h.b16 %v5534
        %v5715 = vunpack.c.h.b16 %v5535
        %v5716 = vunpack.c.h.b16 %v5536
        %v5717 = vunpack.c.h.b16 %v5537
        %v5718 = vunpack.c.l.b16 %v5538
        %v5719 = vunpack.c.l.b16 %v5539
        %v5720 = vunpack.c.l.b16 %v5540
        %v5721 = vunpack.c.l.b16 %v5541
        %v5722 = vunpack.c.h.b16 %v5538
        %v5723 = vunpack.c.h.b16 %v5539
        %v5724 = vunpack.c.h.b16 %v5540
        %v5725 = vunpack.c.h.b16 %v5541
        %v5726 = vunpack.c.l.b16 %v5542
        %v5727 = vunpack.c.l.b16 %v5543
        %v5728 = vunpack.c.l.b16 %v5544
        %v5729 = vunpack.c.l.b16 %v5545
        %v5730 = vunpack.c.h.b16 %v5542
        %v5731 = vunpack.c.h.b16 %v5543
        %v5732 = vunpack.c.h.b16 %v5544
        %v5733 = vunpack.c.h.b16 %v5545
        %v5734 = vunpack.c.l.b16 %v5546
        %v5735 = vunpack.c.l.b16 %v5547
        %v5736 = vunpack.c.l.b16 %v5548
        %v5737 = vunpack.c.l.b16 %v5549
        %v5738 = vunpack.c.h.b16 %v5546
        %v5739 = vunpack.c.h.b16 %v5547
        %v5740 = vunpack.c.h.b16 %v5548
        %v5741 = vunpack.c.h.b16 %v5549
        %v5742 = vpack.c.b16 %v5615, %v5614
        %v5743 = vpack.c.b16 %v5617, %v5616
        %v5744 = vpack.c.b16 %v5619, %v5618
        %v5745 = vpack.c.b16 %v5621, %v5620
        %v5746 = vpack.c.b16 %v5623, %v5622
        %v5747 = vpack.c.b16 %v5625, %v5624
        %v5748 = vpack.c.b16 %v5627, %v5626
        %v5749 = vpack.c.b16 %v5629, %v5628
        %v5750 = vpack.c.b16 %v5631, %v5630
        %v5751 = vpack.c.b16 %v5633, %v5632
        %v5752 = vpack.c.b16 %v5635, %v5634
        %v5753 = vpack.c.b16 %v5637, %v5636
        %v5754 = vpack.c.b16 %v5639, %v5638
        %v5755 = vpack.c.b16 %v5641, %v5640
        %v5756 = vpack.c.b16 %v5643, %v5642
        %v5757 = vpack.c.b16 %v5645, %v5644
        %v5758 = vpack.c.b16 %v5647, %v5646
        %v5759 = vpack.c.b16 %v5649, %v5648
        %v5760 = vpack.c.b16 %v5651, %v5650
        %v5761 = vpack.c.b16 %v5653, %v5652
        %v5762 = vpack.c.b16 %v5655, %v5654
        %v5763 = vpack.c.b16 %v5657, %v5656
        %v5764 = vpack.c.b16 %v5659, %v5658
        %v5765 = vpack.c.b16 %v5661, %v5660
        %v5766 = vpack.c.b16 %v5663, %v5662
        %v5767 = vpack.c.b16 %v5665, %v5664
        %v5768 = vpack.c.b16 %v5667, %v5666
        %v5769 = vpack.c.b16 %v5669, %v5668
        %v5770 = vpack.c.b16 %v5671, %v5670
        %v5771 = vpack.c.b16 %v5673, %v5672
        %v5772 = vpack.c.b16 %v5675, %v5674
        %v5773 = vpack.c.b16 %v5677, %v5676
        %v5774 = vpack.c.b16 %v5679, %v5678
        %v5775 = vpack.c.b16 %v5681, %v5680
        %v5776 = vpack.c.b16 %v5683, %v5682
        %v5777 = vpack.c.b16 %v5685, %v5684
        %v5778 = vpack.c.b16 %v5687, %v5686
        %v5779 = vpack.c.b16 %v5689, %v5688
        %v5780 = vpack.c.b16 %v5691, %v5690
        %v5781 = vpack.c.b16 %v5693, %v5692
        %v5782 = vpack.c.b16 %v5695, %v5694
        %v5783 = vpack.c.b16 %v5697, %v5696
        %v5784 = vpack.c.b16 %v5699, %v5698
        %v5785 = vpack.c.b16 %v5701, %v5700
        %v5786 = vpack.c.b16 %v5703, %v5702
        %v5787 = vpack.c.b16 %v5705, %v5704
        %v5788 = vpack.c.b16 %v5707, %v5706
        %v5789 = vpack.c.b16 %v5709, %v5708
        %v5790 = vpack.c.b16 %v5711, %v5710
        %v5791 = vpack.c.b16 %v5713, %v5712
        %v5792 = vpack.c.b16 %v5715, %v5714
        %v5793 = vpack.c.b16 %v5717, %v5716
        %v5794 = vpack.c.b16 %v5719, %v5718
        %v5795 = vpack.c.b16 %v5721, %v5720
        %v5796 = vpack.c.b16 %v5723, %v5722
        %v5797 = vpack.c.b16 %v5725, %v5724
        %v5798 = vpack.c.b16 %v5727, %v5726
        %v5799 = vpack.c.b16 %v5729, %v5728
        %v5800 = vpack.c.b16 %v5731, %v5730
        %v5801 = vpack.c.b16 %v5733, %v5732
        %v5802 = vpack.c.b16 %v5735, %v5734
        %v5803 = vpack.c.b16 %v5737, %v5736
        %v5804 = vpack.c.b16 %v5739, %v5738
        %v5805 = vpack.c.b16 %v5741, %v5740
        %5870 = vst [vmem:[%s310] sm:$0xff] %v5742
        %5871 = vst [vmem:[%s310 + $0x8] sm:$0xff] %v5743
        %5872 = vst [vmem:[%s310 + $0x10] sm:$0xff] %v5744
        %5873 = vst [vmem:[%s310 + $0x18] sm:$0xff] %v5745
        %5874 = vst [vmem:[%s310 + $0x20] sm:$0xff] %v5746
        %5875 = vst [vmem:[%s310 + $0x28] sm:$0xff] %v5747
        %5876 = vst [vmem:[%s310 + $0x30] sm:$0xff] %v5748
        %5877 = vst [vmem:[%s310 + $0x38] sm:$0xff] %v5749
        %5878 = vst [vmem:[%s310 + $0x40] sm:$0xff] %v5750
        %5879 = vst [vmem:[%s310 + $0x48] sm:$0xff] %v5751
        %5880 = vst [vmem:[%s310 + $0x50] sm:$0xff] %v5752
        %5881 = vst [vmem:[%s310 + $0x58] sm:$0xff] %v5753
        %5882 = vst [vmem:[%s310 + $0x60] sm:$0xff] %v5754
        %5883 = vst [vmem:[%s310 + $0x68] sm:$0xff] %v5755
        %5884 = vst [vmem:[%s310 + $0x70] sm:$0xff] %v5756
        %5885 = vst [vmem:[%s310 + $0x78] sm:$0xff] %v5757
        %5886 = vst [vmem:[%s310 + $0x80] sm:$0xff] %v5758
        %5887 = vst [vmem:[%s310 + $0x88] sm:$0xff] %v5759
        %5888 = vst [vmem:[%s310 + $0x90] sm:$0xff] %v5760
        %5889 = vst [vmem:[%s310 + $0x98] sm:$0xff] %v5761
        %5890 = vst [vmem:[%s310 + $0xa0] sm:$0xff] %v5762
        %5891 = vst [vmem:[%s310 + $0xa8] sm:$0xff] %v5763
        %5892 = vst [vmem:[%s310 + $0xb0] sm:$0xff] %v5764
        %5893 = vst [vmem:[%s310 + $0xb8] sm:$0xff] %v5765
        %5894 = vst [vmem:[%s310 + $0xc0] sm:$0xff] %v5766
        %5895 = vst [vmem:[%s310 + $0xc8] sm:$0xff] %v5767
        %5896 = vst [vmem:[%s310 + $0xd0] sm:$0xff] %v5768
        %5897 = vst [vmem:[%s310 + $0xd8] sm:$0xff] %v5769
        %5898 = vst [vmem:[%s310 + $0xe0] sm:$0xff] %v5770
        %5899 = vst [vmem:[%s310 + $0xe8] sm:$0xff] %v5771
        %5900 = vst [vmem:[%s310 + $0xf0] sm:$0xff] %v5772
        %5901 = vst [vmem:[%s310 + $0xf8] sm:$0xff] %v5773
        %5902 = vst [vmem:[%s310 + $0x100] sm:$0xff] %v5774
        %5903 = vst [vmem:[%s310 + $0x108] sm:$0xff] %v5775
        %5904 = vst [vmem:[%s310 + $0x110] sm:$0xff] %v5776
        %5905 = vst [vmem:[%s310 + $0x118] sm:$0xff] %v5777
        %5906 = vst [vmem:[%s310 + $0x120] sm:$0xff] %v5778
        %5907 = vst [vmem:[%s310 + $0x128] sm:$0xff] %v5779
        %5908 = vst [vmem:[%s310 + $0x130] sm:$0xff] %v5780
        %5909 = vst [vmem:[%s310 + $0x138] sm:$0xff] %v5781
        %5910 = vst [vmem:[%s310 + $0x140] sm:$0xff] %v5782
        %5911 = vst [vmem:[%s310 + $0x148] sm:$0xff] %v5783
        %5912 = vst [vmem:[%s310 + $0x150] sm:$0xff] %v5784
        %5913 = vst [vmem:[%s310 + $0x158] sm:$0xff] %v5785
        %5914 = vst [vmem:[%s310 + $0x160] sm:$0xff] %v5786
        %5915 = vst [vmem:[%s310 + $0x168] sm:$0xff] %v5787
        %5916 = vst [vmem:[%s310 + $0x170] sm:$0xff] %v5788
        %5917 = vst [vmem:[%s310 + $0x178] sm:$0xff] %v5789
        %5918 = vst [vmem:[%s310 + $0x180] sm:$0xff] %v5790
        %5919 = vst [vmem:[%s310 + $0x188] sm:$0xff] %v5791
        %5920 = vst [vmem:[%s310 + $0x190] sm:$0xff] %v5792
        %5921 = vst [vmem:[%s310 + $0x198] sm:$0xff] %v5793
        %5922 = vst [vmem:[%s310 + $0x1a0] sm:$0xff] %v5794
        %5923 = vst [vmem:[%s310 + $0x1a8] sm:$0xff] %v5795
        %5924 = vst [vmem:[%s310 + $0x1b0] sm:$0xff] %v5796
        %5925 = vst [vmem:[%s310 + $0x1b8] sm:$0xff] %v5797
        %5926 = vst [vmem:[%s310 + $0x1c0] sm:$0xff] %v5798
        %5927 = vst [vmem:[%s310 + $0x1c8] sm:$0xff] %v5799
        %5928 = vst [vmem:[%s310 + $0x1d0] sm:$0xff] %v5800
        %5929 = vst [vmem:[%s310 + $0x1d8] sm:$0xff] %v5801
        %5930 = vst [vmem:[%s310 + $0x1e0] sm:$0xff] %v5802
        %5931 = vst [vmem:[%s310 + $0x1e8] sm:$0xff] %v5803
        %5932 = vst [vmem:[%s310 + $0x1f0] sm:$0xff] %v5804
        %5933 = vst [vmem:[%s310 + $0x1f8] sm:$0xff] %v5805
        %s5934 = sand.u32 %s146, 1
        %s5935 = scalar_lea.sflag [#allocation4], %s5934
        %s5936 = sand.u32 %s146, 1
        %s5937 = smul.addr %s5936, 512
        %s5938 = scalar_lea.vmem [#allocation8], %s5937
        %s5939 = sand.u32 %s172, 1
        %s5940 = scalar_lea.sflag [#allocation10], %s5939
        %s5941 = sand.u32 %s172, 1
        %s5942 = smul.addr %s5941, 512
        %s5943 = scalar_lea.vmem [#allocation9], %s5942
        // Predicated region
        $region53: #{tpu_custom_call.1} parent=39 // pred_check
          %p5944 = pneg %p156
        $region54: #{tpu_custom_call.1} parent=39 // pred_check_branch
          %5946 = sbr.rel (%p5944) target = $region56
        $region55: #{tpu_custom_call.1} parent=39 // pred_region
          %s5947 = smul.u32 32, %s28
          %s5949 = ssub.s32 8192, 8192
          %5950 = vsyncadd %s5935, %s5949
          %s5951 = smul.addr %s5947, 4
          %s5952 = smul.addr %s5951, 64
          %s5953 = scalar_lea.hbm %s5, %s5952
          %s5954 = sshll.u32 %s5938, 4
          %s5955 = int_to_ptr.vmem [resolvable:$true] %s5954
          %5960 = dma.vmem_to_hbm [thread:$0]  %s5955, 8192, %s5953, %s5935, 256, 256, 16
        $region56: #{tpu_custom_call.1} parent=39 // pred_fallthru
          _
        // Predicated region
        $region57: #{tpu_custom_call.1} parent=39 // pred_check
          %p5961 = pneg %p182
        $region58: #{tpu_custom_call.1} parent=39 // pred_check_branch
          %5963 = sbr.rel (%p5961) target = $region60
        $region59: #{tpu_custom_call.1} parent=39 // pred_region
          %s5964 = smul.u32 32, %s28
          %s5966 = ssub.s32 8192, 8192
          %5967 = vsyncadd %s5940, %s5966
          %s5968 = smul.addr %s5964, 4
          %s5969 = smul.addr %s5968, 64
          %s5970 = scalar_lea.hbm %s6, %s5969
          %s5971 = sshll.u32 %s5943, 4
          %s5972 = int_to_ptr.vmem [resolvable:$true] %s5971
          %5977 = dma.vmem_to_hbm [thread:$0]  %s5972, 8192, %s5970, %s5940, 256, 256, 16
        $region60: #{tpu_custom_call.1} parent=39 // pred_fallthru
          _
      $region40: #{tpu_custom_call.1} parent=5 // pred_fallthru
        _
      %p5978 = scmp.le.s32.totalorder 2, %s23
      // Predicated region
      $region61: #{tpu_custom_call.1} parent=5 // pred_check
        %p5979 = pneg %p5978
      $region62: #{tpu_custom_call.1} parent=5 // pred_check_branch
        %5981 = sbr.rel (%p5979) target = $region64
      $region63: #{tpu_custom_call.1} parent=5 // pred_region
        %s5982 = ssub.s32 %s23, 2
        // Predicated region
        $region65: #{tpu_custom_call.1} parent=63 // pred_check
          %p5983 = pneg %p162
        $region66: #{tpu_custom_call.1} parent=63 // pred_check_branch
          %5985 = sbr.rel (%p5983) target = $region68
        $region67: #{tpu_custom_call.1} parent=63 // pred_region
          %s5986 = sand.u32 %s147, 1
          %s5987 = scalar_lea.sflag [#allocation4], %s5986
          %s5988 = sand.u32 %s147, 1
          %s5989 = smul.addr %s5988, 512
          %s5990 = scalar_lea.vmem [#allocation8], %s5989
          %5991 = dma.done %s5987, 8192
        $region68: #{tpu_custom_call.1} parent=63 // pred_fallthru
          _
        // Predicated region
        $region69: #{tpu_custom_call.1} parent=63 // pred_check
          %p5992 = pneg %p188
        $region70: #{tpu_custom_call.1} parent=63 // pred_check_branch
          %5994 = sbr.rel (%p5992) target = $region72
        $region71: #{tpu_custom_call.1} parent=63 // pred_region
          %s5995 = sand.u32 %s173, 1
          %s5996 = scalar_lea.sflag [#allocation10], %s5995
          %s5997 = sand.u32 %s173, 1
          %s5998 = smul.addr %s5997, 512
          %s5999 = scalar_lea.vmem [#allocation9], %s5998
          %6000 = dma.done %s5996, 8192
        $region72: #{tpu_custom_call.1} parent=63 // pred_fallthru
          _
      $region64: #{tpu_custom_call.1} parent=5 // pred_fallthru
        _
    $region6: #{tpu_custom_call.1} parent=1 // loop_footer
      %s27 = sadd.s32 1, %s23
    $region7: #{tpu_custom_call.1} parent=1 // loop_footer_branch
      %22 = sbr.rel target = $region3
    $region8: #{tpu_custom_call.1} parent=1 // loop_exit
      _
    %6001 = vsyncpa [#allocation3], 1
    %s6002 = scalar_lea.sflag [#allocation3], 1
    %6003 = vsyncpa %s6002, 1
    %6004 = vsyncpa [#allocation6], 1
    %6005 = vsyncpa [#allocation4], 1
    %s6006 = scalar_lea.sflag [#allocation4], 1
    %6007 = vsyncpa %s6006, 1
    %6008 = vsyncpa [#allocation10], 1
    %s6009 = scalar_lea.sflag [#allocation10], 1
    %6010 = vsyncpa %s6009, 1

// kernel: tpu_custom_call.1
$region0: #{tpu_custom_call.1}
  #allocation0 [shape = 'u32[]', space=smem, size = 0x4, offset = 0x4, fixed_abs, tag = 'smem constant byte address 0x4 - core index']
  #allocation1 [shape = 'u32[144,128]{1,0:T(1,128)}', space=vmem, size = 0x12000, scoped, tag = 'internal scratch']
  %s0 = inlined_call_operand.hbm [shape: bf16[512,512], index: 0, kind: input, shape index: {}]
  %s1 = inlined_call_operand.hbm [shape: bf16[512,512], index: 1, kind: input, shape index: {}]
  %s2 = inlined_call_operand.vmem [shape: f32[1,512], index: 2, kind: input, shape index: {}]
  %s3 = inlined_call_operand.hbm [shape: bf16[512,512], index: 3, kind: input, shape index: {}]
  %s4 = inlined_call_operand.vmem [shape: f32[1,512], index: 4, kind: input, shape index: {}]
  %s5 = inlined_call_operand.hbm [shape: bf16[512,512], index: 5, kind: output, shape index: {0}]
  %s6 = inlined_call_operand.hbm [shape: bf16[512,512], index: 6, kind: output, shape index: {1}]
  %7 = xla_tuple %s5, %s6
  %s8 = sld [smem:[#allocation0]]
  $region73: #{tpu_custom_call.1} parent=0
    _
  %s10 = ssub.s32 1, %s8
  %s11 = scalar_select 0, %s10, %s8
  $region1: #{tpu_custom_call.1} parent=0
    #allocation2 [shape = 'u8[524288]{0}', space=vmem, size = 0x80000, scoped, tag = 'input window, operand 0']
    #allocation3 [shape = 's32[2]{0}', space=sflag, size = 0x8, scoped, tag = 'scoped memory for tpu_custom_call.1']
    #allocation4 [shape = 's32[2]{0}', space=sflag, size = 0x8, scoped, tag = 'scoped memory for tpu_custom_call.1']
    #allocation5 [shape = 'u8[524288]{0}', space=vmem, size = 0x80000, scoped, tag = 'input window, operand 1, single buffered']
    #allocation6 [shape = 's32[1]{0}', space=sflag, size = 0x4, scoped, tag = 'scoped memory for tpu_custom_call.1']
    #allocation7 [shape = 'u8[524288]{0}', space=vmem, size = 0x80000, scoped, tag = 'input window, operand 3, single buffered']
    #allocation8 [shape = 'u8[524288]{0}', space=vmem, size = 0x80000, scoped, tag = 'output window, operand 0']
    #allocation9 [shape = 'u8[524288]{0}', space=vmem, size = 0x80000, scoped, tag = 'output window, operand 1']
    #allocation10 [shape = 's32[2]{0}', space=sflag, size = 0x8, scoped, tag = 'scoped memory for tpu_custom_call.1']
    %12 = vsyncpa [#allocation3], 0
    %s13 = scalar_lea.sflag [#allocation3], 1
    %14 = vsyncpa %s13, 0
    %15 = vsyncpa [#allocation6], 0
    %16 = vsyncpa [#allocation4], 0
    %s17 = scalar_lea.sflag [#allocation4], 1
    %18 = vsyncpa %s17, 0
    %19 = vsyncpa [#allocation10], 0
    %s20 = scalar_lea.sflag [#allocation10], 1
    %21 = vsyncpa %s20, 0
    loop: start=0, step=1, limit=4
    $region2: #{tpu_custom_call.1} parent=1 // loop_pre_header
      _
    $region3: #{tpu_custom_call.1} parent=1 // loop_header
      %s23 = sphi 0, %s27
      %p24 = scmp.ge.s32.totalorder %s23, 4
      %s33 = sphi 0, %s35
      %s36 = sphi 0, %s33
      %s37 = sphi 0, %s36
      %s53 = sphi 0, %s37
      %s57 = sphi 0, %s57
      %s59 = sphi 0, %s57
      %s60 = sphi 0, %s59
      %s74 = sphi 0, %s60
      %s78 = sphi 0, %s78
      %s80 = sphi 0, %s78
      %s81 = sphi 0, %s80
      %s95 = sphi 0, %s81
      %s99 = sphi 0, %s99
      %s101 = sphi 0, %s99
      %s102 = sphi 0, %s101
      %s116 = sphi 0, %s102
      %s120 = sphi 0, %s120
      %s122 = sphi 0, %s120
      %s123 = sphi 0, %s122
      %s137 = sphi 0, %s123
      %s143 = sphi 0, %s145
      %s146 = sphi 0, %s143
      %s147 = sphi 0, %s146
      %s163 = sphi 0, %s147
      %s169 = sphi 0, %s171
      %s172 = sphi 0, %s169
      %s173 = sphi 0, %s172
      %s189 = sphi 0, %s173
    $region4: #{tpu_custom_call.1} parent=1 // loop_header_branch
      %26 = sbr.rel (%p24) target = $region8
    $region5: #{tpu_custom_call.1} parent=1 // loop_body
      %s28 = ssub.s32 %s23, 1
      %s29 = ssub.s32 %s23, 2
      %s30 = sadd.s32 %s23, 1
      %s31 = ssub.s32 %s23, %s30
      %p32 = scmp.eq.s32.totalorder %s31, 0
      %s34 = sadd.s32 %s33, 1
      %s35 = scalar_select %p32, %s33, %s34
      %p38 = pneg %p32
      %p39 = scmp.eq.s32.totalorder %s23, 1
      %p40 = por %p38, %p39
      %p41 = scmp.ne.s32.totalorder %s33, %s36
      %p42 = scmp.eq.s32.totalorder %s23, 0
      %p43 = por %p41, %p42
      %p44 = scmp.ne.s32.totalorder %s33, %s36
      %p45 = scmp.eq.s32.totalorder %s28, 1
      %p46 = por %p44, %p45
      %p47 = scmp.ne.s32.totalorder %s36, %s37
      %p48 = scmp.eq.s32.totalorder %s28, 0
      %p49 = por %p47, %p48
      %p50 = scmp.ne.s32.totalorder %s36, %s37
      %p51 = scmp.eq.s32.totalorder %s29, 1
      %p52 = por %p50, %p51
      %p54 = scmp.ne.s32.totalorder %s37, %s53
      %p55 = scmp.eq.s32.totalorder %s29, 0
      %p56 = por %p54, %p55
      %s58 = sadd.s32 %s57, 1
      %p61 = scmp.eq.s32.totalorder %s23, 1
      %p62 = scmp.ne.s32.totalorder %s57, %s59
      %p63 = scmp.eq.s32.totalorder %s23, 0
      %p64 = por %p62, %p63
      %p65 = scmp.ne.s32.totalorder %s57, %s59
      %p66 = scmp.eq.s32.totalorder %s28, 1
      %p67 = por %p65, %p66
      %p68 = scmp.ne.s32.totalorder %s59, %s60
      %p69 = scmp.eq.s32.totalorder %s28, 0
      %p70 = por %p68, %p69
      %p71 = scmp.ne.s32.totalorder %s59, %s60
      %p72 = scmp.eq.s32.totalorder %s29, 1
      %p73 = por %p71, %p72
      %p75 = scmp.ne.s32.totalorder %s60, %s74
      %p76 = scmp.eq.s32.totalorder %s29, 0
      %p77 = por %p75, %p76
      %s79 = sadd.s32 %s78, 1
      %p82 = scmp.eq.s32.totalorder %s23, 1
      %p83 = scmp.ne.s32.totalorder %s78, %s80
      %p84 = scmp.eq.s32.totalorder %s23, 0
      %p85 = por %p83, %p84
      %p86 = scmp.ne.s32.totalorder %s78, %s80
      %p87 = scmp.eq.s32.totalorder %s28, 1
      %p88 = por %p86, %p87
      %p89 = scmp.ne.s32.totalorder %s80, %s81
      %p90 = scmp.eq.s32.totalorder %s28, 0
      %p91 = por %p89, %p90
      %p92 = scmp.ne.s32.totalorder %s80, %s81
      %p93 = scmp.eq.s32.totalorder %s29, 1
      %p94 = por %p92, %p93
      %p96 = scmp.ne.s32.totalorder %s81, %s95
      %p97 = scmp.eq.s32.totalorder %s29, 0
      %p98 = por %p96, %p97
      %s100 = sadd.s32 %s99, 1
      %p103 = scmp.eq.s32.totalorder %s23, 1
      %p104 = scmp.ne.s32.totalorder %s99, %s101
      %p105 = scmp.eq.s32.totalorder %s23, 0
      %p106 = por %p104, %p105
      %p107 = scmp.ne.s32.totalorder %s99, %s101
      %p108 = scmp.eq.s32.totalorder %s28, 1
      %p109 = por %p107, %p108
      %p110 = scmp.ne.s32.totalorder %s101, %s102
      %p111 = scmp.eq.s32.totalorder %s28, 0
      %p112 = por %p110, %p111
      %p113 = scmp.ne.s32.totalorder %s101, %s102
      %p114 = scmp.eq.s32.totalorder %s29, 1
      %p115 = por %p113, %p114
      %p117 = scmp.ne.s32.totalorder %s102, %s116
      %p118 = scmp.eq.s32.totalorder %s29, 0
      %p119 = por %p117, %p118
      %s121 = sadd.s32 %s120, 1
      %p124 = scmp.eq.s32.totalorder %s23, 1
      %p125 = scmp.ne.s32.totalorder %s120, %s122
      %p126 = scmp.eq.s32.totalorder %s23, 0
      %p127 = por %p125, %p126
      %p128 = scmp.ne.s32.totalorder %s120, %s122
      %p129 = scmp.eq.s32.totalorder %s28, 1
      %p130 = por %p128, %p129
      %p131 = scmp.ne.s32.totalorder %s122, %s123
      %p132 = scmp.eq.s32.totalorder %s28, 0
      %p133 = por %p131, %p132
      %p134 = scmp.ne.s32.totalorder %s122, %s123
      %p135 = scmp.eq.s32.totalorder %s29, 1
      %p136 = por %p134, %p135
      %p138 = scmp.ne.s32.totalorder %s123, %s137
      %p139 = scmp.eq.s32.totalorder %s29, 0
      %p140 = por %p138, %p139
      %s141 = ssub.s32 %s23, %s30
      %p142 = scmp.eq.s32.totalorder %s141, 0
      %s144 = sadd.s32 %s143, 1
      %s145 = scalar_select %p142, %s143, %s144
      %p148 = pneg %p142
      %p149 = scmp.eq.s32.totalorder %s23, 1
      %p150 = por %p148, %p149
      %p151 = scmp.ne.s32.totalorder %s143, %s146
      %p152 = scmp.eq.s32.totalorder %s23, 0
      %p153 = por %p151, %p152
      %p154 = scmp.ne.s32.totalorder %s143, %s146
      %p155 = scmp.eq.s32.totalorder %s28, 1
      %p156 = por %p154, %p155
      %p157 = scmp.ne.s32.totalorder %s146, %s147
      %p158 = scmp.eq.s32.totalorder %s28, 0
      %p159 = por %p157, %p158
      %p160 = scmp.ne.s32.totalorder %s146, %s147
      %p161 = scmp.eq.s32.totalorder %s29, 1
      %p162 = por %p160, %p161
      %p164 = scmp.ne.s32.totalorder %s147, %s163
      %p165 = scmp.eq.s32.totalorder %s29, 0
      %p166 = por %p164, %p165
      %s167 = ssub.s32 %s23, %s30
      %p168 = scmp.eq.s32.totalorder %s167, 0
      %s170 = sadd.s32 %s169, 1
      %s171 = scalar_select %p168, %s169, %s170
      %p174 = pneg %p168
      %p175 = scmp.eq.s32.totalorder %s23, 1
      %p176 = por %p174, %p175
      %p177 = scmp.ne.s32.totalorder %s169, %s172
      %p178 = scmp.eq.s32.totalorder %s23, 0
      %p179 = por %p177, %p178
      %p180 = scmp.ne.s32.totalorder %s169, %s172
      %p181 = scmp.eq.s32.totalorder %s28, 1
      %p182 = por %p180, %p181
      %p183 = scmp.ne.s32.totalorder %s172, %s173
      %p184 = scmp.eq.s32.totalorder %s28, 0
      %p185 = por %p183, %p184
      %p186 = scmp.ne.s32.totalorder %s172, %s173
      %p187 = scmp.eq.s32.totalorder %s29, 1
      %p188 = por %p186, %p187
      %p190 = scmp.ne.s32.totalorder %s173, %s189
      %p191 = scmp.eq.s32.totalorder %s29, 0
      %p192 = por %p190, %p191
      %p193 = scmp.le.s32.totalorder 1, %s23
      %p194 = scmp.lt.s32.totalorder %s23, 3
      %p195 = pnand %p193, %p194
      %p196 = pneg %p195
      // Predicated region
      $region9: #{tpu_custom_call.1} parent=5 // pred_check
        _
      $region10: #{tpu_custom_call.1} parent=5 // pred_check_branch
        %198 = sbr.rel (%p195) target = $region12
      $region11: #{tpu_custom_call.1} parent=5 // pred_region
        %s199 = ssub.s32 %s23, 1
        // Predicated region
        $region13: #{tpu_custom_call.1} parent=11 // pred_check
          %p200 = pneg %p70
        $region14: #{tpu_custom_call.1} parent=11 // pred_check_branch
          %202 = sbr.rel (%p200) target = $region16
        $region15: #{tpu_custom_call.1} parent=11 // pred_region
          %s204 = ssub.s32 16384, 16384
          %205 = vsyncadd [#allocation6], %s204
          %s206 = sshll.u32 [#allocation5], 4
          %s207 = int_to_ptr.vmem [resolvable:$true] %s206
          %212 = dma.hbm_to_vmem [thread:$0]  %s1, 16384, %s207, [#allocation6], 256, 256, 16
        $region16: #{tpu_custom_call.1} parent=11 // pred_fallthru
          _
        // Predicated region
        $region17: #{tpu_custom_call.1} parent=11 // pred_check
          %p213 = pneg %p91
        $region18: #{tpu_custom_call.1} parent=11 // pred_check_branch
          %215 = sbr.rel (%p213) target = $region20
        $region19: #{tpu_custom_call.1} parent=11 // pred_region
          _
        $region20: #{tpu_custom_call.1} parent=11 // pred_fallthru
          _
        // Predicated region
        $region21: #{tpu_custom_call.1} parent=11 // pred_check
          %p216 = pneg %p112
        $region22: #{tpu_custom_call.1} parent=11 // pred_check_branch
          %218 = sbr.rel (%p216) target = $region24
        $region23: #{tpu_custom_call.1} parent=11 // pred_region
          %s220 = ssub.s32 16384, 16384
          %221 = vsyncadd [#allocation6], %s220
          %s222 = sshll.u32 [#allocation7], 4
          %s223 = int_to_ptr.vmem [resolvable:$true] %s222
          %228 = dma.hbm_to_vmem [thread:$0]  %s3, 16384, %s223, [#allocation6], 256, 256, 16
        $region24: #{tpu_custom_call.1} parent=11 // pred_fallthru
          _
        // Predicated region
        $region25: #{tpu_custom_call.1} parent=11 // pred_check
          %p229 = pneg %p133
        $region26: #{tpu_custom_call.1} parent=11 // pred_check_branch
          %231 = sbr.rel (%p229) target = $region28
        $region27: #{tpu_custom_call.1} parent=11 // pred_region
          _
        $region28: #{tpu_custom_call.1} parent=11 // pred_fallthru
          _
      $region12: #{tpu_custom_call.1} parent=5 // pred_fallthru
        _
      %p232 = scmp.lt.s32.totalorder %s23, 2
      // Predicated region
      $region29: #{tpu_custom_call.1} parent=5 // pred_check
        %p233 = pneg %p232
      $region30: #{tpu_custom_call.1} parent=5 // pred_check_branch
        %235 = sbr.rel (%p233) target = $region32
      $region31: #{tpu_custom_call.1} parent=5 // pred_region
        // Predicated region
        $region33: #{tpu_custom_call.1} parent=31 // pred_check
          %p236 = pneg %p43
        $region34: #{tpu_custom_call.1} parent=31 // pred_check_branch
          %238 = sbr.rel (%p236) target = $region36
        $region35: #{tpu_custom_call.1} parent=31 // pred_region
          %s239 = sand.u32 %s33, 1
          %s240 = scalar_lea.sflag [#allocation3], %s239
          %s241 = sand.u32 %s33, 1
          %s242 = smul.addr %s241, 512
          %s243 = scalar_lea.vmem [#allocation2], %s242
          %s244 = smul.u32 32, %s23
          %s246 = ssub.s32 8192, 8192
          %247 = vsyncadd %s240, %s246
          %s248 = smul.addr %s244, 4
          %s249 = smul.addr %s248, 64
          %s250 = scalar_lea.hbm %s0, %s249
          %s251 = sshll.u32 %s243, 4
          %s252 = int_to_ptr.vmem [resolvable:$true] %s251
          %257 = dma.hbm_to_vmem [thread:$0]  %s250, 8192, %s252, %s240, 256, 256, 16
        $region36: #{tpu_custom_call.1} parent=31 // pred_fallthru
          _
      $region32: #{tpu_custom_call.1} parent=5 // pred_fallthru
        _
      %p258 = scmp.le.s32.totalorder 1, %s23
      %p259 = scmp.lt.s32.totalorder %s23, 3
      %p260 = pnand %p258, %p259
      %p261 = pneg %p260
      // Predicated region
      $region37: #{tpu_custom_call.1} parent=5 // pred_check
        _
      $region38: #{tpu_custom_call.1} parent=5 // pred_check_branch
        %263 = sbr.rel (%p260) target = $region40
      $region39: #{tpu_custom_call.1} parent=5 // pred_region
        %s264 = ssub.s32 %s23, 1
        %s265 = sand.u32 %s36, 1
        %s266 = scalar_lea.sflag [#allocation3], %s265
        %s267 = sand.u32 %s36, 1
        %s268 = smul.addr %s267, 512
        %s269 = scalar_lea.vmem [#allocation2], %s268
        // Predicated region
        $region41: #{tpu_custom_call.1} parent=39 // pred_check
          %p270 = pneg %p49
        $region42: #{tpu_custom_call.1} parent=39 // pred_check_branch
          %272 = sbr.rel (%p270) target = $region44
        $region43: #{tpu_custom_call.1} parent=39 // pred_region
          %273 = dma.done %s266, 8192
        $region44: #{tpu_custom_call.1} parent=39 // pred_fallthru
          _
        // Predicated region
        $region45: #{tpu_custom_call.1} parent=39 // pred_check
          %p274 = pneg %p70
        $region46: #{tpu_custom_call.1} parent=39 // pred_check_branch
          %276 = sbr.rel (%p274) target = $region48
        $region47: #{tpu_custom_call.1} parent=39 // pred_region
          %277 = dma.done [#allocation6], 16384
        $region48: #{tpu_custom_call.1} parent=39 // pred_fallthru
          _
        // Predicated region
        $region49: #{tpu_custom_call.1} parent=39 // pred_check
          %p278 = pneg %p112
        $region50: #{tpu_custom_call.1} parent=39 // pred_check_branch
          %280 = sbr.rel (%p278) target = $region52
        $region51: #{tpu_custom_call.1} parent=39 // pred_region
          %281 = dma.done [#allocation6], 16384
        $region52: #{tpu_custom_call.1} parent=39 // pred_fallthru
          _
        %s282 = sand.u32 %s36, 1
        %s283 = scalar_lea.sflag [#allocation3], %s282
        %s284 = sand.u32 %s36, 1
        %s285 = smul.addr %s284, 512
        %s286 = scalar_lea.vmem [#allocation2], %s285
        %p287 = pneg %p49
        %p288 = pneg %p46
        %p289 = pneg %p70
        %p290 = pneg %p67
        %p291 = pneg %p91
        %p292 = pneg %p88
        %p293 = pneg %p112
        %p294 = pneg %p109
        %p295 = pneg %p133
        %p296 = pneg %p130
        %p297 = pneg %p159
        %p298 = pneg %p156
        %s299 = sand.u32 %s146, 1
        %s300 = scalar_lea.sflag [#allocation4], %s299
        %s301 = sand.u32 %s146, 1
        %s302 = smul.addr %s301, 512
        %s303 = scalar_lea.vmem [#allocation8], %s302
        %p304 = pneg %p185
        %p305 = pneg %p182
        %s306 = sand.u32 %s172, 1
        %s307 = scalar_lea.sflag [#allocation10], %s306
        %s308 = sand.u32 %s172, 1
        %s309 = smul.addr %s308, 512
        %s310 = scalar_lea.vmem [#allocation9], %s309
        %s311 = smul.u32 32, %s28
        %s312 = smul.u32 32, %s28
        %s313 = smul.u32 32, %s28
        %v314 = vld [vmem:[%s269] sm:$0xff]
        %v315 = vld [vmem:[%s269 + $0x8] sm:$0xff]
        %v316 = vld [vmem:[%s269 + $0x10] sm:$0xff]
        %v317 = vld [vmem:[%s269 + $0x18] sm:$0xff]
        %v318 = vld [vmem:[%s269 + $0x20] sm:$0xff]
        %v319 = vld [vmem:[%s269 + $0x28] sm:$0xff]
        %v320 = vld [vmem:[%s269 + $0x30] sm:$0xff]
        %v321 = vld [vmem:[%s269 + $0x38] sm:$0xff]
        %v322 = vld [vmem:[%s269 + $0x40] sm:$0xff]
        %v323 = vld [vmem:[%s269 + $0x48] sm:$0xff]
        %v324 = vld [vmem:[%s269 + $0x50] sm:$0xff]
        %v325 = vld [vmem:[%s269 + $0x58] sm:$0xff]
        %v326 = vld [vmem:[%s269 + $0x60] sm:$0xff]
        %v327 = vld [vmem:[%s269 + $0x68] sm:$0xff]
        %v328 = vld [vmem:[%s269 + $0x70] sm:$0xff]
        %v329 = vld [vmem:[%s269 + $0x78] sm:$0xff]
        %v330 = vld [vmem:[%s269 + $0x80] sm:$0xff]
        %v331 = vld [vmem:[%s269 + $0x88] sm:$0xff]
        %v332 = vld [vmem:[%s269 + $0x90] sm:$0xff]
        %v333 = vld [vmem:[%s269 + $0x98] sm:$0xff]
        %v334 = vld [vmem:[%s269 + $0xa0] sm:$0xff]
        %v335 = vld [vmem:[%s269 + $0xa8] sm:$0xff]
        %v336 = vld [vmem:[%s269 + $0xb0] sm:$0xff]
        %v337 = vld [vmem:[%s269 + $0xb8] sm:$0xff]
        %v338 = vld [vmem:[%s269 + $0xc0] sm:$0xff]
        %v339 = vld [vmem:[%s269 + $0xc8] sm:$0xff]
        %v340 = vld [vmem:[%s269 + $0xd0] sm:$0xff]
        %v341 = vld [vmem:[%s269 + $0xd8] sm:$0xff]
        %v342 = vld [vmem:[%s269 + $0xe0] sm:$0xff]
        %v343 = vld [vmem:[%s269 + $0xe8] sm:$0xff]
        %v344 = vld [vmem:[%s269 + $0xf0] sm:$0xff]
        %v345 = vld [vmem:[%s269 + $0xf8] sm:$0xff]
        %v346 = vld [vmem:[%s269 + $0x100] sm:$0xff]
        %v347 = vld [vmem:[%s269 + $0x108] sm:$0xff]
        %v348 = vld [vmem:[%s269 + $0x110] sm:$0xff]
        %v349 = vld [vmem:[%s269 + $0x118] sm:$0xff]
        %v350 = vld [vmem:[%s269 + $0x120] sm:$0xff]
        %v351 = vld [vmem:[%s269 + $0x128] sm:$0xff]
        %v352 = vld [vmem:[%s269 + $0x130] sm:$0xff]
        %v353 = vld [vmem:[%s269 + $0x138] sm:$0xff]
        %v354 = vld [vmem:[%s269 + $0x140] sm:$0xff]
        %v355 = vld [vmem:[%s269 + $0x148] sm:$0xff]
        %v356 = vld [vmem:[%s269 + $0x150] sm:$0xff]
        %v357 = vld [vmem:[%s269 + $0x158] sm:$0xff]
        %v358 = vld [vmem:[%s269 + $0x160] sm:$0xff]
        %v359 = vld [vmem:[%s269 + $0x168] sm:$0xff]
        %v360 = vld [vmem:[%s269 + $0x170] sm:$0xff]
        %v361 = vld [vmem:[%s269 + $0x178] sm:$0xff]
        %v362 = vld [vmem:[%s269 + $0x180] sm:$0xff]
        %v363 = vld [vmem:[%s269 + $0x188] sm:$0xff]
        %v364 = vld [vmem:[%s269 + $0x190] sm:$0xff]
        %v365 = vld [vmem:[%s269 + $0x198] sm:$0xff]
        %v366 = vld [vmem:[%s269 + $0x1a0] sm:$0xff]
        %v367 = vld [vmem:[%s269 + $0x1a8] sm:$0xff]
        %v368 = vld [vmem:[%s269 + $0x1b0] sm:$0xff]
        %v369 = vld [vmem:[%s269 + $0x1b8] sm:$0xff]
        %v370 = vld [vmem:[%s269 + $0x1c0] sm:$0xff]
        %v371 = vld [vmem:[%s269 + $0x1c8] sm:$0xff]
        %v372 = vld [vmem:[%s269 + $0x1d0] sm:$0xff]
        %v373 = vld [vmem:[%s269 + $0x1d8] sm:$0xff]
        %v374 = vld [vmem:[%s269 + $0x1e0] sm:$0xff]
        %v375 = vld [vmem:[%s269 + $0x1e8] sm:$0xff]
        %v376 = vld [vmem:[%s269 + $0x1f0] sm:$0xff]
        %v377 = vld [vmem:[%s269 + $0x1f8] sm:$0xff]
        %v378 = vunpack.c.l.bf16 %v314
        %v379 = vunpack.c.h.bf16 %v314
        %v380 = vunpack.c.l.bf16 %v315
        %v381 = vunpack.c.h.bf16 %v315
        %v382 = vunpack.c.l.bf16 %v316
        %v383 = vunpack.c.h.bf16 %v316
        %v384 = vunpack.c.l.bf16 %v317
        %v385 = vunpack.c.h.bf16 %v317
        %v386 = vunpack.c.l.bf16 %v318
        %v387 = vunpack.c.h.bf16 %v318
        %v388 = vunpack.c.l.bf16 %v319
        %v389 = vunpack.c.h.bf16 %v319
        %v390 = vunpack.c.l.bf16 %v320
        %v391 = vunpack.c.h.bf16 %v320
        %v392 = vunpack.c.l.bf16 %v321
        %v393 = vunpack.c.h.bf16 %v321
        %v394 = vunpack.c.l.bf16 %v322
        %v395 = vunpack.c.h.bf16 %v322
        %v396 = vunpack.c.l.bf16 %v323
        %v397 = vunpack.c.h.bf16 %v323
        %v398 = vunpack.c.l.bf16 %v324
        %v399 = vunpack.c.h.bf16 %v324
        %v400 = vunpack.c.l.bf16 %v325
        %v401 = vunpack.c.h.bf16 %v325
        %v402 = vunpack.c.l.bf16 %v326
        %v403 = vunpack.c.h.bf16 %v326
        %v404 = vunpack.c.l.bf16 %v327
        %v405 = vunpack.c.h.bf16 %v327
        %v406 = vunpack.c.l.bf16 %v328
        %v407 = vunpack.c.h.bf16 %v328
        %v408 = vunpack.c.l.bf16 %v329
        %v409 = vunpack.c.h.bf16 %v329
        %v410 = vunpack.c.l.bf16 %v330
        %v411 = vunpack.c.h.bf16 %v330
        %v412 = vunpack.c.l.bf16 %v331
        %v413 = vunpack.c.h.bf16 %v331
        %v414 = vunpack.c.l.bf16 %v332
        %v415 = vunpack.c.h.bf16 %v332
        %v416 = vunpack.c.l.bf16 %v333
        %v417 = vunpack.c.h.bf16 %v333
        %v418 = vunpack.c.l.bf16 %v334
        %v419 = vunpack.c.h.bf16 %v334
        %v420 = vunpack.c.l.bf16 %v335
        %v421 = vunpack.c.h.bf16 %v335
        %v422 = vunpack.c.l.bf16 %v336
        %v423 = vunpack.c.h.bf16 %v336
        %v424 = vunpack.c.l.bf16 %v337
        %v425 = vunpack.c.h.bf16 %v337
        %v426 = vunpack.c.l.bf16 %v338
        %v427 = vunpack.c.h.bf16 %v338
        %v428 = vunpack.c.l.bf16 %v339
        %v429 = vunpack.c.h.bf16 %v339
        %v430 = vunpack.c.l.bf16 %v340
        %v431 = vunpack.c.h.bf16 %v340
        %v432 = vunpack.c.l.bf16 %v341
        %v433 = vunpack.c.h.bf16 %v341
        %v434 = vunpack.c.l.bf16 %v342
        %v435 = vunpack.c.h.bf16 %v342
        %v436 = vunpack.c.l.bf16 %v343
        %v437 = vunpack.c.h.bf16 %v343
        %v438 = vunpack.c.l.bf16 %v344
        %v439 = vunpack.c.h.bf16 %v344
        %v440 = vunpack.c.l.bf16 %v345
        %v441 = vunpack.c.h.bf16 %v345
        %v442 = vunpack.c.l.bf16 %v346
        %v443 = vunpack.c.h.bf16 %v346
        %v444 = vunpack.c.l.bf16 %v347
        %v445 = vunpack.c.h.bf16 %v347
        %v446 = vunpack.c.l.bf16 %v348
        %v447 = vunpack.c.h.bf16 %v348
        %v448 = vunpack.c.l.bf16 %v349
        %v449 = vunpack.c.h.bf16 %v349
        %v450 = vunpack.c.l.bf16 %v350
        %v451 = vunpack.c.h.bf16 %v350
        %v452 = vunpack.c.l.bf16 %v351
        %v453 = vunpack.c.h.bf16 %v351
        %v454 = vunpack.c.l.bf16 %v352
        %v455 = vunpack.c.h.bf16 %v352
        %v456 = vunpack.c.l.bf16 %v353
        %v457 = vunpack.c.h.bf16 %v353
        %v458 = vunpack.c.l.bf16 %v354
        %v459 = vunpack.c.h.bf16 %v354
        %v460 = vunpack.c.l.bf16 %v355
        %v461 = vunpack.c.h.bf16 %v355
        %v462 = vunpack.c.l.bf16 %v356
        %v463 = vunpack.c.h.bf16 %v356
        %v464 = vunpack.c.l.bf16 %v357
        %v465 = vunpack.c.h.bf16 %v357
        %v466 = vunpack.c.l.bf16 %v358
        %v467 = vunpack.c.h.bf16 %v358
        %v468 = vunpack.c.l.bf16 %v359
        %v469 = vunpack.c.h.bf16 %v359
        %v470 = vunpack.c.l.bf16 %v360
        %v471 = vunpack.c.h.bf16 %v360
        %v472 = vunpack.c.l.bf16 %v361
        %v473 = vunpack.c.h.bf16 %v361
        %v474 = vunpack.c.l.bf16 %v362
        %v475 = vunpack.c.h.bf16 %v362
        %v476 = vunpack.c.l.bf16 %v363
        %v477 = vunpack.c.h.bf16 %v363
        %v478 = vunpack.c.l.bf16 %v364
        %v479 = vunpack.c.h.bf16 %v364
        %v480 = vunpack.c.l.bf16 %v365
        %v481 = vunpack.c.h.bf16 %v365
        %v482 = vunpack.c.l.bf16 %v366
        %v483 = vunpack.c.h.bf16 %v366
        %v484 = vunpack.c.l.bf16 %v367
        %v485 = vunpack.c.h.bf16 %v367
        %v486 = vunpack.c.l.bf16 %v368
        %v487 = vunpack.c.h.bf16 %v368
        %v488 = vunpack.c.l.bf16 %v369
        %v489 = vunpack.c.h.bf16 %v369
        %v490 = vunpack.c.l.bf16 %v370
        %v491 = vunpack.c.h.bf16 %v370
        %v492 = vunpack.c.l.bf16 %v371
        %v493 = vunpack.c.h.bf16 %v371
        %v494 = vunpack.c.l.bf16 %v372
        %v495 = vunpack.c.h.bf16 %v372
        %v496 = vunpack.c.l.bf16 %v373
        %v497 = vunpack.c.h.bf16 %v373
        %v498 = vunpack.c.l.bf16 %v374
        %v499 = vunpack.c.h.bf16 %v374
        %v500 = vunpack.c.l.bf16 %v375
        %v501 = vunpack.c.h.bf16 %v375
        %v502 = vunpack.c.l.bf16 %v376
        %v503 = vunpack.c.h.bf16 %v376
        %v504 = vunpack.c.l.bf16 %v377
        %v505 = vunpack.c.h.bf16 %v377
        %v506 = vmul.f32 %v378, %v378
        %v507 = vmul.f32 %v379, %v379
        %v508 = vmul.f32 %v380, %v380
        %v509 = vmul.f32 %v381, %v381
        %v510 = vmul.f32 %v382, %v382
        %v511 = vmul.f32 %v383, %v383
        %v512 = vmul.f32 %v384, %v384
        %v513 = vmul.f32 %v385, %v385
        %v514 = vmul.f32 %v386, %v386
        %v515 = vmul.f32 %v387, %v387
        %v516 = vmul.f32 %v388, %v388
        %v517 = vmul.f32 %v389, %v389
        %v518 = vmul.f32 %v390, %v390
        %v519 = vmul.f32 %v391, %v391
        %v520 = vmul.f32 %v392, %v392
        %v521 = vmul.f32 %v393, %v393
        %v522 = vmul.f32 %v394, %v394
        %v523 = vmul.f32 %v395, %v395
        %v524 = vmul.f32 %v396, %v396
        %v525 = vmul.f32 %v397, %v397
        %v526 = vmul.f32 %v398, %v398
        %v527 = vmul.f32 %v399, %v399
        %v528 = vmul.f32 %v400, %v400
        %v529 = vmul.f32 %v401, %v401
        %v530 = vmul.f32 %v402, %v402
        %v531 = vmul.f32 %v403, %v403
        %v532 = vmul.f32 %v404, %v404
        %v533 = vmul.f32 %v405, %v405
        %v534 = vmul.f32 %v406, %v406
        %v535 = vmul.f32 %v407, %v407
        %v536 = vmul.f32 %v408, %v408
        %v537 = vmul.f32 %v409, %v409
        %v538 = vmul.f32 %v410, %v410
        %v539 = vmul.f32 %v411, %v411
        %v540 = vmul.f32 %v412, %v412
        %v541 = vmul.f32 %v413, %v413
        %v542 = vmul.f32 %v414, %v414
        %v543 = vmul.f32 %v415, %v415
        %v544 = vmul.f32 %v416, %v416
        %v545 = vmul.f32 %v417, %v417
        %v546 = vmul.f32 %v418, %v418
        %v547 = vmul.f32 %v419, %v419
        %v548 = vmul.f32 %v420, %v420
        %v549 = vmul.f32 %v421, %v421
        %v550 = vmul.f32 %v422, %v422
        %v551 = vmul.f32 %v423, %v423
        %v552 = vmul.f32 %v424, %v424
        %v553 = vmul.f32 %v425, %v425
        %v554 = vmul.f32 %v426, %v426
        %v555 = vmul.f32 %v427, %v427
        %v556 = vmul.f32 %v428, %v428
        %v557 = vmul.f32 %v429, %v429
        %v558 = vmul.f32 %v430, %v430
        %v559 = vmul.f32 %v431, %v431
        %v560 = vmul.f32 %v432, %v432
        %v561 = vmul.f32 %v433, %v433
        %v562 = vmul.f32 %v434, %v434
        %v563 = vmul.f32 %v435, %v435
        %v564 = vmul.f32 %v436, %v436
        %v565 = vmul.f32 %v437, %v437
        %v566 = vmul.f32 %v438, %v438
        %v567 = vmul.f32 %v439, %v439
        %v568 = vmul.f32 %v440, %v440
        %v569 = vmul.f32 %v441, %v441
        %v570 = vmul.f32 %v442, %v442
        %v571 = vmul.f32 %v443, %v443
        %v572 = vmul.f32 %v444, %v444
        %v573 = vmul.f32 %v445, %v445
        %v574 = vmul.f32 %v446, %v446
        %v575 = vmul.f32 %v447, %v447
        %v576 = vmul.f32 %v448, %v448
        %v577 = vmul.f32 %v449, %v449
        %v578 = vmul.f32 %v450, %v450
        %v579 = vmul.f32 %v451, %v451
        %v580 = vmul.f32 %v452, %v452
        %v581 = vmul.f32 %v453, %v453
        %v582 = vmul.f32 %v454, %v454
        %v583 = vmul.f32 %v455, %v455
        %v584 = vmul.f32 %v456, %v456
        %v585 = vmul.f32 %v457, %v457
        %v586 = vmul.f32 %v458, %v458
        %v587 = vmul.f32 %v459, %v459
        %v588 = vmul.f32 %v460, %v460
        %v589 = vmul.f32 %v461, %v461
        %v590 = vmul.f32 %v462, %v462
        %v591 = vmul.f32 %v463, %v463
        %v592 = vmul.f32 %v464, %v464
        %v593 = vmul.f32 %v465, %v465
        %v594 = vmul.f32 %v466, %v466
        %v595 = vmul.f32 %v467, %v467
        %v596 = vmul.f32 %v468, %v468
        %v597 = vmul.f32 %v469, %v469
        %v598 = vmul.f32 %v470, %v470
        %v599 = vmul.f32 %v471, %v471
        %v600 = vmul.f32 %v472, %v472
        %v601 = vmul.f32 %v473, %v473
        %v602 = vmul.f32 %v474, %v474
        %v603 = vmul.f32 %v475, %v475
        %v604 = vmul.f32 %v476, %v476
        %v605 = vmul.f32 %v477, %v477
        %v606 = vmul.f32 %v478, %v478
        %v607 = vmul.f32 %v479, %v479
        %v608 = vmul.f32 %v480, %v480
        %v609 = vmul.f32 %v481, %v481
        %v610 = vmul.f32 %v482, %v482
        %v611 = vmul.f32 %v483, %v483
        %v612 = vmul.f32 %v484, %v484
        %v613 = vmul.f32 %v485, %v485
        %v614 = vmul.f32 %v486, %v486
        %v615 = vmul.f32 %v487, %v487
        %v616 = vmul.f32 %v488, %v488
        %v617 = vmul.f32 %v489, %v489
        %v618 = vmul.f32 %v490, %v490
        %v619 = vmul.f32 %v491, %v491
        %v620 = vmul.f32 %v492, %v492
        %v621 = vmul.f32 %v493, %v493
        %v622 = vmul.f32 %v494, %v494
        %v623 = vmul.f32 %v495, %v495
        %v624 = vmul.f32 %v496, %v496
        %v625 = vmul.f32 %v497, %v497
        %v626 = vmul.f32 %v498, %v498
        %v627 = vmul.f32 %v499, %v499
        %v628 = vmul.f32 %v500, %v500
        %v629 = vmul.f32 %v501, %v501
        %v630 = vmul.f32 %v502, %v502
        %v631 = vmul.f32 %v503, %v503
        %v632 = vmul.f32 %v504, %v504
        %v633 = vmul.f32 %v505, %v505
        %v634 = vadd.f32 %v506, %v507
        %v635 = vadd.f32 %v634, %v508
        %v636 = vadd.f32 %v635, %v509
        %637 = vadd.xlane.f32.xlu0 %v636
        %v638 = vpop.xlane.xlu0 %637
        %v639 = vadd.f32 %v510, %v511
        %v640 = vadd.f32 %v639, %v512
        %v641 = vadd.f32 %v640, %v513
        %642 = vadd.xlane.f32.xlu0 %v641
        %v643 = vpop.xlane.xlu0 %642
        %v644 = vadd.f32 %v514, %v515
        %v645 = vadd.f32 %v644, %v516
        %v646 = vadd.f32 %v645, %v517
        %647 = vadd.xlane.f32.xlu0 %v646
        %v648 = vpop.xlane.xlu0 %647
        %v649 = vadd.f32 %v518, %v519
        %v650 = vadd.f32 %v649, %v520
        %v651 = vadd.f32 %v650, %v521
        %652 = vadd.xlane.f32.xlu0 %v651
        %v653 = vpop.xlane.xlu0 %652
        %v654 = vadd.f32 %v522, %v523
        %v655 = vadd.f32 %v654, %v524
        %v656 = vadd.f32 %v655, %v525
        %657 = vadd.xlane.f32.xlu0 %v656
        %v658 = vpop.xlane.xlu0 %657
        %v659 = vadd.f32 %v526, %v527
        %v660 = vadd.f32 %v659, %v528
        %v661 = vadd.f32 %v660, %v529
        %662 = vadd.xlane.f32.xlu0 %v661
        %v663 = vpop.xlane.xlu0 %662
        %v664 = vadd.f32 %v530, %v531
        %v665 = vadd.f32 %v664, %v532
        %v666 = vadd.f32 %v665, %v533
        %667 = vadd.xlane.f32.xlu0 %v666
        %v668 = vpop.xlane.xlu0 %667
        %v669 = vadd.f32 %v534, %v535
        %v670 = vadd.f32 %v669, %v536
        %v671 = vadd.f32 %v670, %v537
        %672 = vadd.xlane.f32.xlu0 %v671
        %v673 = vpop.xlane.xlu0 %672
        %v674 = vadd.f32 %v538, %v539
        %v675 = vadd.f32 %v674, %v540
        %v676 = vadd.f32 %v675, %v541
        %677 = vadd.xlane.f32.xlu0 %v676
        %v678 = vpop.xlane.xlu0 %677
        %v679 = vadd.f32 %v542, %v543
        %v680 = vadd.f32 %v679, %v544
        %v681 = vadd.f32 %v680, %v545
        %682 = vadd.xlane.f32.xlu0 %v681
        %v683 = vpop.xlane.xlu0 %682
        %v684 = vadd.f32 %v546, %v547
        %v685 = vadd.f32 %v684, %v548
        %v686 = vadd.f32 %v685, %v549
        %687 = vadd.xlane.f32.xlu0 %v686
        %v688 = vpop.xlane.xlu0 %687
        %v689 = vadd.f32 %v550, %v551
        %v690 = vadd.f32 %v689, %v552
        %v691 = vadd.f32 %v690, %v553
        %692 = vadd.xlane.f32.xlu0 %v691
        %v693 = vpop.xlane.xlu0 %692
        %v694 = vadd.f32 %v554, %v555
        %v695 = vadd.f32 %v694, %v556
        %v696 = vadd.f32 %v695, %v557
        %697 = vadd.xlane.f32.xlu0 %v696
        %v698 = vpop.xlane.xlu0 %697
        %v699 = vadd.f32 %v558, %v559
        %v700 = vadd.f32 %v699, %v560
        %v701 = vadd.f32 %v700, %v561
        %702 = vadd.xlane.f32.xlu0 %v701
        %v703 = vpop.xlane.xlu0 %702
        %v704 = vadd.f32 %v562, %v563
        %v705 = vadd.f32 %v704, %v564
        %v706 = vadd.f32 %v705, %v565
        %707 = vadd.xlane.f32.xlu0 %v706
        %v708 = vpop.xlane.xlu0 %707
        %v709 = vadd.f32 %v566, %v567
        %v710 = vadd.f32 %v709, %v568
        %v711 = vadd.f32 %v710, %v569
        %712 = vadd.xlane.f32.xlu0 %v711
        %v713 = vpop.xlane.xlu0 %712
        %v714 = vadd.f32 %v570, %v571
        %v715 = vadd.f32 %v714, %v572
        %v716 = vadd.f32 %v715, %v573
        %717 = vadd.xlane.f32.xlu0 %v716
        %v718 = vpop.xlane.xlu0 %717
        %v719 = vadd.f32 %v574, %v575
        %v720 = vadd.f32 %v719, %v576
        %v721 = vadd.f32 %v720, %v577
        %722 = vadd.xlane.f32.xlu0 %v721
        %v723 = vpop.xlane.xlu0 %722
        %v724 = vadd.f32 %v578, %v579
        %v725 = vadd.f32 %v724, %v580
        %v726 = vadd.f32 %v725, %v581
        %727 = vadd.xlane.f32.xlu0 %v726
        %v728 = vpop.xlane.xlu0 %727
        %v729 = vadd.f32 %v582, %v583
        %v730 = vadd.f32 %v729, %v584
        %v731 = vadd.f32 %v730, %v585
        %732 = vadd.xlane.f32.xlu0 %v731
        %v733 = vpop.xlane.xlu0 %732
        %v734 = vadd.f32 %v586, %v587
        %v735 = vadd.f32 %v734, %v588
        %v736 = vadd.f32 %v735, %v589
        %737 = vadd.xlane.f32.xlu0 %v736
        %v738 = vpop.xlane.xlu0 %737
        %v739 = vadd.f32 %v590, %v591
        %v740 = vadd.f32 %v739, %v592
        %v741 = vadd.f32 %v740, %v593
        %742 = vadd.xlane.f32.xlu0 %v741
        %v743 = vpop.xlane.xlu0 %742
        %v744 = vadd.f32 %v594, %v595
        %v745 = vadd.f32 %v744, %v596
        %v746 = vadd.f32 %v745, %v597
        %747 = vadd.xlane.f32.xlu0 %v746
        %v748 = vpop.xlane.xlu0 %747
        %v749 = vadd.f32 %v598, %v599
        %v750 = vadd.f32 %v749, %v600
        %v751 = vadd.f32 %v750, %v601
        %752 = vadd.xlane.f32.xlu0 %v751
        %v753 = vpop.xlane.xlu0 %752
        %v754 = vadd.f32 %v602, %v603
        %v755 = vadd.f32 %v754, %v604
        %v756 = vadd.f32 %v755, %v605
        %757 = vadd.xlane.f32.xlu0 %v756
        %v758 = vpop.xlane.xlu0 %757
        %v759 = vadd.f32 %v606, %v607
        %v760 = vadd.f32 %v759, %v608
        %v761 = vadd.f32 %v760, %v609
        %762 = vadd.xlane.f32.xlu0 %v761
        %v763 = vpop.xlane.xlu0 %762
        %v764 = vadd.f32 %v610, %v611
        %v765 = vadd.f32 %v764, %v612
        %v766 = vadd.f32 %v765, %v613
        %767 = vadd.xlane.f32.xlu0 %v766
        %v768 = vpop.xlane.xlu0 %767
        %v769 = vadd.f32 %v614, %v615
        %v770 = vadd.f32 %v769, %v616
        %v771 = vadd.f32 %v770, %v617
        %772 = vadd.xlane.f32.xlu0 %v771
        %v773 = vpop.xlane.xlu0 %772
        %v774 = vadd.f32 %v618, %v619
        %v775 = vadd.f32 %v774, %v620
        %v776 = vadd.f32 %v775, %v621
        %777 = vadd.xlane.f32.xlu0 %v776
        %v778 = vpop.xlane.xlu0 %777
        %v779 = vadd.f32 %v622, %v623
        %v780 = vadd.f32 %v779, %v624
        %v781 = vadd.f32 %v780, %v625
        %782 = vadd.xlane.f32.xlu0 %v781
        %v783 = vpop.xlane.xlu0 %782
        %v784 = vadd.f32 %v626, %v627
        %v785 = vadd.f32 %v784, %v628
        %v786 = vadd.f32 %v785, %v629
        %787 = vadd.xlane.f32.xlu0 %v786
        %v788 = vpop.xlane.xlu0 %787
        %v789 = vadd.f32 %v630, %v631
        %v790 = vadd.f32 %v789, %v632
        %v791 = vadd.f32 %v790, %v633
        %792 = vadd.xlane.f32.xlu0 %v791
        %v793 = vpop.xlane.xlu0 %792
        %v794 = vrsqrt.pop %v638
        %v795 = vrsqrt.pop %v643
        %v796 = vrsqrt.pop %v648
        %v797 = vrsqrt.pop %v653
        %v798 = vrsqrt.pop %v658
        %v799 = vrsqrt.pop %v663
        %v800 = vrsqrt.pop %v668
        %v801 = vrsqrt.pop %v673
        %v802 = vrsqrt.pop %v678
        %v803 = vrsqrt.pop %v683
        %v804 = vrsqrt.pop %v688
        %v805 = vrsqrt.pop %v693
        %v806 = vrsqrt.pop %v698
        %v807 = vrsqrt.pop %v703
        %v808 = vrsqrt.pop %v708
        %v809 = vrsqrt.pop %v713
        %v810 = vrsqrt.pop %v718
        %v811 = vrsqrt.pop %v723
        %v812 = vrsqrt.pop %v728
        %v813 = vrsqrt.pop %v733
        %v814 = vrsqrt.pop %v738
        %v815 = vrsqrt.pop %v743
        %v816 = vrsqrt.pop %v748
        %v817 = vrsqrt.pop %v753
        %v818 = vrsqrt.pop %v758
        %v819 = vrsqrt.pop %v763
        %v820 = vrsqrt.pop %v768
        %v821 = vrsqrt.pop %v773
        %v822 = vrsqrt.pop %v778
        %v823 = vrsqrt.pop %v783
        %v824 = vrsqrt.pop %v788
        %v825 = vrsqrt.pop %v793
        %v826 = vmul.f32 %v378, %v794
        %v827 = vmul.f32 %v379, %v794
        %v828 = vmul.f32 %v380, %v794
        %v829 = vmul.f32 %v381, %v794
        %v830 = vmul.f32 %v382, %v795
        %v831 = vmul.f32 %v383, %v795
        %v832 = vmul.f32 %v384, %v795
        %v833 = vmul.f32 %v385, %v795
        %v834 = vmul.f32 %v386, %v796
        %v835 = vmul.f32 %v387, %v796
        %v836 = vmul.f32 %v388, %v796
        %v837 = vmul.f32 %v389, %v796
        %v838 = vmul.f32 %v390, %v797
        %v839 = vmul.f32 %v391, %v797
        %v840 = vmul.f32 %v392, %v797
        %v841 = vmul.f32 %v393, %v797
        %v842 = vmul.f32 %v394, %v798
        %v843 = vmul.f32 %v395, %v798
        %v844 = vmul.f32 %v396, %v798
        %v845 = vmul.f32 %v397, %v798
        %v846 = vmul.f32 %v398, %v799
        %v847 = vmul.f32 %v399, %v799
        %v848 = vmul.f32 %v400, %v799
        %v849 = vmul.f32 %v401, %v799
        %v850 = vmul.f32 %v402, %v800
        %v851 = vmul.f32 %v403, %v800
        %v852 = vmul.f32 %v404, %v800
        %v853 = vmul.f32 %v405, %v800
        %v854 = vmul.f32 %v406, %v801
        %v855 = vmul.f32 %v407, %v801
        %v856 = vmul.f32 %v408, %v801
        %v857 = vmul.f32 %v409, %v801
        %v858 = vmul.f32 %v410, %v802
        %v859 = vmul.f32 %v411, %v802
        %v860 = vmul.f32 %v412, %v802
        %v861 = vmul.f32 %v413, %v802
        %v862 = vmul.f32 %v414, %v803
        %v863 = vmul.f32 %v415, %v803
        %v864 = vmul.f32 %v416, %v803
        %v865 = vmul.f32 %v417, %v803
        %v866 = vmul.f32 %v418, %v804
        %v867 = vmul.f32 %v419, %v804
        %v868 = vmul.f32 %v420, %v804
        %v869 = vmul.f32 %v421, %v804
        %v870 = vmul.f32 %v422, %v805
        %v871 = vmul.f32 %v423, %v805
        %v872 = vmul.f32 %v424, %v805
        %v873 = vmul.f32 %v425, %v805
        %v874 = vmul.f32 %v426, %v806
        %v875 = vmul.f32 %v427, %v806
        %v876 = vmul.f32 %v428, %v806
        %v877 = vmul.f32 %v429, %v806
        %v878 = vmul.f32 %v430, %v807
        %v879 = vmul.f32 %v431, %v807
        %v880 = vmul.f32 %v432, %v807
        %v881 = vmul.f32 %v433, %v807
        %v882 = vmul.f32 %v434, %v808
        %v883 = vmul.f32 %v435, %v808
        %v884 = vmul.f32 %v436, %v808
        %v885 = vmul.f32 %v437, %v808
        %v886 = vmul.f32 %v438, %v809
        %v887 = vmul.f32 %v439, %v809
        %v888 = vmul.f32 %v440, %v809
        %v889 = vmul.f32 %v441, %v809
        %v890 = vmul.f32 %v442, %v810
        %v891 = vmul.f32 %v443, %v810
        %v892 = vmul.f32 %v444, %v810
        %v893 = vmul.f32 %v445, %v810
        %v894 = vmul.f32 %v446, %v811
        %v895 = vmul.f32 %v447, %v811
        %v896 = vmul.f32 %v448, %v811
        %v897 = vmul.f32 %v449, %v811
        %v898 = vmul.f32 %v450, %v812
        %v899 = vmul.f32 %v451, %v812
        %v900 = vmul.f32 %v452, %v812
        %v901 = vmul.f32 %v453, %v812
        %v902 = vmul.f32 %v454, %v813
        %v903 = vmul.f32 %v455, %v813
        %v904 = vmul.f32 %v456, %v813
        %v905 = vmul.f32 %v457, %v813
        %v906 = vmul.f32 %v458, %v814
        %v907 = vmul.f32 %v459, %v814
        %v908 = vmul.f32 %v460, %v814
        %v909 = vmul.f32 %v461, %v814
        %v910 = vmul.f32 %v462, %v815
        %v911 = vmul.f32 %v463, %v815
        %v912 = vmul.f32 %v464, %v815
        %v913 = vmul.f32 %v465, %v815
        %v914 = vmul.f32 %v466, %v816
        %v915 = vmul.f32 %v467, %v816
        %v916 = vmul.f32 %v468, %v816
        %v917 = vmul.f32 %v469, %v816
        %v918 = vmul.f32 %v470, %v817
        %v919 = vmul.f32 %v471, %v817
        %v920 = vmul.f32 %v472, %v817
        %v921 = vmul.f32 %v473, %v817
        %v922 = vmul.f32 %v474, %v818
        %v923 = vmul.f32 %v475, %v818
        %v924 = vmul.f32 %v476, %v818
        %v925 = vmul.f32 %v477, %v818
        %v926 = vmul.f32 %v478, %v819
        %v927 = vmul.f32 %v479, %v819
        %v928 = vmul.f32 %v480, %v819
        %v929 = vmul.f32 %v481, %v819
        %v930 = vmul.f32 %v482, %v820
        %v931 = vmul.f32 %v483, %v820
        %v932 = vmul.f32 %v484, %v820
        %v933 = vmul.f32 %v485, %v820
        %v934 = vmul.f32 %v486, %v821
        %v935 = vmul.f32 %v487, %v821
        %v936 = vmul.f32 %v488, %v821
        %v937 = vmul.f32 %v489, %v821
        %v938 = vmul.f32 %v490, %v822
        %v939 = vmul.f32 %v491, %v822
        %v940 = vmul.f32 %v492, %v822
        %v941 = vmul.f32 %v493, %v822
        %v942 = vmul.f32 %v494, %v823
        %v943 = vmul.f32 %v495, %v823
        %v944 = vmul.f32 %v496, %v823
        %v945 = vmul.f32 %v497, %v823
        %v946 = vmul.f32 %v498, %v824
        %v947 = vmul.f32 %v499, %v824
        %v948 = vmul.f32 %v500, %v824
        %v949 = vmul.f32 %v501, %v824
        %v950 = vmul.f32 %v502, %v825
        %v951 = vmul.f32 %v503, %v825
        %v952 = vmul.f32 %v504, %v825
        %v953 = vmul.f32 %v505, %v825
        %v954 = vpack.c.bf16 %v830, %v826
        %v955 = vpack.c.bf16 %v831, %v827
        %v956 = vpack.c.bf16 %v832, %v828
        %v957 = vpack.c.bf16 %v833, %v829
        %v958 = vpack.c.bf16 %v838, %v834
        %v959 = vpack.c.bf16 %v839, %v835
        %v960 = vpack.c.bf16 %v840, %v836
        %v961 = vpack.c.bf16 %v841, %v837
        %v962 = vpack.c.bf16 %v846, %v842
        %v963 = vpack.c.bf16 %v847, %v843
        %v964 = vpack.c.bf16 %v848, %v844
        %v965 = vpack.c.bf16 %v849, %v845
        %v966 = vpack.c.bf16 %v854, %v850
        %v967 = vpack.c.bf16 %v855, %v851
        %v968 = vpack.c.bf16 %v856, %v852
        %v969 = vpack.c.bf16 %v857, %v853
        %v970 = vpack.c.bf16 %v862, %v858
        %v971 = vpack.c.bf16 %v863, %v859
        %v972 = vpack.c.bf16 %v864, %v860
        %v973 = vpack.c.bf16 %v865, %v861
        %v974 = vpack.c.bf16 %v870, %v866
        %v975 = vpack.c.bf16 %v871, %v867
        %v976 = vpack.c.bf16 %v872, %v868
        %v977 = vpack.c.bf16 %v873, %v869
        %v978 = vpack.c.bf16 %v878, %v874
        %v979 = vpack.c.bf16 %v879, %v875
        %v980 = vpack.c.bf16 %v880, %v876
        %v981 = vpack.c.bf16 %v881, %v877
        %v982 = vpack.c.bf16 %v886, %v882
        %v983 = vpack.c.bf16 %v887, %v883
        %v984 = vpack.c.bf16 %v888, %v884
        %v985 = vpack.c.bf16 %v889, %v885
        %v986 = vpack.c.bf16 %v894, %v890
        %v987 = vpack.c.bf16 %v895, %v891
        %v988 = vpack.c.bf16 %v896, %v892
        %v989 = vpack.c.bf16 %v897, %v893
        %v990 = vpack.c.bf16 %v902, %v898
        %v991 = vpack.c.bf16 %v903, %v899
        %v992 = vpack.c.bf16 %v904, %v900
        %v993 = vpack.c.bf16 %v905, %v901
        %v994 = vpack.c.bf16 %v910, %v906
        %v995 = vpack.c.bf16 %v911, %v907
        %v996 = vpack.c.bf16 %v912, %v908
        %v997 = vpack.c.bf16 %v913, %v909
        %v998 = vpack.c.bf16 %v918, %v914
        %v999 = vpack.c.bf16 %v919, %v915
        %v1000 = vpack.c.bf16 %v920, %v916
        %v1001 = vpack.c.bf16 %v921, %v917
        %v1002 = vpack.c.bf16 %v926, %v922
        %v1003 = vpack.c.bf16 %v927, %v923
        %v1004 = vpack.c.bf16 %v928, %v924
        %v1005 = vpack.c.bf16 %v929, %v925
        %v1006 = vpack.c.bf16 %v934, %v930
        %v1007 = vpack.c.bf16 %v935, %v931
        %v1008 = vpack.c.bf16 %v936, %v932
        %v1009 = vpack.c.bf16 %v937, %v933
        %v1010 = vpack.c.bf16 %v942, %v938
        %v1011 = vpack.c.bf16 %v943, %v939
        %v1012 = vpack.c.bf16 %v944, %v940
        %v1013 = vpack.c.bf16 %v945, %v941
        %v1014 = vpack.c.bf16 %v950, %v946
        %v1015 = vpack.c.bf16 %v951, %v947
        %v1016 = vpack.c.bf16 %v952, %v948
        %v1017 = vpack.c.bf16 %v953, %v949
        %v1018 = vld [vmem:[#allocation5] sm:$0xff]
        %v1019 = vld [vmem:[#allocation5 + $0x8] sm:$0xff]
        %v1020 = vld [vmem:[#allocation5 + $0x10] sm:$0xff]
        %v1021 = vld [vmem:[#allocation5 + $0x18] sm:$0xff]
        %v1022 = vld [vmem:[#allocation5 + $0x20] sm:$0xff]
        %v1023 = vld [vmem:[#allocation5 + $0x28] sm:$0xff]
        %v1024 = vld [vmem:[#allocation5 + $0x30] sm:$0xff]
        %v1025 = vld [vmem:[#allocation5 + $0x38] sm:$0xff]
        %v1026 = vld [vmem:[#allocation5 + $0x40] sm:$0xff]
        %v1027 = vld [vmem:[#allocation5 + $0x48] sm:$0xff]
        %v1028 = vld [vmem:[#allocation5 + $0x50] sm:$0xff]
        %v1029 = vld [vmem:[#allocation5 + $0x58] sm:$0xff]
        %v1030 = vld [vmem:[#allocation5 + $0x60] sm:$0xff]
        %v1031 = vld [vmem:[#allocation5 + $0x68] sm:$0xff]
        %v1032 = vld [vmem:[#allocation5 + $0x70] sm:$0xff]
        %v1033 = vld [vmem:[#allocation5 + $0x78] sm:$0xff]
        %v1034 = vld [vmem:[#allocation5 + $0x80] sm:$0xff]
        %v1035 = vld [vmem:[#allocation5 + $0x88] sm:$0xff]
        %v1036 = vld [vmem:[#allocation5 + $0x90] sm:$0xff]
        %v1037 = vld [vmem:[#allocation5 + $0x98] sm:$0xff]
        %v1038 = vld [vmem:[#allocation5 + $0xa0] sm:$0xff]
        %v1039 = vld [vmem:[#allocation5 + $0xa8] sm:$0xff]
        %v1040 = vld [vmem:[#allocation5 + $0xb0] sm:$0xff]
        %v1041 = vld [vmem:[#allocation5 + $0xb8] sm:$0xff]
        %v1042 = vld [vmem:[#allocation5 + $0xc0] sm:$0xff]
        %v1043 = vld [vmem:[#allocation5 + $0xc8] sm:$0xff]
        %v1044 = vld [vmem:[#allocation5 + $0xd0] sm:$0xff]
        %v1045 = vld [vmem:[#allocation5 + $0xd8] sm:$0xff]
        %v1046 = vld [vmem:[#allocation5 + $0xe0] sm:$0xff]
        %v1047 = vld [vmem:[#allocation5 + $0xe8] sm:$0xff]
        %v1048 = vld [vmem:[#allocation5 + $0xf0] sm:$0xff]
        %v1049 = vld [vmem:[#allocation5 + $0xf8] sm:$0xff]
        %v1050 = vld [vmem:[#allocation5 + $0x100] sm:$0xff]
        %v1051 = vld [vmem:[#allocation5 + $0x108] sm:$0xff]
        %v1052 = vld [vmem:[#allocation5 + $0x110] sm:$0xff]
        %v1053 = vld [vmem:[#allocation5 + $0x118] sm:$0xff]
        %v1054 = vld [vmem:[#allocation5 + $0x120] sm:$0xff]
        %v1055 = vld [vmem:[#allocation5 + $0x128] sm:$0xff]
        %v1056 = vld [vmem:[#allocation5 + $0x130] sm:$0xff]
        %v1057 = vld [vmem:[#allocation5 + $0x138] sm:$0xff]
        %v1058 = vld [vmem:[#allocation5 + $0x140] sm:$0xff]
        %v1059 = vld [vmem:[#allocation5 + $0x148] sm:$0xff]
        %v1060 = vld [vmem:[#allocation5 + $0x150] sm:$0xff]
        %v1061 = vld [vmem:[#allocation5 + $0x158] sm:$0xff]
        %v1062 = vld [vmem:[#allocation5 + $0x160] sm:$0xff]
        %v1063 = vld [vmem:[#allocation5 + $0x168] sm:$0xff]
        %v1064 = vld [vmem:[#allocation5 + $0x170] sm:$0xff]
        %v1065 = vld [vmem:[#allocation5 + $0x178] sm:$0xff]
        %v1066 = vld [vmem:[#allocation5 + $0x180] sm:$0xff]
        %v1067 = vld [vmem:[#allocation5 + $0x188] sm:$0xff]
        %v1068 = vld [vmem:[#allocation5 + $0x190] sm:$0xff]
        %v1069 = vld [vmem:[#allocation5 + $0x198] sm:$0xff]
        %v1070 = vld [vmem:[#allocation5 + $0x1a0] sm:$0xff]
        %v1071 = vld [vmem:[#allocation5 + $0x1a8] sm:$0xff]
        %v1072 = vld [vmem:[#allocation5 + $0x1b0] sm:$0xff]
        %v1073 = vld [vmem:[#allocation5 + $0x1b8] sm:$0xff]
        %v1074 = vld [vmem:[#allocation5 + $0x1c0] sm:$0xff]
        %v1075 = vld [vmem:[#allocation5 + $0x1c8] sm:$0xff]
        %v1076 = vld [vmem:[#allocation5 + $0x1d0] sm:$0xff]
        %v1077 = vld [vmem:[#allocation5 + $0x1d8] sm:$0xff]
        %v1078 = vld [vmem:[#allocation5 + $0x1e0] sm:$0xff]
        %v1079 = vld [vmem:[#allocation5 + $0x1e8] sm:$0xff]
        %v1080 = vld [vmem:[#allocation5 + $0x1f0] sm:$0xff]
        %v1081 = vld [vmem:[#allocation5 + $0x1f8] sm:$0xff]
        %v1082 = vld [vmem:[#allocation5 + $0x200] sm:$0xff]
        %v1083 = vld [vmem:[#allocation5 + $0x208] sm:$0xff]
        %v1084 = vld [vmem:[#allocation5 + $0x210] sm:$0xff]
        %v1085 = vld [vmem:[#allocation5 + $0x218] sm:$0xff]
        %v1086 = vld [vmem:[#allocation5 + $0x220] sm:$0xff]
        %v1087 = vld [vmem:[#allocation5 + $0x228] sm:$0xff]
        %v1088 = vld [vmem:[#allocation5 + $0x230] sm:$0xff]
        %v1089 = vld [vmem:[#allocation5 + $0x238] sm:$0xff]
        %v1090 = vld [vmem:[#allocation5 + $0x240] sm:$0xff]
        %v1091 = vld [vmem:[#allocation5 + $0x248] sm:$0xff]
        %v1092 = vld [vmem:[#allocation5 + $0x250] sm:$0xff]
        %v1093 = vld [vmem:[#allocation5 + $0x258] sm:$0xff]
        %v1094 = vld [vmem:[#allocation5 + $0x260] sm:$0xff]
        %v1095 = vld [vmem:[#allocation5 + $0x268] sm:$0xff]
        %v1096 = vld [vmem:[#allocation5 + $0x270] sm:$0xff]
        %v1097 = vld [vmem:[#allocation5 + $0x278] sm:$0xff]
        %v1098 = vld [vmem:[#allocation5 + $0x280] sm:$0xff]
        %v1099 = vld [vmem:[#allocation5 + $0x288] sm:$0xff]
        %v1100 = vld [vmem:[#allocation5 + $0x290] sm:$0xff]
        %v1101 = vld [vmem:[#allocation5 + $0x298] sm:$0xff]
        %v1102 = vld [vmem:[#allocation5 + $0x2a0] sm:$0xff]
        %v1103 = vld [vmem:[#allocation5 + $0x2a8] sm:$0xff]
        %v1104 = vld [vmem:[#allocation5 + $0x2b0] sm:$0xff]
        %v1105 = vld [vmem:[#allocation5 + $0x2b8] sm:$0xff]
        %v1106 = vld [vmem:[#allocation5 + $0x2c0] sm:$0xff]
        %v1107 = vld [vmem:[#allocation5 + $0x2c8] sm:$0xff]
        %v1108 = vld [vmem:[#allocation5 + $0x2d0] sm:$0xff]
        %v1109 = vld [vmem:[#allocation5 + $0x2d8] sm:$0xff]
        %v1110 = vld [vmem:[#allocation5 + $0x2e0] sm:$0xff]
        %v1111 = vld [vmem:[#allocation5 + $0x2e8] sm:$0xff]
        %v1112 = vld [vmem:[#allocation5 + $0x2f0] sm:$0xff]
        %v1113 = vld [vmem:[#allocation5 + $0x2f8] sm:$0xff]
        %v1114 = vld [vmem:[#allocation5 + $0x300] sm:$0xff]
        %v1115 = vld [vmem:[#allocation5 + $0x308] sm:$0xff]
        %v1116 = vld [vmem:[#allocation5 + $0x310] sm:$0xff]
        %v1117 = vld [vmem:[#allocation5 + $0x318] sm:$0xff]
        %v1118 = vld [vmem:[#allocation5 + $0x320] sm:$0xff]
        %v1119 = vld [vmem:[#allocation5 + $0x328] sm:$0xff]
        %v1120 = vld [vmem:[#allocation5 + $0x330] sm:$0xff]
        %v1121 = vld [vmem:[#allocation5 + $0x338] sm:$0xff]
        %v1122 = vld [vmem:[#allocation5 + $0x340] sm:$0xff]
        %v1123 = vld [vmem:[#allocation5 + $0x348] sm:$0xff]
        %v1124 = vld [vmem:[#allocation5 + $0x350] sm:$0xff]
        %v1125 = vld [vmem:[#allocation5 + $0x358] sm:$0xff]
        %v1126 = vld [vmem:[#allocation5 + $0x360] sm:$0xff]
        %v1127 = vld [vmem:[#allocation5 + $0x368] sm:$0xff]
        %v1128 = vld [vmem:[#allocation5 + $0x370] sm:$0xff]
        %v1129 = vld [vmem:[#allocation5 + $0x378] sm:$0xff]
        %v1130 = vld [vmem:[#allocation5 + $0x380] sm:$0xff]
        %v1131 = vld [vmem:[#allocation5 + $0x388] sm:$0xff]
        %v1132 = vld [vmem:[#allocation5 + $0x390] sm:$0xff]
        %v1133 = vld [vmem:[#allocation5 + $0x398] sm:$0xff]
        %v1134 = vld [vmem:[#allocation5 + $0x3a0] sm:$0xff]
        %v1135 = vld [vmem:[#allocation5 + $0x3a8] sm:$0xff]
        %v1136 = vld [vmem:[#allocation5 + $0x3b0] sm:$0xff]
        %v1137 = vld [vmem:[#allocation5 + $0x3b8] sm:$0xff]
        %v1138 = vld [vmem:[#allocation5 + $0x3c0] sm:$0xff]
        %v1139 = vld [vmem:[#allocation5 + $0x3c8] sm:$0xff]
        %v1140 = vld [vmem:[#allocation5 + $0x3d0] sm:$0xff]
        %v1141 = vld [vmem:[#allocation5 + $0x3d8] sm:$0xff]
        %v1142 = vld [vmem:[#allocation5 + $0x3e0] sm:$0xff]
        %v1143 = vld [vmem:[#allocation5 + $0x3e8] sm:$0xff]
        %v1144 = vld [vmem:[#allocation5 + $0x3f0] sm:$0xff]
        %v1145 = vld [vmem:[#allocation5 + $0x3f8] sm:$0xff]
        %v1146 = vld [vmem:[%s2] sm:$0xf]
        %v1148 = vlaneseq
        %v1149 = vshrl.u32 %v1148, 7
        %v1150 = vsub.s32 0, %v1149
        %v1151 = vrot.slane %v1146, %v1150
        %v1152 = vlaneseq
        %v1153 = vshrl.u32 %v1152, 7
        %v1154 = vsub.s32 1, %v1153
        %v1155 = vrot.slane %v1146, %v1154
        %v1156 = vlaneseq
        %v1157 = vshrl.u32 %v1156, 7
        %v1158 = vsub.s32 2, %v1157
        %v1159 = vrot.slane %v1146, %v1158
        %v1160 = vlaneseq
        %v1161 = vshrl.u32 %v1160, 7
        %v1162 = vsub.s32 3, %v1161
        %v1163 = vrot.slane %v1146, %v1162
        %v1296 = vunpack.c.l.b16 %v1018
        %v1297 = vunpack.c.h.b16 %v1018
        %v1298 = vunpack.c.l.b16 %v1019
        %v1299 = vunpack.c.h.b16 %v1019
        %v1300 = vunpack.c.l.b16 %v1020
        %v1301 = vunpack.c.h.b16 %v1020
        %v1302 = vunpack.c.l.b16 %v1021
        %v1303 = vunpack.c.h.b16 %v1021
        %v1304 = vunpack.c.l.b16 %v1022
        %v1305 = vunpack.c.h.b16 %v1022
        %v1306 = vunpack.c.l.b16 %v1023
        %v1307 = vunpack.c.h.b16 %v1023
        %v1308 = vunpack.c.l.b16 %v1024
        %v1309 = vunpack.c.h.b16 %v1024
        %v1310 = vunpack.c.l.b16 %v1025
        %v1311 = vunpack.c.h.b16 %v1025
        %v1312 = vunpack.c.l.b16 %v1026
        %v1313 = vunpack.c.h.b16 %v1026
        %v1314 = vunpack.c.l.b16 %v1027
        %v1315 = vunpack.c.h.b16 %v1027
        %v1316 = vunpack.c.l.b16 %v1028
        %v1317 = vunpack.c.h.b16 %v1028
        %v1318 = vunpack.c.l.b16 %v1029
        %v1319 = vunpack.c.h.b16 %v1029
        %v1320 = vunpack.c.l.b16 %v1030
        %v1321 = vunpack.c.h.b16 %v1030
        %v1322 = vunpack.c.l.b16 %v1031
        %v1323 = vunpack.c.h.b16 %v1031
        %v1324 = vunpack.c.l.b16 %v1032
        %v1325 = vunpack.c.h.b16 %v1032
        %v1326 = vunpack.c.l.b16 %v1033
        %v1327 = vunpack.c.h.b16 %v1033
        %v1328 = vunpack.c.l.b16 %v1034
        %v1329 = vunpack.c.h.b16 %v1034
        %v1330 = vunpack.c.l.b16 %v1035
        %v1331 = vunpack.c.h.b16 %v1035
        %v1332 = vunpack.c.l.b16 %v1036
        %v1333 = vunpack.c.h.b16 %v1036
        %v1334 = vunpack.c.l.b16 %v1037
        %v1335 = vunpack.c.h.b16 %v1037
        %v1336 = vunpack.c.l.b16 %v1038
        %v1337 = vunpack.c.h.b16 %v1038
        %v1338 = vunpack.c.l.b16 %v1039
        %v1339 = vunpack.c.h.b16 %v1039
        %v1340 = vunpack.c.l.b16 %v1040
        %v1341 = vunpack.c.h.b16 %v1040
        %v1342 = vunpack.c.l.b16 %v1041
        %v1343 = vunpack.c.h.b16 %v1041
        %v1344 = vunpack.c.l.b16 %v1042
        %v1345 = vunpack.c.h.b16 %v1042
        %v1346 = vunpack.c.l.b16 %v1043
        %v1347 = vunpack.c.h.b16 %v1043
        %v1348 = vunpack.c.l.b16 %v1044
        %v1349 = vunpack.c.h.b16 %v1044
        %v1350 = vunpack.c.l.b16 %v1045
        %v1351 = vunpack.c.h.b16 %v1045
        %v1352 = vunpack.c.l.b16 %v1046
        %v1353 = vunpack.c.h.b16 %v1046
        %v1354 = vunpack.c.l.b16 %v1047
        %v1355 = vunpack.c.h.b16 %v1047
        %v1356 = vunpack.c.l.b16 %v1048
        %v1357 = vunpack.c.h.b16 %v1048
        %v1358 = vunpack.c.l.b16 %v1049
        %v1359 = vunpack.c.h.b16 %v1049
        %v1360 = vunpack.c.l.b16 %v1050
        %v1361 = vunpack.c.h.b16 %v1050
        %v1362 = vunpack.c.l.b16 %v1051
        %v1363 = vunpack.c.h.b16 %v1051
        %v1364 = vunpack.c.l.b16 %v1052
        %v1365 = vunpack.c.h.b16 %v1052
        %v1366 = vunpack.c.l.b16 %v1053
        %v1367 = vunpack.c.h.b16 %v1053
        %v1368 = vunpack.c.l.b16 %v1054
        %v1369 = vunpack.c.h.b16 %v1054
        %v1370 = vunpack.c.l.b16 %v1055
        %v1371 = vunpack.c.h.b16 %v1055
        %v1372 = vunpack.c.l.b16 %v1056
        %v1373 = vunpack.c.h.b16 %v1056
        %v1374 = vunpack.c.l.b16 %v1057
        %v1375 = vunpack.c.h.b16 %v1057
        %v1376 = vunpack.c.l.b16 %v1058
        %v1377 = vunpack.c.h.b16 %v1058
        %v1378 = vunpack.c.l.b16 %v1059
        %v1379 = vunpack.c.h.b16 %v1059
        %v1380 = vunpack.c.l.b16 %v1060
        %v1381 = vunpack.c.h.b16 %v1060
        %v1382 = vunpack.c.l.b16 %v1061
        %v1383 = vunpack.c.h.b16 %v1061
        %v1384 = vunpack.c.l.b16 %v1062
        %v1385 = vunpack.c.h.b16 %v1062
        %v1386 = vunpack.c.l.b16 %v1063
        %v1387 = vunpack.c.h.b16 %v1063
        %v1388 = vunpack.c.l.b16 %v1064
        %v1389 = vunpack.c.h.b16 %v1064
        %v1390 = vunpack.c.l.b16 %v1065
        %v1391 = vunpack.c.h.b16 %v1065
        %v1392 = vunpack.c.l.b16 %v1066
        %v1393 = vunpack.c.h.b16 %v1066
        %v1394 = vunpack.c.l.b16 %v1067
        %v1395 = vunpack.c.h.b16 %v1067
        %v1396 = vunpack.c.l.b16 %v1068
        %v1397 = vunpack.c.h.b16 %v1068
        %v1398 = vunpack.c.l.b16 %v1069
        %v1399 = vunpack.c.h.b16 %v1069
        %v1400 = vunpack.c.l.b16 %v1070
        %v1401 = vunpack.c.h.b16 %v1070
        %v1402 = vunpack.c.l.b16 %v1071
        %v1403 = vunpack.c.h.b16 %v1071
        %v1404 = vunpack.c.l.b16 %v1072
        %v1405 = vunpack.c.h.b16 %v1072
        %v1406 = vunpack.c.l.b16 %v1073
        %v1407 = vunpack.c.h.b16 %v1073
        %v1408 = vunpack.c.l.b16 %v1074
        %v1409 = vunpack.c.h.b16 %v1074
        %v1410 = vunpack.c.l.b16 %v1075
        %v1411 = vunpack.c.h.b16 %v1075
        %v1412 = vunpack.c.l.b16 %v1076
        %v1413 = vunpack.c.h.b16 %v1076
        %v1414 = vunpack.c.l.b16 %v1077
        %v1415 = vunpack.c.h.b16 %v1077
        %v1416 = vunpack.c.l.b16 %v1078
        %v1417 = vunpack.c.h.b16 %v1078
        %v1418 = vunpack.c.l.b16 %v1079
        %v1419 = vunpack.c.h.b16 %v1079
        %v1420 = vunpack.c.l.b16 %v1080
        %v1421 = vunpack.c.h.b16 %v1080
        %v1422 = vunpack.c.l.b16 %v1081
        %v1423 = vunpack.c.h.b16 %v1081
        %v1424 = vunpack.c.l.b16 %v1082
        %v1425 = vunpack.c.h.b16 %v1082
        %v1426 = vunpack.c.l.b16 %v1083
        %v1427 = vunpack.c.h.b16 %v1083
        %v1428 = vunpack.c.l.b16 %v1084
        %v1429 = vunpack.c.h.b16 %v1084
        %v1430 = vunpack.c.l.b16 %v1085
        %v1431 = vunpack.c.h.b16 %v1085
        %v1432 = vunpack.c.l.b16 %v1086
        %v1433 = vunpack.c.h.b16 %v1086
        %v1434 = vunpack.c.l.b16 %v1087
        %v1435 = vunpack.c.h.b16 %v1087
        %v1436 = vunpack.c.l.b16 %v1088
        %v1437 = vunpack.c.h.b16 %v1088
        %v1438 = vunpack.c.l.b16 %v1089
        %v1439 = vunpack.c.h.b16 %v1089
        %v1440 = vunpack.c.l.b16 %v1090
        %v1441 = vunpack.c.h.b16 %v1090
        %v1442 = vunpack.c.l.b16 %v1091
        %v1443 = vunpack.c.h.b16 %v1091
        %v1444 = vunpack.c.l.b16 %v1092
        %v1445 = vunpack.c.h.b16 %v1092
        %v1446 = vunpack.c.l.b16 %v1093
        %v1447 = vunpack.c.h.b16 %v1093
        %v1448 = vunpack.c.l.b16 %v1094
        %v1449 = vunpack.c.h.b16 %v1094
        %v1450 = vunpack.c.l.b16 %v1095
        %v1451 = vunpack.c.h.b16 %v1095
        %v1452 = vunpack.c.l.b16 %v1096
        %v1453 = vunpack.c.h.b16 %v1096
        %v1454 = vunpack.c.l.b16 %v1097
        %v1455 = vunpack.c.h.b16 %v1097
        %v1456 = vunpack.c.l.b16 %v1098
        %v1457 = vunpack.c.h.b16 %v1098
        %v1458 = vunpack.c.l.b16 %v1099
        %v1459 = vunpack.c.h.b16 %v1099
        %v1460 = vunpack.c.l.b16 %v1100
        %v1461 = vunpack.c.h.b16 %v1100
        %v1462 = vunpack.c.l.b16 %v1101
        %v1463 = vunpack.c.h.b16 %v1101
        %v1464 = vunpack.c.l.b16 %v1102
        %v1465 = vunpack.c.h.b16 %v1102
        %v1466 = vunpack.c.l.b16 %v1103
        %v1467 = vunpack.c.h.b16 %v1103
        %v1468 = vunpack.c.l.b16 %v1104
        %v1469 = vunpack.c.h.b16 %v1104
        %v1470 = vunpack.c.l.b16 %v1105
        %v1471 = vunpack.c.h.b16 %v1105
        %v1472 = vunpack.c.l.b16 %v1106
        %v1473 = vunpack.c.h.b16 %v1106
        %v1474 = vunpack.c.l.b16 %v1107
        %v1475 = vunpack.c.h.b16 %v1107
        %v1476 = vunpack.c.l.b16 %v1108
        %v1477 = vunpack.c.h.b16 %v1108
        %v1478 = vunpack.c.l.b16 %v1109
        %v1479 = vunpack.c.h.b16 %v1109
        %v1480 = vunpack.c.l.b16 %v1110
        %v1481 = vunpack.c.h.b16 %v1110
        %v1482 = vunpack.c.l.b16 %v1111
        %v1483 = vunpack.c.h.b16 %v1111
        %v1484 = vunpack.c.l.b16 %v1112
        %v1485 = vunpack.c.h.b16 %v1112
        %v1486 = vunpack.c.l.b16 %v1113
        %v1487 = vunpack.c.h.b16 %v1113
        %v1488 = vunpack.c.l.b16 %v1114
        %v1489 = vunpack.c.h.b16 %v1114
        %v1490 = vunpack.c.l.b16 %v1115
        %v1491 = vunpack.c.h.b16 %v1115
        %v1492 = vunpack.c.l.b16 %v1116
        %v1493 = vunpack.c.h.b16 %v1116
        %v1494 = vunpack.c.l.b16 %v1117
        %v1495 = vunpack.c.h.b16 %v1117
        %v1496 = vunpack.c.l.b16 %v1118
        %v1497 = vunpack.c.h.b16 %v1118
        %v1498 = vunpack.c.l.b16 %v1119
        %v1499 = vunpack.c.h.b16 %v1119
        %v1500 = vunpack.c.l.b16 %v1120
        %v1501 = vunpack.c.h.b16 %v1120
        %v1502 = vunpack.c.l.b16 %v1121
        %v1503 = vunpack.c.h.b16 %v1121
        %v1504 = vunpack.c.l.b16 %v1122
        %v1505 = vunpack.c.h.b16 %v1122
        %v1506 = vunpack.c.l.b16 %v1123
        %v1507 = vunpack.c.h.b16 %v1123
        %v1508 = vunpack.c.l.b16 %v1124
        %v1509 = vunpack.c.h.b16 %v1124
        %v1510 = vunpack.c.l.b16 %v1125
        %v1511 = vunpack.c.h.b16 %v1125
        %v1512 = vunpack.c.l.b16 %v1126
        %v1513 = vunpack.c.h.b16 %v1126
        %v1514 = vunpack.c.l.b16 %v1127
        %v1515 = vunpack.c.h.b16 %v1127
        %v1516 = vunpack.c.l.b16 %v1128
        %v1517 = vunpack.c.h.b16 %v1128
        %v1518 = vunpack.c.l.b16 %v1129
        %v1519 = vunpack.c.h.b16 %v1129
        %v1520 = vunpack.c.l.b16 %v1130
        %v1521 = vunpack.c.h.b16 %v1130
        %v1522 = vunpack.c.l.b16 %v1131
        %v1523 = vunpack.c.h.b16 %v1131
        %v1524 = vunpack.c.l.b16 %v1132
        %v1525 = vunpack.c.h.b16 %v1132
        %v1526 = vunpack.c.l.b16 %v1133
        %v1527 = vunpack.c.h.b16 %v1133
        %v1528 = vunpack.c.l.b16 %v1134
        %v1529 = vunpack.c.h.b16 %v1134
        %v1530 = vunpack.c.l.b16 %v1135
        %v1531 = vunpack.c.h.b16 %v1135
        %v1532 = vunpack.c.l.b16 %v1136
        %v1533 = vunpack.c.h.b16 %v1136
        %v1534 = vunpack.c.l.b16 %v1137
        %v1535 = vunpack.c.h.b16 %v1137
        %v1536 = vunpack.c.l.b16 %v1138
        %v1537 = vunpack.c.h.b16 %v1138
        %v1538 = vunpack.c.l.b16 %v1139
        %v1539 = vunpack.c.h.b16 %v1139
        %v1540 = vunpack.c.l.b16 %v1140
        %v1541 = vunpack.c.h.b16 %v1140
        %v1542 = vunpack.c.l.b16 %v1141
        %v1543 = vunpack.c.h.b16 %v1141
        %v1544 = vunpack.c.l.b16 %v1142
        %v1545 = vunpack.c.h.b16 %v1142
        %v1546 = vunpack.c.l.b16 %v1143
        %v1547 = vunpack.c.h.b16 %v1143
        %v1548 = vunpack.c.l.b16 %v1144
        %v1549 = vunpack.c.h.b16 %v1144
        %v1550 = vunpack.c.l.b16 %v1145
        %v1551 = vunpack.c.h.b16 %v1145
        %v1552 = vpack.c.b16 %v1300, %v1296
        %v1553 = vpack.c.b16 %v1301, %v1297
        %v1554 = vpack.c.b16 %v1302, %v1298
        %v1555 = vpack.c.b16 %v1303, %v1299
        %v1556 = vpack.c.b16 %v1308, %v1304
        %v1557 = vpack.c.b16 %v1309, %v1305
        %v1558 = vpack.c.b16 %v1310, %v1306
        %v1559 = vpack.c.b16 %v1311, %v1307
        %v1560 = vpack.c.b16 %v1316, %v1312
        %v1561 = vpack.c.b16 %v1317, %v1313
        %v1562 = vpack.c.b16 %v1318, %v1314
        %v1563 = vpack.c.b16 %v1319, %v1315
        %v1564 = vpack.c.b16 %v1324, %v1320
        %v1565 = vpack.c.b16 %v1325, %v1321
        %v1566 = vpack.c.b16 %v1326, %v1322
        %v1567 = vpack.c.b16 %v1327, %v1323
        %v1568 = vpack.c.b16 %v1332, %v1328
        %v1569 = vpack.c.b16 %v1333, %v1329
        %v1570 = vpack.c.b16 %v1334, %v1330
        %v1571 = vpack.c.b16 %v1335, %v1331
        %v1572 = vpack.c.b16 %v1340, %v1336
        %v1573 = vpack.c.b16 %v1341, %v1337
        %v1574 = vpack.c.b16 %v1342, %v1338
        %v1575 = vpack.c.b16 %v1343, %v1339
        %v1576 = vpack.c.b16 %v1348, %v1344
        %v1577 = vpack.c.b16 %v1349, %v1345
        %v1578 = vpack.c.b16 %v1350, %v1346
        %v1579 = vpack.c.b16 %v1351, %v1347
        %v1580 = vpack.c.b16 %v1356, %v1352
        %v1581 = vpack.c.b16 %v1357, %v1353
        %v1582 = vpack.c.b16 %v1358, %v1354
        %v1583 = vpack.c.b16 %v1359, %v1355
        %v1584 = vpack.c.b16 %v1364, %v1360
        %v1585 = vpack.c.b16 %v1365, %v1361
        %v1586 = vpack.c.b16 %v1366, %v1362
        %v1587 = vpack.c.b16 %v1367, %v1363
        %v1588 = vpack.c.b16 %v1372, %v1368
        %v1589 = vpack.c.b16 %v1373, %v1369
        %v1590 = vpack.c.b16 %v1374, %v1370
        %v1591 = vpack.c.b16 %v1375, %v1371
        %v1592 = vpack.c.b16 %v1380, %v1376
        %v1593 = vpack.c.b16 %v1381, %v1377
        %v1594 = vpack.c.b16 %v1382, %v1378
        %v1595 = vpack.c.b16 %v1383, %v1379
        %v1596 = vpack.c.b16 %v1388, %v1384
        %v1597 = vpack.c.b16 %v1389, %v1385
        %v1598 = vpack.c.b16 %v1390, %v1386
        %v1599 = vpack.c.b16 %v1391, %v1387
        %v1600 = vpack.c.b16 %v1396, %v1392
        %v1601 = vpack.c.b16 %v1397, %v1393
        %v1602 = vpack.c.b16 %v1398, %v1394
        %v1603 = vpack.c.b16 %v1399, %v1395
        %v1604 = vpack.c.b16 %v1404, %v1400
        %v1605 = vpack.c.b16 %v1405, %v1401
        %v1606 = vpack.c.b16 %v1406, %v1402
        %v1607 = vpack.c.b16 %v1407, %v1403
        %v1608 = vpack.c.b16 %v1412, %v1408
        %v1609 = vpack.c.b16 %v1413, %v1409
        %v1610 = vpack.c.b16 %v1414, %v1410
        %v1611 = vpack.c.b16 %v1415, %v1411
        %v1612 = vpack.c.b16 %v1420, %v1416
        %v1613 = vpack.c.b16 %v1421, %v1417
        %v1614 = vpack.c.b16 %v1422, %v1418
        %v1615 = vpack.c.b16 %v1423, %v1419
        %v1616 = vpack.c.b16 %v1428, %v1424
        %v1617 = vpack.c.b16 %v1429, %v1425
        %v1618 = vpack.c.b16 %v1430, %v1426
        %v1619 = vpack.c.b16 %v1431, %v1427
        %v1620 = vpack.c.b16 %v1436, %v1432
        %v1621 = vpack.c.b16 %v1437, %v1433
        %v1622 = vpack.c.b16 %v1438, %v1434
        %v1623 = vpack.c.b16 %v1439, %v1435
        %v1624 = vpack.c.b16 %v1444, %v1440
        %v1625 = vpack.c.b16 %v1445, %v1441
        %v1626 = vpack.c.b16 %v1446, %v1442
        %v1627 = vpack.c.b16 %v1447, %v1443
        %v1628 = vpack.c.b16 %v1452, %v1448
        %v1629 = vpack.c.b16 %v1453, %v1449
        %v1630 = vpack.c.b16 %v1454, %v1450
        %v1631 = vpack.c.b16 %v1455, %v1451
        %v1632 = vpack.c.b16 %v1460, %v1456
        %v1633 = vpack.c.b16 %v1461, %v1457
        %v1634 = vpack.c.b16 %v1462, %v1458
        %v1635 = vpack.c.b16 %v1463, %v1459
        %v1636 = vpack.c.b16 %v1468, %v1464
        %v1637 = vpack.c.b16 %v1469, %v1465
        %v1638 = vpack.c.b16 %v1470, %v1466
        %v1639 = vpack.c.b16 %v1471, %v1467
        %v1640 = vpack.c.b16 %v1476, %v1472
        %v1641 = vpack.c.b16 %v1477, %v1473
        %v1642 = vpack.c.b16 %v1478, %v1474
        %v1643 = vpack.c.b16 %v1479, %v1475
        %v1644 = vpack.c.b16 %v1484, %v1480
        %v1645 = vpack.c.b16 %v1485, %v1481
        %v1646 = vpack.c.b16 %v1486, %v1482
        %v1647 = vpack.c.b16 %v1487, %v1483
        %v1648 = vpack.c.b16 %v1492, %v1488
        %v1649 = vpack.c.b16 %v1493, %v1489
        %v1650 = vpack.c.b16 %v1494, %v1490
        %v1651 = vpack.c.b16 %v1495, %v1491
        %v1652 = vpack.c.b16 %v1500, %v1496
        %v1653 = vpack.c.b16 %v1501, %v1497
        %v1654 = vpack.c.b16 %v1502, %v1498
        %v1655 = vpack.c.b16 %v1503, %v1499
        %v1656 = vpack.c.b16 %v1508, %v1504
        %v1657 = vpack.c.b16 %v1509, %v1505
        %v1658 = vpack.c.b16 %v1510, %v1506
        %v1659 = vpack.c.b16 %v1511, %v1507
        %v1660 = vpack.c.b16 %v1516, %v1512
        %v1661 = vpack.c.b16 %v1517, %v1513
        %v1662 = vpack.c.b16 %v1518, %v1514
        %v1663 = vpack.c.b16 %v1519, %v1515
        %v1664 = vpack.c.b16 %v1524, %v1520
        %v1665 = vpack.c.b16 %v1525, %v1521
        %v1666 = vpack.c.b16 %v1526, %v1522
        %v1667 = vpack.c.b16 %v1527, %v1523
        %v1668 = vpack.c.b16 %v1532, %v1528
        %v1669 = vpack.c.b16 %v1533, %v1529
        %v1670 = vpack.c.b16 %v1534, %v1530
        %v1671 = vpack.c.b16 %v1535, %v1531
        %v1672 = vpack.c.b16 %v1540, %v1536
        %v1673 = vpack.c.b16 %v1541, %v1537
        %v1674 = vpack.c.b16 %v1542, %v1538
        %v1675 = vpack.c.b16 %v1543, %v1539
        %v1676 = vpack.c.b16 %v1548, %v1544
        %v1677 = vpack.c.b16 %v1549, %v1545
        %v1678 = vpack.c.b16 %v1550, %v1546
        %v1679 = vpack.c.b16 %v1551, %v1547
        %1808 = vmatprep.subr.bf16.mxu0 %v1553
        %1809 = vmatpush1.bf16.msra.mxu0 %v1552
        %1810 = vmatprep.subr.bf16.mxu0 %v1557
        %1811 = vmatpush1.bf16.msra.mxu0 %v1556
        %1812 = vmatprep.subr.bf16.mxu0 %v1561
        %1813 = vmatpush1.bf16.msra.mxu0 %v1560
        %1814 = vmatprep.subr.bf16.mxu0 %v1565
        %1815 = vmatpush1.bf16.msra.mxu0 %v1564
        %1816 = vmatprep.subr.bf16.mxu0 %v1569
        %1817 = vmatpush1.bf16.msra.mxu0 %v1568
        %1818 = vmatprep.subr.bf16.mxu0 %v1573
        %1819 = vmatpush1.bf16.msra.mxu0 %v1572
        %1820 = vmatprep.subr.bf16.mxu0 %v1577
        %1821 = vmatpush1.bf16.msra.mxu0 %v1576
        %1822 = vmatprep.subr.bf16.mxu0 %v1581
        %1823 = vmatpush1.bf16.msra.mxu0 %v1580
        %1824 = vmatprep.subr.bf16.mxu0 %v1585
        %1825 = vmatpush1.bf16.msra.mxu0 %v1584
        %1826 = vmatprep.subr.bf16.mxu0 %v1589
        %1827 = vmatpush1.bf16.msra.mxu0 %v1588
        %1828 = vmatprep.subr.bf16.mxu0 %v1593
        %1829 = vmatpush1.bf16.msra.mxu0 %v1592
        %1830 = vmatprep.subr.bf16.mxu0 %v1597
        %1831 = vmatpush1.bf16.msra.mxu0 %v1596
        %1832 = vmatprep.subr.bf16.mxu0 %v1601
        %1833 = vmatpush1.bf16.msra.mxu0 %v1600
        %1834 = vmatprep.subr.bf16.mxu0 %v1605
        %1835 = vmatpush1.bf16.msra.mxu0 %v1604
        %1836 = vmatprep.subr.bf16.mxu0 %v1609
        %1837 = vmatpush1.bf16.msra.mxu0 %v1608
        %1838 = vmatprep.subr.bf16.mxu0 %v1613
        %1839 = vmatpush1.bf16.msra.mxu0 %v1612
        %1840 = vmatprep.mubr.bf16.mxu0 %v955
        %1841 = vmatmul.mubr.bf16.gmra.mrb[0].mxu0 %v954
        %v1842 = vpop.f32.mrb[0].mxu0
        %v1843 = vadd.f32 %v1151, %v1842
        %v1844 = vpop.f32.mrb[0].mxu0
        %v1845 = vadd.f32 %v1155, %v1844
        %v1846 = vpop.f32.mrb[0].mxu0
        %v1847 = vadd.f32 %v1151, %v1846
        %v1848 = vpop.f32.mrb[0].mxu0
        %v1849 = vadd.f32 %v1155, %v1848
        %1850 = vmatprep.mubr.bf16.mxu0 %v959
        %1851 = vmatmul.mubr.bf16.gmra.mrb[0].mxu0 %v958
        %v1852 = vpop.f32.mrb[0].mxu0
        %v1853 = vadd.f32 %v1151, %v1852
        %v1854 = vpop.f32.mrb[0].mxu0
        %v1855 = vadd.f32 %v1155, %v1854
        %v1856 = vpop.f32.mrb[0].mxu0
        %v1857 = vadd.f32 %v1151, %v1856
        %v1858 = vpop.f32.mrb[0].mxu0
        %v1859 = vadd.f32 %v1155, %v1858
        %1860 = vmatprep.mubr.bf16.mxu0 %v963
        %1861 = vmatmul.mubr.bf16.gmra.mrb[0].mxu0 %v962
        %v1862 = vpop.f32.mrb[0].mxu0
        %v1863 = vadd.f32 %v1151, %v1862
        %v1864 = vpop.f32.mrb[0].mxu0
        %v1865 = vadd.f32 %v1155, %v1864
        %v1866 = vpop.f32.mrb[0].mxu0
        %v1867 = vadd.f32 %v1151, %v1866
        %v1868 = vpop.f32.mrb[0].mxu0
        %v1869 = vadd.f32 %v1155, %v1868
        %1870 = vmatprep.mubr.bf16.mxu0 %v967
        %1871 = vmatmul.mubr.bf16.gmra.mrb[0].mxu0 %v966
        %v1872 = vpop.f32.mrb[0].mxu0
        %v1873 = vadd.f32 %v1151, %v1872
        %v1874 = vpop.f32.mrb[0].mxu0
        %v1875 = vadd.f32 %v1155, %v1874
        %v1876 = vpop.f32.mrb[0].mxu0
        %v1877 = vadd.f32 %v1151, %v1876
        %v1878 = vpop.f32.mrb[0].mxu0
        %v1879 = vadd.f32 %v1155, %v1878
        %1880 = vmatprep.mubr.bf16.mxu0 %v971
        %1881 = vmatmul.mubr.bf16.gmra.mrb[0].mxu0 %v970
        %v1882 = vpop.f32.mrb[0].mxu0
        %v1883 = vadd.f32 %v1151, %v1882
        %v1884 = vpop.f32.mrb[0].mxu0
        %v1885 = vadd.f32 %v1155, %v1884
        %v1886 = vpop.f32.mrb[0].mxu0
        %v1887 = vadd.f32 %v1151, %v1886
        %v1888 = vpop.f32.mrb[0].mxu0
        %v1889 = vadd.f32 %v1155, %v1888
        %1890 = vmatprep.mubr.bf16.mxu0 %v975
        %1891 = vmatmul.mubr.bf16.gmra.mrb[0].mxu0 %v974
        %v1892 = vpop.f32.mrb[0].mxu0
        %v1893 = vadd.f32 %v1151, %v1892
        %v1894 = vpop.f32.mrb[0].mxu0
        %v1895 = vadd.f32 %v1155, %v1894
        %v1896 = vpop.f32.mrb[0].mxu0
        %v1897 = vadd.f32 %v1151, %v1896
        %v1898 = vpop.f32.mrb[0].mxu0
        %v1899 = vadd.f32 %v1155, %v1898
        %1900 = vmatprep.mubr.bf16.mxu0 %v979
        %1901 = vmatmul.mubr.bf16.gmra.mrb[0].mxu0 %v978
        %v1902 = vpop.f32.mrb[0].mxu0
        %v1903 = vadd.f32 %v1151, %v1902
        %v1904 = vpop.f32.mrb[0].mxu0
        %v1905 = vadd.f32 %v1155, %v1904
        %v1906 = vpop.f32.mrb[0].mxu0
        %v1907 = vadd.f32 %v1151, %v1906
        %v1908 = vpop.f32.mrb[0].mxu0
        %v1909 = vadd.f32 %v1155, %v1908
        %1910 = vmatprep.mubr.bf16.mxu0 %v983
        %1911 = vmatmul.mubr.bf16.gmra.mrb[0].mxu0 %v982
        %v1912 = vpop.f32.mrb[0].mxu0
        %v1913 = vadd.f32 %v1151, %v1912
        %v1914 = vpop.f32.mrb[0].mxu0
        %v1915 = vadd.f32 %v1155, %v1914
        %v1916 = vpop.f32.mrb[0].mxu0
        %v1917 = vadd.f32 %v1151, %v1916
        %v1918 = vpop.f32.mrb[0].mxu0
        %v1919 = vadd.f32 %v1155, %v1918
        %1920 = vmatprep.mubr.bf16.mxu0 %v987
        %1921 = vmatmul.mubr.bf16.gmra.mrb[0].mxu0 %v986
        %v1922 = vpop.f32.mrb[0].mxu0
        %v1923 = vadd.f32 %v1151, %v1922
        %v1924 = vpop.f32.mrb[0].mxu0
        %v1925 = vadd.f32 %v1155, %v1924
        %v1926 = vpop.f32.mrb[0].mxu0
        %v1927 = vadd.f32 %v1151, %v1926
        %v1928 = vpop.f32.mrb[0].mxu0
        %v1929 = vadd.f32 %v1155, %v1928
        %1930 = vmatprep.mubr.bf16.mxu0 %v991
        %1931 = vmatmul.mubr.bf16.gmra.mrb[0].mxu0 %v990
        %v1932 = vpop.f32.mrb[0].mxu0
        %v1933 = vadd.f32 %v1151, %v1932
        %v1934 = vpop.f32.mrb[0].mxu0
        %v1935 = vadd.f32 %v1155, %v1934
        %v1936 = vpop.f32.mrb[0].mxu0
        %v1937 = vadd.f32 %v1151, %v1936
        %v1938 = vpop.f32.mrb[0].mxu0
        %v1939 = vadd.f32 %v1155, %v1938
        %1940 = vmatprep.mubr.bf16.mxu0 %v995
        %1941 = vmatmul.mubr.bf16.gmra.mrb[0].mxu0 %v994
        %v1942 = vpop.f32.mrb[0].mxu0
        %v1943 = vadd.f32 %v1151, %v1942
        %v1944 = vpop.f32.mrb[0].mxu0
        %v1945 = vadd.f32 %v1155, %v1944
        %v1946 = vpop.f32.mrb[0].mxu0
        %v1947 = vadd.f32 %v1151, %v1946
        %v1948 = vpop.f32.mrb[0].mxu0
        %v1949 = vadd.f32 %v1155, %v1948
        %1950 = vmatprep.mubr.bf16.mxu0 %v999
        %1951 = vmatmul.mubr.bf16.gmra.mrb[0].mxu0 %v998
        %v1952 = vpop.f32.mrb[0].mxu0
        %v1953 = vadd.f32 %v1151, %v1952
        %v1954 = vpop.f32.mrb[0].mxu0
        %v1955 = vadd.f32 %v1155, %v1954
        %v1956 = vpop.f32.mrb[0].mxu0
        %v1957 = vadd.f32 %v1151, %v1956
        %v1958 = vpop.f32.mrb[0].mxu0
        %v1959 = vadd.f32 %v1155, %v1958
        %1960 = vmatprep.mubr.bf16.mxu0 %v1003
        %1961 = vmatmul.mubr.bf16.gmra.mrb[0].mxu0 %v1002
        %v1962 = vpop.f32.mrb[0].mxu0
        %v1963 = vadd.f32 %v1151, %v1962
        %v1964 = vpop.f32.mrb[0].mxu0
        %v1965 = vadd.f32 %v1155, %v1964
        %v1966 = vpop.f32.mrb[0].mxu0
        %v1967 = vadd.f32 %v1151, %v1966
        %v1968 = vpop.f32.mrb[0].mxu0
        %v1969 = vadd.f32 %v1155, %v1968
        %1970 = vmatprep.mubr.bf16.mxu0 %v1007
        %1971 = vmatmul.mubr.bf16.gmra.mrb[0].mxu0 %v1006
        %v1972 = vpop.f32.mrb[0].mxu0
        %v1973 = vadd.f32 %v1151, %v1972
        %v1974 = vpop.f32.mrb[0].mxu0
        %v1975 = vadd.f32 %v1155, %v1974
        %v1976 = vpop.f32.mrb[0].mxu0
        %v1977 = vadd.f32 %v1151, %v1976
        %v1978 = vpop.f32.mrb[0].mxu0
        %v1979 = vadd.f32 %v1155, %v1978
        %1980 = vmatprep.mubr.bf16.mxu0 %v1011
        %1981 = vmatmul.mubr.bf16.gmra.mrb[0].mxu0 %v1010
        %v1982 = vpop.f32.mrb[0].mxu0
        %v1983 = vadd.f32 %v1151, %v1982
        %v1984 = vpop.f32.mrb[0].mxu0
        %v1985 = vadd.f32 %v1155, %v1984
        %v1986 = vpop.f32.mrb[0].mxu0
        %v1987 = vadd.f32 %v1151, %v1986
        %v1988 = vpop.f32.mrb[0].mxu0
        %v1989 = vadd.f32 %v1155, %v1988
        %1990 = vmatprep.mubr.bf16.mxu0 %v1015
        %1991 = vmatmul.mubr.bf16.gmra.mrb[0].mxu0 %v1014
        %v1992 = vpop.f32.mrb[0].mxu0
        %v1993 = vadd.f32 %v1151, %v1992
        %v1994 = vpop.f32.mrb[0].mxu0
        %v1995 = vadd.f32 %v1155, %v1994
        %v1996 = vpop.f32.mrb[0].mxu0
        %v1997 = vadd.f32 %v1151, %v1996
        %v1998 = vpop.f32.mrb[0].mxu0
        %v1999 = vadd.f32 %v1155, %v1998
        %2000 = vdwg.mxu0
        %2001 = vmatprep.subr.bf16.mxu0 %v1617
        %2002 = vmatpush1.bf16.msra.mxu0 %v1616
        %2003 = vmatprep.subr.bf16.mxu0 %v1621
        %2004 = vmatpush1.bf16.msra.mxu0 %v1620
        %2005 = vmatprep.subr.bf16.mxu0 %v1625
        %2006 = vmatpush1.bf16.msra.mxu0 %v1624
        %2007 = vmatprep.subr.bf16.mxu0 %v1629
        %2008 = vmatpush1.bf16.msra.mxu0 %v1628
        %2009 = vmatprep.subr.bf16.mxu0 %v1633
        %2010 = vmatpush1.bf16.msra.mxu0 %v1632
        %2011 = vmatprep.subr.bf16.mxu0 %v1637
        %2012 = vmatpush1.bf16.msra.mxu0 %v1636
        %2013 = vmatprep.subr.bf16.mxu0 %v1641
        %2014 = vmatpush1.bf16.msra.mxu0 %v1640
        %2015 = vmatprep.subr.bf16.mxu0 %v1645
        %2016 = vmatpush1.bf16.msra.mxu0 %v1644
        %2017 = vmatprep.subr.bf16.mxu0 %v1649
        %2018 = vmatpush1.bf16.msra.mxu0 %v1648
        %2019 = vmatprep.subr.bf16.mxu0 %v1653
        %2020 = vmatpush1.bf16.msra.mxu0 %v1652
        %2021 = vmatprep.subr.bf16.mxu0 %v1657
        %2022 = vmatpush1.bf16.msra.mxu0 %v1656
        %2023 = vmatprep.subr.bf16.mxu0 %v1661
        %2024 = vmatpush1.bf16.msra.mxu0 %v1660
        %2025 = vmatprep.subr.bf16.mxu0 %v1665
        %2026 = vmatpush1.bf16.msra.mxu0 %v1664
        %2027 = vmatprep.subr.bf16.mxu0 %v1669
        %2028 = vmatpush1.bf16.msra.mxu0 %v1668
        %2029 = vmatprep.subr.bf16.mxu0 %v1673
        %2030 = vmatpush1.bf16.msra.mxu0 %v1672
        %2031 = vmatprep.subr.bf16.mxu0 %v1677
        %2032 = vmatpush1.bf16.msra.mxu0 %v1676
        %2033 = vmatprep.mubr.bf16.mxu0 %v957
        %2034 = vmatmul.mubr.bf16.gmra.mrb[0].mxu0 %v956
        %v2035 = vpop.f32.mrb[0].mxu0
        %v2036 = vadd.f32 %v1843, %v2035
        %v2037 = vpop.f32.mrb[0].mxu0
        %v2038 = vadd.f32 %v1845, %v2037
        %v2039 = vpop.f32.mrb[0].mxu0
        %v2040 = vadd.f32 %v1847, %v2039
        %v2041 = vpop.f32.mrb[0].mxu0
        %v2042 = vadd.f32 %v1849, %v2041
        %2043 = vmatprep.mubr.bf16.mxu0 %v961
        %2044 = vmatmul.mubr.bf16.gmra.mrb[0].mxu0 %v960
        %v2045 = vpop.f32.mrb[0].mxu0
        %v2046 = vadd.f32 %v1853, %v2045
        %v2047 = vpop.f32.mrb[0].mxu0
        %v2048 = vadd.f32 %v1855, %v2047
        %v2049 = vpop.f32.mrb[0].mxu0
        %v2050 = vadd.f32 %v1857, %v2049
        %v2051 = vpop.f32.mrb[0].mxu0
        %v2052 = vadd.f32 %v1859, %v2051
        %2053 = vmatprep.mubr.bf16.mxu0 %v965
        %2054 = vmatmul.mubr.bf16.gmra.mrb[0].mxu0 %v964
        %v2055 = vpop.f32.mrb[0].mxu0
        %v2056 = vadd.f32 %v1863, %v2055
        %v2057 = vpop.f32.mrb[0].mxu0
        %v2058 = vadd.f32 %v1865, %v2057
        %v2059 = vpop.f32.mrb[0].mxu0
        %v2060 = vadd.f32 %v1867, %v2059
        %v2061 = vpop.f32.mrb[0].mxu0
        %v2062 = vadd.f32 %v1869, %v2061
        %2063 = vmatprep.mubr.bf16.mxu0 %v969
        %2064 = vmatmul.mubr.bf16.gmra.mrb[0].mxu0 %v968
        %v2065 = vpop.f32.mrb[0].mxu0
        %v2066 = vadd.f32 %v1873, %v2065
        %v2067 = vpop.f32.mrb[0].mxu0
        %v2068 = vadd.f32 %v1875, %v2067
        %v2069 = vpop.f32.mrb[0].mxu0
        %v2070 = vadd.f32 %v1877, %v2069
        %v2071 = vpop.f32.mrb[0].mxu0
        %v2072 = vadd.f32 %v1879, %v2071
        %2073 = vmatprep.mubr.bf16.mxu0 %v973
        %2074 = vmatmul.mubr.bf16.gmra.mrb[0].mxu0 %v972
        %v2075 = vpop.f32.mrb[0].mxu0
        %v2076 = vadd.f32 %v1883, %v2075
        %v2077 = vpop.f32.mrb[0].mxu0
        %v2078 = vadd.f32 %v1885, %v2077
        %v2079 = vpop.f32.mrb[0].mxu0
        %v2080 = vadd.f32 %v1887, %v2079
        %v2081 = vpop.f32.mrb[0].mxu0
        %v2082 = vadd.f32 %v1889, %v2081
        %2083 = vmatprep.mubr.bf16.mxu0 %v977
        %2084 = vmatmul.mubr.bf16.gmra.mrb[0].mxu0 %v976
        %v2085 = vpop.f32.mrb[0].mxu0
        %v2086 = vadd.f32 %v1893, %v2085
        %v2087 = vpop.f32.mrb[0].mxu0
        %v2088 = vadd.f32 %v1895, %v2087
        %v2089 = vpop.f32.mrb[0].mxu0
        %v2090 = vadd.f32 %v1897, %v2089
        %v2091 = vpop.f32.mrb[0].mxu0
        %v2092 = vadd.f32 %v1899, %v2091
        %2093 = vmatprep.mubr.bf16.mxu0 %v981
        %2094 = vmatmul.mubr.bf16.gmra.mrb[0].mxu0 %v980
        %v2095 = vpop.f32.mrb[0].mxu0
        %v2096 = vadd.f32 %v1903, %v2095
        %v2097 = vpop.f32.mrb[0].mxu0
        %v2098 = vadd.f32 %v1905, %v2097
        %v2099 = vpop.f32.mrb[0].mxu0
        %v2100 = vadd.f32 %v1907, %v2099
        %v2101 = vpop.f32.mrb[0].mxu0
        %v2102 = vadd.f32 %v1909, %v2101
        %2103 = vmatprep.mubr.bf16.mxu0 %v985
        %2104 = vmatmul.mubr.bf16.gmra.mrb[0].mxu0 %v984
        %v2105 = vpop.f32.mrb[0].mxu0
        %v2106 = vadd.f32 %v1913, %v2105
        %v2107 = vpop.f32.mrb[0].mxu0
        %v2108 = vadd.f32 %v1915, %v2107
        %v2109 = vpop.f32.mrb[0].mxu0
        %v2110 = vadd.f32 %v1917, %v2109
        %v2111 = vpop.f32.mrb[0].mxu0
        %v2112 = vadd.f32 %v1919, %v2111
        %2113 = vmatprep.mubr.bf16.mxu0 %v989
        %2114 = vmatmul.mubr.bf16.gmra.mrb[0].mxu0 %v988
        %v2115 = vpop.f32.mrb[0].mxu0
        %v2116 = vadd.f32 %v1923, %v2115
        %v2117 = vpop.f32.mrb[0].mxu0
        %v2118 = vadd.f32 %v1925, %v2117
        %v2119 = vpop.f32.mrb[0].mxu0
        %v2120 = vadd.f32 %v1927, %v2119
        %v2121 = vpop.f32.mrb[0].mxu0
        %v2122 = vadd.f32 %v1929, %v2121
        %2123 = vmatprep.mubr.bf16.mxu0 %v993
        %2124 = vmatmul.mubr.bf16.gmra.mrb[0].mxu0 %v992
        %v2125 = vpop.f32.mrb[0].mxu0
        %v2126 = vadd.f32 %v1933, %v2125
        %v2127 = vpop.f32.mrb[0].mxu0
        %v2128 = vadd.f32 %v1935, %v2127
        %v2129 = vpop.f32.mrb[0].mxu0
        %v2130 = vadd.f32 %v1937, %v2129
        %v2131 = vpop.f32.mrb[0].mxu0
        %v2132 = vadd.f32 %v1939, %v2131
        %2133 = vmatprep.mubr.bf16.mxu0 %v997
        %2134 = vmatmul.mubr.bf16.gmra.mrb[0].mxu0 %v996
        %v2135 = vpop.f32.mrb[0].mxu0
        %v2136 = vadd.f32 %v1943, %v2135
        %v2137 = vpop.f32.mrb[0].mxu0
        %v2138 = vadd.f32 %v1945, %v2137
        %v2139 = vpop.f32.mrb[0].mxu0
        %v2140 = vadd.f32 %v1947, %v2139
        %v2141 = vpop.f32.mrb[0].mxu0
        %v2142 = vadd.f32 %v1949, %v2141
        %2143 = vmatprep.mubr.bf16.mxu0 %v1001
        %2144 = vmatmul.mubr.bf16.gmra.mrb[0].mxu0 %v1000
        %v2145 = vpop.f32.mrb[0].mxu0
        %v2146 = vadd.f32 %v1953, %v2145
        %v2147 = vpop.f32.mrb[0].mxu0
        %v2148 = vadd.f32 %v1955, %v2147
        %v2149 = vpop.f32.mrb[0].mxu0
        %v2150 = vadd.f32 %v1957, %v2149
        %v2151 = vpop.f32.mrb[0].mxu0
        %v2152 = vadd.f32 %v1959, %v2151
        %2153 = vmatprep.mubr.bf16.mxu0 %v1005
        %2154 = vmatmul.mubr.bf16.gmra.mrb[0].mxu0 %v1004
        %v2155 = vpop.f32.mrb[0].mxu0
        %v2156 = vadd.f32 %v1963, %v2155
        %v2157 = vpop.f32.mrb[0].mxu0
        %v2158 = vadd.f32 %v1965, %v2157
        %v2159 = vpop.f32.mrb[0].mxu0
        %v2160 = vadd.f32 %v1967, %v2159
        %v2161 = vpop.f32.mrb[0].mxu0
        %v2162 = vadd.f32 %v1969, %v2161
        %2163 = vmatprep.mubr.bf16.mxu0 %v1009
        %2164 = vmatmul.mubr.bf16.gmra.mrb[0].mxu0 %v1008
        %v2165 = vpop.f32.mrb[0].mxu0
        %v2166 = vadd.f32 %v1973, %v2165
        %v2167 = vpop.f32.mrb[0].mxu0
        %v2168 = vadd.f32 %v1975, %v2167
        %v2169 = vpop.f32.mrb[0].mxu0
        %v2170 = vadd.f32 %v1977, %v2169
        %v2171 = vpop.f32.mrb[0].mxu0
        %v2172 = vadd.f32 %v1979, %v2171
        %2173 = vmatprep.mubr.bf16.mxu0 %v1013
        %2174 = vmatmul.mubr.bf16.gmra.mrb[0].mxu0 %v1012
        %v2175 = vpop.f32.mrb[0].mxu0
        %v2176 = vadd.f32 %v1983, %v2175
        %v2177 = vpop.f32.mrb[0].mxu0
        %v2178 = vadd.f32 %v1985, %v2177
        %v2179 = vpop.f32.mrb[0].mxu0
        %v2180 = vadd.f32 %v1987, %v2179
        %v2181 = vpop.f32.mrb[0].mxu0
        %v2182 = vadd.f32 %v1989, %v2181
        %2183 = vmatprep.mubr.bf16.mxu0 %v1017
        %2184 = vmatmul.mubr.bf16.gmra.mrb[0].mxu0 %v1016
        %v2185 = vpop.f32.mrb[0].mxu0
        %v2186 = vadd.f32 %v1993, %v2185
        %v2187 = vpop.f32.mrb[0].mxu0
        %v2188 = vadd.f32 %v1995, %v2187
        %v2189 = vpop.f32.mrb[0].mxu0
        %v2190 = vadd.f32 %v1997, %v2189
        %v2191 = vpop.f32.mrb[0].mxu0
        %v2192 = vadd.f32 %v1999, %v2191
        %2193 = vdwg.mxu0
        %2194 = vmatprep.subr.bf16.mxu0 %v1555
        %2195 = vmatpush1.bf16.msra.mxu0 %v1554
        %2196 = vmatprep.subr.bf16.mxu0 %v1559
        %2197 = vmatpush1.bf16.msra.mxu0 %v1558
        %2198 = vmatprep.subr.bf16.mxu0 %v1563
        %2199 = vmatpush1.bf16.msra.mxu0 %v1562
        %2200 = vmatprep.subr.bf16.mxu0 %v1567
        %2201 = vmatpush1.bf16.msra.mxu0 %v1566
        %2202 = vmatprep.subr.bf16.mxu0 %v1571
        %2203 = vmatpush1.bf16.msra.mxu0 %v1570
        %2204 = vmatprep.subr.bf16.mxu0 %v1575
        %2205 = vmatpush1.bf16.msra.mxu0 %v1574
        %2206 = vmatprep.subr.bf16.mxu0 %v1579
        %2207 = vmatpush1.bf16.msra.mxu0 %v1578
        %2208 = vmatprep.subr.bf16.mxu0 %v1583
        %2209 = vmatpush1.bf16.msra.mxu0 %v1582
        %2210 = vmatprep.subr.bf16.mxu0 %v1587
        %2211 = vmatpush1.bf16.msra.mxu0 %v1586
        %2212 = vmatprep.subr.bf16.mxu0 %v1591
        %2213 = vmatpush1.bf16.msra.mxu0 %v1590
        %2214 = vmatprep.subr.bf16.mxu0 %v1595
        %2215 = vmatpush1.bf16.msra.mxu0 %v1594
        %2216 = vmatprep.subr.bf16.mxu0 %v1599
        %2217 = vmatpush1.bf16.msra.mxu0 %v1598
        %2218 = vmatprep.subr.bf16.mxu0 %v1603
        %2219 = vmatpush1.bf16.msra.mxu0 %v1602
        %2220 = vmatprep.subr.bf16.mxu0 %v1607
        %2221 = vmatpush1.bf16.msra.mxu0 %v1606
        %2222 = vmatprep.subr.bf16.mxu0 %v1611
        %2223 = vmatpush1.bf16.msra.mxu0 %v1610
        %2224 = vmatprep.subr.bf16.mxu0 %v1615
        %2225 = vmatpush1.bf16.msra.mxu0 %v1614
        %2226 = vmatprep.mubr.bf16.mxu0 %v955
        %2227 = vmatmul.mubr.bf16.gmra.mrb[0].mxu0 %v954
        %v2228 = vpop.f32.mrb[0].mxu0
        %v2229 = vadd.f32 %v1159, %v2228
        %v2230 = vpop.f32.mrb[0].mxu0
        %v2231 = vadd.f32 %v1163, %v2230
        %v2232 = vpop.f32.mrb[0].mxu0
        %v2233 = vadd.f32 %v1159, %v2232
        %v2234 = vpop.f32.mrb[0].mxu0
        %v2235 = vadd.f32 %v1163, %v2234
        %2236 = vmatprep.mubr.bf16.mxu0 %v959
        %2237 = vmatmul.mubr.bf16.gmra.mrb[0].mxu0 %v958
        %v2238 = vpop.f32.mrb[0].mxu0
        %v2239 = vadd.f32 %v1159, %v2238
        %v2240 = vpop.f32.mrb[0].mxu0
        %v2241 = vadd.f32 %v1163, %v2240
        %v2242 = vpop.f32.mrb[0].mxu0
        %v2243 = vadd.f32 %v1159, %v2242
        %v2244 = vpop.f32.mrb[0].mxu0
        %v2245 = vadd.f32 %v1163, %v2244
        %2246 = vmatprep.mubr.bf16.mxu0 %v963
        %2247 = vmatmul.mubr.bf16.gmra.mrb[0].mxu0 %v962
        %v2248 = vpop.f32.mrb[0].mxu0
        %v2249 = vadd.f32 %v1159, %v2248
        %v2250 = vpop.f32.mrb[0].mxu0
        %v2251 = vadd.f32 %v1163, %v2250
        %v2252 = vpop.f32.mrb[0].mxu0
        %v2253 = vadd.f32 %v1159, %v2252
        %v2254 = vpop.f32.mrb[0].mxu0
        %v2255 = vadd.f32 %v1163, %v2254
        %2256 = vmatprep.mubr.bf16.mxu0 %v967
        %2257 = vmatmul.mubr.bf16.gmra.mrb[0].mxu0 %v966
        %v2258 = vpop.f32.mrb[0].mxu0
        %v2259 = vadd.f32 %v1159, %v2258
        %v2260 = vpop.f32.mrb[0].mxu0
        %v2261 = vadd.f32 %v1163, %v2260
        %v2262 = vpop.f32.mrb[0].mxu0
        %v2263 = vadd.f32 %v1159, %v2262
        %v2264 = vpop.f32.mrb[0].mxu0
        %v2265 = vadd.f32 %v1163, %v2264
        %2266 = vmatprep.mubr.bf16.mxu0 %v971
        %2267 = vmatmul.mubr.bf16.gmra.mrb[0].mxu0 %v970
        %v2268 = vpop.f32.mrb[0].mxu0
        %v2269 = vadd.f32 %v1159, %v2268
        %v2270 = vpop.f32.mrb[0].mxu0
        %v2271 = vadd.f32 %v1163, %v2270
        %v2272 = vpop.f32.mrb[0].mxu0
        %v2273 = vadd.f32 %v1159, %v2272
        %v2274 = vpop.f32.mrb[0].mxu0
        %v2275 = vadd.f32 %v1163, %v2274
        %2276 = vmatprep.mubr.bf16.mxu0 %v975
        %2277 = vmatmul.mubr.bf16.gmra.mrb[0].mxu0 %v974
        %v2278 = vpop.f32.mrb[0].mxu0
        %v2279 = vadd.f32 %v1159, %v2278
        %v2280 = vpop.f32.mrb[0].mxu0
        %v2281 = vadd.f32 %v1163, %v2280
        %v2282 = vpop.f32.mrb[0].mxu0
        %v2283 = vadd.f32 %v1159, %v2282
        %v2284 = vpop.f32.mrb[0].mxu0
        %v2285 = vadd.f32 %v1163, %v2284
        %2286 = vmatprep.mubr.bf16.mxu0 %v979
        %2287 = vmatmul.mubr.bf16.gmra.mrb[0].mxu0 %v978
        %v2288 = vpop.f32.mrb[0].mxu0
        %v2289 = vadd.f32 %v1159, %v2288
        %v2290 = vpop.f32.mrb[0].mxu0
        %v2291 = vadd.f32 %v1163, %v2290
        %v2292 = vpop.f32.mrb[0].mxu0
        %v2293 = vadd.f32 %v1159, %v2292
        %v2294 = vpop.f32.mrb[0].mxu0
        %v2295 = vadd.f32 %v1163, %v2294
        %2296 = vmatprep.mubr.bf16.mxu0 %v983
        %2297 = vmatmul.mubr.bf16.gmra.mrb[0].mxu0 %v982
        %v2298 = vpop.f32.mrb[0].mxu0
        %v2299 = vadd.f32 %v1159, %v2298
        %v2300 = vpop.f32.mrb[0].mxu0
        %v2301 = vadd.f32 %v1163, %v2300
        %v2302 = vpop.f32.mrb[0].mxu0
        %v2303 = vadd.f32 %v1159, %v2302
        %v2304 = vpop.f32.mrb[0].mxu0
        %v2305 = vadd.f32 %v1163, %v2304
        %2306 = vmatprep.mubr.bf16.mxu0 %v987
        %2307 = vmatmul.mubr.bf16.gmra.mrb[0].mxu0 %v986
        %v2308 = vpop.f32.mrb[0].mxu0
        %v2309 = vadd.f32 %v1159, %v2308
        %v2310 = vpop.f32.mrb[0].mxu0
        %v2311 = vadd.f32 %v1163, %v2310
        %v2312 = vpop.f32.mrb[0].mxu0
        %v2313 = vadd.f32 %v1159, %v2312
        %v2314 = vpop.f32.mrb[0].mxu0
        %v2315 = vadd.f32 %v1163, %v2314
        %2316 = vmatprep.mubr.bf16.mxu0 %v991
        %2317 = vmatmul.mubr.bf16.gmra.mrb[0].mxu0 %v990
        %v2318 = vpop.f32.mrb[0].mxu0
        %v2319 = vadd.f32 %v1159, %v2318
        %v2320 = vpop.f32.mrb[0].mxu0
        %v2321 = vadd.f32 %v1163, %v2320
        %v2322 = vpop.f32.mrb[0].mxu0
        %v2323 = vadd.f32 %v1159, %v2322
        %v2324 = vpop.f32.mrb[0].mxu0
        %v2325 = vadd.f32 %v1163, %v2324
        %2326 = vmatprep.mubr.bf16.mxu0 %v995
        %2327 = vmatmul.mubr.bf16.gmra.mrb[0].mxu0 %v994
        %v2328 = vpop.f32.mrb[0].mxu0
        %v2329 = vadd.f32 %v1159, %v2328
        %v2330 = vpop.f32.mrb[0].mxu0
        %v2331 = vadd.f32 %v1163, %v2330
        %v2332 = vpop.f32.mrb[0].mxu0
        %v2333 = vadd.f32 %v1159, %v2332
        %v2334 = vpop.f32.mrb[0].mxu0
        %v2335 = vadd.f32 %v1163, %v2334
        %2336 = vmatprep.mubr.bf16.mxu0 %v999
        %2337 = vmatmul.mubr.bf16.gmra.mrb[0].mxu0 %v998
        %v2338 = vpop.f32.mrb[0].mxu0
        %v2339 = vadd.f32 %v1159, %v2338
        %v2340 = vpop.f32.mrb[0].mxu0
        %v2341 = vadd.f32 %v1163, %v2340
        %v2342 = vpop.f32.mrb[0].mxu0
        %v2343 = vadd.f32 %v1159, %v2342
        %v2344 = vpop.f32.mrb[0].mxu0
        %v2345 = vadd.f32 %v1163, %v2344
        %2346 = vmatprep.mubr.bf16.mxu0 %v1003
        %2347 = vmatmul.mubr.bf16.gmra.mrb[0].mxu0 %v1002
        %v2348 = vpop.f32.mrb[0].mxu0
        %v2349 = vadd.f32 %v1159, %v2348
        %v2350 = vpop.f32.mrb[0].mxu0
        %v2351 = vadd.f32 %v1163, %v2350
        %v2352 = vpop.f32.mrb[0].mxu0
        %v2353 = vadd.f32 %v1159, %v2352
        %v2354 = vpop.f32.mrb[0].mxu0
        %v2355 = vadd.f32 %v1163, %v2354
        %2356 = vmatprep.mubr.bf16.mxu0 %v1007
        %2357 = vmatmul.mubr.bf16.gmra.mrb[0].mxu0 %v1006
        %v2358 = vpop.f32.mrb[0].mxu0
        %v2359 = vadd.f32 %v1159, %v2358
        %v2360 = vpop.f32.mrb[0].mxu0
        %v2361 = vadd.f32 %v1163, %v2360
        %v2362 = vpop.f32.mrb[0].mxu0
        %v2363 = vadd.f32 %v1159, %v2362
        %v2364 = vpop.f32.mrb[0].mxu0
        %v2365 = vadd.f32 %v1163, %v2364
        %2366 = vmatprep.mubr.bf16.mxu0 %v1011
        %2367 = vmatmul.mubr.bf16.gmra.mrb[0].mxu0 %v1010
        %v2368 = vpop.f32.mrb[0].mxu0
        %v2369 = vadd.f32 %v1159, %v2368
        %v2370 = vpop.f32.mrb[0].mxu0
        %v2371 = vadd.f32 %v1163, %v2370
        %v2372 = vpop.f32.mrb[0].mxu0
        %v2373 = vadd.f32 %v1159, %v2372
        %v2374 = vpop.f32.mrb[0].mxu0
        %v2375 = vadd.f32 %v1163, %v2374
        %2376 = vmatprep.mubr.bf16.mxu0 %v1015
        %2377 = vmatmul.mubr.bf16.gmra.mrb[0].mxu0 %v1014
        %v2378 = vpop.f32.mrb[0].mxu0
        %v2379 = vadd.f32 %v1159, %v2378
        %v2380 = vpop.f32.mrb[0].mxu0
        %v2381 = vadd.f32 %v1163, %v2380
        %v2382 = vpop.f32.mrb[0].mxu0
        %v2383 = vadd.f32 %v1159, %v2382
        %v2384 = vpop.f32.mrb[0].mxu0
        %v2385 = vadd.f32 %v1163, %v2384
        %2386 = vdwg.mxu0
        %2387 = vmatprep.subr.bf16.mxu0 %v1619
        %2388 = vmatpush1.bf16.msra.mxu0 %v1618
        %2389 = vmatprep.subr.bf16.mxu0 %v1623
        %2390 = vmatpush1.bf16.msra.mxu0 %v1622
        %2391 = vmatprep.subr.bf16.mxu0 %v1627
        %2392 = vmatpush1.bf16.msra.mxu0 %v1626
        %2393 = vmatprep.subr.bf16.mxu0 %v1631
        %2394 = vmatpush1.bf16.msra.mxu0 %v1630
        %2395 = vmatprep.subr.bf16.mxu0 %v1635
        %2396 = vmatpush1.bf16.msra.mxu0 %v1634
        %2397 = vmatprep.subr.bf16.mxu0 %v1639
        %2398 = vmatpush1.bf16.msra.mxu0 %v1638
        %2399 = vmatprep.subr.bf16.mxu0 %v1643
        %2400 = vmatpush1.bf16.msra.mxu0 %v1642
        %2401 = vmatprep.subr.bf16.mxu0 %v1647
        %2402 = vmatpush1.bf16.msra.mxu0 %v1646
        %2403 = vmatprep.subr.bf16.mxu0 %v1651
        %2404 = vmatpush1.bf16.msra.mxu0 %v1650
        %2405 = vmatprep.subr.bf16.mxu0 %v1655
        %2406 = vmatpush1.bf16.msra.mxu0 %v1654
        %2407 = vmatprep.subr.bf16.mxu0 %v1659
        %2408 = vmatpush1.bf16.msra.mxu0 %v1658
        %2409 = vmatprep.subr.bf16.mxu0 %v1663
        %2410 = vmatpush1.bf16.msra.mxu0 %v1662
        %2411 = vmatprep.subr.bf16.mxu0 %v1667
        %2412 = vmatpush1.bf16.msra.mxu0 %v1666
        %2413 = vmatprep.subr.bf16.mxu0 %v1671
        %2414 = vmatpush1.bf16.msra.mxu0 %v1670
        %2415 = vmatprep.subr.bf16.mxu0 %v1675
        %2416 = vmatpush1.bf16.msra.mxu0 %v1674
        %2417 = vmatprep.subr.bf16.mxu0 %v1679
        %2418 = vmatpush1.bf16.msra.mxu0 %v1678
        %2419 = vmatprep.mubr.bf16.mxu0 %v957
        %2420 = vmatmul.mubr.bf16.gmra.mrb[0].mxu0 %v956
        %v2421 = vpop.f32.mrb[0].mxu0
        %v2422 = vadd.f32 %v2229, %v2421
        %v2423 = vpop.f32.mrb[0].mxu0
        %v2424 = vadd.f32 %v2231, %v2423
        %v2425 = vpop.f32.mrb[0].mxu0
        %v2426 = vadd.f32 %v2233, %v2425
        %v2427 = vpop.f32.mrb[0].mxu0
        %v2428 = vadd.f32 %v2235, %v2427
        %2429 = vmatprep.mubr.bf16.mxu0 %v961
        %2430 = vmatmul.mubr.bf16.gmra.mrb[0].mxu0 %v960
        %v2431 = vpop.f32.mrb[0].mxu0
        %v2432 = vadd.f32 %v2239, %v2431
        %v2433 = vpop.f32.mrb[0].mxu0
        %v2434 = vadd.f32 %v2241, %v2433
        %v2435 = vpop.f32.mrb[0].mxu0
        %v2436 = vadd.f32 %v2243, %v2435
        %v2437 = vpop.f32.mrb[0].mxu0
        %v2438 = vadd.f32 %v2245, %v2437
        %2439 = vmatprep.mubr.bf16.mxu0 %v965
        %2440 = vmatmul.mubr.bf16.gmra.mrb[0].mxu0 %v964
        %v2441 = vpop.f32.mrb[0].mxu0
        %v2442 = vadd.f32 %v2249, %v2441
        %v2443 = vpop.f32.mrb[0].mxu0
        %v2444 = vadd.f32 %v2251, %v2443
        %v2445 = vpop.f32.mrb[0].mxu0
        %v2446 = vadd.f32 %v2253, %v2445
        %v2447 = vpop.f32.mrb[0].mxu0
        %v2448 = vadd.f32 %v2255, %v2447
        %2449 = vmatprep.mubr.bf16.mxu0 %v969
        %2450 = vmatmul.mubr.bf16.gmra.mrb[0].mxu0 %v968
        %v2451 = vpop.f32.mrb[0].mxu0
        %v2452 = vadd.f32 %v2259, %v2451
        %v2453 = vpop.f32.mrb[0].mxu0
        %v2454 = vadd.f32 %v2261, %v2453
        %v2455 = vpop.f32.mrb[0].mxu0
        %v2456 = vadd.f32 %v2263, %v2455
        %v2457 = vpop.f32.mrb[0].mxu0
        %v2458 = vadd.f32 %v2265, %v2457
        %2459 = vmatprep.mubr.bf16.mxu0 %v973
        %2460 = vmatmul.mubr.bf16.gmra.mrb[0].mxu0 %v972
        %v2461 = vpop.f32.mrb[0].mxu0
        %v2462 = vadd.f32 %v2269, %v2461
        %v2463 = vpop.f32.mrb[0].mxu0
        %v2464 = vadd.f32 %v2271, %v2463
        %v2465 = vpop.f32.mrb[0].mxu0
        %v2466 = vadd.f32 %v2273, %v2465
        %v2467 = vpop.f32.mrb[0].mxu0
        %v2468 = vadd.f32 %v2275, %v2467
        %2469 = vmatprep.mubr.bf16.mxu0 %v977
        %2470 = vmatmul.mubr.bf16.gmra.mrb[0].mxu0 %v976
        %v2471 = vpop.f32.mrb[0].mxu0
        %v2472 = vadd.f32 %v2279, %v2471
        %v2473 = vpop.f32.mrb[0].mxu0
        %v2474 = vadd.f32 %v2281, %v2473
        %v2475 = vpop.f32.mrb[0].mxu0
        %v2476 = vadd.f32 %v2283, %v2475
        %v2477 = vpop.f32.mrb[0].mxu0
        %v2478 = vadd.f32 %v2285, %v2477
        %2479 = vmatprep.mubr.bf16.mxu0 %v981
        %2480 = vmatmul.mubr.bf16.gmra.mrb[0].mxu0 %v980
        %v2481 = vpop.f32.mrb[0].mxu0
        %v2482 = vadd.f32 %v2289, %v2481
        %v2483 = vpop.f32.mrb[0].mxu0
        %v2484 = vadd.f32 %v2291, %v2483
        %v2485 = vpop.f32.mrb[0].mxu0
        %v2486 = vadd.f32 %v2293, %v2485
        %v2487 = vpop.f32.mrb[0].mxu0
        %v2488 = vadd.f32 %v2295, %v2487
        %2489 = vmatprep.mubr.bf16.mxu0 %v985
        %2490 = vmatmul.mubr.bf16.gmra.mrb[0].mxu0 %v984
        %v2491 = vpop.f32.mrb[0].mxu0
        %v2492 = vadd.f32 %v2299, %v2491
        %v2493 = vpop.f32.mrb[0].mxu0
        %v2494 = vadd.f32 %v2301, %v2493
        %v2495 = vpop.f32.mrb[0].mxu0
        %v2496 = vadd.f32 %v2303, %v2495
        %v2497 = vpop.f32.mrb[0].mxu0
        %v2498 = vadd.f32 %v2305, %v2497
        %2499 = vmatprep.mubr.bf16.mxu0 %v989
        %2500 = vmatmul.mubr.bf16.gmra.mrb[0].mxu0 %v988
        %v2501 = vpop.f32.mrb[0].mxu0
        %v2502 = vadd.f32 %v2309, %v2501
        %v2503 = vpop.f32.mrb[0].mxu0
        %v2504 = vadd.f32 %v2311, %v2503
        %v2505 = vpop.f32.mrb[0].mxu0
        %v2506 = vadd.f32 %v2313, %v2505
        %v2507 = vpop.f32.mrb[0].mxu0
        %v2508 = vadd.f32 %v2315, %v2507
        %2509 = vmatprep.mubr.bf16.mxu0 %v993
        %2510 = vmatmul.mubr.bf16.gmra.mrb[0].mxu0 %v992
        %v2511 = vpop.f32.mrb[0].mxu0
        %v2512 = vadd.f32 %v2319, %v2511
        %v2513 = vpop.f32.mrb[0].mxu0
        %v2514 = vadd.f32 %v2321, %v2513
        %v2515 = vpop.f32.mrb[0].mxu0
        %v2516 = vadd.f32 %v2323, %v2515
        %v2517 = vpop.f32.mrb[0].mxu0
        %v2518 = vadd.f32 %v2325, %v2517
        %2519 = vmatprep.mubr.bf16.mxu0 %v997
        %2520 = vmatmul.mubr.bf16.gmra.mrb[0].mxu0 %v996
        %v2521 = vpop.f32.mrb[0].mxu0
        %v2522 = vadd.f32 %v2329, %v2521
        %v2523 = vpop.f32.mrb[0].mxu0
        %v2524 = vadd.f32 %v2331, %v2523
        %v2525 = vpop.f32.mrb[0].mxu0
        %v2526 = vadd.f32 %v2333, %v2525
        %v2527 = vpop.f32.mrb[0].mxu0
        %v2528 = vadd.f32 %v2335, %v2527
        %2529 = vmatprep.mubr.bf16.mxu0 %v1001
        %2530 = vmatmul.mubr.bf16.gmra.mrb[0].mxu0 %v1000
        %v2531 = vpop.f32.mrb[0].mxu0
        %v2532 = vadd.f32 %v2339, %v2531
        %v2533 = vpop.f32.mrb[0].mxu0
        %v2534 = vadd.f32 %v2341, %v2533
        %v2535 = vpop.f32.mrb[0].mxu0
        %v2536 = vadd.f32 %v2343, %v2535
        %v2537 = vpop.f32.mrb[0].mxu0
        %v2538 = vadd.f32 %v2345, %v2537
        %2539 = vmatprep.mubr.bf16.mxu0 %v1005
        %2540 = vmatmul.mubr.bf16.gmra.mrb[0].mxu0 %v1004
        %v2541 = vpop.f32.mrb[0].mxu0
        %v2542 = vadd.f32 %v2349, %v2541
        %v2543 = vpop.f32.mrb[0].mxu0
        %v2544 = vadd.f32 %v2351, %v2543
        %v2545 = vpop.f32.mrb[0].mxu0
        %v2546 = vadd.f32 %v2353, %v2545
        %v2547 = vpop.f32.mrb[0].mxu0
        %v2548 = vadd.f32 %v2355, %v2547
        %2549 = vmatprep.mubr.bf16.mxu0 %v1009
        %2550 = vmatmul.mubr.bf16.gmra.mrb[0].mxu0 %v1008
        %v2551 = vpop.f32.mrb[0].mxu0
        %v2552 = vadd.f32 %v2359, %v2551
        %v2553 = vpop.f32.mrb[0].mxu0
        %v2554 = vadd.f32 %v2361, %v2553
        %v2555 = vpop.f32.mrb[0].mxu0
        %v2556 = vadd.f32 %v2363, %v2555
        %v2557 = vpop.f32.mrb[0].mxu0
        %v2558 = vadd.f32 %v2365, %v2557
        %2559 = vmatprep.mubr.bf16.mxu0 %v1013
        %2560 = vmatmul.mubr.bf16.gmra.mrb[0].mxu0 %v1012
        %v2561 = vpop.f32.mrb[0].mxu0
        %v2562 = vadd.f32 %v2369, %v2561
        %v2563 = vpop.f32.mrb[0].mxu0
        %v2564 = vadd.f32 %v2371, %v2563
        %v2565 = vpop.f32.mrb[0].mxu0
        %v2566 = vadd.f32 %v2373, %v2565
        %v2567 = vpop.f32.mrb[0].mxu0
        %v2568 = vadd.f32 %v2375, %v2567
        %2569 = vmatprep.mubr.bf16.mxu0 %v1017
        %2570 = vmatmul.mubr.bf16.gmra.mrb[0].mxu0 %v1016
        %v2571 = vpop.f32.mrb[0].mxu0
        %v2572 = vadd.f32 %v2379, %v2571
        %v2573 = vpop.f32.mrb[0].mxu0
        %v2574 = vadd.f32 %v2381, %v2573
        %v2575 = vpop.f32.mrb[0].mxu0
        %v2576 = vadd.f32 %v2383, %v2575
        %v2577 = vpop.f32.mrb[0].mxu0
        %v2578 = vadd.f32 %v2385, %v2577
        %2579 = vdwg.mxu0
        %v2580 = vmax.f32 %v2036, 0.0
        %v2581 = vmax.f32 %v2038, 0.0
        %v2582 = vmax.f32 %v2422, 0.0
        %v2583 = vmax.f32 %v2424, 0.0
        %v2584 = vmax.f32 %v2040, 0.0
        %v2585 = vmax.f32 %v2042, 0.0
        %v2586 = vmax.f32 %v2426, 0.0
        %v2587 = vmax.f32 %v2428, 0.0
        %v2588 = vmax.f32 %v2046, 0.0
        %v2589 = vmax.f32 %v2048, 0.0
        %v2590 = vmax.f32 %v2432, 0.0
        %v2591 = vmax.f32 %v2434, 0.0
        %v2592 = vmax.f32 %v2050, 0.0
        %v2593 = vmax.f32 %v2052, 0.0
        %v2594 = vmax.f32 %v2436, 0.0
        %v2595 = vmax.f32 %v2438, 0.0
        %v2596 = vmax.f32 %v2056, 0.0
        %v2597 = vmax.f32 %v2058, 0.0
        %v2598 = vmax.f32 %v2442, 0.0
        %v2599 = vmax.f32 %v2444, 0.0
        %v2600 = vmax.f32 %v2060, 0.0
        %v2601 = vmax.f32 %v2062, 0.0
        %v2602 = vmax.f32 %v2446, 0.0
        %v2603 = vmax.f32 %v2448, 0.0
        %v2604 = vmax.f32 %v2066, 0.0
        %v2605 = vmax.f32 %v2068, 0.0
        %v2606 = vmax.f32 %v2452, 0.0
        %v2607 = vmax.f32 %v2454, 0.0
        %v2608 = vmax.f32 %v2070, 0.0
        %v2609 = vmax.f32 %v2072, 0.0
        %v2610 = vmax.f32 %v2456, 0.0
        %v2611 = vmax.f32 %v2458, 0.0
        %v2612 = vmax.f32 %v2076, 0.0
        %v2613 = vmax.f32 %v2078, 0.0
        %v2614 = vmax.f32 %v2462, 0.0
        %v2615 = vmax.f32 %v2464, 0.0
        %v2616 = vmax.f32 %v2080, 0.0
        %v2617 = vmax.f32 %v2082, 0.0
        %v2618 = vmax.f32 %v2466, 0.0
        %v2619 = vmax.f32 %v2468, 0.0
        %v2620 = vmax.f32 %v2086, 0.0
        %v2621 = vmax.f32 %v2088, 0.0
        %v2622 = vmax.f32 %v2472, 0.0
        %v2623 = vmax.f32 %v2474, 0.0
        %v2624 = vmax.f32 %v2090, 0.0
        %v2625 = vmax.f32 %v2092, 0.0
        %v2626 = vmax.f32 %v2476, 0.0
        %v2627 = vmax.f32 %v2478, 0.0
        %v2628 = vmax.f32 %v2096, 0.0
        %v2629 = vmax.f32 %v2098, 0.0
        %v2630 = vmax.f32 %v2482, 0.0
        %v2631 = vmax.f32 %v2484, 0.0
        %v2632 = vmax.f32 %v2100, 0.0
        %v2633 = vmax.f32 %v2102, 0.0
        %v2634 = vmax.f32 %v2486, 0.0
        %v2635 = vmax.f32 %v2488, 0.0
        %v2636 = vmax.f32 %v2106, 0.0
        %v2637 = vmax.f32 %v2108, 0.0
        %v2638 = vmax.f32 %v2492, 0.0
        %v2639 = vmax.f32 %v2494, 0.0
        %v2640 = vmax.f32 %v2110, 0.0
        %v2641 = vmax.f32 %v2112, 0.0
        %v2642 = vmax.f32 %v2496, 0.0
        %v2643 = vmax.f32 %v2498, 0.0
        %v2644 = vmax.f32 %v2116, 0.0
        %v2645 = vmax.f32 %v2118, 0.0
        %v2646 = vmax.f32 %v2502, 0.0
        %v2647 = vmax.f32 %v2504, 0.0
        %v2648 = vmax.f32 %v2120, 0.0
        %v2649 = vmax.f32 %v2122, 0.0
        %v2650 = vmax.f32 %v2506, 0.0
        %v2651 = vmax.f32 %v2508, 0.0
        %v2652 = vmax.f32 %v2126, 0.0
        %v2653 = vmax.f32 %v2128, 0.0
        %v2654 = vmax.f32 %v2512, 0.0
        %v2655 = vmax.f32 %v2514, 0.0
        %v2656 = vmax.f32 %v2130, 0.0
        %v2657 = vmax.f32 %v2132, 0.0
        %v2658 = vmax.f32 %v2516, 0.0
        %v2659 = vmax.f32 %v2518, 0.0
        %v2660 = vmax.f32 %v2136, 0.0
        %v2661 = vmax.f32 %v2138, 0.0
        %v2662 = vmax.f32 %v2522, 0.0
        %v2663 = vmax.f32 %v2524, 0.0
        %v2664 = vmax.f32 %v2140, 0.0
        %v2665 = vmax.f32 %v2142, 0.0
        %v2666 = vmax.f32 %v2526, 0.0
        %v2667 = vmax.f32 %v2528, 0.0
        %v2668 = vmax.f32 %v2146, 0.0
        %v2669 = vmax.f32 %v2148, 0.0
        %v2670 = vmax.f32 %v2532, 0.0
        %v2671 = vmax.f32 %v2534, 0.0
        %v2672 = vmax.f32 %v2150, 0.0
        %v2673 = vmax.f32 %v2152, 0.0
        %v2674 = vmax.f32 %v2536, 0.0
        %v2675 = vmax.f32 %v2538, 0.0
        %v2676 = vmax.f32 %v2156, 0.0
        %v2677 = vmax.f32 %v2158, 0.0
        %v2678 = vmax.f32 %v2542, 0.0
        %v2679 = vmax.f32 %v2544, 0.0
        %v2680 = vmax.f32 %v2160, 0.0
        %v2681 = vmax.f32 %v2162, 0.0
        %v2682 = vmax.f32 %v2546, 0.0
        %v2683 = vmax.f32 %v2548, 0.0
        %v2684 = vmax.f32 %v2166, 0.0
        %v2685 = vmax.f32 %v2168, 0.0
        %v2686 = vmax.f32 %v2552, 0.0
        %v2687 = vmax.f32 %v2554, 0.0
        %v2688 = vmax.f32 %v2170, 0.0
        %v2689 = vmax.f32 %v2172, 0.0
        %v2690 = vmax.f32 %v2556, 0.0
        %v2691 = vmax.f32 %v2558, 0.0
        %v2692 = vmax.f32 %v2176, 0.0
        %v2693 = vmax.f32 %v2178, 0.0
        %v2694 = vmax.f32 %v2562, 0.0
        %v2695 = vmax.f32 %v2564, 0.0
        %v2696 = vmax.f32 %v2180, 0.0
        %v2697 = vmax.f32 %v2182, 0.0
        %v2698 = vmax.f32 %v2566, 0.0
        %v2699 = vmax.f32 %v2568, 0.0
        %v2700 = vmax.f32 %v2186, 0.0
        %v2701 = vmax.f32 %v2188, 0.0
        %v2702 = vmax.f32 %v2572, 0.0
        %v2703 = vmax.f32 %v2574, 0.0
        %v2704 = vmax.f32 %v2190, 0.0
        %v2705 = vmax.f32 %v2192, 0.0
        %v2706 = vmax.f32 %v2576, 0.0
        %v2707 = vmax.f32 %v2578, 0.0
        %v2708 = vpack.c.bf16 %v2584, %v2580
        %v2709 = vpack.c.bf16 %v2585, %v2581
        %v2710 = vpack.c.bf16 %v2586, %v2582
        %v2711 = vpack.c.bf16 %v2587, %v2583
        %v2712 = vpack.c.bf16 %v2592, %v2588
        %v2713 = vpack.c.bf16 %v2593, %v2589
        %v2714 = vpack.c.bf16 %v2594, %v2590
        %v2715 = vpack.c.bf16 %v2595, %v2591
        %v2716 = vpack.c.bf16 %v2600, %v2596
        %v2717 = vpack.c.bf16 %v2601, %v2597
        %v2718 = vpack.c.bf16 %v2602, %v2598
        %v2719 = vpack.c.bf16 %v2603, %v2599
        %v2720 = vpack.c.bf16 %v2608, %v2604
        %v2721 = vpack.c.bf16 %v2609, %v2605
        %v2722 = vpack.c.bf16 %v2610, %v2606
        %v2723 = vpack.c.bf16 %v2611, %v2607
        %v2724 = vpack.c.bf16 %v2616, %v2612
        %v2725 = vpack.c.bf16 %v2617, %v2613
        %v2726 = vpack.c.bf16 %v2618, %v2614
        %v2727 = vpack.c.bf16 %v2619, %v2615
        %v2728 = vpack.c.bf16 %v2624, %v2620
        %v2729 = vpack.c.bf16 %v2625, %v2621
        %v2730 = vpack.c.bf16 %v2626, %v2622
        %v2731 = vpack.c.bf16 %v2627, %v2623
        %v2732 = vpack.c.bf16 %v2632, %v2628
        %v2733 = vpack.c.bf16 %v2633, %v2629
        %v2734 = vpack.c.bf16 %v2634, %v2630
        %v2735 = vpack.c.bf16 %v2635, %v2631
        %v2736 = vpack.c.bf16 %v2640, %v2636
        %v2737 = vpack.c.bf16 %v2641, %v2637
        %v2738 = vpack.c.bf16 %v2642, %v2638
        %v2739 = vpack.c.bf16 %v2643, %v2639
        %v2740 = vpack.c.bf16 %v2648, %v2644
        %v2741 = vpack.c.bf16 %v2649, %v2645
        %v2742 = vpack.c.bf16 %v2650, %v2646
        %v2743 = vpack.c.bf16 %v2651, %v2647
        %v2744 = vpack.c.bf16 %v2656, %v2652
        %v2745 = vpack.c.bf16 %v2657, %v2653
        %v2746 = vpack.c.bf16 %v2658, %v2654
        %v2747 = vpack.c.bf16 %v2659, %v2655
        %v2748 = vpack.c.bf16 %v2664, %v2660
        %v2749 = vpack.c.bf16 %v2665, %v2661
        %v2750 = vpack.c.bf16 %v2666, %v2662
        %v2751 = vpack.c.bf16 %v2667, %v2663
        %v2752 = vpack.c.bf16 %v2672, %v2668
        %v2753 = vpack.c.bf16 %v2673, %v2669
        %v2754 = vpack.c.bf16 %v2674, %v2670
        %v2755 = vpack.c.bf16 %v2675, %v2671
        %v2756 = vpack.c.bf16 %v2680, %v2676
        %v2757 = vpack.c.bf16 %v2681, %v2677
        %v2758 = vpack.c.bf16 %v2682, %v2678
        %v2759 = vpack.c.bf16 %v2683, %v2679
        %v2760 = vpack.c.bf16 %v2688, %v2684
        %v2761 = vpack.c.bf16 %v2689, %v2685
        %v2762 = vpack.c.bf16 %v2690, %v2686
        %v2763 = vpack.c.bf16 %v2691, %v2687
        %v2764 = vpack.c.bf16 %v2696, %v2692
        %v2765 = vpack.c.bf16 %v2697, %v2693
        %v2766 = vpack.c.bf16 %v2698, %v2694
        %v2767 = vpack.c.bf16 %v2699, %v2695
        %v2768 = vpack.c.bf16 %v2704, %v2700
        %v2769 = vpack.c.bf16 %v2705, %v2701
        %v2770 = vpack.c.bf16 %v2706, %v2702
        %v2771 = vpack.c.bf16 %v2707, %v2703
        %v2772 = vld [vmem:[#allocation7] sm:$0xff]
        %v2773 = vld [vmem:[#allocation7 + $0x8] sm:$0xff]
        %v2774 = vld [vmem:[#allocation7 + $0x10] sm:$0xff]
        %v2775 = vld [vmem:[#allocation7 + $0x18] sm:$0xff]
        %v2776 = vld [vmem:[#allocation7 + $0x20] sm:$0xff]
        %v2777 = vld [vmem:[#allocation7 + $0x28] sm:$0xff]
        %v2778 = vld [vmem:[#allocation7 + $0x30] sm:$0xff]
        %v2779 = vld [vmem:[#allocation7 + $0x38] sm:$0xff]
        %v2780 = vld [vmem:[#allocation7 + $0x40] sm:$0xff]
        %v2781 = vld [vmem:[#allocation7 + $0x48] sm:$0xff]
        %v2782 = vld [vmem:[#allocation7 + $0x50] sm:$0xff]
        %v2783 = vld [vmem:[#allocation7 + $0x58] sm:$0xff]
        %v2784 = vld [vmem:[#allocation7 + $0x60] sm:$0xff]
        %v2785 = vld [vmem:[#allocation7 + $0x68] sm:$0xff]
        %v2786 = vld [vmem:[#allocation7 + $0x70] sm:$0xff]
        %v2787 = vld [vmem:[#allocation7 + $0x78] sm:$0xff]
        %v2788 = vld [vmem:[#allocation7 + $0x80] sm:$0xff]
        %v2789 = vld [vmem:[#allocation7 + $0x88] sm:$0xff]
        %v2790 = vld [vmem:[#allocation7 + $0x90] sm:$0xff]
        %v2791 = vld [vmem:[#allocation7 + $0x98] sm:$0xff]
        %v2792 = vld [vmem:[#allocation7 + $0xa0] sm:$0xff]
        %v2793 = vld [vmem:[#allocation7 + $0xa8] sm:$0xff]
        %v2794 = vld [vmem:[#allocation7 + $0xb0] sm:$0xff]
        %v2795 = vld [vmem:[#allocation7 + $0xb8] sm:$0xff]
        %v2796 = vld [vmem:[#allocation7 + $0xc0] sm:$0xff]
        %v2797 = vld [vmem:[#allocation7 + $0xc8] sm:$0xff]
        %v2798 = vld [vmem:[#allocation7 + $0xd0] sm:$0xff]
        %v2799 = vld [vmem:[#allocation7 + $0xd8] sm:$0xff]
        %v2800 = vld [vmem:[#allocation7 + $0xe0] sm:$0xff]
        %v2801 = vld [vmem:[#allocation7 + $0xe8] sm:$0xff]
        %v2802 = vld [vmem:[#allocation7 + $0xf0] sm:$0xff]
        %v2803 = vld [vmem:[#allocation7 + $0xf8] sm:$0xff]
        %v2804 = vld [vmem:[#allocation7 + $0x100] sm:$0xff]
        %v2805 = vld [vmem:[#allocation7 + $0x108] sm:$0xff]
        %v2806 = vld [vmem:[#allocation7 + $0x110] sm:$0xff]
        %v2807 = vld [vmem:[#allocation7 + $0x118] sm:$0xff]
        %v2808 = vld [vmem:[#allocation7 + $0x120] sm:$0xff]
        %v2809 = vld [vmem:[#allocation7 + $0x128] sm:$0xff]
        %v2810 = vld [vmem:[#allocation7 + $0x130] sm:$0xff]
        %v2811 = vld [vmem:[#allocation7 + $0x138] sm:$0xff]
        %v2812 = vld [vmem:[#allocation7 + $0x140] sm:$0xff]
        %v2813 = vld [vmem:[#allocation7 + $0x148] sm:$0xff]
        %v2814 = vld [vmem:[#allocation7 + $0x150] sm:$0xff]
        %v2815 = vld [vmem:[#allocation7 + $0x158] sm:$0xff]
        %v2816 = vld [vmem:[#allocation7 + $0x160] sm:$0xff]
        %v2817 = vld [vmem:[#allocation7 + $0x168] sm:$0xff]
        %v2818 = vld [vmem:[#allocation7 + $0x170] sm:$0xff]
        %v2819 = vld [vmem:[#allocation7 + $0x178] sm:$0xff]
        %v2820 = vld [vmem:[#allocation7 + $0x180] sm:$0xff]
        %v2821 = vld [vmem:[#allocation7 + $0x188] sm:$0xff]
        %v2822 = vld [vmem:[#allocation7 + $0x190] sm:$0xff]
        %v2823 = vld [vmem:[#allocation7 + $0x198] sm:$0xff]
        %v2824 = vld [vmem:[#allocation7 + $0x1a0] sm:$0xff]
        %v2825 = vld [vmem:[#allocation7 + $0x1a8] sm:$0xff]
        %v2826 = vld [vmem:[#allocation7 + $0x1b0] sm:$0xff]
        %v2827 = vld [vmem:[#allocation7 + $0x1b8] sm:$0xff]
        %v2828 = vld [vmem:[#allocation7 + $0x1c0] sm:$0xff]
        %v2829 = vld [vmem:[#allocation7 + $0x1c8] sm:$0xff]
        %v2830 = vld [vmem:[#allocation7 + $0x1d0] sm:$0xff]
        %v2831 = vld [vmem:[#allocation7 + $0x1d8] sm:$0xff]
        %v2832 = vld [vmem:[#allocation7 + $0x1e0] sm:$0xff]
        %v2833 = vld [vmem:[#allocation7 + $0x1e8] sm:$0xff]
        %v2834 = vld [vmem:[#allocation7 + $0x1f0] sm:$0xff]
        %v2835 = vld [vmem:[#allocation7 + $0x1f8] sm:$0xff]
        %v2836 = vld [vmem:[#allocation7 + $0x200] sm:$0xff]
        %v2837 = vld [vmem:[#allocation7 + $0x208] sm:$0xff]
        %v2838 = vld [vmem:[#allocation7 + $0x210] sm:$0xff]
        %v2839 = vld [vmem:[#allocation7 + $0x218] sm:$0xff]
        %v2840 = vld [vmem:[#allocation7 + $0x220] sm:$0xff]
        %v2841 = vld [vmem:[#allocation7 + $0x228] sm:$0xff]
        %v2842 = vld [vmem:[#allocation7 + $0x230] sm:$0xff]
        %v2843 = vld [vmem:[#allocation7 + $0x238] sm:$0xff]
        %v2844 = vld [vmem:[#allocation7 + $0x240] sm:$0xff]
        %v2845 = vld [vmem:[#allocation7 + $0x248] sm:$0xff]
        %v2846 = vld [vmem:[#allocation7 + $0x250] sm:$0xff]
        %v2847 = vld [vmem:[#allocation7 + $0x258] sm:$0xff]
        %v2848 = vld [vmem:[#allocation7 + $0x260] sm:$0xff]
        %v2849 = vld [vmem:[#allocation7 + $0x268] sm:$0xff]
        %v2850 = vld [vmem:[#allocation7 + $0x270] sm:$0xff]
        %v2851 = vld [vmem:[#allocation7 + $0x278] sm:$0xff]
        %v2852 = vld [vmem:[#allocation7 + $0x280] sm:$0xff]
        %v2853 = vld [vmem:[#allocation7 + $0x288] sm:$0xff]
        %v2854 = vld [vmem:[#allocation7 + $0x290] sm:$0xff]
        %v2855 = vld [vmem:[#allocation7 + $0x298] sm:$0xff]
        %v2856 = vld [vmem:[#allocation7 + $0x2a0] sm:$0xff]
        %v2857 = vld [vmem:[#allocation7 + $0x2a8] sm:$0xff]
        %v2858 = vld [vmem:[#allocation7 + $0x2b0] sm:$0xff]
        %v2859 = vld [vmem:[#allocation7 + $0x2b8] sm:$0xff]
        %v2860 = vld [vmem:[#allocation7 + $0x2c0] sm:$0xff]
        %v2861 = vld [vmem:[#allocation7 + $0x2c8] sm:$0xff]
        %v2862 = vld [vmem:[#allocation7 + $0x2d0] sm:$0xff]
        %v2863 = vld [vmem:[#allocation7 + $0x2d8] sm:$0xff]
        %v2864 = vld [vmem:[#allocation7 + $0x2e0] sm:$0xff]
        %v2865 = vld [vmem:[#allocation7 + $0x2e8] sm:$0xff]
        %v2866 = vld [vmem:[#allocation7 + $0x2f0] sm:$0xff]
        %v2867 = vld [vmem:[#allocation7 + $0x2f8] sm:$0xff]
        %v2868 = vld [vmem:[#allocation7 + $0x300] sm:$0xff]
        %v2869 = vld [vmem:[#allocation7 + $0x308] sm:$0xff]
        %v2870 = vld [vmem:[#allocation7 + $0x310] sm:$0xff]
        %v2871 = vld [vmem:[#allocation7 + $0x318] sm:$0xff]
        %v2872 = vld [vmem:[#allocation7 + $0x320] sm:$0xff]
        %v2873 = vld [vmem:[#allocation7 + $0x328] sm:$0xff]
        %v2874 = vld [vmem:[#allocation7 + $0x330] sm:$0xff]
        %v2875 = vld [vmem:[#allocation7 + $0x338] sm:$0xff]
        %v2876 = vld [vmem:[#allocation7 + $0x340] sm:$0xff]
        %v2877 = vld [vmem:[#allocation7 + $0x348] sm:$0xff]
        %v2878 = vld [vmem:[#allocation7 + $0x350] sm:$0xff]
        %v2879 = vld [vmem:[#allocation7 + $0x358] sm:$0xff]
        %v2880 = vld [vmem:[#allocation7 + $0x360] sm:$0xff]
        %v2881 = vld [vmem:[#allocation7 + $0x368] sm:$0xff]
        %v2882 = vld [vmem:[#allocation7 + $0x370] sm:$0xff]
        %v2883 = vld [vmem:[#allocation7 + $0x378] sm:$0xff]
        %v2884 = vld [vmem:[#allocation7 + $0x380] sm:$0xff]
        %v2885 = vld [vmem:[#allocation7 + $0x388] sm:$0xff]
        %v2886 = vld [vmem:[#allocation7 + $0x390] sm:$0xff]
        %v2887 = vld [vmem:[#allocation7 + $0x398] sm:$0xff]
        %v2888 = vld [vmem:[#allocation7 + $0x3a0] sm:$0xff]
        %v2889 = vld [vmem:[#allocation7 + $0x3a8] sm:$0xff]
        %v2890 = vld [vmem:[#allocation7 + $0x3b0] sm:$0xff]
        %v2891 = vld [vmem:[#allocation7 + $0x3b8] sm:$0xff]
        %v2892 = vld [vmem:[#allocation7 + $0x3c0] sm:$0xff]
        %v2893 = vld [vmem:[#allocation7 + $0x3c8] sm:$0xff]
        %v2894 = vld [vmem:[#allocation7 + $0x3d0] sm:$0xff]
        %v2895 = vld [vmem:[#allocation7 + $0x3d8] sm:$0xff]
        %v2896 = vld [vmem:[#allocation7 + $0x3e0] sm:$0xff]
        %v2897 = vld [vmem:[#allocation7 + $0x3e8] sm:$0xff]
        %v2898 = vld [vmem:[#allocation7 + $0x3f0] sm:$0xff]
        %v2899 = vld [vmem:[#allocation7 + $0x3f8] sm:$0xff]
        %v2900 = vld [vmem:[%s4] sm:$0xf]
        %v2902 = vlaneseq
        %v2903 = vshrl.u32 %v2902, 7
        %v2904 = vsub.s32 0, %v2903
        %v2905 = vrot.slane %v2900, %v2904
        %v2906 = vlaneseq
        %v2907 = vshrl.u32 %v2906, 7
        %v2908 = vsub.s32 1, %v2907
        %v2909 = vrot.slane %v2900, %v2908
        %v2910 = vlaneseq
        %v2911 = vshrl.u32 %v2910, 7
        %v2912 = vsub.s32 2, %v2911
        %v2913 = vrot.slane %v2900, %v2912
        %v2914 = vlaneseq
        %v2915 = vshrl.u32 %v2914, 7
        %v2916 = vsub.s32 3, %v2915
        %v2917 = vrot.slane %v2900, %v2916
        %v3050 = vunpack.c.l.b16 %v2772
        %v3051 = vunpack.c.h.b16 %v2772
        %v3052 = vunpack.c.l.b16 %v2773
        %v3053 = vunpack.c.h.b16 %v2773
        %v3054 = vunpack.c.l.b16 %v2774
        %v3055 = vunpack.c.h.b16 %v2774
        %v3056 = vunpack.c.l.b16 %v2775
        %v3057 = vunpack.c.h.b16 %v2775
        %v3058 = vunpack.c.l.b16 %v2776
        %v3059 = vunpack.c.h.b16 %v2776
        %v3060 = vunpack.c.l.b16 %v2777
        %v3061 = vunpack.c.h.b16 %v2777
        %v3062 = vunpack.c.l.b16 %v2778
        %v3063 = vunpack.c.h.b16 %v2778
        %v3064 = vunpack.c.l.b16 %v2779
        %v3065 = vunpack.c.h.b16 %v2779
        %v3066 = vunpack.c.l.b16 %v2780
        %v3067 = vunpack.c.h.b16 %v2780
        %v3068 = vunpack.c.l.b16 %v2781
        %v3069 = vunpack.c.h.b16 %v2781
        %v3070 = vunpack.c.l.b16 %v2782
        %v3071 = vunpack.c.h.b16 %v2782
        %v3072 = vunpack.c.l.b16 %v2783
        %v3073 = vunpack.c.h.b16 %v2783
        %v3074 = vunpack.c.l.b16 %v2784
        %v3075 = vunpack.c.h.b16 %v2784
        %v3076 = vunpack.c.l.b16 %v2785
        %v3077 = vunpack.c.h.b16 %v2785
        %v3078 = vunpack.c.l.b16 %v2786
        %v3079 = vunpack.c.h.b16 %v2786
        %v3080 = vunpack.c.l.b16 %v2787
        %v3081 = vunpack.c.h.b16 %v2787
        %v3082 = vunpack.c.l.b16 %v2788
        %v3083 = vunpack.c.h.b16 %v2788
        %v3084 = vunpack.c.l.b16 %v2789
        %v3085 = vunpack.c.h.b16 %v2789
        %v3086 = vunpack.c.l.b16 %v2790
        %v3087 = vunpack.c.h.b16 %v2790
        %v3088 = vunpack.c.l.b16 %v2791
        %v3089 = vunpack.c.h.b16 %v2791
        %v3090 = vunpack.c.l.b16 %v2792
        %v3091 = vunpack.c.h.b16 %v2792
        %v3092 = vunpack.c.l.b16 %v2793
        %v3093 = vunpack.c.h.b16 %v2793
        %v3094 = vunpack.c.l.b16 %v2794
        %v3095 = vunpack.c.h.b16 %v2794
        %v3096 = vunpack.c.l.b16 %v2795
        %v3097 = vunpack.c.h.b16 %v2795
        %v3098 = vunpack.c.l.b16 %v2796
        %v3099 = vunpack.c.h.b16 %v2796
        %v3100 = vunpack.c.l.b16 %v2797
        %v3101 = vunpack.c.h.b16 %v2797
        %v3102 = vunpack.c.l.b16 %v2798
        %v3103 = vunpack.c.h.b16 %v2798
        %v3104 = vunpack.c.l.b16 %v2799
        %v3105 = vunpack.c.h.b16 %v2799
        %v3106 = vunpack.c.l.b16 %v2800
        %v3107 = vunpack.c.h.b16 %v2800
        %v3108 = vunpack.c.l.b16 %v2801
        %v3109 = vunpack.c.h.b16 %v2801
        %v3110 = vunpack.c.l.b16 %v2802
        %v3111 = vunpack.c.h.b16 %v2802
        %v3112 = vunpack.c.l.b16 %v2803
        %v3113 = vunpack.c.h.b16 %v2803
        %v3114 = vunpack.c.l.b16 %v2804
        %v3115 = vunpack.c.h.b16 %v2804
        %v3116 = vunpack.c.l.b16 %v2805
        %v3117 = vunpack.c.h.b16 %v2805
        %v3118 = vunpack.c.l.b16 %v2806
        %v3119 = vunpack.c.h.b16 %v2806
        %v3120 = vunpack.c.l.b16 %v2807
        %v3121 = vunpack.c.h.b16 %v2807
        %v3122 = vunpack.c.l.b16 %v2808
        %v3123 = vunpack.c.h.b16 %v2808
        %v3124 = vunpack.c.l.b16 %v2809
        %v3125 = vunpack.c.h.b16 %v2809
        %v3126 = vunpack.c.l.b16 %v2810
        %v3127 = vunpack.c.h.b16 %v2810
        %v3128 = vunpack.c.l.b16 %v2811
        %v3129 = vunpack.c.h.b16 %v2811
        %v3130 = vunpack.c.l.b16 %v2812
        %v3131 = vunpack.c.h.b16 %v2812
        %v3132 = vunpack.c.l.b16 %v2813
        %v3133 = vunpack.c.h.b16 %v2813
        %v3134 = vunpack.c.l.b16 %v2814
        %v3135 = vunpack.c.h.b16 %v2814
        %v3136 = vunpack.c.l.b16 %v2815
        %v3137 = vunpack.c.h.b16 %v2815
        %v3138 = vunpack.c.l.b16 %v2816
        %v3139 = vunpack.c.h.b16 %v2816
        %v3140 = vunpack.c.l.b16 %v2817
        %v3141 = vunpack.c.h.b16 %v2817
        %v3142 = vunpack.c.l.b16 %v2818
        %v3143 = vunpack.c.h.b16 %v2818
        %v3144 = vunpack.c.l.b16 %v2819
        %v3145 = vunpack.c.h.b16 %v2819
        %v3146 = vunpack.c.l.b16 %v2820
        %v3147 = vunpack.c.h.b16 %v2820
        %v3148 = vunpack.c.l.b16 %v2821
        %v3149 = vunpack.c.h.b16 %v2821
        %v3150 = vunpack.c.l.b16 %v2822
        %v3151 = vunpack.c.h.b16 %v2822
        %v3152 = vunpack.c.l.b16 %v2823
        %v3153 = vunpack.c.h.b16 %v2823
        %v3154 = vunpack.c.l.b16 %v2824
        %v3155 = vunpack.c.h.b16 %v2824
        %v3156 = vunpack.c.l.b16 %v2825
        %v3157 = vunpack.c.h.b16 %v2825
        %v3158 = vunpack.c.l.b16 %v2826
        %v3159 = vunpack.c.h.b16 %v2826
        %v3160 = vunpack.c.l.b16 %v2827
        %v3161 = vunpack.c.h.b16 %v2827
        %v3162 = vunpack.c.l.b16 %v2828
        %v3163 = vunpack.c.h.b16 %v2828
        %v3164 = vunpack.c.l.b16 %v2829
        %v3165 = vunpack.c.h.b16 %v2829
        %v3166 = vunpack.c.l.b16 %v2830
        %v3167 = vunpack.c.h.b16 %v2830
        %v3168 = vunpack.c.l.b16 %v2831
        %v3169 = vunpack.c.h.b16 %v2831
        %v3170 = vunpack.c.l.b16 %v2832
        %v3171 = vunpack.c.h.b16 %v2832
        %v3172 = vunpack.c.l.b16 %v2833
        %v3173 = vunpack.c.h.b16 %v2833
        %v3174 = vunpack.c.l.b16 %v2834
        %v3175 = vunpack.c.h.b16 %v2834
        %v3176 = vunpack.c.l.b16 %v2835
        %v3177 = vunpack.c.h.b16 %v2835
        %v3178 = vunpack.c.l.b16 %v2836
        %v3179 = vunpack.c.h.b16 %v2836
        %v3180 = vunpack.c.l.b16 %v2837
        %v3181 = vunpack.c.h.b16 %v2837
        %v3182 = vunpack.c.l.b16 %v2838
        %v3183 = vunpack.c.h.b16 %v2838
        %v3184 = vunpack.c.l.b16 %v2839
        %v3185 = vunpack.c.h.b16 %v2839
        %v3186 = vunpack.c.l.b16 %v2840
        %v3187 = vunpack.c.h.b16 %v2840
        %v3188 = vunpack.c.l.b16 %v2841
        %v3189 = vunpack.c.h.b16 %v2841
        %v3190 = vunpack.c.l.b16 %v2842
        %v3191 = vunpack.c.h.b16 %v2842
        %v3192 = vunpack.c.l.b16 %v2843
        %v3193 = vunpack.c.h.b16 %v2843
        %v3194 = vunpack.c.l.b16 %v2844
        %v3195 = vunpack.c.h.b16 %v2844
        %v3196 = vunpack.c.l.b16 %v2845
        %v3197 = vunpack.c.h.b16 %v2845
        %v3198 = vunpack.c.l.b16 %v2846
        %v3199 = vunpack.c.h.b16 %v2846
        %v3200 = vunpack.c.l.b16 %v2847
        %v3201 = vunpack.c.h.b16 %v2847
        %v3202 = vunpack.c.l.b16 %v2848
        %v3203 = vunpack.c.h.b16 %v2848
        %v3204 = vunpack.c.l.b16 %v2849
        %v3205 = vunpack.c.h.b16 %v2849
        %v3206 = vunpack.c.l.b16 %v2850
        %v3207 = vunpack.c.h.b16 %v2850
        %v3208 = vunpack.c.l.b16 %v2851
        %v3209 = vunpack.c.h.b16 %v2851
        %v3210 = vunpack.c.l.b16 %v2852
        %v3211 = vunpack.c.h.b16 %v2852
        %v3212 = vunpack.c.l.b16 %v2853
        %v3213 = vunpack.c.h.b16 %v2853
        %v3214 = vunpack.c.l.b16 %v2854
        %v3215 = vunpack.c.h.b16 %v2854
        %v3216 = vunpack.c.l.b16 %v2855
        %v3217 = vunpack.c.h.b16 %v2855
        %v3218 = vunpack.c.l.b16 %v2856
        %v3219 = vunpack.c.h.b16 %v2856
        %v3220 = vunpack.c.l.b16 %v2857
        %v3221 = vunpack.c.h.b16 %v2857
        %v3222 = vunpack.c.l.b16 %v2858
        %v3223 = vunpack.c.h.b16 %v2858
        %v3224 = vunpack.c.l.b16 %v2859
        %v3225 = vunpack.c.h.b16 %v2859
        %v3226 = vunpack.c.l.b16 %v2860
        %v3227 = vunpack.c.h.b16 %v2860
        %v3228 = vunpack.c.l.b16 %v2861
        %v3229 = vunpack.c.h.b16 %v2861
        %v3230 = vunpack.c.l.b16 %v2862
        %v3231 = vunpack.c.h.b16 %v2862
        %v3232 = vunpack.c.l.b16 %v2863
        %v3233 = vunpack.c.h.b16 %v2863
        %v3234 = vunpack.c.l.b16 %v2864
        %v3235 = vunpack.c.h.b16 %v2864
        %v3236 = vunpack.c.l.b16 %v2865
        %v3237 = vunpack.c.h.b16 %v2865
        %v3238 = vunpack.c.l.b16 %v2866
        %v3239 = vunpack.c.h.b16 %v2866
        %v3240 = vunpack.c.l.b16 %v2867
        %v3241 = vunpack.c.h.b16 %v2867
        %v3242 = vunpack.c.l.b16 %v2868
        %v3243 = vunpack.c.h.b16 %v2868
        %v3244 = vunpack.c.l.b16 %v2869
        %v3245 = vunpack.c.h.b16 %v2869
        %v3246 = vunpack.c.l.b16 %v2870
        %v3247 = vunpack.c.h.b16 %v2870
        %v3248 = vunpack.c.l.b16 %v2871
        %v3249 = vunpack.c.h.b16 %v2871
        %v3250 = vunpack.c.l.b16 %v2872
        %v3251 = vunpack.c.h.b16 %v2872
        %v3252 = vunpack.c.l.b16 %v2873
        %v3253 = vunpack.c.h.b16 %v2873
        %v3254 = vunpack.c.l.b16 %v2874
        %v3255 = vunpack.c.h.b16 %v2874
        %v3256 = vunpack.c.l.b16 %v2875
        %v3257 = vunpack.c.h.b16 %v2875
        %v3258 = vunpack.c.l.b16 %v2876
        %v3259 = vunpack.c.h.b16 %v2876
        %v3260 = vunpack.c.l.b16 %v2877
        %v3261 = vunpack.c.h.b16 %v2877
        %v3262 = vunpack.c.l.b16 %v2878
        %v3263 = vunpack.c.h.b16 %v2878
        %v3264 = vunpack.c.l.b16 %v2879
        %v3265 = vunpack.c.h.b16 %v2879
        %v3266 = vunpack.c.l.b16 %v2880
        %v3267 = vunpack.c.h.b16 %v2880
        %v3268 = vunpack.c.l.b16 %v2881
        %v3269 = vunpack.c.h.b16 %v2881
        %v3270 = vunpack.c.l.b16 %v2882
        %v3271 = vunpack.c.h.b16 %v2882
        %v3272 = vunpack.c.l.b16 %v2883
        %v3273 = vunpack.c.h.b16 %v2883
        %v3274 = vunpack.c.l.b16 %v2884
        %v3275 = vunpack.c.h.b16 %v2884
        %v3276 = vunpack.c.l.b16 %v2885
        %v3277 = vunpack.c.h.b16 %v2885
        %v3278 = vunpack.c.l.b16 %v2886
        %v3279 = vunpack.c.h.b16 %v2886
        %v3280 = vunpack.c.l.b16 %v2887
        %v3281 = vunpack.c.h.b16 %v2887
        %v3282 = vunpack.c.l.b16 %v2888
        %v3283 = vunpack.c.h.b16 %v2888
        %v3284 = vunpack.c.l.b16 %v2889
        %v3285 = vunpack.c.h.b16 %v2889
        %v3286 = vunpack.c.l.b16 %v2890
        %v3287 = vunpack.c.h.b16 %v2890
        %v3288 = vunpack.c.l.b16 %v2891
        %v3289 = vunpack.c.h.b16 %v2891
        %v3290 = vunpack.c.l.b16 %v2892
        %v3291 = vunpack.c.h.b16 %v2892
        %v3292 = vunpack.c.l.b16 %v2893
        %v3293 = vunpack.c.h.b16 %v2893
        %v3294 = vunpack.c.l.b16 %v2894
        %v3295 = vunpack.c.h.b16 %v2894
        %v3296 = vunpack.c.l.b16 %v2895
        %v3297 = vunpack.c.h.b16 %v2895
        %v3298 = vunpack.c.l.b16 %v2896
        %v3299 = vunpack.c.h.b16 %v2896
        %v3300 = vunpack.c.l.b16 %v2897
        %v3301 = vunpack.c.h.b16 %v2897
        %v3302 = vunpack.c.l.b16 %v2898
        %v3303 = vunpack.c.h.b16 %v2898
        %v3304 = vunpack.c.l.b16 %v2899
        %v3305 = vunpack.c.h.b16 %v2899
        %v3306 = vpack.c.b16 %v3054, %v3050
        %v3307 = vpack.c.b16 %v3055, %v3051
        %v3308 = vpack.c.b16 %v3056, %v3052
        %v3309 = vpack.c.b16 %v3057, %v3053
        %v3310 = vpack.c.b16 %v3062, %v3058
        %v3311 = vpack.c.b16 %v3063, %v3059
        %v3312 = vpack.c.b16 %v3064, %v3060
        %v3313 = vpack.c.b16 %v3065, %v3061
        %v3314 = vpack.c.b16 %v3070, %v3066
        %v3315 = vpack.c.b16 %v3071, %v3067
        %v3316 = vpack.c.b16 %v3072, %v3068
        %v3317 = vpack.c.b16 %v3073, %v3069
        %v3318 = vpack.c.b16 %v3078, %v3074
        %v3319 = vpack.c.b16 %v3079, %v3075
        %v3320 = vpack.c.b16 %v3080, %v3076
        %v3321 = vpack.c.b16 %v3081, %v3077
        %v3322 = vpack.c.b16 %v3086, %v3082
        %v3323 = vpack.c.b16 %v3087, %v3083
        %v3324 = vpack.c.b16 %v3088, %v3084
        %v3325 = vpack.c.b16 %v3089, %v3085
        %v3326 = vpack.c.b16 %v3094, %v3090
        %v3327 = vpack.c.b16 %v3095, %v3091
        %v3328 = vpack.c.b16 %v3096, %v3092
        %v3329 = vpack.c.b16 %v3097, %v3093
        %v3330 = vpack.c.b16 %v3102, %v3098
        %v3331 = vpack.c.b16 %v3103, %v3099
        %v3332 = vpack.c.b16 %v3104, %v3100
        %v3333 = vpack.c.b16 %v3105, %v3101
        %v3334 = vpack.c.b16 %v3110, %v3106
        %v3335 = vpack.c.b16 %v3111, %v3107
        %v3336 = vpack.c.b16 %v3112, %v3108
        %v3337 = vpack.c.b16 %v3113, %v3109
        %v3338 = vpack.c.b16 %v3118, %v3114
        %v3339 = vpack.c.b16 %v3119, %v3115
        %v3340 = vpack.c.b16 %v3120, %v3116
        %v3341 = vpack.c.b16 %v3121, %v3117
        %v3342 = vpack.c.b16 %v3126, %v3122
        %v3343 = vpack.c.b16 %v3127, %v3123
        %v3344 = vpack.c.b16 %v3128, %v3124
        %v3345 = vpack.c.b16 %v3129, %v3125
        %v3346 = vpack.c.b16 %v3134, %v3130
        %v3347 = vpack.c.b16 %v3135, %v3131
        %v3348 = vpack.c.b16 %v3136, %v3132
        %v3349 = vpack.c.b16 %v3137, %v3133
        %v3350 = vpack.c.b16 %v3142, %v3138
        %v3351 = vpack.c.b16 %v3143, %v3139
        %v3352 = vpack.c.b16 %v3144, %v3140
        %v3353 = vpack.c.b16 %v3145, %v3141
        %v3354 = vpack.c.b16 %v3150, %v3146
        %v3355 = vpack.c.b16 %v3151, %v3147
        %v3356 = vpack.c.b16 %v3152, %v3148
        %v3357 = vpack.c.b16 %v3153, %v3149
        %v3358 = vpack.c.b16 %v3158, %v3154
        %v3359 = vpack.c.b16 %v3159, %v3155
        %v3360 = vpack.c.b16 %v3160, %v3156
        %v3361 = vpack.c.b16 %v3161, %v3157
        %v3362 = vpack.c.b16 %v3166, %v3162
        %v3363 = vpack.c.b16 %v3167, %v3163
        %v3364 = vpack.c.b16 %v3168, %v3164
        %v3365 = vpack.c.b16 %v3169, %v3165
        %v3366 = vpack.c.b16 %v3174, %v3170
        %v3367 = vpack.c.b16 %v3175, %v3171
        %v3368 = vpack.c.b16 %v3176, %v3172
        %v3369 = vpack.c.b16 %v3177, %v3173
        %v3370 = vpack.c.b16 %v3182, %v3178
        %v3371 = vpack.c.b16 %v3183, %v3179
        %v3372 = vpack.c.b16 %v3184, %v3180
        %v3373 = vpack.c.b16 %v3185, %v3181
        %v3374 = vpack.c.b16 %v3190, %v3186
        %v3375 = vpack.c.b16 %v3191, %v3187
        %v3376 = vpack.c.b16 %v3192, %v3188
        %v3377 = vpack.c.b16 %v3193, %v3189
        %v3378 = vpack.c.b16 %v3198, %v3194
        %v3379 = vpack.c.b16 %v3199, %v3195
        %v3380 = vpack.c.b16 %v3200, %v3196
        %v3381 = vpack.c.b16 %v3201, %v3197
        %v3382 = vpack.c.b16 %v3206, %v3202
        %v3383 = vpack.c.b16 %v3207, %v3203
        %v3384 = vpack.c.b16 %v3208, %v3204
        %v3385 = vpack.c.b16 %v3209, %v3205
        %v3386 = vpack.c.b16 %v3214, %v3210
        %v3387 = vpack.c.b16 %v3215, %v3211
        %v3388 = vpack.c.b16 %v3216, %v3212
        %v3389 = vpack.c.b16 %v3217, %v3213
        %v3390 = vpack.c.b16 %v3222, %v3218
        %v3391 = vpack.c.b16 %v3223, %v3219
        %v3392 = vpack.c.b16 %v3224, %v3220
        %v3393 = vpack.c.b16 %v3225, %v3221
        %v3394 = vpack.c.b16 %v3230, %v3226
        %v3395 = vpack.c.b16 %v3231, %v3227
        %v3396 = vpack.c.b16 %v3232, %v3228
        %v3397 = vpack.c.b16 %v3233, %v3229
        %v3398 = vpack.c.b16 %v3238, %v3234
        %v3399 = vpack.c.b16 %v3239, %v3235
        %v3400 = vpack.c.b16 %v3240, %v3236
        %v3401 = vpack.c.b16 %v3241, %v3237
        %v3402 = vpack.c.b16 %v3246, %v3242
        %v3403 = vpack.c.b16 %v3247, %v3243
        %v3404 = vpack.c.b16 %v3248, %v3244
        %v3405 = vpack.c.b16 %v3249, %v3245
        %v3406 = vpack.c.b16 %v3254, %v3250
        %v3407 = vpack.c.b16 %v3255, %v3251
        %v3408 = vpack.c.b16 %v3256, %v3252
        %v3409 = vpack.c.b16 %v3257, %v3253
        %v3410 = vpack.c.b16 %v3262, %v3258
        %v3411 = vpack.c.b16 %v3263, %v3259
        %v3412 = vpack.c.b16 %v3264, %v3260
        %v3413 = vpack.c.b16 %v3265, %v3261
        %v3414 = vpack.c.b16 %v3270, %v3266
        %v3415 = vpack.c.b16 %v3271, %v3267
        %v3416 = vpack.c.b16 %v3272, %v3268
        %v3417 = vpack.c.b16 %v3273, %v3269
        %v3418 = vpack.c.b16 %v3278, %v3274
        %v3419 = vpack.c.b16 %v3279, %v3275
        %v3420 = vpack.c.b16 %v3280, %v3276
        %v3421 = vpack.c.b16 %v3281, %v3277
        %v3422 = vpack.c.b16 %v3286, %v3282
        %v3423 = vpack.c.b16 %v3287, %v3283
        %v3424 = vpack.c.b16 %v3288, %v3284
        %v3425 = vpack.c.b16 %v3289, %v3285
        %v3426 = vpack.c.b16 %v3294, %v3290
        %v3427 = vpack.c.b16 %v3295, %v3291
        %v3428 = vpack.c.b16 %v3296, %v3292
        %v3429 = vpack.c.b16 %v3297, %v3293
        %v3430 = vpack.c.b16 %v3302, %v3298
        %v3431 = vpack.c.b16 %v3303, %v3299
        %v3432 = vpack.c.b16 %v3304, %v3300
        %v3433 = vpack.c.b16 %v3305, %v3301
        %3562 = vmatprep.subr.bf16.mxu0 %v3307
        %3563 = vmatpush1.bf16.msra.mxu0 %v3306
        %3564 = vmatprep.subr.bf16.mxu0 %v3311
        %3565 = vmatpush1.bf16.msra.mxu0 %v3310
        %3566 = vmatprep.subr.bf16.mxu0 %v3315
        %3567 = vmatpush1.bf16.msra.mxu0 %v3314
        %3568 = vmatprep.subr.bf16.mxu0 %v3319
        %3569 = vmatpush1.bf16.msra.mxu0 %v3318
        %3570 = vmatprep.subr.bf16.mxu0 %v3323
        %3571 = vmatpush1.bf16.msra.mxu0 %v3322
        %3572 = vmatprep.subr.bf16.mxu0 %v3327
        %3573 = vmatpush1.bf16.msra.mxu0 %v3326
        %3574 = vmatprep.subr.bf16.mxu0 %v3331
        %3575 = vmatpush1.bf16.msra.mxu0 %v3330
        %3576 = vmatprep.subr.bf16.mxu0 %v3335
        %3577 = vmatpush1.bf16.msra.mxu0 %v3334
        %3578 = vmatprep.subr.bf16.mxu0 %v3339
        %3579 = vmatpush1.bf16.msra.mxu0 %v3338
        %3580 = vmatprep.subr.bf16.mxu0 %v3343
        %3581 = vmatpush1.bf16.msra.mxu0 %v3342
        %3582 = vmatprep.subr.bf16.mxu0 %v3347
        %3583 = vmatpush1.bf16.msra.mxu0 %v3346
        %3584 = vmatprep.subr.bf16.mxu0 %v3351
        %3585 = vmatpush1.bf16.msra.mxu0 %v3350
        %3586 = vmatprep.subr.bf16.mxu0 %v3355
        %3587 = vmatpush1.bf16.msra.mxu0 %v3354
        %3588 = vmatprep.subr.bf16.mxu0 %v3359
        %3589 = vmatpush1.bf16.msra.mxu0 %v3358
        %3590 = vmatprep.subr.bf16.mxu0 %v3363
        %3591 = vmatpush1.bf16.msra.mxu0 %v3362
        %3592 = vmatprep.subr.bf16.mxu0 %v3367
        %3593 = vmatpush1.bf16.msra.mxu0 %v3366
        %3594 = vmatprep.mubr.bf16.mxu0 %v2709
        %3595 = vmatmul.mubr.bf16.gmra.mrb[0].mxu0 %v2708
        %v3596 = vpop.f32.mrb[0].mxu0
        %v3597 = vadd.f32 %v2905, %v3596
        %v3598 = vpop.f32.mrb[0].mxu0
        %v3599 = vadd.f32 %v2909, %v3598
        %v3600 = vpop.f32.mrb[0].mxu0
        %v3601 = vadd.f32 %v2905, %v3600
        %v3602 = vpop.f32.mrb[0].mxu0
        %v3603 = vadd.f32 %v2909, %v3602
        %3604 = vmatprep.mubr.bf16.mxu0 %v2713
        %3605 = vmatmul.mubr.bf16.gmra.mrb[0].mxu0 %v2712
        %v3606 = vpop.f32.mrb[0].mxu0
        %v3607 = vadd.f32 %v2905, %v3606
        %v3608 = vpop.f32.mrb[0].mxu0
        %v3609 = vadd.f32 %v2909, %v3608
        %v3610 = vpop.f32.mrb[0].mxu0
        %v3611 = vadd.f32 %v2905, %v3610
        %v3612 = vpop.f32.mrb[0].mxu0
        %v3613 = vadd.f32 %v2909, %v3612
        %3614 = vmatprep.mubr.bf16.mxu0 %v2717
        %3615 = vmatmul.mubr.bf16.gmra.mrb[0].mxu0 %v2716
        %v3616 = vpop.f32.mrb[0].mxu0
        %v3617 = vadd.f32 %v2905, %v3616
        %v3618 = vpop.f32.mrb[0].mxu0
        %v3619 = vadd.f32 %v2909, %v3618
        %v3620 = vpop.f32.mrb[0].mxu0
        %v3621 = vadd.f32 %v2905, %v3620
        %v3622 = vpop.f32.mrb[0].mxu0
        %v3623 = vadd.f32 %v2909, %v3622
        %3624 = vmatprep.mubr.bf16.mxu0 %v2721
        %3625 = vmatmul.mubr.bf16.gmra.mrb[0].mxu0 %v2720
        %v3626 = vpop.f32.mrb[0].mxu0
        %v3627 = vadd.f32 %v2905, %v3626
        %v3628 = vpop.f32.mrb[0].mxu0
        %v3629 = vadd.f32 %v2909, %v3628
        %v3630 = vpop.f32.mrb[0].mxu0
        %v3631 = vadd.f32 %v2905, %v3630
        %v3632 = vpop.f32.mrb[0].mxu0
        %v3633 = vadd.f32 %v2909, %v3632
        %3634 = vmatprep.mubr.bf16.mxu0 %v2725
        %3635 = vmatmul.mubr.bf16.gmra.mrb[0].mxu0 %v2724
        %v3636 = vpop.f32.mrb[0].mxu0
        %v3637 = vadd.f32 %v2905, %v3636
        %v3638 = vpop.f32.mrb[0].mxu0
        %v3639 = vadd.f32 %v2909, %v3638
        %v3640 = vpop.f32.mrb[0].mxu0
        %v3641 = vadd.f32 %v2905, %v3640
        %v3642 = vpop.f32.mrb[0].mxu0
        %v3643 = vadd.f32 %v2909, %v3642
        %3644 = vmatprep.mubr.bf16.mxu0 %v2729
        %3645 = vmatmul.mubr.bf16.gmra.mrb[0].mxu0 %v2728
        %v3646 = vpop.f32.mrb[0].mxu0
        %v3647 = vadd.f32 %v2905, %v3646
        %v3648 = vpop.f32.mrb[0].mxu0
        %v3649 = vadd.f32 %v2909, %v3648
        %v3650 = vpop.f32.mrb[0].mxu0
        %v3651 = vadd.f32 %v2905, %v3650
        %v3652 = vpop.f32.mrb[0].mxu0
        %v3653 = vadd.f32 %v2909, %v3652
        %3654 = vmatprep.mubr.bf16.mxu0 %v2733
        %3655 = vmatmul.mubr.bf16.gmra.mrb[0].mxu0 %v2732
        %v3656 = vpop.f32.mrb[0].mxu0
        %v3657 = vadd.f32 %v2905, %v3656
        %v3658 = vpop.f32.mrb[0].mxu0
        %v3659 = vadd.f32 %v2909, %v3658
        %v3660 = vpop.f32.mrb[0].mxu0
        %v3661 = vadd.f32 %v2905, %v3660
        %v3662 = vpop.f32.mrb[0].mxu0
        %v3663 = vadd.f32 %v2909, %v3662
        %3664 = vmatprep.mubr.bf16.mxu0 %v2737
        %3665 = vmatmul.mubr.bf16.gmra.mrb[0].mxu0 %v2736
        %v3666 = vpop.f32.mrb[0].mxu0
        %v3667 = vadd.f32 %v2905, %v3666
        %v3668 = vpop.f32.mrb[0].mxu0
        %v3669 = vadd.f32 %v2909, %v3668
        %v3670 = vpop.f32.mrb[0].mxu0
        %v3671 = vadd.f32 %v2905, %v3670
        %v3672 = vpop.f32.mrb[0].mxu0
        %v3673 = vadd.f32 %v2909, %v3672
        %3674 = vmatprep.mubr.bf16.mxu0 %v2741
        %3675 = vmatmul.mubr.bf16.gmra.mrb[0].mxu0 %v2740
        %v3676 = vpop.f32.mrb[0].mxu0
        %v3677 = vadd.f32 %v2905, %v3676
        %v3678 = vpop.f32.mrb[0].mxu0
        %v3679 = vadd.f32 %v2909, %v3678
        %v3680 = vpop.f32.mrb[0].mxu0
        %v3681 = vadd.f32 %v2905, %v3680
        %v3682 = vpop.f32.mrb[0].mxu0
        %v3683 = vadd.f32 %v2909, %v3682
        %3684 = vmatprep.mubr.bf16.mxu0 %v2745
        %3685 = vmatmul.mubr.bf16.gmra.mrb[0].mxu0 %v2744
        %v3686 = vpop.f32.mrb[0].mxu0
        %v3687 = vadd.f32 %v2905, %v3686
        %v3688 = vpop.f32.mrb[0].mxu0
        %v3689 = vadd.f32 %v2909, %v3688
        %v3690 = vpop.f32.mrb[0].mxu0
        %v3691 = vadd.f32 %v2905, %v3690
        %v3692 = vpop.f32.mrb[0].mxu0
        %v3693 = vadd.f32 %v2909, %v3692
        %3694 = vmatprep.mubr.bf16.mxu0 %v2749
        %3695 = vmatmul.mubr.bf16.gmra.mrb[0].mxu0 %v2748
        %v3696 = vpop.f32.mrb[0].mxu0
        %v3697 = vadd.f32 %v2905, %v3696
        %v3698 = vpop.f32.mrb[0].mxu0
        %v3699 = vadd.f32 %v2909, %v3698
        %v3700 = vpop.f32.mrb[0].mxu0
        %v3701 = vadd.f32 %v2905, %v3700
        %v3702 = vpop.f32.mrb[0].mxu0
        %v3703 = vadd.f32 %v2909, %v3702
        %3704 = vmatprep.mubr.bf16.mxu0 %v2753
        %3705 = vmatmul.mubr.bf16.gmra.mrb[0].mxu0 %v2752
        %v3706 = vpop.f32.mrb[0].mxu0
        %v3707 = vadd.f32 %v2905, %v3706
        %v3708 = vpop.f32.mrb[0].mxu0
        %v3709 = vadd.f32 %v2909, %v3708
        %v3710 = vpop.f32.mrb[0].mxu0
        %v3711 = vadd.f32 %v2905, %v3710
        %v3712 = vpop.f32.mrb[0].mxu0
        %v3713 = vadd.f32 %v2909, %v3712
        %3714 = vmatprep.mubr.bf16.mxu0 %v2757
        %3715 = vmatmul.mubr.bf16.gmra.mrb[0].mxu0 %v2756
        %v3716 = vpop.f32.mrb[0].mxu0
        %v3717 = vadd.f32 %v2905, %v3716
        %v3718 = vpop.f32.mrb[0].mxu0
        %v3719 = vadd.f32 %v2909, %v3718
        %v3720 = vpop.f32.mrb[0].mxu0
        %v3721 = vadd.f32 %v2905, %v3720
        %v3722 = vpop.f32.mrb[0].mxu0
        %v3723 = vadd.f32 %v2909, %v3722
        %3724 = vmatprep.mubr.bf16.mxu0 %v2761
        %3725 = vmatmul.mubr.bf16.gmra.mrb[0].mxu0 %v2760
        %v3726 = vpop.f32.mrb[0].mxu0
        %v3727 = vadd.f32 %v2905, %v3726
        %v3728 = vpop.f32.mrb[0].mxu0
        %v3729 = vadd.f32 %v2909, %v3728
        %v3730 = vpop.f32.mrb[0].mxu0
        %v3731 = vadd.f32 %v2905, %v3730
        %v3732 = vpop.f32.mrb[0].mxu0
        %v3733 = vadd.f32 %v2909, %v3732
        %3734 = vmatprep.mubr.bf16.mxu0 %v2765
        %3735 = vmatmul.mubr.bf16.gmra.mrb[0].mxu0 %v2764
        %v3736 = vpop.f32.mrb[0].mxu0
        %v3737 = vadd.f32 %v2905, %v3736
        %v3738 = vpop.f32.mrb[0].mxu0
        %v3739 = vadd.f32 %v2909, %v3738
        %v3740 = vpop.f32.mrb[0].mxu0
        %v3741 = vadd.f32 %v2905, %v3740
        %v3742 = vpop.f32.mrb[0].mxu0
        %v3743 = vadd.f32 %v2909, %v3742
        %3744 = vmatprep.mubr.bf16.mxu0 %v2769
        %3745 = vmatmul.mubr.bf16.gmra.mrb[0].mxu0 %v2768
        %v3746 = vpop.f32.mrb[0].mxu0
        %v3747 = vadd.f32 %v2905, %v3746
        %v3748 = vpop.f32.mrb[0].mxu0
        %v3749 = vadd.f32 %v2909, %v3748
        %v3750 = vpop.f32.mrb[0].mxu0
        %v3751 = vadd.f32 %v2905, %v3750
        %v3752 = vpop.f32.mrb[0].mxu0
        %v3753 = vadd.f32 %v2909, %v3752
        %3754 = vdwg.mxu0
        %3755 = vmatprep.subr.bf16.mxu0 %v3371
        %3756 = vmatpush1.bf16.msra.mxu0 %v3370
        %3757 = vmatprep.subr.bf16.mxu0 %v3375
        %3758 = vmatpush1.bf16.msra.mxu0 %v3374
        %3759 = vmatprep.subr.bf16.mxu0 %v3379
        %3760 = vmatpush1.bf16.msra.mxu0 %v3378
        %3761 = vmatprep.subr.bf16.mxu0 %v3383
        %3762 = vmatpush1.bf16.msra.mxu0 %v3382
        %3763 = vmatprep.subr.bf16.mxu0 %v3387
        %3764 = vmatpush1.bf16.msra.mxu0 %v3386
        %3765 = vmatprep.subr.bf16.mxu0 %v3391
        %3766 = vmatpush1.bf16.msra.mxu0 %v3390
        %3767 = vmatprep.subr.bf16.mxu0 %v3395
        %3768 = vmatpush1.bf16.msra.mxu0 %v3394
        %3769 = vmatprep.subr.bf16.mxu0 %v3399
        %3770 = vmatpush1.bf16.msra.mxu0 %v3398
        %3771 = vmatprep.subr.bf16.mxu0 %v3403
        %3772 = vmatpush1.bf16.msra.mxu0 %v3402
        %3773 = vmatprep.subr.bf16.mxu0 %v3407
        %3774 = vmatpush1.bf16.msra.mxu0 %v3406
        %3775 = vmatprep.subr.bf16.mxu0 %v3411
        %3776 = vmatpush1.bf16.msra.mxu0 %v3410
        %3777 = vmatprep.subr.bf16.mxu0 %v3415
        %3778 = vmatpush1.bf16.msra.mxu0 %v3414
        %3779 = vmatprep.subr.bf16.mxu0 %v3419
        %3780 = vmatpush1.bf16.msra.mxu0 %v3418
        %3781 = vmatprep.subr.bf16.mxu0 %v3423
        %3782 = vmatpush1.bf16.msra.mxu0 %v3422
        %3783 = vmatprep.subr.bf16.mxu0 %v3427
        %3784 = vmatpush1.bf16.msra.mxu0 %v3426
        %3785 = vmatprep.subr.bf16.mxu0 %v3431
        %3786 = vmatpush1.bf16.msra.mxu0 %v3430
        %3787 = vmatprep.mubr.bf16.mxu0 %v2711
        %3788 = vmatmul.mubr.bf16.gmra.mrb[0].mxu0 %v2710
        %v3789 = vpop.f32.mrb[0].mxu0
        %v3790 = vadd.f32 %v3597, %v3789
        %v3791 = vpop.f32.mrb[0].mxu0
        %v3792 = vadd.f32 %v3599, %v3791
        %v3793 = vpop.f32.mrb[0].mxu0
        %v3794 = vadd.f32 %v3601, %v3793
        %v3795 = vpop.f32.mrb[0].mxu0
        %v3796 = vadd.f32 %v3603, %v3795
        %3797 = vmatprep.mubr.bf16.mxu0 %v2715
        %3798 = vmatmul.mubr.bf16.gmra.mrb[0].mxu0 %v2714
        %v3799 = vpop.f32.mrb[0].mxu0
        %v3800 = vadd.f32 %v3607, %v3799
        %v3801 = vpop.f32.mrb[0].mxu0
        %v3802 = vadd.f32 %v3609, %v3801
        %v3803 = vpop.f32.mrb[0].mxu0
        %v3804 = vadd.f32 %v3611, %v3803
        %v3805 = vpop.f32.mrb[0].mxu0
        %v3806 = vadd.f32 %v3613, %v3805
        %3807 = vmatprep.mubr.bf16.mxu0 %v2719
        %3808 = vmatmul.mubr.bf16.gmra.mrb[0].mxu0 %v2718
        %v3809 = vpop.f32.mrb[0].mxu0
        %v3810 = vadd.f32 %v3617, %v3809
        %v3811 = vpop.f32.mrb[0].mxu0
        %v3812 = vadd.f32 %v3619, %v3811
        %v3813 = vpop.f32.mrb[0].mxu0
        %v3814 = vadd.f32 %v3621, %v3813
        %v3815 = vpop.f32.mrb[0].mxu0
        %v3816 = vadd.f32 %v3623, %v3815
        %3817 = vmatprep.mubr.bf16.mxu0 %v2723
        %3818 = vmatmul.mubr.bf16.gmra.mrb[0].mxu0 %v2722
        %v3819 = vpop.f32.mrb[0].mxu0
        %v3820 = vadd.f32 %v3627, %v3819
        %v3821 = vpop.f32.mrb[0].mxu0
        %v3822 = vadd.f32 %v3629, %v3821
        %v3823 = vpop.f32.mrb[0].mxu0
        %v3824 = vadd.f32 %v3631, %v3823
        %v3825 = vpop.f32.mrb[0].mxu0
        %v3826 = vadd.f32 %v3633, %v3825
        %3827 = vmatprep.mubr.bf16.mxu0 %v2727
        %3828 = vmatmul.mubr.bf16.gmra.mrb[0].mxu0 %v2726
        %v3829 = vpop.f32.mrb[0].mxu0
        %v3830 = vadd.f32 %v3637, %v3829
        %v3831 = vpop.f32.mrb[0].mxu0
        %v3832 = vadd.f32 %v3639, %v3831
        %v3833 = vpop.f32.mrb[0].mxu0
        %v3834 = vadd.f32 %v3641, %v3833
        %v3835 = vpop.f32.mrb[0].mxu0
        %v3836 = vadd.f32 %v3643, %v3835
        %3837 = vmatprep.mubr.bf16.mxu0 %v2731
        %3838 = vmatmul.mubr.bf16.gmra.mrb[0].mxu0 %v2730
        %v3839 = vpop.f32.mrb[0].mxu0
        %v3840 = vadd.f32 %v3647, %v3839
        %v3841 = vpop.f32.mrb[0].mxu0
        %v3842 = vadd.f32 %v3649, %v3841
        %v3843 = vpop.f32.mrb[0].mxu0
        %v3844 = vadd.f32 %v3651, %v3843
        %v3845 = vpop.f32.mrb[0].mxu0
        %v3846 = vadd.f32 %v3653, %v3845
        %3847 = vmatprep.mubr.bf16.mxu0 %v2735
        %3848 = vmatmul.mubr.bf16.gmra.mrb[0].mxu0 %v2734
        %v3849 = vpop.f32.mrb[0].mxu0
        %v3850 = vadd.f32 %v3657, %v3849
        %v3851 = vpop.f32.mrb[0].mxu0
        %v3852 = vadd.f32 %v3659, %v3851
        %v3853 = vpop.f32.mrb[0].mxu0
        %v3854 = vadd.f32 %v3661, %v3853
        %v3855 = vpop.f32.mrb[0].mxu0
        %v3856 = vadd.f32 %v3663, %v3855
        %3857 = vmatprep.mubr.bf16.mxu0 %v2739
        %3858 = vmatmul.mubr.bf16.gmra.mrb[0].mxu0 %v2738
        %v3859 = vpop.f32.mrb[0].mxu0
        %v3860 = vadd.f32 %v3667, %v3859
        %v3861 = vpop.f32.mrb[0].mxu0
        %v3862 = vadd.f32 %v3669, %v3861
        %v3863 = vpop.f32.mrb[0].mxu0
        %v3864 = vadd.f32 %v3671, %v3863
        %v3865 = vpop.f32.mrb[0].mxu0
        %v3866 = vadd.f32 %v3673, %v3865
        %3867 = vmatprep.mubr.bf16.mxu0 %v2743
        %3868 = vmatmul.mubr.bf16.gmra.mrb[0].mxu0 %v2742
        %v3869 = vpop.f32.mrb[0].mxu0
        %v3870 = vadd.f32 %v3677, %v3869
        %v3871 = vpop.f32.mrb[0].mxu0
        %v3872 = vadd.f32 %v3679, %v3871
        %v3873 = vpop.f32.mrb[0].mxu0
        %v3874 = vadd.f32 %v3681, %v3873
        %v3875 = vpop.f32.mrb[0].mxu0
        %v3876 = vadd.f32 %v3683, %v3875
        %3877 = vmatprep.mubr.bf16.mxu0 %v2747
        %3878 = vmatmul.mubr.bf16.gmra.mrb[0].mxu0 %v2746
        %v3879 = vpop.f32.mrb[0].mxu0
        %v3880 = vadd.f32 %v3687, %v3879
        %v3881 = vpop.f32.mrb[0].mxu0
        %v3882 = vadd.f32 %v3689, %v3881
        %v3883 = vpop.f32.mrb[0].mxu0
        %v3884 = vadd.f32 %v3691, %v3883
        %v3885 = vpop.f32.mrb[0].mxu0
        %v3886 = vadd.f32 %v3693, %v3885
        %3887 = vmatprep.mubr.bf16.mxu0 %v2751
        %3888 = vmatmul.mubr.bf16.gmra.mrb[0].mxu0 %v2750
        %v3889 = vpop.f32.mrb[0].mxu0
        %v3890 = vadd.f32 %v3697, %v3889
        %v3891 = vpop.f32.mrb[0].mxu0
        %v3892 = vadd.f32 %v3699, %v3891
        %v3893 = vpop.f32.mrb[0].mxu0
        %v3894 = vadd.f32 %v3701, %v3893
        %v3895 = vpop.f32.mrb[0].mxu0
        %v3896 = vadd.f32 %v3703, %v3895
        %3897 = vmatprep.mubr.bf16.mxu0 %v2755
        %3898 = vmatmul.mubr.bf16.gmra.mrb[0].mxu0 %v2754
        %v3899 = vpop.f32.mrb[0].mxu0
        %v3900 = vadd.f32 %v3707, %v3899
        %v3901 = vpop.f32.mrb[0].mxu0
        %v3902 = vadd.f32 %v3709, %v3901
        %v3903 = vpop.f32.mrb[0].mxu0
        %v3904 = vadd.f32 %v3711, %v3903
        %v3905 = vpop.f32.mrb[0].mxu0
        %v3906 = vadd.f32 %v3713, %v3905
        %3907 = vmatprep.mubr.bf16.mxu0 %v2759
        %3908 = vmatmul.mubr.bf16.gmra.mrb[0].mxu0 %v2758
        %v3909 = vpop.f32.mrb[0].mxu0
        %v3910 = vadd.f32 %v3717, %v3909
        %v3911 = vpop.f32.mrb[0].mxu0
        %v3912 = vadd.f32 %v3719, %v3911
        %v3913 = vpop.f32.mrb[0].mxu0
        %v3914 = vadd.f32 %v3721, %v3913
        %v3915 = vpop.f32.mrb[0].mxu0
        %v3916 = vadd.f32 %v3723, %v3915
        %3917 = vmatprep.mubr.bf16.mxu0 %v2763
        %3918 = vmatmul.mubr.bf16.gmra.mrb[0].mxu0 %v2762
        %v3919 = vpop.f32.mrb[0].mxu0
        %v3920 = vadd.f32 %v3727, %v3919
        %v3921 = vpop.f32.mrb[0].mxu0
        %v3922 = vadd.f32 %v3729, %v3921
        %v3923 = vpop.f32.mrb[0].mxu0
        %v3924 = vadd.f32 %v3731, %v3923
        %v3925 = vpop.f32.mrb[0].mxu0
        %v3926 = vadd.f32 %v3733, %v3925
        %3927 = vmatprep.mubr.bf16.mxu0 %v2767
        %3928 = vmatmul.mubr.bf16.gmra.mrb[0].mxu0 %v2766
        %v3929 = vpop.f32.mrb[0].mxu0
        %v3930 = vadd.f32 %v3737, %v3929
        %v3931 = vpop.f32.mrb[0].mxu0
        %v3932 = vadd.f32 %v3739, %v3931
        %v3933 = vpop.f32.mrb[0].mxu0
        %v3934 = vadd.f32 %v3741, %v3933
        %v3935 = vpop.f32.mrb[0].mxu0
        %v3936 = vadd.f32 %v3743, %v3935
        %3937 = vmatprep.mubr.bf16.mxu0 %v2771
        %3938 = vmatmul.mubr.bf16.gmra.mrb[0].mxu0 %v2770
        %v3939 = vpop.f32.mrb[0].mxu0
        %v3940 = vadd.f32 %v3747, %v3939
        %v3941 = vpop.f32.mrb[0].mxu0
        %v3942 = vadd.f32 %v3749, %v3941
        %v3943 = vpop.f32.mrb[0].mxu0
        %v3944 = vadd.f32 %v3751, %v3943
        %v3945 = vpop.f32.mrb[0].mxu0
        %v3946 = vadd.f32 %v3753, %v3945
        %3947 = vdwg.mxu0
        %3948 = vmatprep.subr.bf16.mxu0 %v3309
        %3949 = vmatpush1.bf16.msra.mxu0 %v3308
        %3950 = vmatprep.subr.bf16.mxu0 %v3313
        %3951 = vmatpush1.bf16.msra.mxu0 %v3312
        %3952 = vmatprep.subr.bf16.mxu0 %v3317
        %3953 = vmatpush1.bf16.msra.mxu0 %v3316
        %3954 = vmatprep.subr.bf16.mxu0 %v3321
        %3955 = vmatpush1.bf16.msra.mxu0 %v3320
        %3956 = vmatprep.subr.bf16.mxu0 %v3325
        %3957 = vmatpush1.bf16.msra.mxu0 %v3324
        %3958 = vmatprep.subr.bf16.mxu0 %v3329
        %3959 = vmatpush1.bf16.msra.mxu0 %v3328
        %3960 = vmatprep.subr.bf16.mxu0 %v3333
        %3961 = vmatpush1.bf16.msra.mxu0 %v3332
        %3962 = vmatprep.subr.bf16.mxu0 %v3337
        %3963 = vmatpush1.bf16.msra.mxu0 %v3336
        %3964 = vmatprep.subr.bf16.mxu0 %v3341
        %3965 = vmatpush1.bf16.msra.mxu0 %v3340
        %3966 = vmatprep.subr.bf16.mxu0 %v3345
        %3967 = vmatpush1.bf16.msra.mxu0 %v3344
        %3968 = vmatprep.subr.bf16.mxu0 %v3349
        %3969 = vmatpush1.bf16.msra.mxu0 %v3348
        %3970 = vmatprep.subr.bf16.mxu0 %v3353
        %3971 = vmatpush1.bf16.msra.mxu0 %v3352
        %3972 = vmatprep.subr.bf16.mxu0 %v3357
        %3973 = vmatpush1.bf16.msra.mxu0 %v3356
        %3974 = vmatprep.subr.bf16.mxu0 %v3361
        %3975 = vmatpush1.bf16.msra.mxu0 %v3360
        %3976 = vmatprep.subr.bf16.mxu0 %v3365
        %3977 = vmatpush1.bf16.msra.mxu0 %v3364
        %3978 = vmatprep.subr.bf16.mxu0 %v3369
        %3979 = vmatpush1.bf16.msra.mxu0 %v3368
        %3980 = vmatprep.mubr.bf16.mxu0 %v2709
        %3981 = vmatmul.mubr.bf16.gmra.mrb[0].mxu0 %v2708
        %v3982 = vpop.f32.mrb[0].mxu0
        %v3983 = vadd.f32 %v2913, %v3982
        %v3984 = vpop.f32.mrb[0].mxu0
        %v3985 = vadd.f32 %v2917, %v3984
        %v3986 = vpop.f32.mrb[0].mxu0
        %v3987 = vadd.f32 %v2913, %v3986
        %v3988 = vpop.f32.mrb[0].mxu0
        %v3989 = vadd.f32 %v2917, %v3988
        %3990 = vmatprep.mubr.bf16.mxu0 %v2713
        %3991 = vmatmul.mubr.bf16.gmra.mrb[0].mxu0 %v2712
        %v3992 = vpop.f32.mrb[0].mxu0
        %v3993 = vadd.f32 %v2913, %v3992
        %v3994 = vpop.f32.mrb[0].mxu0
        %v3995 = vadd.f32 %v2917, %v3994
        %v3996 = vpop.f32.mrb[0].mxu0
        %v3997 = vadd.f32 %v2913, %v3996
        %v3998 = vpop.f32.mrb[0].mxu0
        %v3999 = vadd.f32 %v2917, %v3998
        %4000 = vmatprep.mubr.bf16.mxu0 %v2717
        %4001 = vmatmul.mubr.bf16.gmra.mrb[0].mxu0 %v2716
        %v4002 = vpop.f32.mrb[0].mxu0
        %v4003 = vadd.f32 %v2913, %v4002
        %v4004 = vpop.f32.mrb[0].mxu0
        %v4005 = vadd.f32 %v2917, %v4004
        %v4006 = vpop.f32.mrb[0].mxu0
        %v4007 = vadd.f32 %v2913, %v4006
        %v4008 = vpop.f32.mrb[0].mxu0
        %v4009 = vadd.f32 %v2917, %v4008
        %4010 = vmatprep.mubr.bf16.mxu0 %v2721
        %4011 = vmatmul.mubr.bf16.gmra.mrb[0].mxu0 %v2720
        %v4012 = vpop.f32.mrb[0].mxu0
        %v4013 = vadd.f32 %v2913, %v4012
        %v4014 = vpop.f32.mrb[0].mxu0
        %v4015 = vadd.f32 %v2917, %v4014
        %v4016 = vpop.f32.mrb[0].mxu0
        %v4017 = vadd.f32 %v2913, %v4016
        %v4018 = vpop.f32.mrb[0].mxu0
        %v4019 = vadd.f32 %v2917, %v4018
        %4020 = vmatprep.mubr.bf16.mxu0 %v2725
        %4021 = vmatmul.mubr.bf16.gmra.mrb[0].mxu0 %v2724
        %v4022 = vpop.f32.mrb[0].mxu0
        %v4023 = vadd.f32 %v2913, %v4022
        %v4024 = vpop.f32.mrb[0].mxu0
        %v4025 = vadd.f32 %v2917, %v4024
        %v4026 = vpop.f32.mrb[0].mxu0
        %v4027 = vadd.f32 %v2913, %v4026
        %v4028 = vpop.f32.mrb[0].mxu0
        %v4029 = vadd.f32 %v2917, %v4028
        %4030 = vmatprep.mubr.bf16.mxu0 %v2729
        %4031 = vmatmul.mubr.bf16.gmra.mrb[0].mxu0 %v2728
        %v4032 = vpop.f32.mrb[0].mxu0
        %v4033 = vadd.f32 %v2913, %v4032
        %v4034 = vpop.f32.mrb[0].mxu0
        %v4035 = vadd.f32 %v2917, %v4034
        %v4036 = vpop.f32.mrb[0].mxu0
        %v4037 = vadd.f32 %v2913, %v4036
        %v4038 = vpop.f32.mrb[0].mxu0
        %v4039 = vadd.f32 %v2917, %v4038
        %4040 = vmatprep.mubr.bf16.mxu0 %v2733
        %4041 = vmatmul.mubr.bf16.gmra.mrb[0].mxu0 %v2732
        %v4042 = vpop.f32.mrb[0].mxu0
        %v4043 = vadd.f32 %v2913, %v4042
        %v4044 = vpop.f32.mrb[0].mxu0
        %v4045 = vadd.f32 %v2917, %v4044
        %v4046 = vpop.f32.mrb[0].mxu0
        %v4047 = vadd.f32 %v2913, %v4046
        %v4048 = vpop.f32.mrb[0].mxu0
        %v4049 = vadd.f32 %v2917, %v4048
        %4050 = vmatprep.mubr.bf16.mxu0 %v2737
        %4051 = vmatmul.mubr.bf16.gmra.mrb[0].mxu0 %v2736
        %v4052 = vpop.f32.mrb[0].mxu0
        %v4053 = vadd.f32 %v2913, %v4052
        %v4054 = vpop.f32.mrb[0].mxu0
        %v4055 = vadd.f32 %v2917, %v4054
        %v4056 = vpop.f32.mrb[0].mxu0
        %v4057 = vadd.f32 %v2913, %v4056
        %v4058 = vpop.f32.mrb[0].mxu0
        %v4059 = vadd.f32 %v2917, %v4058
        %4060 = vmatprep.mubr.bf16.mxu0 %v2741
        %4061 = vmatmul.mubr.bf16.gmra.mrb[0].mxu0 %v2740
        %v4062 = vpop.f32.mrb[0].mxu0
        %v4063 = vadd.f32 %v2913, %v4062
        %v4064 = vpop.f32.mrb[0].mxu0
        %v4065 = vadd.f32 %v2917, %v4064
        %v4066 = vpop.f32.mrb[0].mxu0
        %v4067 = vadd.f32 %v2913, %v4066
        %v4068 = vpop.f32.mrb[0].mxu0
        %v4069 = vadd.f32 %v2917, %v4068
        %4070 = vmatprep.mubr.bf16.mxu0 %v2745
        %4071 = vmatmul.mubr.bf16.gmra.mrb[0].mxu0 %v2744
        %v4072 = vpop.f32.mrb[0].mxu0
        %v4073 = vadd.f32 %v2913, %v4072
        %v4074 = vpop.f32.mrb[0].mxu0
        %v4075 = vadd.f32 %v2917, %v4074
        %v4076 = vpop.f32.mrb[0].mxu0
        %v4077 = vadd.f32 %v2913, %v4076
        %v4078 = vpop.f32.mrb[0].mxu0
        %v4079 = vadd.f32 %v2917, %v4078
        %4080 = vmatprep.mubr.bf16.mxu0 %v2749
        %4081 = vmatmul.mubr.bf16.gmra.mrb[0].mxu0 %v2748
        %v4082 = vpop.f32.mrb[0].mxu0
        %v4083 = vadd.f32 %v2913, %v4082
        %v4084 = vpop.f32.mrb[0].mxu0
        %v4085 = vadd.f32 %v2917, %v4084
        %v4086 = vpop.f32.mrb[0].mxu0
        %v4087 = vadd.f32 %v2913, %v4086
        %v4088 = vpop.f32.mrb[0].mxu0
        %v4089 = vadd.f32 %v2917, %v4088
        %4090 = vmatprep.mubr.bf16.mxu0 %v2753
        %4091 = vmatmul.mubr.bf16.gmra.mrb[0].mxu0 %v2752
        %v4092 = vpop.f32.mrb[0].mxu0
        %v4093 = vadd.f32 %v2913, %v4092
        %v4094 = vpop.f32.mrb[0].mxu0
        %v4095 = vadd.f32 %v2917, %v4094
        %v4096 = vpop.f32.mrb[0].mxu0
        %v4097 = vadd.f32 %v2913, %v4096
        %v4098 = vpop.f32.mrb[0].mxu0
        %v4099 = vadd.f32 %v2917, %v4098
        %4100 = vmatprep.mubr.bf16.mxu0 %v2757
        %4101 = vmatmul.mubr.bf16.gmra.mrb[0].mxu0 %v2756
        %v4102 = vpop.f32.mrb[0].mxu0
        %v4103 = vadd.f32 %v2913, %v4102
        %v4104 = vpop.f32.mrb[0].mxu0
        %v4105 = vadd.f32 %v2917, %v4104
        %v4106 = vpop.f32.mrb[0].mxu0
        %v4107 = vadd.f32 %v2913, %v4106
        %v4108 = vpop.f32.mrb[0].mxu0
        %v4109 = vadd.f32 %v2917, %v4108
        %4110 = vmatprep.mubr.bf16.mxu0 %v2761
        %4111 = vmatmul.mubr.bf16.gmra.mrb[0].mxu0 %v2760
        %v4112 = vpop.f32.mrb[0].mxu0
        %v4113 = vadd.f32 %v2913, %v4112
        %v4114 = vpop.f32.mrb[0].mxu0
        %v4115 = vadd.f32 %v2917, %v4114
        %v4116 = vpop.f32.mrb[0].mxu0
        %v4117 = vadd.f32 %v2913, %v4116
        %v4118 = vpop.f32.mrb[0].mxu0
        %v4119 = vadd.f32 %v2917, %v4118
        %4120 = vmatprep.mubr.bf16.mxu0 %v2765
        %4121 = vmatmul.mubr.bf16.gmra.mrb[0].mxu0 %v2764
        %v4122 = vpop.f32.mrb[0].mxu0
        %v4123 = vadd.f32 %v2913, %v4122
        %v4124 = vpop.f32.mrb[0].mxu0
        %v4125 = vadd.f32 %v2917, %v4124
        %v4126 = vpop.f32.mrb[0].mxu0
        %v4127 = vadd.f32 %v2913, %v4126
        %v4128 = vpop.f32.mrb[0].mxu0
        %v4129 = vadd.f32 %v2917, %v4128
        %4130 = vmatprep.mubr.bf16.mxu0 %v2769
        %4131 = vmatmul.mubr.bf16.gmra.mrb[0].mxu0 %v2768
        %v4132 = vpop.f32.mrb[0].mxu0
        %v4133 = vadd.f32 %v2913, %v4132
        %v4134 = vpop.f32.mrb[0].mxu0
        %v4135 = vadd.f32 %v2917, %v4134
        %v4136 = vpop.f32.mrb[0].mxu0
        %v4137 = vadd.f32 %v2913, %v4136
        %v4138 = vpop.f32.mrb[0].mxu0
        %v4139 = vadd.f32 %v2917, %v4138
        %4140 = vdwg.mxu0
        %4141 = vmatprep.subr.bf16.mxu0 %v3373
        %4142 = vmatpush1.bf16.msra.mxu0 %v3372
        %4143 = vmatprep.subr.bf16.mxu0 %v3377
        %4144 = vmatpush1.bf16.msra.mxu0 %v3376
        %4145 = vmatprep.subr.bf16.mxu0 %v3381
        %4146 = vmatpush1.bf16.msra.mxu0 %v3380
        %4147 = vmatprep.subr.bf16.mxu0 %v3385
        %4148 = vmatpush1.bf16.msra.mxu0 %v3384
        %4149 = vmatprep.subr.bf16.mxu0 %v3389
        %4150 = vmatpush1.bf16.msra.mxu0 %v3388
        %4151 = vmatprep.subr.bf16.mxu0 %v3393
        %4152 = vmatpush1.bf16.msra.mxu0 %v3392
        %4153 = vmatprep.subr.bf16.mxu0 %v3397
        %4154 = vmatpush1.bf16.msra.mxu0 %v3396
        %4155 = vmatprep.subr.bf16.mxu0 %v3401
        %4156 = vmatpush1.bf16.msra.mxu0 %v3400
        %4157 = vmatprep.subr.bf16.mxu0 %v3405
        %4158 = vmatpush1.bf16.msra.mxu0 %v3404
        %4159 = vmatprep.subr.bf16.mxu0 %v3409
        %4160 = vmatpush1.bf16.msra.mxu0 %v3408
        %4161 = vmatprep.subr.bf16.mxu0 %v3413
        %4162 = vmatpush1.bf16.msra.mxu0 %v3412
        %4163 = vmatprep.subr.bf16.mxu0 %v3417
        %4164 = vmatpush1.bf16.msra.mxu0 %v3416
        %4165 = vmatprep.subr.bf16.mxu0 %v3421
        %4166 = vmatpush1.bf16.msra.mxu0 %v3420
        %4167 = vmatprep.subr.bf16.mxu0 %v3425
        %4168 = vmatpush1.bf16.msra.mxu0 %v3424
        %4169 = vmatprep.subr.bf16.mxu0 %v3429
        %4170 = vmatpush1.bf16.msra.mxu0 %v3428
        %4171 = vmatprep.subr.bf16.mxu0 %v3433
        %4172 = vmatpush1.bf16.msra.mxu0 %v3432
        %4173 = vmatprep.mubr.bf16.mxu0 %v2711
        %4174 = vmatmul.mubr.bf16.gmra.mrb[0].mxu0 %v2710
        %v4175 = vpop.f32.mrb[0].mxu0
        %v4176 = vadd.f32 %v3983, %v4175
        %v4177 = vpop.f32.mrb[0].mxu0
        %v4178 = vadd.f32 %v3985, %v4177
        %v4179 = vpop.f32.mrb[0].mxu0
        %v4180 = vadd.f32 %v3987, %v4179
        %v4181 = vpop.f32.mrb[0].mxu0
        %v4182 = vadd.f32 %v3989, %v4181
        %4183 = vmatprep.mubr.bf16.mxu0 %v2715
        %4184 = vmatmul.mubr.bf16.gmra.mrb[0].mxu0 %v2714
        %v4185 = vpop.f32.mrb[0].mxu0
        %v4186 = vadd.f32 %v3993, %v4185
        %v4187 = vpop.f32.mrb[0].mxu0
        %v4188 = vadd.f32 %v3995, %v4187
        %v4189 = vpop.f32.mrb[0].mxu0
        %v4190 = vadd.f32 %v3997, %v4189
        %v4191 = vpop.f32.mrb[0].mxu0
        %v4192 = vadd.f32 %v3999, %v4191
        %4193 = vmatprep.mubr.bf16.mxu0 %v2719
        %4194 = vmatmul.mubr.bf16.gmra.mrb[0].mxu0 %v2718
        %v4195 = vpop.f32.mrb[0].mxu0
        %v4196 = vadd.f32 %v4003, %v4195
        %v4197 = vpop.f32.mrb[0].mxu0
        %v4198 = vadd.f32 %v4005, %v4197
        %v4199 = vpop.f32.mrb[0].mxu0
        %v4200 = vadd.f32 %v4007, %v4199
        %v4201 = vpop.f32.mrb[0].mxu0
        %v4202 = vadd.f32 %v4009, %v4201
        %4203 = vmatprep.mubr.bf16.mxu0 %v2723
        %4204 = vmatmul.mubr.bf16.gmra.mrb[0].mxu0 %v2722
        %v4205 = vpop.f32.mrb[0].mxu0
        %v4206 = vadd.f32 %v4013, %v4205
        %v4207 = vpop.f32.mrb[0].mxu0
        %v4208 = vadd.f32 %v4015, %v4207
        %v4209 = vpop.f32.mrb[0].mxu0
        %v4210 = vadd.f32 %v4017, %v4209
        %v4211 = vpop.f32.mrb[0].mxu0
        %v4212 = vadd.f32 %v4019, %v4211
        %4213 = vmatprep.mubr.bf16.mxu0 %v2727
        %4214 = vmatmul.mubr.bf16.gmra.mrb[0].mxu0 %v2726
        %v4215 = vpop.f32.mrb[0].mxu0
        %v4216 = vadd.f32 %v4023, %v4215
        %v4217 = vpop.f32.mrb[0].mxu0
        %v4218 = vadd.f32 %v4025, %v4217
        %v4219 = vpop.f32.mrb[0].mxu0
        %v4220 = vadd.f32 %v4027, %v4219
        %v4221 = vpop.f32.mrb[0].mxu0
        %v4222 = vadd.f32 %v4029, %v4221
        %4223 = vmatprep.mubr.bf16.mxu0 %v2731
        %4224 = vmatmul.mubr.bf16.gmra.mrb[0].mxu0 %v2730
        %v4225 = vpop.f32.mrb[0].mxu0
        %v4226 = vadd.f32 %v4033, %v4225
        %v4227 = vpop.f32.mrb[0].mxu0
        %v4228 = vadd.f32 %v4035, %v4227
        %v4229 = vpop.f32.mrb[0].mxu0
        %v4230 = vadd.f32 %v4037, %v4229
        %v4231 = vpop.f32.mrb[0].mxu0
        %v4232 = vadd.f32 %v4039, %v4231
        %4233 = vmatprep.mubr.bf16.mxu0 %v2735
        %4234 = vmatmul.mubr.bf16.gmra.mrb[0].mxu0 %v2734
        %v4235 = vpop.f32.mrb[0].mxu0
        %v4236 = vadd.f32 %v4043, %v4235
        %v4237 = vpop.f32.mrb[0].mxu0
        %v4238 = vadd.f32 %v4045, %v4237
        %v4239 = vpop.f32.mrb[0].mxu0
        %v4240 = vadd.f32 %v4047, %v4239
        %v4241 = vpop.f32.mrb[0].mxu0
        %v4242 = vadd.f32 %v4049, %v4241
        %4243 = vmatprep.mubr.bf16.mxu0 %v2739
        %4244 = vmatmul.mubr.bf16.gmra.mrb[0].mxu0 %v2738
        %v4245 = vpop.f32.mrb[0].mxu0
        %v4246 = vadd.f32 %v4053, %v4245
        %v4247 = vpop.f32.mrb[0].mxu0
        %v4248 = vadd.f32 %v4055, %v4247
        %v4249 = vpop.f32.mrb[0].mxu0
        %v4250 = vadd.f32 %v4057, %v4249
        %v4251 = vpop.f32.mrb[0].mxu0
        %v4252 = vadd.f32 %v4059, %v4251
        %4253 = vmatprep.mubr.bf16.mxu0 %v2743
        %4254 = vmatmul.mubr.bf16.gmra.mrb[0].mxu0 %v2742
        %v4255 = vpop.f32.mrb[0].mxu0
        %v4256 = vadd.f32 %v4063, %v4255
        %v4257 = vpop.f32.mrb[0].mxu0
        %v4258 = vadd.f32 %v4065, %v4257
        %v4259 = vpop.f32.mrb[0].mxu0
        %v4260 = vadd.f32 %v4067, %v4259
        %v4261 = vpop.f32.mrb[0].mxu0
        %v4262 = vadd.f32 %v4069, %v4261
        %4263 = vmatprep.mubr.bf16.mxu0 %v2747
        %4264 = vmatmul.mubr.bf16.gmra.mrb[0].mxu0 %v2746
        %v4265 = vpop.f32.mrb[0].mxu0
        %v4266 = vadd.f32 %v4073, %v4265
        %v4267 = vpop.f32.mrb[0].mxu0
        %v4268 = vadd.f32 %v4075, %v4267
        %v4269 = vpop.f32.mrb[0].mxu0
        %v4270 = vadd.f32 %v4077, %v4269
        %v4271 = vpop.f32.mrb[0].mxu0
        %v4272 = vadd.f32 %v4079, %v4271
        %4273 = vmatprep.mubr.bf16.mxu0 %v2751
        %4274 = vmatmul.mubr.bf16.gmra.mrb[0].mxu0 %v2750
        %v4275 = vpop.f32.mrb[0].mxu0
        %v4276 = vadd.f32 %v4083, %v4275
        %v4277 = vpop.f32.mrb[0].mxu0
        %v4278 = vadd.f32 %v4085, %v4277
        %v4279 = vpop.f32.mrb[0].mxu0
        %v4280 = vadd.f32 %v4087, %v4279
        %v4281 = vpop.f32.mrb[0].mxu0
        %v4282 = vadd.f32 %v4089, %v4281
        %4283 = vmatprep.mubr.bf16.mxu0 %v2755
        %4284 = vmatmul.mubr.bf16.gmra.mrb[0].mxu0 %v2754
        %v4285 = vpop.f32.mrb[0].mxu0
        %v4286 = vadd.f32 %v4093, %v4285
        %v4287 = vpop.f32.mrb[0].mxu0
        %v4288 = vadd.f32 %v4095, %v4287
        %v4289 = vpop.f32.mrb[0].mxu0
        %v4290 = vadd.f32 %v4097, %v4289
        %v4291 = vpop.f32.mrb[0].mxu0
        %v4292 = vadd.f32 %v4099, %v4291
        %4293 = vmatprep.mubr.bf16.mxu0 %v2759
        %4294 = vmatmul.mubr.bf16.gmra.mrb[0].mxu0 %v2758
        %v4295 = vpop.f32.mrb[0].mxu0
        %v4296 = vadd.f32 %v4103, %v4295
        %v4297 = vpop.f32.mrb[0].mxu0
        %v4298 = vadd.f32 %v4105, %v4297
        %v4299 = vpop.f32.mrb[0].mxu0
        %v4300 = vadd.f32 %v4107, %v4299
        %v4301 = vpop.f32.mrb[0].mxu0
        %v4302 = vadd.f32 %v4109, %v4301
        %4303 = vmatprep.mubr.bf16.mxu0 %v2763
        %4304 = vmatmul.mubr.bf16.gmra.mrb[0].mxu0 %v2762
        %v4305 = vpop.f32.mrb[0].mxu0
        %v4306 = vadd.f32 %v4113, %v4305
        %v4307 = vpop.f32.mrb[0].mxu0
        %v4308 = vadd.f32 %v4115, %v4307
        %v4309 = vpop.f32.mrb[0].mxu0
        %v4310 = vadd.f32 %v4117, %v4309
        %v4311 = vpop.f32.mrb[0].mxu0
        %v4312 = vadd.f32 %v4119, %v4311
        %4313 = vmatprep.mubr.bf16.mxu0 %v2767
        %4314 = vmatmul.mubr.bf16.gmra.mrb[0].mxu0 %v2766
        %v4315 = vpop.f32.mrb[0].mxu0
        %v4316 = vadd.f32 %v4123, %v4315
        %v4317 = vpop.f32.mrb[0].mxu0
        %v4318 = vadd.f32 %v4125, %v4317
        %v4319 = vpop.f32.mrb[0].mxu0
        %v4320 = vadd.f32 %v4127, %v4319
        %v4321 = vpop.f32.mrb[0].mxu0
        %v4322 = vadd.f32 %v4129, %v4321
        %4323 = vmatprep.mubr.bf16.mxu0 %v2771
        %4324 = vmatmul.mubr.bf16.gmra.mrb[0].mxu0 %v2770
        %v4325 = vpop.f32.mrb[0].mxu0
        %v4326 = vadd.f32 %v4133, %v4325
        %v4327 = vpop.f32.mrb[0].mxu0
        %v4328 = vadd.f32 %v4135, %v4327
        %v4329 = vpop.f32.mrb[0].mxu0
        %v4330 = vadd.f32 %v4137, %v4329
        %v4331 = vpop.f32.mrb[0].mxu0
        %v4332 = vadd.f32 %v4139, %v4331
        %4333 = vdwg.mxu0
        %v4334 = vmax.f32 %v3790, 0.0
        %v4335 = vmax.f32 %v3792, 0.0
        %v4336 = vmax.f32 %v4176, 0.0
        %v4337 = vmax.f32 %v4178, 0.0
        %v4338 = vmax.f32 %v3794, 0.0
        %v4339 = vmax.f32 %v3796, 0.0
        %v4340 = vmax.f32 %v4180, 0.0
        %v4341 = vmax.f32 %v4182, 0.0
        %v4342 = vmax.f32 %v3800, 0.0
        %v4343 = vmax.f32 %v3802, 0.0
        %v4344 = vmax.f32 %v4186, 0.0
        %v4345 = vmax.f32 %v4188, 0.0
        %v4346 = vmax.f32 %v3804, 0.0
        %v4347 = vmax.f32 %v3806, 0.0
        %v4348 = vmax.f32 %v4190, 0.0
        %v4349 = vmax.f32 %v4192, 0.0
        %v4350 = vmax.f32 %v3810, 0.0
        %v4351 = vmax.f32 %v3812, 0.0
        %v4352 = vmax.f32 %v4196, 0.0
        %v4353 = vmax.f32 %v4198, 0.0
        %v4354 = vmax.f32 %v3814, 0.0
        %v4355 = vmax.f32 %v3816, 0.0
        %v4356 = vmax.f32 %v4200, 0.0
        %v4357 = vmax.f32 %v4202, 0.0
        %v4358 = vmax.f32 %v3820, 0.0
        %v4359 = vmax.f32 %v3822, 0.0
        %v4360 = vmax.f32 %v4206, 0.0
        %v4361 = vmax.f32 %v4208, 0.0
        %v4362 = vmax.f32 %v3824, 0.0
        %v4363 = vmax.f32 %v3826, 0.0
        %v4364 = vmax.f32 %v4210, 0.0
        %v4365 = vmax.f32 %v4212, 0.0
        %v4366 = vmax.f32 %v3830, 0.0
        %v4367 = vmax.f32 %v3832, 0.0
        %v4368 = vmax.f32 %v4216, 0.0
        %v4369 = vmax.f32 %v4218, 0.0
        %v4370 = vmax.f32 %v3834, 0.0
        %v4371 = vmax.f32 %v3836, 0.0
        %v4372 = vmax.f32 %v4220, 0.0
        %v4373 = vmax.f32 %v4222, 0.0
        %v4374 = vmax.f32 %v3840, 0.0
        %v4375 = vmax.f32 %v3842, 0.0
        %v4376 = vmax.f32 %v4226, 0.0
        %v4377 = vmax.f32 %v4228, 0.0
        %v4378 = vmax.f32 %v3844, 0.0
        %v4379 = vmax.f32 %v3846, 0.0
        %v4380 = vmax.f32 %v4230, 0.0
        %v4381 = vmax.f32 %v4232, 0.0
        %v4382 = vmax.f32 %v3850, 0.0
        %v4383 = vmax.f32 %v3852, 0.0
        %v4384 = vmax.f32 %v4236, 0.0
        %v4385 = vmax.f32 %v4238, 0.0
        %v4386 = vmax.f32 %v3854, 0.0
        %v4387 = vmax.f32 %v3856, 0.0
        %v4388 = vmax.f32 %v4240, 0.0
        %v4389 = vmax.f32 %v4242, 0.0
        %v4390 = vmax.f32 %v3860, 0.0
        %v4391 = vmax.f32 %v3862, 0.0
        %v4392 = vmax.f32 %v4246, 0.0
        %v4393 = vmax.f32 %v4248, 0.0
        %v4394 = vmax.f32 %v3864, 0.0
        %v4395 = vmax.f32 %v3866, 0.0
        %v4396 = vmax.f32 %v4250, 0.0
        %v4397 = vmax.f32 %v4252, 0.0
        %v4398 = vmax.f32 %v3870, 0.0
        %v4399 = vmax.f32 %v3872, 0.0
        %v4400 = vmax.f32 %v4256, 0.0
        %v4401 = vmax.f32 %v4258, 0.0
        %v4402 = vmax.f32 %v3874, 0.0
        %v4403 = vmax.f32 %v3876, 0.0
        %v4404 = vmax.f32 %v4260, 0.0
        %v4405 = vmax.f32 %v4262, 0.0
        %v4406 = vmax.f32 %v3880, 0.0
        %v4407 = vmax.f32 %v3882, 0.0
        %v4408 = vmax.f32 %v4266, 0.0
        %v4409 = vmax.f32 %v4268, 0.0
        %v4410 = vmax.f32 %v3884, 0.0
        %v4411 = vmax.f32 %v3886, 0.0
        %v4412 = vmax.f32 %v4270, 0.0
        %v4413 = vmax.f32 %v4272, 0.0
        %v4414 = vmax.f32 %v3890, 0.0
        %v4415 = vmax.f32 %v3892, 0.0
        %v4416 = vmax.f32 %v4276, 0.0
        %v4417 = vmax.f32 %v4278, 0.0
        %v4418 = vmax.f32 %v3894, 0.0
        %v4419 = vmax.f32 %v3896, 0.0
        %v4420 = vmax.f32 %v4280, 0.0
        %v4421 = vmax.f32 %v4282, 0.0
        %v4422 = vmax.f32 %v3900, 0.0
        %v4423 = vmax.f32 %v3902, 0.0
        %v4424 = vmax.f32 %v4286, 0.0
        %v4425 = vmax.f32 %v4288, 0.0
        %v4426 = vmax.f32 %v3904, 0.0
        %v4427 = vmax.f32 %v3906, 0.0
        %v4428 = vmax.f32 %v4290, 0.0
        %v4429 = vmax.f32 %v4292, 0.0
        %v4430 = vmax.f32 %v3910, 0.0
        %v4431 = vmax.f32 %v3912, 0.0
        %v4432 = vmax.f32 %v4296, 0.0
        %v4433 = vmax.f32 %v4298, 0.0
        %v4434 = vmax.f32 %v3914, 0.0
        %v4435 = vmax.f32 %v3916, 0.0
        %v4436 = vmax.f32 %v4300, 0.0
        %v4437 = vmax.f32 %v4302, 0.0
        %v4438 = vmax.f32 %v3920, 0.0
        %v4439 = vmax.f32 %v3922, 0.0
        %v4440 = vmax.f32 %v4306, 0.0
        %v4441 = vmax.f32 %v4308, 0.0
        %v4442 = vmax.f32 %v3924, 0.0
        %v4443 = vmax.f32 %v3926, 0.0
        %v4444 = vmax.f32 %v4310, 0.0
        %v4445 = vmax.f32 %v4312, 0.0
        %v4446 = vmax.f32 %v3930, 0.0
        %v4447 = vmax.f32 %v3932, 0.0
        %v4448 = vmax.f32 %v4316, 0.0
        %v4449 = vmax.f32 %v4318, 0.0
        %v4450 = vmax.f32 %v3934, 0.0
        %v4451 = vmax.f32 %v3936, 0.0
        %v4452 = vmax.f32 %v4320, 0.0
        %v4453 = vmax.f32 %v4322, 0.0
        %v4454 = vmax.f32 %v3940, 0.0
        %v4455 = vmax.f32 %v3942, 0.0
        %v4456 = vmax.f32 %v4326, 0.0
        %v4457 = vmax.f32 %v4328, 0.0
        %v4458 = vmax.f32 %v3944, 0.0
        %v4459 = vmax.f32 %v3946, 0.0
        %v4460 = vmax.f32 %v4330, 0.0
        %v4461 = vmax.f32 %v4332, 0.0
        %v4462 = vsub.f32 %v378, %v4334
        %v4463 = vsub.f32 %v379, %v4335
        %v4464 = vsub.f32 %v380, %v4336
        %v4465 = vsub.f32 %v381, %v4337
        %v4466 = vsub.f32 %v382, %v4338
        %v4467 = vsub.f32 %v383, %v4339
        %v4468 = vsub.f32 %v384, %v4340
        %v4469 = vsub.f32 %v385, %v4341
        %v4470 = vsub.f32 %v386, %v4342
        %v4471 = vsub.f32 %v387, %v4343
        %v4472 = vsub.f32 %v388, %v4344
        %v4473 = vsub.f32 %v389, %v4345
        %v4474 = vsub.f32 %v390, %v4346
        %v4475 = vsub.f32 %v391, %v4347
        %v4476 = vsub.f32 %v392, %v4348
        %v4477 = vsub.f32 %v393, %v4349
        %v4478 = vsub.f32 %v394, %v4350
        %v4479 = vsub.f32 %v395, %v4351
        %v4480 = vsub.f32 %v396, %v4352
        %v4481 = vsub.f32 %v397, %v4353
        %v4482 = vsub.f32 %v398, %v4354
        %v4483 = vsub.f32 %v399, %v4355
        %v4484 = vsub.f32 %v400, %v4356
        %v4485 = vsub.f32 %v401, %v4357
        %v4486 = vsub.f32 %v402, %v4358
        %v4487 = vsub.f32 %v403, %v4359
        %v4488 = vsub.f32 %v404, %v4360
        %v4489 = vsub.f32 %v405, %v4361
        %v4490 = vsub.f32 %v406, %v4362
        %v4491 = vsub.f32 %v407, %v4363
        %v4492 = vsub.f32 %v408, %v4364
        %v4493 = vsub.f32 %v409, %v4365
        %v4494 = vsub.f32 %v410, %v4366
        %v4495 = vsub.f32 %v411, %v4367
        %v4496 = vsub.f32 %v412, %v4368
        %v4497 = vsub.f32 %v413, %v4369
        %v4498 = vsub.f32 %v414, %v4370
        %v4499 = vsub.f32 %v415, %v4371
        %v4500 = vsub.f32 %v416, %v4372
        %v4501 = vsub.f32 %v417, %v4373
        %v4502 = vsub.f32 %v418, %v4374
        %v4503 = vsub.f32 %v419, %v4375
        %v4504 = vsub.f32 %v420, %v4376
        %v4505 = vsub.f32 %v421, %v4377
        %v4506 = vsub.f32 %v422, %v4378
        %v4507 = vsub.f32 %v423, %v4379
        %v4508 = vsub.f32 %v424, %v4380
        %v4509 = vsub.f32 %v425, %v4381
        %v4510 = vsub.f32 %v426, %v4382
        %v4511 = vsub.f32 %v427, %v4383
        %v4512 = vsub.f32 %v428, %v4384
        %v4513 = vsub.f32 %v429, %v4385
        %v4514 = vsub.f32 %v430, %v4386
        %v4515 = vsub.f32 %v431, %v4387
        %v4516 = vsub.f32 %v432, %v4388
        %v4517 = vsub.f32 %v433, %v4389
        %v4518 = vsub.f32 %v434, %v4390
        %v4519 = vsub.f32 %v435, %v4391
        %v4520 = vsub.f32 %v436, %v4392
        %v4521 = vsub.f32 %v437, %v4393
        %v4522 = vsub.f32 %v438, %v4394
        %v4523 = vsub.f32 %v439, %v4395
        %v4524 = vsub.f32 %v440, %v4396
        %v4525 = vsub.f32 %v441, %v4397
        %v4526 = vsub.f32 %v442, %v4398
        %v4527 = vsub.f32 %v443, %v4399
        %v4528 = vsub.f32 %v444, %v4400
        %v4529 = vsub.f32 %v445, %v4401
        %v4530 = vsub.f32 %v446, %v4402
        %v4531 = vsub.f32 %v447, %v4403
        %v4532 = vsub.f32 %v448, %v4404
        %v4533 = vsub.f32 %v449, %v4405
        %v4534 = vsub.f32 %v450, %v4406
        %v4535 = vsub.f32 %v451, %v4407
        %v4536 = vsub.f32 %v452, %v4408
        %v4537 = vsub.f32 %v453, %v4409
        %v4538 = vsub.f32 %v454, %v4410
        %v4539 = vsub.f32 %v455, %v4411
        %v4540 = vsub.f32 %v456, %v4412
        %v4541 = vsub.f32 %v457, %v4413
        %v4542 = vsub.f32 %v458, %v4414
        %v4543 = vsub.f32 %v459, %v4415
        %v4544 = vsub.f32 %v460, %v4416
        %v4545 = vsub.f32 %v461, %v4417
        %v4546 = vsub.f32 %v462, %v4418
        %v4547 = vsub.f32 %v463, %v4419
        %v4548 = vsub.f32 %v464, %v4420
        %v4549 = vsub.f32 %v465, %v4421
        %v4550 = vsub.f32 %v466, %v4422
        %v4551 = vsub.f32 %v467, %v4423
        %v4552 = vsub.f32 %v468, %v4424
        %v4553 = vsub.f32 %v469, %v4425
        %v4554 = vsub.f32 %v470, %v4426
        %v4555 = vsub.f32 %v471, %v4427
        %v4556 = vsub.f32 %v472, %v4428
        %v4557 = vsub.f32 %v473, %v4429
        %v4558 = vsub.f32 %v474, %v4430
        %v4559 = vsub.f32 %v475, %v4431
        %v4560 = vsub.f32 %v476, %v4432
        %v4561 = vsub.f32 %v477, %v4433
        %v4562 = vsub.f32 %v478, %v4434
        %v4563 = vsub.f32 %v479, %v4435
        %v4564 = vsub.f32 %v480, %v4436
        %v4565 = vsub.f32 %v481, %v4437
        %v4566 = vsub.f32 %v482, %v4438
        %v4567 = vsub.f32 %v483, %v4439
        %v4568 = vsub.f32 %v484, %v4440
        %v4569 = vsub.f32 %v485, %v4441
        %v4570 = vsub.f32 %v486, %v4442
        %v4571 = vsub.f32 %v487, %v4443
        %v4572 = vsub.f32 %v488, %v4444
        %v4573 = vsub.f32 %v489, %v4445
        %v4574 = vsub.f32 %v490, %v4446
        %v4575 = vsub.f32 %v491, %v4447
        %v4576 = vsub.f32 %v492, %v4448
        %v4577 = vsub.f32 %v493, %v4449
        %v4578 = vsub.f32 %v494, %v4450
        %v4579 = vsub.f32 %v495, %v4451
        %v4580 = vsub.f32 %v496, %v4452
        %v4581 = vsub.f32 %v497, %v4453
        %v4582 = vsub.f32 %v498, %v4454
        %v4583 = vsub.f32 %v499, %v4455
        %v4584 = vsub.f32 %v500, %v4456
        %v4585 = vsub.f32 %v501, %v4457
        %v4586 = vsub.f32 %v502, %v4458
        %v4587 = vsub.f32 %v503, %v4459
        %v4588 = vsub.f32 %v504, %v4460
        %v4589 = vsub.f32 %v505, %v4461
        %v4590 = vmul.f32 %v4462, %v4462
        %v4591 = vmul.f32 %v4463, %v4463
        %v4592 = vmul.f32 %v4464, %v4464
        %v4593 = vmul.f32 %v4465, %v4465
        %v4594 = vmul.f32 %v4466, %v4466
        %v4595 = vmul.f32 %v4467, %v4467
        %v4596 = vmul.f32 %v4468, %v4468
        %v4597 = vmul.f32 %v4469, %v4469
        %v4598 = vmul.f32 %v4470, %v4470
        %v4599 = vmul.f32 %v4471, %v4471
        %v4600 = vmul.f32 %v4472, %v4472
        %v4601 = vmul.f32 %v4473, %v4473
        %v4602 = vmul.f32 %v4474, %v4474
        %v4603 = vmul.f32 %v4475, %v4475
        %v4604 = vmul.f32 %v4476, %v4476
        %v4605 = vmul.f32 %v4477, %v4477
        %v4606 = vmul.f32 %v4478, %v4478
        %v4607 = vmul.f32 %v4479, %v4479
        %v4608 = vmul.f32 %v4480, %v4480
        %v4609 = vmul.f32 %v4481, %v4481
        %v4610 = vmul.f32 %v4482, %v4482
        %v4611 = vmul.f32 %v4483, %v4483
        %v4612 = vmul.f32 %v4484, %v4484
        %v4613 = vmul.f32 %v4485, %v4485
        %v4614 = vmul.f32 %v4486, %v4486
        %v4615 = vmul.f32 %v4487, %v4487
        %v4616 = vmul.f32 %v4488, %v4488
        %v4617 = vmul.f32 %v4489, %v4489
        %v4618 = vmul.f32 %v4490, %v4490
        %v4619 = vmul.f32 %v4491, %v4491
        %v4620 = vmul.f32 %v4492, %v4492
        %v4621 = vmul.f32 %v4493, %v4493
        %v4622 = vmul.f32 %v4494, %v4494
        %v4623 = vmul.f32 %v4495, %v4495
        %v4624 = vmul.f32 %v4496, %v4496
        %v4625 = vmul.f32 %v4497, %v4497
        %v4626 = vmul.f32 %v4498, %v4498
        %v4627 = vmul.f32 %v4499, %v4499
        %v4628 = vmul.f32 %v4500, %v4500
        %v4629 = vmul.f32 %v4501, %v4501
        %v4630 = vmul.f32 %v4502, %v4502
        %v4631 = vmul.f32 %v4503, %v4503
        %v4632 = vmul.f32 %v4504, %v4504
        %v4633 = vmul.f32 %v4505, %v4505
        %v4634 = vmul.f32 %v4506, %v4506
        %v4635 = vmul.f32 %v4507, %v4507
        %v4636 = vmul.f32 %v4508, %v4508
        %v4637 = vmul.f32 %v4509, %v4509
        %v4638 = vmul.f32 %v4510, %v4510
        %v4639 = vmul.f32 %v4511, %v4511
        %v4640 = vmul.f32 %v4512, %v4512
        %v4641 = vmul.f32 %v4513, %v4513
        %v4642 = vmul.f32 %v4514, %v4514
        %v4643 = vmul.f32 %v4515, %v4515
        %v4644 = vmul.f32 %v4516, %v4516
        %v4645 = vmul.f32 %v4517, %v4517
        %v4646 = vmul.f32 %v4518, %v4518
        %v4647 = vmul.f32 %v4519, %v4519
        %v4648 = vmul.f32 %v4520, %v4520
        %v4649 = vmul.f32 %v4521, %v4521
        %v4650 = vmul.f32 %v4522, %v4522
        %v4651 = vmul.f32 %v4523, %v4523
        %v4652 = vmul.f32 %v4524, %v4524
        %v4653 = vmul.f32 %v4525, %v4525
        %v4654 = vmul.f32 %v4526, %v4526
        %v4655 = vmul.f32 %v4527, %v4527
        %v4656 = vmul.f32 %v4528, %v4528
        %v4657 = vmul.f32 %v4529, %v4529
        %v4658 = vmul.f32 %v4530, %v4530
        %v4659 = vmul.f32 %v4531, %v4531
        %v4660 = vmul.f32 %v4532, %v4532
        %v4661 = vmul.f32 %v4533, %v4533
        %v4662 = vmul.f32 %v4534, %v4534
        %v4663 = vmul.f32 %v4535, %v4535
        %v4664 = vmul.f32 %v4536, %v4536
        %v4665 = vmul.f32 %v4537, %v4537
        %v4666 = vmul.f32 %v4538, %v4538
        %v4667 = vmul.f32 %v4539, %v4539
        %v4668 = vmul.f32 %v4540, %v4540
        %v4669 = vmul.f32 %v4541, %v4541
        %v4670 = vmul.f32 %v4542, %v4542
        %v4671 = vmul.f32 %v4543, %v4543
        %v4672 = vmul.f32 %v4544, %v4544
        %v4673 = vmul.f32 %v4545, %v4545
        %v4674 = vmul.f32 %v4546, %v4546
        %v4675 = vmul.f32 %v4547, %v4547
        %v4676 = vmul.f32 %v4548, %v4548
        %v4677 = vmul.f32 %v4549, %v4549
        %v4678 = vmul.f32 %v4550, %v4550
        %v4679 = vmul.f32 %v4551, %v4551
        %v4680 = vmul.f32 %v4552, %v4552
        %v4681 = vmul.f32 %v4553, %v4553
        %v4682 = vmul.f32 %v4554, %v4554
        %v4683 = vmul.f32 %v4555, %v4555
        %v4684 = vmul.f32 %v4556, %v4556
        %v4685 = vmul.f32 %v4557, %v4557
        %v4686 = vmul.f32 %v4558, %v4558
        %v4687 = vmul.f32 %v4559, %v4559
        %v4688 = vmul.f32 %v4560, %v4560
        %v4689 = vmul.f32 %v4561, %v4561
        %v4690 = vmul.f32 %v4562, %v4562
        %v4691 = vmul.f32 %v4563, %v4563
        %v4692 = vmul.f32 %v4564, %v4564
        %v4693 = vmul.f32 %v4565, %v4565
        %v4694 = vmul.f32 %v4566, %v4566
        %v4695 = vmul.f32 %v4567, %v4567
        %v4696 = vmul.f32 %v4568, %v4568
        %v4697 = vmul.f32 %v4569, %v4569
        %v4698 = vmul.f32 %v4570, %v4570
        %v4699 = vmul.f32 %v4571, %v4571
        %v4700 = vmul.f32 %v4572, %v4572
        %v4701 = vmul.f32 %v4573, %v4573
        %v4702 = vmul.f32 %v4574, %v4574
        %v4703 = vmul.f32 %v4575, %v4575
        %v4704 = vmul.f32 %v4576, %v4576
        %v4705 = vmul.f32 %v4577, %v4577
        %v4706 = vmul.f32 %v4578, %v4578
        %v4707 = vmul.f32 %v4579, %v4579
        %v4708 = vmul.f32 %v4580, %v4580
        %v4709 = vmul.f32 %v4581, %v4581
        %v4710 = vmul.f32 %v4582, %v4582
        %v4711 = vmul.f32 %v4583, %v4583
        %v4712 = vmul.f32 %v4584, %v4584
        %v4713 = vmul.f32 %v4585, %v4585
        %v4714 = vmul.f32 %v4586, %v4586
        %v4715 = vmul.f32 %v4587, %v4587
        %v4716 = vmul.f32 %v4588, %v4588
        %v4717 = vmul.f32 %v4589, %v4589
        %v4718 = vadd.f32 %v4590, %v4591
        %v4719 = vadd.f32 %v4718, %v4592
        %v4720 = vadd.f32 %v4719, %v4593
        %4721 = vadd.xlane.f32.xlu0 %v4720
        %v4722 = vpop.xlane.xlu0 %4721
        %v4723 = vadd.f32 %v4594, %v4595
        %v4724 = vadd.f32 %v4723, %v4596
        %v4725 = vadd.f32 %v4724, %v4597
        %4726 = vadd.xlane.f32.xlu0 %v4725
        %v4727 = vpop.xlane.xlu0 %4726
        %v4728 = vadd.f32 %v4598, %v4599
        %v4729 = vadd.f32 %v4728, %v4600
        %v4730 = vadd.f32 %v4729, %v4601
        %4731 = vadd.xlane.f32.xlu0 %v4730
        %v4732 = vpop.xlane.xlu0 %4731
        %v4733 = vadd.f32 %v4602, %v4603
        %v4734 = vadd.f32 %v4733, %v4604
        %v4735 = vadd.f32 %v4734, %v4605
        %4736 = vadd.xlane.f32.xlu0 %v4735
        %v4737 = vpop.xlane.xlu0 %4736
        %v4738 = vadd.f32 %v4606, %v4607
        %v4739 = vadd.f32 %v4738, %v4608
        %v4740 = vadd.f32 %v4739, %v4609
        %4741 = vadd.xlane.f32.xlu0 %v4740
        %v4742 = vpop.xlane.xlu0 %4741
        %v4743 = vadd.f32 %v4610, %v4611
        %v4744 = vadd.f32 %v4743, %v4612
        %v4745 = vadd.f32 %v4744, %v4613
        %4746 = vadd.xlane.f32.xlu0 %v4745
        %v4747 = vpop.xlane.xlu0 %4746
        %v4748 = vadd.f32 %v4614, %v4615
        %v4749 = vadd.f32 %v4748, %v4616
        %v4750 = vadd.f32 %v4749, %v4617
        %4751 = vadd.xlane.f32.xlu0 %v4750
        %v4752 = vpop.xlane.xlu0 %4751
        %v4753 = vadd.f32 %v4618, %v4619
        %v4754 = vadd.f32 %v4753, %v4620
        %v4755 = vadd.f32 %v4754, %v4621
        %4756 = vadd.xlane.f32.xlu0 %v4755
        %v4757 = vpop.xlane.xlu0 %4756
        %v4758 = vadd.f32 %v4622, %v4623
        %v4759 = vadd.f32 %v4758, %v4624
        %v4760 = vadd.f32 %v4759, %v4625
        %4761 = vadd.xlane.f32.xlu0 %v4760
        %v4762 = vpop.xlane.xlu0 %4761
        %v4763 = vadd.f32 %v4626, %v4627
        %v4764 = vadd.f32 %v4763, %v4628
        %v4765 = vadd.f32 %v4764, %v4629
        %4766 = vadd.xlane.f32.xlu0 %v4765
        %v4767 = vpop.xlane.xlu0 %4766
        %v4768 = vadd.f32 %v4630, %v4631
        %v4769 = vadd.f32 %v4768, %v4632
        %v4770 = vadd.f32 %v4769, %v4633
        %4771 = vadd.xlane.f32.xlu0 %v4770
        %v4772 = vpop.xlane.xlu0 %4771
        %v4773 = vadd.f32 %v4634, %v4635
        %v4774 = vadd.f32 %v4773, %v4636
        %v4775 = vadd.f32 %v4774, %v4637
        %4776 = vadd.xlane.f32.xlu0 %v4775
        %v4777 = vpop.xlane.xlu0 %4776
        %v4778 = vadd.f32 %v4638, %v4639
        %v4779 = vadd.f32 %v4778, %v4640
        %v4780 = vadd.f32 %v4779, %v4641
        %4781 = vadd.xlane.f32.xlu0 %v4780
        %v4782 = vpop.xlane.xlu0 %4781
        %v4783 = vadd.f32 %v4642, %v4643
        %v4784 = vadd.f32 %v4783, %v4644
        %v4785 = vadd.f32 %v4784, %v4645
        %4786 = vadd.xlane.f32.xlu0 %v4785
        %v4787 = vpop.xlane.xlu0 %4786
        %v4788 = vadd.f32 %v4646, %v4647
        %v4789 = vadd.f32 %v4788, %v4648
        %v4790 = vadd.f32 %v4789, %v4649
        %4791 = vadd.xlane.f32.xlu0 %v4790
        %v4792 = vpop.xlane.xlu0 %4791
        %v4793 = vadd.f32 %v4650, %v4651
        %v4794 = vadd.f32 %v4793, %v4652
        %v4795 = vadd.f32 %v4794, %v4653
        %4796 = vadd.xlane.f32.xlu0 %v4795
        %v4797 = vpop.xlane.xlu0 %4796
        %v4798 = vadd.f32 %v4654, %v4655
        %v4799 = vadd.f32 %v4798, %v4656
        %v4800 = vadd.f32 %v4799, %v4657
        %4801 = vadd.xlane.f32.xlu0 %v4800
        %v4802 = vpop.xlane.xlu0 %4801
        %v4803 = vadd.f32 %v4658, %v4659
        %v4804 = vadd.f32 %v4803, %v4660
        %v4805 = vadd.f32 %v4804, %v4661
        %4806 = vadd.xlane.f32.xlu0 %v4805
        %v4807 = vpop.xlane.xlu0 %4806
        %v4808 = vadd.f32 %v4662, %v4663
        %v4809 = vadd.f32 %v4808, %v4664
        %v4810 = vadd.f32 %v4809, %v4665
        %4811 = vadd.xlane.f32.xlu0 %v4810
        %v4812 = vpop.xlane.xlu0 %4811
        %v4813 = vadd.f32 %v4666, %v4667
        %v4814 = vadd.f32 %v4813, %v4668
        %v4815 = vadd.f32 %v4814, %v4669
        %4816 = vadd.xlane.f32.xlu0 %v4815
        %v4817 = vpop.xlane.xlu0 %4816
        %v4818 = vadd.f32 %v4670, %v4671
        %v4819 = vadd.f32 %v4818, %v4672
        %v4820 = vadd.f32 %v4819, %v4673
        %4821 = vadd.xlane.f32.xlu0 %v4820
        %v4822 = vpop.xlane.xlu0 %4821
        %v4823 = vadd.f32 %v4674, %v4675
        %v4824 = vadd.f32 %v4823, %v4676
        %v4825 = vadd.f32 %v4824, %v4677
        %4826 = vadd.xlane.f32.xlu0 %v4825
        %v4827 = vpop.xlane.xlu0 %4826
        %v4828 = vadd.f32 %v4678, %v4679
        %v4829 = vadd.f32 %v4828, %v4680
        %v4830 = vadd.f32 %v4829, %v4681
        %4831 = vadd.xlane.f32.xlu0 %v4830
        %v4832 = vpop.xlane.xlu0 %4831
        %v4833 = vadd.f32 %v4682, %v4683
        %v4834 = vadd.f32 %v4833, %v4684
        %v4835 = vadd.f32 %v4834, %v4685
        %4836 = vadd.xlane.f32.xlu0 %v4835
        %v4837 = vpop.xlane.xlu0 %4836
        %v4838 = vadd.f32 %v4686, %v4687
        %v4839 = vadd.f32 %v4838, %v4688
        %v4840 = vadd.f32 %v4839, %v4689
        %4841 = vadd.xlane.f32.xlu0 %v4840
        %v4842 = vpop.xlane.xlu0 %4841
        %v4843 = vadd.f32 %v4690, %v4691
        %v4844 = vadd.f32 %v4843, %v4692
        %v4845 = vadd.f32 %v4844, %v4693
        %4846 = vadd.xlane.f32.xlu0 %v4845
        %v4847 = vpop.xlane.xlu0 %4846
        %v4848 = vadd.f32 %v4694, %v4695
        %v4849 = vadd.f32 %v4848, %v4696
        %v4850 = vadd.f32 %v4849, %v4697
        %4851 = vadd.xlane.f32.xlu0 %v4850
        %v4852 = vpop.xlane.xlu0 %4851
        %v4853 = vadd.f32 %v4698, %v4699
        %v4854 = vadd.f32 %v4853, %v4700
        %v4855 = vadd.f32 %v4854, %v4701
        %4856 = vadd.xlane.f32.xlu0 %v4855
        %v4857 = vpop.xlane.xlu0 %4856
        %v4858 = vadd.f32 %v4702, %v4703
        %v4859 = vadd.f32 %v4858, %v4704
        %v4860 = vadd.f32 %v4859, %v4705
        %4861 = vadd.xlane.f32.xlu0 %v4860
        %v4862 = vpop.xlane.xlu0 %4861
        %v4863 = vadd.f32 %v4706, %v4707
        %v4864 = vadd.f32 %v4863, %v4708
        %v4865 = vadd.f32 %v4864, %v4709
        %4866 = vadd.xlane.f32.xlu0 %v4865
        %v4867 = vpop.xlane.xlu0 %4866
        %v4868 = vadd.f32 %v4710, %v4711
        %v4869 = vadd.f32 %v4868, %v4712
        %v4870 = vadd.f32 %v4869, %v4713
        %4871 = vadd.xlane.f32.xlu0 %v4870
        %v4872 = vpop.xlane.xlu0 %4871
        %v4873 = vadd.f32 %v4714, %v4715
        %v4874 = vadd.f32 %v4873, %v4716
        %v4875 = vadd.f32 %v4874, %v4717
        %4876 = vadd.xlane.f32.xlu0 %v4875
        %v4877 = vpop.xlane.xlu0 %4876
        %v4878 = vrsqrt.pop %v4722
        %v4879 = vrsqrt.pop %v4727
        %v4880 = vrsqrt.pop %v4732
        %v4881 = vrsqrt.pop %v4737
        %v4882 = vrsqrt.pop %v4742
        %v4883 = vrsqrt.pop %v4747
        %v4884 = vrsqrt.pop %v4752
        %v4885 = vrsqrt.pop %v4757
        %v4886 = vrsqrt.pop %v4762
        %v4887 = vrsqrt.pop %v4767
        %v4888 = vrsqrt.pop %v4772
        %v4889 = vrsqrt.pop %v4777
        %v4890 = vrsqrt.pop %v4782
        %v4891 = vrsqrt.pop %v4787
        %v4892 = vrsqrt.pop %v4792
        %v4893 = vrsqrt.pop %v4797
        %v4894 = vrsqrt.pop %v4802
        %v4895 = vrsqrt.pop %v4807
        %v4896 = vrsqrt.pop %v4812
        %v4897 = vrsqrt.pop %v4817
        %v4898 = vrsqrt.pop %v4822
        %v4899 = vrsqrt.pop %v4827
        %v4900 = vrsqrt.pop %v4832
        %v4901 = vrsqrt.pop %v4837
        %v4902 = vrsqrt.pop %v4842
        %v4903 = vrsqrt.pop %v4847
        %v4904 = vrsqrt.pop %v4852
        %v4905 = vrsqrt.pop %v4857
        %v4906 = vrsqrt.pop %v4862
        %v4907 = vrsqrt.pop %v4867
        %v4908 = vrsqrt.pop %v4872
        %v4909 = vrsqrt.pop %v4877
        %v4910 = vmul.f32 %v4462, %v4878
        %v4911 = vmul.f32 %v4463, %v4878
        %v4912 = vmul.f32 %v4464, %v4878
        %v4913 = vmul.f32 %v4465, %v4878
        %v4914 = vmul.f32 %v4466, %v4879
        %v4915 = vmul.f32 %v4467, %v4879
        %v4916 = vmul.f32 %v4468, %v4879
        %v4917 = vmul.f32 %v4469, %v4879
        %v4918 = vmul.f32 %v4470, %v4880
        %v4919 = vmul.f32 %v4471, %v4880
        %v4920 = vmul.f32 %v4472, %v4880
        %v4921 = vmul.f32 %v4473, %v4880
        %v4922 = vmul.f32 %v4474, %v4881
        %v4923 = vmul.f32 %v4475, %v4881
        %v4924 = vmul.f32 %v4476, %v4881
        %v4925 = vmul.f32 %v4477, %v4881
        %v4926 = vmul.f32 %v4478, %v4882
        %v4927 = vmul.f32 %v4479, %v4882
        %v4928 = vmul.f32 %v4480, %v4882
        %v4929 = vmul.f32 %v4481, %v4882
        %v4930 = vmul.f32 %v4482, %v4883
        %v4931 = vmul.f32 %v4483, %v4883
        %v4932 = vmul.f32 %v4484, %v4883
        %v4933 = vmul.f32 %v4485, %v4883
        %v4934 = vmul.f32 %v4486, %v4884
        %v4935 = vmul.f32 %v4487, %v4884
        %v4936 = vmul.f32 %v4488, %v4884
        %v4937 = vmul.f32 %v4489, %v4884
        %v4938 = vmul.f32 %v4490, %v4885
        %v4939 = vmul.f32 %v4491, %v4885
        %v4940 = vmul.f32 %v4492, %v4885
        %v4941 = vmul.f32 %v4493, %v4885
        %v4942 = vmul.f32 %v4494, %v4886
        %v4943 = vmul.f32 %v4495, %v4886
        %v4944 = vmul.f32 %v4496, %v4886
        %v4945 = vmul.f32 %v4497, %v4886
        %v4946 = vmul.f32 %v4498, %v4887
        %v4947 = vmul.f32 %v4499, %v4887
        %v4948 = vmul.f32 %v4500, %v4887
        %v4949 = vmul.f32 %v4501, %v4887
        %v4950 = vmul.f32 %v4502, %v4888
        %v4951 = vmul.f32 %v4503, %v4888
        %v4952 = vmul.f32 %v4504, %v4888
        %v4953 = vmul.f32 %v4505, %v4888
        %v4954 = vmul.f32 %v4506, %v4889
        %v4955 = vmul.f32 %v4507, %v4889
        %v4956 = vmul.f32 %v4508, %v4889
        %v4957 = vmul.f32 %v4509, %v4889
        %v4958 = vmul.f32 %v4510, %v4890
        %v4959 = vmul.f32 %v4511, %v4890
        %v4960 = vmul.f32 %v4512, %v4890
        %v4961 = vmul.f32 %v4513, %v4890
        %v4962 = vmul.f32 %v4514, %v4891
        %v4963 = vmul.f32 %v4515, %v4891
        %v4964 = vmul.f32 %v4516, %v4891
        %v4965 = vmul.f32 %v4517, %v4891
        %v4966 = vmul.f32 %v4518, %v4892
        %v4967 = vmul.f32 %v4519, %v4892
        %v4968 = vmul.f32 %v4520, %v4892
        %v4969 = vmul.f32 %v4521, %v4892
        %v4970 = vmul.f32 %v4522, %v4893
        %v4971 = vmul.f32 %v4523, %v4893
        %v4972 = vmul.f32 %v4524, %v4893
        %v4973 = vmul.f32 %v4525, %v4893
        %v4974 = vmul.f32 %v4526, %v4894
        %v4975 = vmul.f32 %v4527, %v4894
        %v4976 = vmul.f32 %v4528, %v4894
        %v4977 = vmul.f32 %v4529, %v4894
        %v4978 = vmul.f32 %v4530, %v4895
        %v4979 = vmul.f32 %v4531, %v4895
        %v4980 = vmul.f32 %v4532, %v4895
        %v4981 = vmul.f32 %v4533, %v4895
        %v4982 = vmul.f32 %v4534, %v4896
        %v4983 = vmul.f32 %v4535, %v4896
        %v4984 = vmul.f32 %v4536, %v4896
        %v4985 = vmul.f32 %v4537, %v4896
        %v4986 = vmul.f32 %v4538, %v4897
        %v4987 = vmul.f32 %v4539, %v4897
        %v4988 = vmul.f32 %v4540, %v4897
        %v4989 = vmul.f32 %v4541, %v4897
        %v4990 = vmul.f32 %v4542, %v4898
        %v4991 = vmul.f32 %v4543, %v4898
        %v4992 = vmul.f32 %v4544, %v4898
        %v4993 = vmul.f32 %v4545, %v4898
        %v4994 = vmul.f32 %v4546, %v4899
        %v4995 = vmul.f32 %v4547, %v4899
        %v4996 = vmul.f32 %v4548, %v4899
        %v4997 = vmul.f32 %v4549, %v4899
        %v4998 = vmul.f32 %v4550, %v4900
        %v4999 = vmul.f32 %v4551, %v4900
        %v5000 = vmul.f32 %v4552, %v4900
        %v5001 = vmul.f32 %v4553, %v4900
        %v5002 = vmul.f32 %v4554, %v4901
        %v5003 = vmul.f32 %v4555, %v4901
        %v5004 = vmul.f32 %v4556, %v4901
        %v5005 = vmul.f32 %v4557, %v4901
        %v5006 = vmul.f32 %v4558, %v4902
        %v5007 = vmul.f32 %v4559, %v4902
        %v5008 = vmul.f32 %v4560, %v4902
        %v5009 = vmul.f32 %v4561, %v4902
        %v5010 = vmul.f32 %v4562, %v4903
        %v5011 = vmul.f32 %v4563, %v4903
        %v5012 = vmul.f32 %v4564, %v4903
        %v5013 = vmul.f32 %v4565, %v4903
        %v5014 = vmul.f32 %v4566, %v4904
        %v5015 = vmul.f32 %v4567, %v4904
        %v5016 = vmul.f32 %v4568, %v4904
        %v5017 = vmul.f32 %v4569, %v4904
        %v5018 = vmul.f32 %v4570, %v4905
        %v5019 = vmul.f32 %v4571, %v4905
        %v5020 = vmul.f32 %v4572, %v4905
        %v5021 = vmul.f32 %v4573, %v4905
        %v5022 = vmul.f32 %v4574, %v4906
        %v5023 = vmul.f32 %v4575, %v4906
        %v5024 = vmul.f32 %v4576, %v4906
        %v5025 = vmul.f32 %v4577, %v4906
        %v5026 = vmul.f32 %v4578, %v4907
        %v5027 = vmul.f32 %v4579, %v4907
        %v5028 = vmul.f32 %v4580, %v4907
        %v5029 = vmul.f32 %v4581, %v4907
        %v5030 = vmul.f32 %v4582, %v4908
        %v5031 = vmul.f32 %v4583, %v4908
        %v5032 = vmul.f32 %v4584, %v4908
        %v5033 = vmul.f32 %v4585, %v4908
        %v5034 = vmul.f32 %v4586, %v4909
        %v5035 = vmul.f32 %v4587, %v4909
        %v5036 = vmul.f32 %v4588, %v4909
        %v5037 = vmul.f32 %v4589, %v4909
        %v5038 = vpack.c.bf16 %v4914, %v4910
        %v5039 = vpack.c.bf16 %v4915, %v4911
        %v5040 = vpack.c.bf16 %v4916, %v4912
        %v5041 = vpack.c.bf16 %v4917, %v4913
        %v5042 = vpack.c.bf16 %v4922, %v4918
        %v5043 = vpack.c.bf16 %v4923, %v4919
        %v5044 = vpack.c.bf16 %v4924, %v4920
        %v5045 = vpack.c.bf16 %v4925, %v4921
        %v5046 = vpack.c.bf16 %v4930, %v4926
        %v5047 = vpack.c.bf16 %v4931, %v4927
        %v5048 = vpack.c.bf16 %v4932, %v4928
        %v5049 = vpack.c.bf16 %v4933, %v4929
        %v5050 = vpack.c.bf16 %v4938, %v4934
        %v5051 = vpack.c.bf16 %v4939, %v4935
        %v5052 = vpack.c.bf16 %v4940, %v4936
        %v5053 = vpack.c.bf16 %v4941, %v4937
        %v5054 = vpack.c.bf16 %v4946, %v4942
        %v5055 = vpack.c.bf16 %v4947, %v4943
        %v5056 = vpack.c.bf16 %v4948, %v4944
        %v5057 = vpack.c.bf16 %v4949, %v4945
        %v5058 = vpack.c.bf16 %v4954, %v4950
        %v5059 = vpack.c.bf16 %v4955, %v4951
        %v5060 = vpack.c.bf16 %v4956, %v4952
        %v5061 = vpack.c.bf16 %v4957, %v4953
        %v5062 = vpack.c.bf16 %v4962, %v4958
        %v5063 = vpack.c.bf16 %v4963, %v4959
        %v5064 = vpack.c.bf16 %v4964, %v4960
        %v5065 = vpack.c.bf16 %v4965, %v4961
        %v5066 = vpack.c.bf16 %v4970, %v4966
        %v5067 = vpack.c.bf16 %v4971, %v4967
        %v5068 = vpack.c.bf16 %v4972, %v4968
        %v5069 = vpack.c.bf16 %v4973, %v4969
        %v5070 = vpack.c.bf16 %v4978, %v4974
        %v5071 = vpack.c.bf16 %v4979, %v4975
        %v5072 = vpack.c.bf16 %v4980, %v4976
        %v5073 = vpack.c.bf16 %v4981, %v4977
        %v5074 = vpack.c.bf16 %v4986, %v4982
        %v5075 = vpack.c.bf16 %v4987, %v4983
        %v5076 = vpack.c.bf16 %v4988, %v4984
        %v5077 = vpack.c.bf16 %v4989, %v4985
        %v5078 = vpack.c.bf16 %v4994, %v4990
        %v5079 = vpack.c.bf16 %v4995, %v4991
        %v5080 = vpack.c.bf16 %v4996, %v4992
        %v5081 = vpack.c.bf16 %v4997, %v4993
        %v5082 = vpack.c.bf16 %v5002, %v4998
        %v5083 = vpack.c.bf16 %v5003, %v4999
        %v5084 = vpack.c.bf16 %v5004, %v5000
        %v5085 = vpack.c.bf16 %v5005, %v5001
        %v5086 = vpack.c.bf16 %v5010, %v5006
        %v5087 = vpack.c.bf16 %v5011, %v5007
        %v5088 = vpack.c.bf16 %v5012, %v5008
        %v5089 = vpack.c.bf16 %v5013, %v5009
        %v5090 = vpack.c.bf16 %v5018, %v5014
        %v5091 = vpack.c.bf16 %v5019, %v5015
        %v5092 = vpack.c.bf16 %v5020, %v5016
        %v5093 = vpack.c.bf16 %v5021, %v5017
        %v5094 = vpack.c.bf16 %v5026, %v5022
        %v5095 = vpack.c.bf16 %v5027, %v5023
        %v5096 = vpack.c.bf16 %v5028, %v5024
        %v5097 = vpack.c.bf16 %v5029, %v5025
        %v5098 = vpack.c.bf16 %v5034, %v5030
        %v5099 = vpack.c.bf16 %v5035, %v5031
        %v5100 = vpack.c.bf16 %v5036, %v5032
        %v5101 = vpack.c.bf16 %v5037, %v5033
        %v5166 = vunpack.c.l.b16 %v5038
        %v5167 = vunpack.c.l.b16 %v5039
        %v5168 = vunpack.c.l.b16 %v5040
        %v5169 = vunpack.c.l.b16 %v5041
        %v5170 = vunpack.c.h.b16 %v5038
        %v5171 = vunpack.c.h.b16 %v5039
        %v5172 = vunpack.c.h.b16 %v5040
        %v5173 = vunpack.c.h.b16 %v5041
        %v5174 = vunpack.c.l.b16 %v5042
        %v5175 = vunpack.c.l.b16 %v5043
        %v5176 = vunpack.c.l.b16 %v5044
        %v5177 = vunpack.c.l.b16 %v5045
        %v5178 = vunpack.c.h.b16 %v5042
        %v5179 = vunpack.c.h.b16 %v5043
        %v5180 = vunpack.c.h.b16 %v5044
        %v5181 = vunpack.c.h.b16 %v5045
        %v5182 = vunpack.c.l.b16 %v5046
        %v5183 = vunpack.c.l.b16 %v5047
        %v5184 = vunpack.c.l.b16 %v5048
        %v5185 = vunpack.c.l.b16 %v5049
        %v5186 = vunpack.c.h.b16 %v5046
        %v5187 = vunpack.c.h.b16 %v5047
        %v5188 = vunpack.c.h.b16 %v5048
        %v5189 = vunpack.c.h.b16 %v5049
        %v5190 = vunpack.c.l.b16 %v5050
        %v5191 = vunpack.c.l.b16 %v5051
        %v5192 = vunpack.c.l.b16 %v5052
        %v5193 = vunpack.c.l.b16 %v5053
        %v5194 = vunpack.c.h.b16 %v5050
        %v5195 = vunpack.c.h.b16 %v5051
        %v5196 = vunpack.c.h.b16 %v5052
        %v5197 = vunpack.c.h.b16 %v5053
        %v5198 = vunpack.c.l.b16 %v5054
        %v5199 = vunpack.c.l.b16 %v5055
        %v5200 = vunpack.c.l.b16 %v5056
        %v5201 = vunpack.c.l.b16 %v5057
        %v5202 = vunpack.c.h.b16 %v5054
        %v5203 = vunpack.c.h.b16 %v5055
        %v5204 = vunpack.c.h.b16 %v5056
        %v5205 = vunpack.c.h.b16 %v5057
        %v5206 = vunpack.c.l.b16 %v5058
        %v5207 = vunpack.c.l.b16 %v5059
        %v5208 = vunpack.c.l.b16 %v5060
        %v5209 = vunpack.c.l.b16 %v5061
        %v5210 = vunpack.c.h.b16 %v5058
        %v5211 = vunpack.c.h.b16 %v5059
        %v5212 = vunpack.c.h.b16 %v5060
        %v5213 = vunpack.c.h.b16 %v5061
        %v5214 = vunpack.c.l.b16 %v5062
        %v5215 = vunpack.c.l.b16 %v5063
        %v5216 = vunpack.c.l.b16 %v5064
        %v5217 = vunpack.c.l.b16 %v5065
        %v5218 = vunpack.c.h.b16 %v5062
        %v5219 = vunpack.c.h.b16 %v5063
        %v5220 = vunpack.c.h.b16 %v5064
        %v5221 = vunpack.c.h.b16 %v5065
        %v5222 = vunpack.c.l.b16 %v5066
        %v5223 = vunpack.c.l.b16 %v5067
        %v5224 = vunpack.c.l.b16 %v5068
        %v5225 = vunpack.c.l.b16 %v5069
        %v5226 = vunpack.c.h.b16 %v5066
        %v5227 = vunpack.c.h.b16 %v5067
        %v5228 = vunpack.c.h.b16 %v5068
        %v5229 = vunpack.c.h.b16 %v5069
        %v5230 = vunpack.c.l.b16 %v5070
        %v5231 = vunpack.c.l.b16 %v5071
        %v5232 = vunpack.c.l.b16 %v5072
        %v5233 = vunpack.c.l.b16 %v5073
        %v5234 = vunpack.c.h.b16 %v5070
        %v5235 = vunpack.c.h.b16 %v5071
        %v5236 = vunpack.c.h.b16 %v5072
        %v5237 = vunpack.c.h.b16 %v5073
        %v5238 = vunpack.c.l.b16 %v5074
        %v5239 = vunpack.c.l.b16 %v5075
        %v5240 = vunpack.c.l.b16 %v5076
        %v5241 = vunpack.c.l.b16 %v5077
        %v5242 = vunpack.c.h.b16 %v5074
        %v5243 = vunpack.c.h.b16 %v5075
        %v5244 = vunpack.c.h.b16 %v5076
        %v5245 = vunpack.c.h.b16 %v5077
        %v5246 = vunpack.c.l.b16 %v5078
        %v5247 = vunpack.c.l.b16 %v5079
        %v5248 = vunpack.c.l.b16 %v5080
        %v5249 = vunpack.c.l.b16 %v5081
        %v5250 = vunpack.c.h.b16 %v5078
        %v5251 = vunpack.c.h.b16 %v5079
        %v5252 = vunpack.c.h.b16 %v5080
        %v5253 = vunpack.c.h.b16 %v5081
        %v5254 = vunpack.c.l.b16 %v5082
        %v5255 = vunpack.c.l.b16 %v5083
        %v5256 = vunpack.c.l.b16 %v5084
        %v5257 = vunpack.c.l.b16 %v5085
        %v5258 = vunpack.c.h.b16 %v5082
        %v5259 = vunpack.c.h.b16 %v5083
        %v5260 = vunpack.c.h.b16 %v5084
        %v5261 = vunpack.c.h.b16 %v5085
        %v5262 = vunpack.c.l.b16 %v5086
        %v5263 = vunpack.c.l.b16 %v5087
        %v5264 = vunpack.c.l.b16 %v5088
        %v5265 = vunpack.c.l.b16 %v5089
        %v5266 = vunpack.c.h.b16 %v5086
        %v5267 = vunpack.c.h.b16 %v5087
        %v5268 = vunpack.c.h.b16 %v5088
        %v5269 = vunpack.c.h.b16 %v5089
        %v5270 = vunpack.c.l.b16 %v5090
        %v5271 = vunpack.c.l.b16 %v5091
        %v5272 = vunpack.c.l.b16 %v5092
        %v5273 = vunpack.c.l.b16 %v5093
        %v5274 = vunpack.c.h.b16 %v5090
        %v5275 = vunpack.c.h.b16 %v5091
        %v5276 = vunpack.c.h.b16 %v5092
        %v5277 = vunpack.c.h.b16 %v5093
        %v5278 = vunpack.c.l.b16 %v5094
        %v5279 = vunpack.c.l.b16 %v5095
        %v5280 = vunpack.c.l.b16 %v5096
        %v5281 = vunpack.c.l.b16 %v5097
        %v5282 = vunpack.c.h.b16 %v5094
        %v5283 = vunpack.c.h.b16 %v5095
        %v5284 = vunpack.c.h.b16 %v5096
        %v5285 = vunpack.c.h.b16 %v5097
        %v5286 = vunpack.c.l.b16 %v5098
        %v5287 = vunpack.c.l.b16 %v5099
        %v5288 = vunpack.c.l.b16 %v5100
        %v5289 = vunpack.c.l.b16 %v5101
        %v5290 = vunpack.c.h.b16 %v5098
        %v5291 = vunpack.c.h.b16 %v5099
        %v5292 = vunpack.c.h.b16 %v5100
        %v5293 = vunpack.c.h.b16 %v5101
        %v5294 = vpack.c.b16 %v5167, %v5166
        %v5295 = vpack.c.b16 %v5169, %v5168
        %v5296 = vpack.c.b16 %v5171, %v5170
        %v5297 = vpack.c.b16 %v5173, %v5172
        %v5298 = vpack.c.b16 %v5175, %v5174
        %v5299 = vpack.c.b16 %v5177, %v5176
        %v5300 = vpack.c.b16 %v5179, %v5178
        %v5301 = vpack.c.b16 %v5181, %v5180
        %v5302 = vpack.c.b16 %v5183, %v5182
        %v5303 = vpack.c.b16 %v5185, %v5184
        %v5304 = vpack.c.b16 %v5187, %v5186
        %v5305 = vpack.c.b16 %v5189, %v5188
        %v5306 = vpack.c.b16 %v5191, %v5190
        %v5307 = vpack.c.b16 %v5193, %v5192
        %v5308 = vpack.c.b16 %v5195, %v5194
        %v5309 = vpack.c.b16 %v5197, %v5196
        %v5310 = vpack.c.b16 %v5199, %v5198
        %v5311 = vpack.c.b16 %v5201, %v5200
        %v5312 = vpack.c.b16 %v5203, %v5202
        %v5313 = vpack.c.b16 %v5205, %v5204
        %v5314 = vpack.c.b16 %v5207, %v5206
        %v5315 = vpack.c.b16 %v5209, %v5208
        %v5316 = vpack.c.b16 %v5211, %v5210
        %v5317 = vpack.c.b16 %v5213, %v5212
        %v5318 = vpack.c.b16 %v5215, %v5214
        %v5319 = vpack.c.b16 %v5217, %v5216
        %v5320 = vpack.c.b16 %v5219, %v5218
        %v5321 = vpack.c.b16 %v5221, %v5220
        %v5322 = vpack.c.b16 %v5223, %v5222
        %v5323 = vpack.c.b16 %v5225, %v5224
        %v5324 = vpack.c.b16 %v5227, %v5226
        %v5325 = vpack.c.b16 %v5229, %v5228
        %v5326 = vpack.c.b16 %v5231, %v5230
        %v5327 = vpack.c.b16 %v5233, %v5232
        %v5328 = vpack.c.b16 %v5235, %v5234
        %v5329 = vpack.c.b16 %v5237, %v5236
        %v5330 = vpack.c.b16 %v5239, %v5238
        %v5331 = vpack.c.b16 %v5241, %v5240
        %v5332 = vpack.c.b16 %v5243, %v5242
        %v5333 = vpack.c.b16 %v5245, %v5244
        %v5334 = vpack.c.b16 %v5247, %v5246
        %v5335 = vpack.c.b16 %v5249, %v5248
        %v5336 = vpack.c.b16 %v5251, %v5250
        %v5337 = vpack.c.b16 %v5253, %v5252
        %v5338 = vpack.c.b16 %v5255, %v5254
        %v5339 = vpack.c.b16 %v5257, %v5256
        %v5340 = vpack.c.b16 %v5259, %v5258
        %v5341 = vpack.c.b16 %v5261, %v5260
        %v5342 = vpack.c.b16 %v5263, %v5262
        %v5343 = vpack.c.b16 %v5265, %v5264
        %v5344 = vpack.c.b16 %v5267, %v5266
        %v5345 = vpack.c.b16 %v5269, %v5268
        %v5346 = vpack.c.b16 %v5271, %v5270
        %v5347 = vpack.c.b16 %v5273, %v5272
        %v5348 = vpack.c.b16 %v5275, %v5274
        %v5349 = vpack.c.b16 %v5277, %v5276
        %v5350 = vpack.c.b16 %v5279, %v5278
        %v5351 = vpack.c.b16 %v5281, %v5280
        %v5352 = vpack.c.b16 %v5283, %v5282
        %v5353 = vpack.c.b16 %v5285, %v5284
        %v5354 = vpack.c.b16 %v5287, %v5286
        %v5355 = vpack.c.b16 %v5289, %v5288
        %v5356 = vpack.c.b16 %v5291, %v5290
        %v5357 = vpack.c.b16 %v5293, %v5292
        %5422 = vst [vmem:[%s303] sm:$0xff] %v5294
        %5423 = vst [vmem:[%s303 + $0x8] sm:$0xff] %v5295
        %5424 = vst [vmem:[%s303 + $0x10] sm:$0xff] %v5296
        %5425 = vst [vmem:[%s303 + $0x18] sm:$0xff] %v5297
        %5426 = vst [vmem:[%s303 + $0x20] sm:$0xff] %v5298
        %5427 = vst [vmem:[%s303 + $0x28] sm:$0xff] %v5299
        %5428 = vst [vmem:[%s303 + $0x30] sm:$0xff] %v5300
        %5429 = vst [vmem:[%s303 + $0x38] sm:$0xff] %v5301
        %5430 = vst [vmem:[%s303 + $0x40] sm:$0xff] %v5302
        %5431 = vst [vmem:[%s303 + $0x48] sm:$0xff] %v5303
        %5432 = vst [vmem:[%s303 + $0x50] sm:$0xff] %v5304
        %5433 = vst [vmem:[%s303 + $0x58] sm:$0xff] %v5305
        %5434 = vst [vmem:[%s303 + $0x60] sm:$0xff] %v5306
        %5435 = vst [vmem:[%s303 + $0x68] sm:$0xff] %v5307
        %5436 = vst [vmem:[%s303 + $0x70] sm:$0xff] %v5308
        %5437 = vst [vmem:[%s303 + $0x78] sm:$0xff] %v5309
        %5438 = vst [vmem:[%s303 + $0x80] sm:$0xff] %v5310
        %5439 = vst [vmem:[%s303 + $0x88] sm:$0xff] %v5311
        %5440 = vst [vmem:[%s303 + $0x90] sm:$0xff] %v5312
        %5441 = vst [vmem:[%s303 + $0x98] sm:$0xff] %v5313
        %5442 = vst [vmem:[%s303 + $0xa0] sm:$0xff] %v5314
        %5443 = vst [vmem:[%s303 + $0xa8] sm:$0xff] %v5315
        %5444 = vst [vmem:[%s303 + $0xb0] sm:$0xff] %v5316
        %5445 = vst [vmem:[%s303 + $0xb8] sm:$0xff] %v5317
        %5446 = vst [vmem:[%s303 + $0xc0] sm:$0xff] %v5318
        %5447 = vst [vmem:[%s303 + $0xc8] sm:$0xff] %v5319
        %5448 = vst [vmem:[%s303 + $0xd0] sm:$0xff] %v5320
        %5449 = vst [vmem:[%s303 + $0xd8] sm:$0xff] %v5321
        %5450 = vst [vmem:[%s303 + $0xe0] sm:$0xff] %v5322
        %5451 = vst [vmem:[%s303 + $0xe8] sm:$0xff] %v5323
        %5452 = vst [vmem:[%s303 + $0xf0] sm:$0xff] %v5324
        %5453 = vst [vmem:[%s303 + $0xf8] sm:$0xff] %v5325
        %5454 = vst [vmem:[%s303 + $0x100] sm:$0xff] %v5326
        %5455 = vst [vmem:[%s303 + $0x108] sm:$0xff] %v5327
        %5456 = vst [vmem:[%s303 + $0x110] sm:$0xff] %v5328
        %5457 = vst [vmem:[%s303 + $0x118] sm:$0xff] %v5329
        %5458 = vst [vmem:[%s303 + $0x120] sm:$0xff] %v5330
        %5459 = vst [vmem:[%s303 + $0x128] sm:$0xff] %v5331
        %5460 = vst [vmem:[%s303 + $0x130] sm:$0xff] %v5332
        %5461 = vst [vmem:[%s303 + $0x138] sm:$0xff] %v5333
        %5462 = vst [vmem:[%s303 + $0x140] sm:$0xff] %v5334
        %5463 = vst [vmem:[%s303 + $0x148] sm:$0xff] %v5335
        %5464 = vst [vmem:[%s303 + $0x150] sm:$0xff] %v5336
        %5465 = vst [vmem:[%s303 + $0x158] sm:$0xff] %v5337
        %5466 = vst [vmem:[%s303 + $0x160] sm:$0xff] %v5338
        %5467 = vst [vmem:[%s303 + $0x168] sm:$0xff] %v5339
        %5468 = vst [vmem:[%s303 + $0x170] sm:$0xff] %v5340
        %5469 = vst [vmem:[%s303 + $0x178] sm:$0xff] %v5341
        %5470 = vst [vmem:[%s303 + $0x180] sm:$0xff] %v5342
        %5471 = vst [vmem:[%s303 + $0x188] sm:$0xff] %v5343
        %5472 = vst [vmem:[%s303 + $0x190] sm:$0xff] %v5344
        %5473 = vst [vmem:[%s303 + $0x198] sm:$0xff] %v5345
        %5474 = vst [vmem:[%s303 + $0x1a0] sm:$0xff] %v5346
        %5475 = vst [vmem:[%s303 + $0x1a8] sm:$0xff] %v5347
        %5476 = vst [vmem:[%s303 + $0x1b0] sm:$0xff] %v5348
        %5477 = vst [vmem:[%s303 + $0x1b8] sm:$0xff] %v5349
        %5478 = vst [vmem:[%s303 + $0x1c0] sm:$0xff] %v5350
        %5479 = vst [vmem:[%s303 + $0x1c8] sm:$0xff] %v5351
        %5480 = vst [vmem:[%s303 + $0x1d0] sm:$0xff] %v5352
        %5481 = vst [vmem:[%s303 + $0x1d8] sm:$0xff] %v5353
        %5482 = vst [vmem:[%s303 + $0x1e0] sm:$0xff] %v5354
        %5483 = vst [vmem:[%s303 + $0x1e8] sm:$0xff] %v5355
        %5484 = vst [vmem:[%s303 + $0x1f0] sm:$0xff] %v5356
        %5485 = vst [vmem:[%s303 + $0x1f8] sm:$0xff] %v5357
        %v5486 = vpack.c.bf16 %v4338, %v4334
        %v5487 = vpack.c.bf16 %v4339, %v4335
        %v5488 = vpack.c.bf16 %v4340, %v4336
        %v5489 = vpack.c.bf16 %v4341, %v4337
        %v5490 = vpack.c.bf16 %v4346, %v4342
        %v5491 = vpack.c.bf16 %v4347, %v4343
        %v5492 = vpack.c.bf16 %v4348, %v4344
        %v5493 = vpack.c.bf16 %v4349, %v4345
        %v5494 = vpack.c.bf16 %v4354, %v4350
        %v5495 = vpack.c.bf16 %v4355, %v4351
        %v5496 = vpack.c.bf16 %v4356, %v4352
        %v5497 = vpack.c.bf16 %v4357, %v4353
        %v5498 = vpack.c.bf16 %v4362, %v4358
        %v5499 = vpack.c.bf16 %v4363, %v4359
        %v5500 = vpack.c.bf16 %v4364, %v4360
        %v5501 = vpack.c.bf16 %v4365, %v4361
        %v5502 = vpack.c.bf16 %v4370, %v4366
        %v5503 = vpack.c.bf16 %v4371, %v4367
        %v5504 = vpack.c.bf16 %v4372, %v4368
        %v5505 = vpack.c.bf16 %v4373, %v4369
        %v5506 = vpack.c.bf16 %v4378, %v4374
        %v5507 = vpack.c.bf16 %v4379, %v4375
        %v5508 = vpack.c.bf16 %v4380, %v4376
        %v5509 = vpack.c.bf16 %v4381, %v4377
        %v5510 = vpack.c.bf16 %v4386, %v4382
        %v5511 = vpack.c.bf16 %v4387, %v4383
        %v5512 = vpack.c.bf16 %v4388, %v4384
        %v5513 = vpack.c.bf16 %v4389, %v4385
        %v5514 = vpack.c.bf16 %v4394, %v4390
        %v5515 = vpack.c.bf16 %v4395, %v4391
        %v5516 = vpack.c.bf16 %v4396, %v4392
        %v5517 = vpack.c.bf16 %v4397, %v4393
        %v5518 = vpack.c.bf16 %v4402, %v4398
        %v5519 = vpack.c.bf16 %v4403, %v4399
        %v5520 = vpack.c.bf16 %v4404, %v4400
        %v5521 = vpack.c.bf16 %v4405, %v4401
        %v5522 = vpack.c.bf16 %v4410, %v4406
        %v5523 = vpack.c.bf16 %v4411, %v4407
        %v5524 = vpack.c.bf16 %v4412, %v4408
        %v5525 = vpack.c.bf16 %v4413, %v4409
        %v5526 = vpack.c.bf16 %v4418, %v4414
        %v5527 = vpack.c.bf16 %v4419, %v4415
        %v5528 = vpack.c.bf16 %v4420, %v4416
        %v5529 = vpack.c.bf16 %v4421, %v4417
        %v5530 = vpack.c.bf16 %v4426, %v4422
        %v5531 = vpack.c.bf16 %v4427, %v4423
        %v5532 = vpack.c.bf16 %v4428, %v4424
        %v5533 = vpack.c.bf16 %v4429, %v4425
        %v5534 = vpack.c.bf16 %v4434, %v4430
        %v5535 = vpack.c.bf16 %v4435, %v4431
        %v5536 = vpack.c.bf16 %v4436, %v4432
        %v5537 = vpack.c.bf16 %v4437, %v4433
        %v5538 = vpack.c.bf16 %v4442, %v4438
        %v5539 = vpack.c.bf16 %v4443, %v4439
        %v5540 = vpack.c.bf16 %v4444, %v4440
        %v5541 = vpack.c.bf16 %v4445, %v4441
        %v5542 = vpack.c.bf16 %v4450, %v4446
        %v5543 = vpack.c.bf16 %v4451, %v4447
        %v5544 = vpack.c.bf16 %v4452, %v4448
        %v5545 = vpack.c.bf16 %v4453, %v4449
        %v5546 = vpack.c.bf16 %v4458, %v4454
        %v5547 = vpack.c.bf16 %v4459, %v4455
        %v5548 = vpack.c.bf16 %v4460, %v4456
        %v5549 = vpack.c.bf16 %v4461, %v4457
        %v5614 = vunpack.c.l.b16 %v5486
        %v5615 = vunpack.c.l.b16 %v5487
        %v5616 = vunpack.c.l.b16 %v5488
        %v5617 = vunpack.c.l.b16 %v5489
        %v5618 = vunpack.c.h.b16 %v5486
        %v5619 = vunpack.c.h.b16 %v5487
        %v5620 = vunpack.c.h.b16 %v5488
        %v5621 = vunpack.c.h.b16 %v5489
        %v5622 = vunpack.c.l.b16 %v5490
        %v5623 = vunpack.c.l.b16 %v5491
        %v5624 = vunpack.c.l.b16 %v5492
        %v5625 = vunpack.c.l.b16 %v5493
        %v5626 = vunpack.c.h.b16 %v5490
        %v5627 = vunpack.c.h.b16 %v5491
        %v5628 = vunpack.c.h.b16 %v5492
        %v5629 = vunpack.c.h.b16 %v5493
        %v5630 = vunpack.c.l.b16 %v5494
        %v5631 = vunpack.c.l.b16 %v5495
        %v5632 = vunpack.c.l.b16 %v5496
        %v5633 = vunpack.c.l.b16 %v5497
        %v5634 = vunpack.c.h.b16 %v5494
        %v5635 = vunpack.c.h.b16 %v5495
        %v5636 = vunpack.c.h.b16 %v5496
        %v5637 = vunpack.c.h.b16 %v5497
        %v5638 = vunpack.c.l.b16 %v5498
        %v5639 = vunpack.c.l.b16 %v5499
        %v5640 = vunpack.c.l.b16 %v5500
        %v5641 = vunpack.c.l.b16 %v5501
        %v5642 = vunpack.c.h.b16 %v5498
        %v5643 = vunpack.c.h.b16 %v5499
        %v5644 = vunpack.c.h.b16 %v5500
        %v5645 = vunpack.c.h.b16 %v5501
        %v5646 = vunpack.c.l.b16 %v5502
        %v5647 = vunpack.c.l.b16 %v5503
        %v5648 = vunpack.c.l.b16 %v5504
        %v5649 = vunpack.c.l.b16 %v5505
        %v5650 = vunpack.c.h.b16 %v5502
        %v5651 = vunpack.c.h.b16 %v5503
        %v5652 = vunpack.c.h.b16 %v5504
        %v5653 = vunpack.c.h.b16 %v5505
        %v5654 = vunpack.c.l.b16 %v5506
        %v5655 = vunpack.c.l.b16 %v5507
        %v5656 = vunpack.c.l.b16 %v5508
        %v5657 = vunpack.c.l.b16 %v5509
        %v5658 = vunpack.c.h.b16 %v5506
        %v5659 = vunpack.c.h.b16 %v5507
        %v5660 = vunpack.c.h.b16 %v5508
        %v5661 = vunpack.c.h.b16 %v5509
        %v5662 = vunpack.c.l.b16 %v5510
        %v5663 = vunpack.c.l.b16 %v5511
        %v5664 = vunpack.c.l.b16 %v5512
        %v5665 = vunpack.c.l.b16 %v5513
        %v5666 = vunpack.c.h.b16 %v5510
        %v5667 = vunpack.c.h.b16 %v5511
        %v5668 = vunpack.c.h.b16 %v5512
        %v5669 = vunpack.c.h.b16 %v5513
        %v5670 = vunpack.c.l.b16 %v5514
        %v5671 = vunpack.c.l.b16 %v5515
        %v5672 = vunpack.c.l.b16 %v5516
        %v5673 = vunpack.c.l.b16 %v5517
        %v5674 = vunpack.c.h.b16 %v5514
        %v5675 = vunpack.c.h.b16 %v5515
        %v5676 = vunpack.c.h.b16 %v5516
        %v5677 = vunpack.c.h.b16 %v5517
        %v5678 = vunpack.c.l.b16 %v5518
        %v5679 = vunpack.c.l.b16 %v5519
        %v5680 = vunpack.c.l.b16 %v5520
        %v5681 = vunpack.c.l.b16 %v5521
        %v5682 = vunpack.c.h.b16 %v5518
        %v5683 = vunpack.c.h.b16 %v5519
        %v5684 = vunpack.c.h.b16 %v5520
        %v5685 = vunpack.c.h.b16 %v5521
        %v5686 = vunpack.c.l.b16 %v5522
        %v5687 = vunpack.c.l.b16 %v5523
        %v5688 = vunpack.c.l.b16 %v5524
        %v5689 = vunpack.c.l.b16 %v5525
        %v5690 = vunpack.c.h.b16 %v5522
        %v5691 = vunpack.c.h.b16 %v5523
        %v5692 = vunpack.c.h.b16 %v5524
        %v5693 = vunpack.c.h.b16 %v5525
        %v5694 = vunpack.c.l.b16 %v5526
        %v5695 = vunpack.c.l.b16 %v5527
        %v5696 = vunpack.c.l.b16 %v5528
        %v5697 = vunpack.c.l.b16 %v5529
        %v5698 = vunpack.c.h.b16 %v5526
        %v5699 = vunpack.c.h.b16 %v5527
        %v5700 = vunpack.c.h.b16 %v5528
        %v5701 = vunpack.c.h.b16 %v5529
        %v5702 = vunpack.c.l.b16 %v5530
        %v5703 = vunpack.c.l.b16 %v5531
        %v5704 = vunpack.c.l.b16 %v5532
        %v5705 = vunpack.c.l.b16 %v5533
        %v5706 = vunpack.c.h.b16 %v5530
        %v5707 = vunpack.c.h.b16 %v5531
        %v5708 = vunpack.c.h.b16 %v5532
        %v5709 = vunpack.c.h.b16 %v5533
        %v5710 = vunpack.c.l.b16 %v5534
        %v5711 = vunpack.c.l.b16 %v5535
        %v5712 = vunpack.c.l.b16 %v5536
        %v5713 = vunpack.c.l.b16 %v5537
        %v5714 = vunpack.c.h.b16 %v5534
        %v5715 = vunpack.c.h.b16 %v5535
        %v5716 = vunpack.c.h.b16 %v5536
        %v5717 = vunpack.c.h.b16 %v5537
        %v5718 = vunpack.c.l.b16 %v5538
        %v5719 = vunpack.c.l.b16 %v5539
        %v5720 = vunpack.c.l.b16 %v5540
        %v5721 = vunpack.c.l.b16 %v5541
        %v5722 = vunpack.c.h.b16 %v5538
        %v5723 = vunpack.c.h.b16 %v5539
        %v5724 = vunpack.c.h.b16 %v5540
        %v5725 = vunpack.c.h.b16 %v5541
        %v5726 = vunpack.c.l.b16 %v5542
        %v5727 = vunpack.c.l.b16 %v5543
        %v5728 = vunpack.c.l.b16 %v5544
        %v5729 = vunpack.c.l.b16 %v5545
        %v5730 = vunpack.c.h.b16 %v5542
        %v5731 = vunpack.c.h.b16 %v5543
        %v5732 = vunpack.c.h.b16 %v5544
        %v5733 = vunpack.c.h.b16 %v5545
        %v5734 = vunpack.c.l.b16 %v5546
        %v5735 = vunpack.c.l.b16 %v5547
        %v5736 = vunpack.c.l.b16 %v5548
        %v5737 = vunpack.c.l.b16 %v5549
        %v5738 = vunpack.c.h.b16 %v5546
        %v5739 = vunpack.c.h.b16 %v5547
        %v5740 = vunpack.c.h.b16 %v5548
        %v5741 = vunpack.c.h.b16 %v5549
        %v5742 = vpack.c.b16 %v5615, %v5614
        %v5743 = vpack.c.b16 %v5617, %v5616
        %v5744 = vpack.c.b16 %v5619, %v5618
        %v5745 = vpack.c.b16 %v5621, %v5620
        %v5746 = vpack.c.b16 %v5623, %v5622
        %v5747 = vpack.c.b16 %v5625, %v5624
        %v5748 = vpack.c.b16 %v5627, %v5626
        %v5749 = vpack.c.b16 %v5629, %v5628
        %v5750 = vpack.c.b16 %v5631, %v5630
        %v5751 = vpack.c.b16 %v5633, %v5632
        %v5752 = vpack.c.b16 %v5635, %v5634
        %v5753 = vpack.c.b16 %v5637, %v5636
        %v5754 = vpack.c.b16 %v5639, %v5638
        %v5755 = vpack.c.b16 %v5641, %v5640
        %v5756 = vpack.c.b16 %v5643, %v5642
        %v5757 = vpack.c.b16 %v5645, %v5644
        %v5758 = vpack.c.b16 %v5647, %v5646
        %v5759 = vpack.c.b16 %v5649, %v5648
        %v5760 = vpack.c.b16 %v5651, %v5650
        %v5761 = vpack.c.b16 %v5653, %v5652
        %v5762 = vpack.c.b16 %v5655, %v5654
        %v5763 = vpack.c.b16 %v5657, %v5656
        %v5764 = vpack.c.b16 %v5659, %v5658
        %v5765 = vpack.c.b16 %v5661, %v5660
        %v5766 = vpack.c.b16 %v5663, %v5662
        %v5767 = vpack.c.b16 %v5665, %v5664
        %v5768 = vpack.c.b16 %v5667, %v5666
        %v5769 = vpack.c.b16 %v5669, %v5668
        %v5770 = vpack.c.b16 %v5671, %v5670
        %v5771 = vpack.c.b16 %v5673, %v5672
        %v5772 = vpack.c.b16 %v5675, %v5674
        %v5773 = vpack.c.b16 %v5677, %v5676
        %v5774 = vpack.c.b16 %v5679, %v5678
        %v5775 = vpack.c.b16 %v5681, %v5680
        %v5776 = vpack.c.b16 %v5683, %v5682
        %v5777 = vpack.c.b16 %v5685, %v5684
        %v5778 = vpack.c.b16 %v5687, %v5686
        %v5779 = vpack.c.b16 %v5689, %v5688
        %v5780 = vpack.c.b16 %v5691, %v5690
        %v5781 = vpack.c.b16 %v5693, %v5692
        %v5782 = vpack.c.b16 %v5695, %v5694
        %v5783 = vpack.c.b16 %v5697, %v5696
        %v5784 = vpack.c.b16 %v5699, %v5698
        %v5785 = vpack.c.b16 %v5701, %v5700
        %v5786 = vpack.c.b16 %v5703, %v5702
        %v5787 = vpack.c.b16 %v5705, %v5704
        %v5788 = vpack.c.b16 %v5707, %v5706
        %v5789 = vpack.c.b16 %v5709, %v5708
        %v5790 = vpack.c.b16 %v5711, %v5710
        %v5791 = vpack.c.b16 %v5713, %v5712
        %v5792 = vpack.c.b16 %v5715, %v5714
        %v5793 = vpack.c.b16 %v5717, %v5716
        %v5794 = vpack.c.b16 %v5719, %v5718
        %v5795 = vpack.c.b16 %v5721, %v5720
        %v5796 = vpack.c.b16 %v5723, %v5722
        %v5797 = vpack.c.b16 %v5725, %v5724
        %v5798 = vpack.c.b16 %v5727, %v5726
        %v5799 = vpack.c.b16 %v5729, %v5728
        %v5800 = vpack.c.b16 %v5731, %v5730
        %v5801 = vpack.c.b16 %v5733, %v5732
        %v5802 = vpack.c.b16 %v5735, %v5734
        %v5803 = vpack.c.b16 %v5737, %v5736
        %v5804 = vpack.c.b16 %v5739, %v5738
        %v5805 = vpack.c.b16 %v5741, %v5740
        %5870 = vst [vmem:[%s310] sm:$0xff] %v5742
        %5871 = vst [vmem:[%s310 + $0x8] sm:$0xff] %v5743
        %5872 = vst [vmem:[%s310 + $0x10] sm:$0xff] %v5744
        %5873 = vst [vmem:[%s310 + $0x18] sm:$0xff] %v5745
        %5874 = vst [vmem:[%s310 + $0x20] sm:$0xff] %v5746
        %5875 = vst [vmem:[%s310 + $0x28] sm:$0xff] %v5747
        %5876 = vst [vmem:[%s310 + $0x30] sm:$0xff] %v5748
        %5877 = vst [vmem:[%s310 + $0x38] sm:$0xff] %v5749
        %5878 = vst [vmem:[%s310 + $0x40] sm:$0xff] %v5750
        %5879 = vst [vmem:[%s310 + $0x48] sm:$0xff] %v5751
        %5880 = vst [vmem:[%s310 + $0x50] sm:$0xff] %v5752
        %5881 = vst [vmem:[%s310 + $0x58] sm:$0xff] %v5753
        %5882 = vst [vmem:[%s310 + $0x60] sm:$0xff] %v5754
        %5883 = vst [vmem:[%s310 + $0x68] sm:$0xff] %v5755
        %5884 = vst [vmem:[%s310 + $0x70] sm:$0xff] %v5756
        %5885 = vst [vmem:[%s310 + $0x78] sm:$0xff] %v5757
        %5886 = vst [vmem:[%s310 + $0x80] sm:$0xff] %v5758
        %5887 = vst [vmem:[%s310 + $0x88] sm:$0xff] %v5759
        %5888 = vst [vmem:[%s310 + $0x90] sm:$0xff] %v5760
        %5889 = vst [vmem:[%s310 + $0x98] sm:$0xff] %v5761
        %5890 = vst [vmem:[%s310 + $0xa0] sm:$0xff] %v5762
        %5891 = vst [vmem:[%s310 + $0xa8] sm:$0xff] %v5763
        %5892 = vst [vmem:[%s310 + $0xb0] sm:$0xff] %v5764
        %5893 = vst [vmem:[%s310 + $0xb8] sm:$0xff] %v5765
        %5894 = vst [vmem:[%s310 + $0xc0] sm:$0xff] %v5766
        %5895 = vst [vmem:[%s310 + $0xc8] sm:$0xff] %v5767
        %5896 = vst [vmem:[%s310 + $0xd0] sm:$0xff] %v5768
        %5897 = vst [vmem:[%s310 + $0xd8] sm:$0xff] %v5769
        %5898 = vst [vmem:[%s310 + $0xe0] sm:$0xff] %v5770
        %5899 = vst [vmem:[%s310 + $0xe8] sm:$0xff] %v5771
        %5900 = vst [vmem:[%s310 + $0xf0] sm:$0xff] %v5772
        %5901 = vst [vmem:[%s310 + $0xf8] sm:$0xff] %v5773
        %5902 = vst [vmem:[%s310 + $0x100] sm:$0xff] %v5774
        %5903 = vst [vmem:[%s310 + $0x108] sm:$0xff] %v5775
        %5904 = vst [vmem:[%s310 + $0x110] sm:$0xff] %v5776
        %5905 = vst [vmem:[%s310 + $0x118] sm:$0xff] %v5777
        %5906 = vst [vmem:[%s310 + $0x120] sm:$0xff] %v5778
        %5907 = vst [vmem:[%s310 + $0x128] sm:$0xff] %v5779
        %5908 = vst [vmem:[%s310 + $0x130] sm:$0xff] %v5780
        %5909 = vst [vmem:[%s310 + $0x138] sm:$0xff] %v5781
        %5910 = vst [vmem:[%s310 + $0x140] sm:$0xff] %v5782
        %5911 = vst [vmem:[%s310 + $0x148] sm:$0xff] %v5783
        %5912 = vst [vmem:[%s310 + $0x150] sm:$0xff] %v5784
        %5913 = vst [vmem:[%s310 + $0x158] sm:$0xff] %v5785
        %5914 = vst [vmem:[%s310 + $0x160] sm:$0xff] %v5786
        %5915 = vst [vmem:[%s310 + $0x168] sm:$0xff] %v5787
        %5916 = vst [vmem:[%s310 + $0x170] sm:$0xff] %v5788
        %5917 = vst [vmem:[%s310 + $0x178] sm:$0xff] %v5789
        %5918 = vst [vmem:[%s310 + $0x180] sm:$0xff] %v5790
        %5919 = vst [vmem:[%s310 + $0x188] sm:$0xff] %v5791
        %5920 = vst [vmem:[%s310 + $0x190] sm:$0xff] %v5792
        %5921 = vst [vmem:[%s310 + $0x198] sm:$0xff] %v5793
        %5922 = vst [vmem:[%s310 + $0x1a0] sm:$0xff] %v5794
        %5923 = vst [vmem:[%s310 + $0x1a8] sm:$0xff] %v5795
        %5924 = vst [vmem:[%s310 + $0x1b0] sm:$0xff] %v5796
        %5925 = vst [vmem:[%s310 + $0x1b8] sm:$0xff] %v5797
        %5926 = vst [vmem:[%s310 + $0x1c0] sm:$0xff] %v5798
        %5927 = vst [vmem:[%s310 + $0x1c8] sm:$0xff] %v5799
        %5928 = vst [vmem:[%s310 + $0x1d0] sm:$0xff] %v5800
        %5929 = vst [vmem:[%s310 + $0x1d8] sm:$0xff] %v5801
        %5930 = vst [vmem:[%s310 + $0x1e0] sm:$0xff] %v5802
        %5931 = vst [vmem:[%s310 + $0x1e8] sm:$0xff] %v5803
        %5932 = vst [vmem:[%s310 + $0x1f0] sm:$0xff] %v5804
        %5933 = vst [vmem:[%s310 + $0x1f8] sm:$0xff] %v5805
        %s5934 = sand.u32 %s146, 1
        %s5935 = scalar_lea.sflag [#allocation4], %s5934
        %s5936 = sand.u32 %s146, 1
        %s5937 = smul.addr %s5936, 512
        %s5938 = scalar_lea.vmem [#allocation8], %s5937
        %s5939 = sand.u32 %s172, 1
        %s5940 = scalar_lea.sflag [#allocation10], %s5939
        %s5941 = sand.u32 %s172, 1
        %s5942 = smul.addr %s5941, 512
        %s5943 = scalar_lea.vmem [#allocation9], %s5942
        // Predicated region
        $region53: #{tpu_custom_call.1} parent=39 // pred_check
          %p5944 = pneg %p156
        $region54: #{tpu_custom_call.1} parent=39 // pred_check_branch
          %5946 = sbr.rel (%p5944) target = $region56
        $region55: #{tpu_custom_call.1} parent=39 // pred_region
          %s5947 = smul.u32 32, %s28
          %s5949 = ssub.s32 8192, 8192
          %5950 = vsyncadd %s5935, %s5949
          %s5951 = smul.addr %s5947, 4
          %s5952 = smul.addr %s5951, 64
          %s5953 = scalar_lea.hbm %s5, %s5952
          %s5954 = sshll.u32 %s5938, 4
          %s5955 = int_to_ptr.vmem [resolvable:$true] %s5954
          %5960 = dma.vmem_to_hbm [thread:$0]  %s5955, 8192, %s5953, %s5935, 256, 256, 16
        $region56: #{tpu_custom_call.1} parent=39 // pred_fallthru
          _
        // Predicated region
        $region57: #{tpu_custom_call.1} parent=39 // pred_check
          %p5961 = pneg %p182
        $region58: #{tpu_custom_call.1} parent=39 // pred_check_branch
          %5963 = sbr.rel (%p5961) target = $region60
        $region59: #{tpu_custom_call.1} parent=39 // pred_region
          %s5964 = smul.u32 32, %s28
          %s5966 = ssub.s32 8192, 8192
          %5967 = vsyncadd %s5940, %s5966
          %s5968 = smul.addr %s5964, 4
          %s5969 = smul.addr %s5968, 64
          %s5970 = scalar_lea.hbm %s6, %s5969
          %s5971 = sshll.u32 %s5943, 4
          %s5972 = int_to_ptr.vmem [resolvable:$true] %s5971
          %5977 = dma.vmem_to_hbm [thread:$0]  %s5972, 8192, %s5970, %s5940, 256, 256, 16
        $region60: #{tpu_custom_call.1} parent=39 // pred_fallthru
          _
      $region40: #{tpu_custom_call.1} parent=5 // pred_fallthru
        _
      %p5978 = scmp.le.s32.totalorder 2, %s23
      // Predicated region
      $region61: #{tpu_custom_call.1} parent=5 // pred_check
        %p5979 = pneg %p5978
      $region62: #{tpu_custom_call.1} parent=5 // pred_check_branch
        %5981 = sbr.rel (%p5979) target = $region64
      $region63: #{tpu_custom_call.1} parent=5 // pred_region
        %s5982 = ssub.s32 %s23, 2
        // Predicated region
        $region65: #{tpu_custom_call.1} parent=63 // pred_check
          %p5983 = pneg %p162
        $region66: #{tpu_custom_call.1} parent=63 // pred_check_branch
          %5985 = sbr.rel (%p5983) target = $region68
        $region67: #{tpu_custom_call.1} parent=63 // pred_region
          %s5986 = sand.u32 %s147, 1
          %s5987 = scalar_lea.sflag [#allocation4], %s5986
          %s5988 = sand.u32 %s147, 1
          %s5989 = smul.addr %s5988, 512
          %s5990 = scalar_lea.vmem [#allocation8], %s5989
          %5991 = dma.done %s5987, 8192
        $region68: #{tpu_custom_call.1} parent=63 // pred_fallthru
          _
        // Predicated region
        $region69: #{tpu_custom_call.1} parent=63 // pred_check
          %p5992 = pneg %p188
        $region70: #{tpu_custom_call.1} parent=63 // pred_check_branch
          %5994 = sbr.rel (%p5992) target = $region72
        $region71: #{tpu_custom_call.1} parent=63 // pred_region
          %s5995 = sand.u32 %s173, 1
          %s5996 = scalar_lea.sflag [#allocation10], %s5995
          %s5997 = sand.u32 %s173, 1
          %s5998 = smul.addr %s5997, 512
          %s5999 = scalar_lea.vmem [#allocation9], %s5998
          %6000 = dma.done %s5996, 8192
        $region72: #{tpu_custom_call.1} parent=63 // pred_fallthru
          _
      $region64: #{tpu_custom_call.1} parent=5 // pred_fallthru
        _
    $region6: #{tpu_custom_call.1} parent=1 // loop_footer
      %s27 = sadd.s32 1, %s23
    $region7: #{tpu_custom_call.1} parent=1 // loop_footer_branch
      %22 = sbr.rel target = $region3
    $region8: #{tpu_custom_call.1} parent=1 // loop_exit
      _
    %6001 = vsyncpa [#allocation3], 1
    %s6002 = scalar_lea.sflag [#allocation3], 1
    %6003 = vsyncpa %s6002, 1
    %6004 = vsyncpa [#allocation6], 1
    %6005 = vsyncpa [#allocation4], 1
    %s6006 = scalar_lea.sflag [#allocation4], 1
    %6007 = vsyncpa %s6006, 1
    %6008 = vsyncpa [#allocation10], 1
    %s6009 = scalar_lea.sflag [#allocation10], 1
    %6010 = vsyncpa %s6009, 1

</llo_original>
